<compile_context>
chip_gen: v7x
topology: tpu7x:2x2x1
jax: 0.10.0
libtpu: 0.0.40
codegen_flags: <defaults>
</compile_context>

<pallas_src>
import jax
import jax.numpy as jnp
import numpy as np
from jax.experimental import pallas as pl
from jax.experimental.pallas import tpu as pltpu

# ---------------- model sizes ----------------
LSTM_IN = 16                      # lstmInfea
LSTM_H = 32                       # lstmfea
MAIN = 64                         # mainfea
SEQ = 8                           # history length
GRAPH_H = GRAPH_W = 15            # graph feature map (1 channel)
X_DIM = 32                        # width of the dense input `x`
CONV_FLAT = 16 * 4 * 4            # conv tower flatten: 15 -(k3)-> 13 -(k3)-> 11 -(k5,s2)-> 4
IN_FEA = X_DIM + CONV_FLAT        # the `in_fea` ctor argument (288)
D_MLP = IN_FEA + LSTM_H           # cat([x, lstm_h, conv_flat]) width = 320

# ---------------- conv tower geometry ----------------
CROWS = 16                        # channel rows used for every conv activation
HW1, OHW1 = 15 * 15, 13 * 13      # 225, 169
HW2, OHW2 = 13 * 13, 11 * 11      # 169, 121
HW3, OHW3 = 11 * 11, 4 * 4        # 121, 16
HW1P, OHW1P = 256, 256            # padded flattened-position widths
HW2P, OHW2P = 256, 128            # (HW2P == OHW1P, HW3P == OHW2P by construction)
HW3P, OHW3P = 128, 16
T1, T2, T3 = 9, 9, 25             # taps per conv layer (k*k)

# ---------------- packed parameter buffer layouts (row offsets) ----------------
P256_S1 = 0
P256_B1M = T1 * HW1P                                   # 2304
P256_ROWS = P256_B1M + CROWS                           # 2320

P128_S2 = 0
P128_B2M = T2 * HW2P                                   # 2304
P128_WIH = P128_B2M + CROWS                            # 2320
P128_WHH = P128_WIH + LSTM_IN                          # 2336
P128_VEC = P128_WHH + LSTM_H                           # 2368
(VEC_BLSTM, VEC_GX, VEC_BX, VEC_GH, VEC_BH,
 VEC_B1, VEC_B2, VEC_G2, VEC_BE2,
 VEC_B3, VEC_G3, VEC_BE3,
 VEC_B4, VEC_G4, VEC_BE4,
 VEC_WFC, VEC_BFC) = range(17)
P128_ROWS = -(-(P128_VEC + 17) // 8) * 8               # 2392

P16_B3M = 0
P16_GNOW = P16_B3M + CROWS                             # 16
P16_BNOW = P16_GNOW + CROWS                            # 32
P16_WT1 = P16_BNOW + CROWS                             # 48
P16_WT2 = P16_WT1 + T1 * CROWS                         # 192
P16_WT3 = P16_WT2 + T2 * CROWS                         # 336
P16_ROWS = P16_WT3 + T3 * CROWS                        # 736

P64_W1X = 0
P64_W1H = X_DIM                                        # 32
P64_W1N = P64_W1H + LSTM_H                             # 64
P64_W2 = P64_W1N + CONV_FLAT                           # 320
P64_W3 = P64_W2 + MAIN                                 # 384
P64_W4 = P64_W3 + MAIN                                 # 448
P64_ROWS = P64_W4 + MAIN                               # 512

_VMEM = pl.BlockSpec(memory_space=pltpu.MemorySpace.VMEM)


# ---------------- the fused Pallas kernel ----------------
def _fused_kernel(x_ref, seq_ref, g0_ref, p256_ref, p128_ref, p16_ref, s3_ref,
                  p64_ref, o_ref):
    f32 = jnp.float32

    def mm(a, b):
        return jnp.dot(a, b, preferred_element_type=f32)

    # ---- conv tower: im2col-as-matmul with constant 0/1 shift matrices -----------------
    # Activations are (channel-rows=16, flattened-position-lanes); zero padding everywhere
    # outside the valid region is preserved by construction of the packed params.
    act = g0_ref[...]                                            # (16, 256) valid (1, 225)

    # conv1: 1 -> 6 channels, k=3, stride 1, ReLU
    z = p256_ref[P256_B1M:P256_B1M + CROWS, :]                   # bias map (16, 256)
    for t in range(T1):
        s_t = p256_ref[P256_S1 + t * HW1P:P256_S1 + (t + 1) * HW1P, :]     # (256, 256)
        w_t = p16_ref[P16_WT1 + t * CROWS:P16_WT1 + (t + 1) * CROWS, :]    # (16, 16)
        z = z + mm(w_t, mm(act, s_t))
    act = jnp.maximum(z, 0.0)                                    # (16, 256) valid (6, 169)

    # conv2: 6 -> 16 channels, k=3, stride 1, ReLU
    z = p128_ref[P128_B2M:P128_B2M + CROWS, :]                   # bias map (16, 128)
    for t in range(T2):
        s_t = p128_ref[P128_S2 + t * HW2P:P128_S2 + (t + 1) * HW2P, :]     # (256, 128)
        w_t = p16_ref[P16_WT2 + t * CROWS:P16_WT2 + (t + 1) * CROWS, :]
        z = z + mm(w_t, mm(act, s_t))
    act = jnp.maximum(z, 0.0)                                    # (16, 128) valid (16, 121)

    # conv3: 16 -> 16 channels, k=5, stride 2, no activation.  All 25 tap gathers are one
    # matmul against the lane-concatenated shift matrix.
    g3 = mm(act, s3_ref[...])                                    # (16, 25*16) = (16, 400)
    z = p16_ref[P16_B3M:P16_B3M + CROWS, :]                      # bias map (16, 16)
    for t in range(T3):
        w_t = p16_ref[P16_WT3 + t * CROWS:P16_WT3 + (t + 1) * CROWS, :]
        z = z + mm(w_t, g3[:, t * OHW3P:(t + 1) * OHW3P])
    now = z                         # (16, 16): rows = channels, lanes = 4x4 positions;
                                    # row-major order == torch .view(1, -1) on NCHW.

    # ---- LSTM (B=1, T=SEQ, torch gate order i|f|g|o); input projection hoisted ---------
    wih = p128_ref[P128_WIH:P128_WIH + LSTM_IN, :]               # (16, 128)
    whh = p128_ref[P128_WHH:P128_WHH + LSTM_H, :]                # (32, 128)
    b_l = p128_ref[P128_VEC + VEC_BLSTM:P128_VEC + VEC_BLSTM + 1, :]        # (1, 128)
    xwb = mm(seq_ref[...], wih) + b_l                            # (SEQ, 128)
    h = jnp.zeros((1, LSTM_H), f32)
    c = jnp.zeros((1, LSTM_H), f32)
    for t in range(SEQ):                                         # static, fully unrolled
        gates = xwb[t:t + 1, :] + mm(h, whh)                     # (1, 128)
        sg = jax.nn.sigmoid(gates)                               # full-vreg EUP ops
        th = jnp.tanh(gates)
        i_g = sg[:, 0 * LSTM_H:1 * LSTM_H]
        f_g = sg[:, 1 * LSTM_H:2 * LSTM_H]
        g_g = th[:, 2 * LSTM_H:3 * LSTM_H]
        o_g = sg[:, 3 * LSTM_H:4 * LSTM_H]
        c = f_g * c + i_g * g_g
        h = o_g * jnp.tanh(c)
    # h == lstm output at the final step == x1[:, -1, :]

    # ---- MLP head: LayerNorm(cat) -> Lin -> tanh -> 3x[Lin -> LN -> tanh] -> fc --------
    # The concat [x | h | now] is never materialized: LN statistics and the first Linear
    # are evaluated piecewise (W1 / gamma / beta were split by segment at pack time).
    def vec(idx):
        return p128_ref[P128_VEC + idx:P128_VEC + idx + 1, :]    # (1, 128)

    x_in = x_ref[...]                                            # (1, 32)
    inv_n = 1.0 / float(D_MLP)
    mu = (jnp.sum(x_in) + jnp.sum(h) + jnp.sum(now)) * inv_n
    dx = x_in - mu
    dh = h - mu
    dnw = now - mu
    var = (jnp.sum(dx * dx) + jnp.sum(dh * dh) + jnp.sum(dnw * dnw)) * inv_n
    inv = jax.lax.rsqrt(var + 1e-5)

    xn = dx * inv * vec(VEC_GX)[:, :X_DIM] + vec(VEC_BX)[:, :X_DIM]
    hn = dh * inv * vec(VEC_GH)[:, :LSTM_H] + vec(VEC_BH)[:, :LSTM_H]
    g_now = p16_ref[P16_GNOW:P16_GNOW + CROWS, :]                # (16, 16)
    b_now = p16_ref[P16_BNOW:P16_BNOW + CROWS, :]
    nwn = dnw * inv * g_now + b_now                              # (16, 16)

    h1 = (mm(xn, p64_ref[P64_W1X:P64_W1X + X_DIM, :])
          + mm(hn, p64_ref[P64_W1H:P64_W1H + LSTM_H, :]))        # (1, 64)
    for cc in range(CROWS):
        w1n_c = p64_ref[P64_W1N + cc * OHW3:P64_W1N + (cc + 1) * OHW3, :]   # (16, 64)
        h1 = h1 + mm(nwn[cc:cc + 1, :], w1n_c)
    h1 = jnp.tanh(h1 + vec(VEC_B1)[:, :MAIN])

    def lin_ln_tanh(hh, w_off, b_i, g_i, be_i):
        zz = mm(hh, p64_ref[w_off:w_off + MAIN, :]) + vec(b_i)[:, :MAIN]
        m = jnp.mean(zz, axis=-1, keepdims=True)
        cz = zz - m
        v = jnp.mean(cz * cz, axis=-1, keepdims=True)
        zn = cz * jax.lax.rsqrt(v + 1e-5) * vec(g_i)[:, :MAIN] + vec(be_i)[:, :MAIN]
        return jnp.tanh(zn)

    h2 = lin_ln_tanh(h1, P64_W2, VEC_B2, VEC_G2, VEC_BE2)
    h3 = lin_ln_tanh(h2, P64_W3, VEC_B3, VEC_G3, VEC_BE3)
    h4 = lin_ln_tanh(h3, P64_W4, VEC_B4, VEC_G4, VEC_BE4)

    # fc: Linear(mainfea, 1) as a lane reduction
    o_ref[...] = (jnp.sum(h4 * vec(VEC_WFC)[:, :MAIN], axis=-1, keepdims=True)
                  + vec(VEC_BFC)[:, :1])


# ---------------- wrapper ----------------
def forward(packed, x, graphFea, hisActFea):
    """AgentCriNet.forward (the .cuda(cudaId) moves are device-placement no-ops here)."""
    g_flat = graphFea.reshape(1, HW1).astype(jnp.float32)
    g0 = jnp.pad(g_flat, ((0, CROWS - 1), (0, HW1P - HW1)))      # (16, 256), rest zero
    seq = hisActFea.reshape(SEQ, LSTM_IN).astype(jnp.float32)
    return pl.pallas_call(
        _fused_kernel,
        out_shape=jax.ShapeDtypeStruct((1, 1), jnp.float32),
        in_specs=[_VMEM] * 8,
        out_specs=_VMEM,
    )(x.astype(jnp.float32), seq, g0,
      packed["p256"], packed["p128"], packed["p16"], packed["s3cat"], packed["p64"])
    # TODO(synk): if multiple agents/samples are evaluated, add a leading batch grid axis
    # with dimension_semantics=("parallel",) to shard across v7x's two TensorCores.


# ---------------- deterministic logical parameters (torch-equivalent layout) ----------------
def init_params(key):
    ks = jax.random.split(key, 20)

    def w(k, shape, scale=0.1):
        return scale * jax.random.normal(k, shape, dtype=jnp.float32)

    p = {}
    # LSTM stored transposed: (In, 4H)/(H, 4H), torch gate order i|f|g|o; bias = b_ih + b_hh.
    p["wih"] = w(ks[0], (LSTM_IN, 4 * LSTM_H))
    p["whh"] = w(ks[1], (LSTM_H, 4 * LSTM_H))
    p["b_lstm"] = w(ks[2], (4 * LSTM_H,))
    # conv stack (OIHW, as in PyTorch)
    p["cw1"], p["cb1"] = w(ks[3], (6, 1, 3, 3)), w(ks[4], (6,))
    p["cw2"], p["cb2"] = w(ks[5], (16, 6, 3, 3)), w(ks[6], (16,))
    p["cw3"], p["cb3"] = w(ks[7], (16, 16, 5, 5)), w(ks[8], (16,))
    # mlp_base (+ LayerNorms with default gamma=1, beta=0) and fc; Linear weights stored (in, out)
    p["ln0_g"], p["ln0_b"] = jnp.ones((D_MLP,), jnp.float32), jnp.zeros((D_MLP,), jnp.float32)
    p["w1"], p["b1"] = w(ks[9], (D_MLP, MAIN)), w(ks[10], (MAIN,))
    p["w2"], p["b2"] = w(ks[11], (MAIN, MAIN)), w(ks[12], (MAIN,))
    p["ln2_g"], p["ln2_b"] = jnp.ones((MAIN,), jnp.float32), jnp.zeros((MAIN,), jnp.float32)
    p["w3"], p["b3"] = w(ks[13], (MAIN, MAIN)), w(ks[14], (MAIN,))
    p["ln3_g"], p["ln3_b"] = jnp.ones((MAIN,), jnp.float32), jnp.zeros((MAIN,), jnp.float32)
    p["w4"], p["b4"] = w(ks[15], (MAIN, MAIN)), w(ks[16], (MAIN,))
    p["ln4_g"], p["ln4_b"] = jnp.ones((MAIN,), jnp.float32), jnp.zeros((MAIN,), jnp.float32)
    p["wfc"], p["bfc"] = w(ks[17], (MAIN,)), w(ks[18], (1,))
    return p


# ---------------- one-time parameter packing (pre-pad / pre-permute) ----------------
def _shift_matrices(h, w_, k, s):
    """0/1 matrices S[t] with S[t][p, q] = 1 iff input position p feeds output position q
    for kernel tap t = ky*k + kx (VALID conv, stride s, row-major position flattening)."""
    oh = (h - k) // s + 1
    ow = (w_ - k) // s + 1
    s_mats = np.zeros((k * k, h * w_, oh * ow), np.float32)
    for ky in range(k):
        for kx in range(k):
            t = ky * k + kx
            for oy in range(oh):
                for ox in range(ow):
                    p = (oy * s + ky) * w_ + (ox * s + kx)
                    s_mats[t, p, oy * ow + ox] = 1.0
    return s_mats


def pack_params(p):
    """Pack all parameters + constant conv shift matrices into 5 VMEM-friendly buffers."""
    pn = {k: np.asarray(v, np.float32) for k, v in p.items()}
    s1 = _shift_matrices(15, 15, 3, 1)          # (9, 225, 169)
    s2 = _shift_matrices(13, 13, 3, 1)          # (9, 169, 121)
    s3 = _shift_matrices(11, 11, 5, 2)          # (25, 121, 16)

    p256 = np.zeros((P256_ROWS, OHW1P), np.float32)
    for t in range(T1):
        p256[P256_S1 + t * HW1P:P256_S1 + t * HW1P + HW1, :OHW1] = s1[t]
    p256[P256_B1M:P256_B1M + 6, :OHW1] = pn["cb1"][:, None]

    p128 = np.zeros((P128_ROWS, OHW2P), np.float32)
    for t in range(T2):
        p128[P128_S2 + t * HW2P:P128_S2 + t * HW2P + HW2, :OHW2] = s2[t]
    p128[P128_B2M:P128_B2M + 16, :OHW2] = pn["cb2"][:, None]
    p128[P128_WIH:P128_WIH + LSTM_IN, :] = pn["wih"]
    p128[P128_WHH:P128_WHH + LSTM_H, :] = pn["whh"]

    def setvec(idx, v):
        v = np.asarray(v, np.float32).reshape(-1)
        p128[P128_VEC + idx, :v.shape[0]] = v

    setvec(VEC_BLSTM, pn["b_lstm"])
    setvec(VEC_GX, pn["ln0_g"][:X_DIM]); setvec(VEC_BX, pn["ln0_b"][:X_DIM])
    setvec(VEC_GH, pn["ln0_g"][X_DIM:X_DIM + LSTM_H])
    setvec(VEC_BH, pn["ln0_b"][X_DIM:X_DIM + LSTM_H])
    setvec(VEC_B1, pn["b1"])
    setvec(VEC_B2, pn["b2"]); setvec(VEC_G2, pn["ln2_g"]); setvec(VEC_BE2, pn["ln2_b"])
    setvec(VEC_B3, pn["b3"]); setvec(VEC_G3, pn["ln3_g"]); setvec(VEC_BE3, pn["ln3_b"])
    setvec(VEC_B4, pn["b4"]); setvec(VEC_G4, pn["ln4_g"]); setvec(VEC_BE4, pn["ln4_b"])
    setvec(VEC_WFC, pn["wfc"]); setvec(VEC_BFC, pn["bfc"])

    p16 = np.zeros((P16_ROWS, OHW3P), np.float32)
    p16[P16_B3M:P16_B3M + 16, :OHW3] = pn["cb3"][:, None]
    p16[P16_GNOW:P16_GNOW + CROWS, :] = pn["ln0_g"][X_DIM + LSTM_H:].reshape(CROWS, OHW3)
    p16[P16_BNOW:P16_BNOW + CROWS, :] = pn["ln0_b"][X_DIM + LSTM_H:].reshape(CROWS, OHW3)

    def set_taps(dst_off, w_oihw):
        o_c, i_c, kh, kw = w_oihw.shape
        taps = np.transpose(w_oihw, (2, 3, 0, 1)).reshape(kh * kw, o_c, i_c)
        for t in range(kh * kw):
            p16[dst_off + t * CROWS:dst_off + t * CROWS + o_c, :i_c] = taps[t]

    set_taps(P16_WT1, pn["cw1"])
    set_taps(P16_WT2, pn["cw2"])
    set_taps(P16_WT3, pn["cw3"])

    # conv3 shift matrices lane-concatenated: one (128, 25*16) gather matmul in-kernel.
    s3cat = np.zeros((HW3P, T3 * OHW3P), np.float32)
    for t in range(T3):
        s3cat[:HW3, t * OHW3P:t * OHW3P + OHW3] = s3[t]

    p64 = np.zeros((P64_ROWS, MAIN), np.float32)
    p64[P64_W1X:P64_W1X + D_MLP, :] = pn["w1"]      # rows already in [x | h | now] concat order
    p64[P64_W2:P64_W2 + MAIN, :] = pn["w2"]
    p64[P64_W3:P64_W3 + MAIN, :] = pn["w3"]
    p64[P64_W4:P64_W4 + MAIN, :] = pn["w4"]

    return {"p256": jnp.asarray(p256), "p128": jnp.asarray(p128),
            "p16": jnp.asarray(p16), "s3cat": jnp.asarray(s3cat),
            "p64": jnp.asarray(p64)}


# ---------------- pure-JAX reference (mirrors the PyTorch module) ----------------
def reference_forward(p, x, graphFea, hisActFea):
    hp = jax.lax.Precision.HIGHEST
    # LSTM
    h = jnp.zeros((1, LSTM_H), jnp.float32)
    c = jnp.zeros((1, LSTM_H), jnp.float32)
    seq = hisActFea.reshape(SEQ, LSTM_IN)
    for t in range(SEQ):
        gates = (jnp.dot(seq[t:t + 1], p["wih"], precision=hp)
                 + jnp.dot(h, p["whh"], precision=hp) + p["b_lstm"][None, :])
        i = jax.nn.sigmoid(gates[:, :LSTM_H])
        f = jax.nn.sigmoid(gates[:, LSTM_H:2 * LSTM_H])
        g = jnp.tanh(gates[:, 2 * LSTM_H:3 * LSTM_H])
        o = jax.nn.sigmoid(gates[:, 3 * LSTM_H:])
        c = f * c + i * g
        h = o * jnp.tanh(c)
    # conv tower (NCHW / OIHW, VALID)
    dn = ("NCHW", "OIHW", "NCHW")
    y = graphFea[None]                                            # (1, 1, 15, 15)
    y = jax.lax.conv_general_dilated(y, p["cw1"], (1, 1), "VALID",
                                     dimension_numbers=dn, precision=hp)
    y = jnp.maximum(y + p["cb1"].reshape(1, -1, 1, 1), 0.0)
    y = jax.lax.conv_general_dilated(y, p["cw2"], (1, 1), "VALID",
                                     dimension_numbers=dn, precision=hp)
    y = jnp.maximum(y + p["cb2"].reshape(1, -1, 1, 1), 0.0)
    y = jax.lax.conv_general_dilated(y, p["cw3"], (2, 2), "VALID",
                                     dimension_numbers=dn, precision=hp)
    y = y + p["cb3"].reshape(1, -1, 1, 1)
    now = y.reshape(1, -1)                                        # torch .view(1, -1) on NCHW
    # mlp_base + fc
    feat = jnp.concatenate([x, h, now], axis=1)

    def ln(v, g, b):
        m = jnp.mean(v, axis=-1, keepdims=True)
        cv = v - m
        var = jnp.mean(cv * cv, axis=-1, keepdims=True)
        return cv * jax.lax.rsqrt(var + 1e-5) * g + b

    z = ln(feat, p["ln0_g"], p["ln0_b"])
    z = jnp.tanh(jnp.dot(z, p["w1"], precision=hp) + p["b1"])
    z = jnp.tanh(ln(jnp.dot(z, p["w2"], precision=hp) + p["b2"], p["ln2_g"], p["ln2_b"]))
    z = jnp.tanh(ln(jnp.dot(z, p["w3"], precision=hp) + p["b3"], p["ln3_g"], p["ln3_b"]))
    z = jnp.tanh(ln(jnp.dot(z, p["w4"], precision=hp) + p["b4"], p["ln4_g"], p["ln4_b"]))
    return jnp.dot(z, p["wfc"].reshape(MAIN, 1), precision=hp) + p["bfc"].reshape(1, 1)


if __name__ == "__main__":
    key = jax.random.PRNGKey(0)
    kp, kx, kg, kh = jax.random.split(key, 4)

    params = init_params(kp)
    packed = pack_params(params)

    # batch must be 1: torch.cat((x, x1, now), dim=1) requires it (conv batch is 1)
    x = jax.random.normal(kx, (1, X_DIM), dtype=jnp.float32)
    graphFea = jax.random.normal(kg, (1, GRAPH_H, GRAPH_W), dtype=jnp.float32)
    hisActFea = jax.random.normal(kh, (1, SEQ, LSTM_IN), dtype=jnp.float32)

    fwd = jax.jit(forward)
    out = jax.block_until_ready(fwd(packed, x, graphFea, hisActFea))
    assert out.shape == (1, 1) and out.dtype == jnp.float32

    # numerical sanity-check of the fused kernel against a pure-JAX reference
    ref = jax.block_until_ready(reference_forward(params, x, graphFea, hisActFea))
    np.testing.assert_allclose(np.asarray(out), np.asarray(ref), rtol=2e-2, atol=2e-2)

    # TODO(synk): .cuda(cudaId) device placement from the PyTorch forward has no Pallas
    # equivalent; tensors already live on the TPU backend.
    print("KERNEL_OK")
</pallas_src>

<mosaic_0001>
module attributes {stable_mosaic.version = 11 : i64} {
  func.func @_fused_kernel(%arg0: memref<1x32xf32, #tpu.memory_space<vmem>>, %arg1: memref<8x16xf32, #tpu.memory_space<vmem>>, %arg2: memref<16x256xf32, #tpu.memory_space<vmem>>, %arg3: memref<2320x256xf32, #tpu.memory_space<vmem>>, %arg4: memref<2392x128xf32, #tpu.memory_space<vmem>>, %arg5: memref<736x16xf32, #tpu.memory_space<vmem>>, %arg6: memref<128x400xf32, #tpu.memory_space<vmem>>, %arg7: memref<512x64xf32, #tpu.memory_space<vmem>>, %arg8: memref<1x1xf32, #tpu.memory_space<vmem>>) attributes {dimension_semantics = [], scalar_prefetch = 0 : i64, scratch_operands = 0 : i64, tpu.core_type = #tpu.core_type<tc>} {
    %c0 = arith.constant 0 : index
    %c0_0 = arith.constant 0 : index
    %0 = vector.load %arg2[%c0, %c0_0] : memref<16x256xf32, #tpu.memory_space<vmem>>, vector<16x256xf32>
    %c2304 = arith.constant 2304 : index
    %c0_1 = arith.constant 0 : index
    %1 = vector.load %arg3[%c2304, %c0_1] : memref<2320x256xf32, #tpu.memory_space<vmem>>, vector<16x256xf32>
    %c0_2 = arith.constant 0 : index
    %c0_3 = arith.constant 0 : index
    %2 = vector.load %arg3[%c0_2, %c0_3] : memref<2320x256xf32, #tpu.memory_space<vmem>>, vector<256x256xf32>
    %c48 = arith.constant 48 : index
    %c0_4 = arith.constant 0 : index
    %3 = vector.load %arg5[%c48, %c0_4] : memref<736x16xf32, #tpu.memory_space<vmem>>, vector<16x16xf32>
    %cst = arith.constant dense<0.000000e+00> : vector<16x256xf32>
    %4 = tpu.matmul %0, %2, %cst {dimension_numbers = #tpu.dot_dimension_numbers<[1], [0], [0], [1], [0, 0, 1, 1], [], []>} : vector<16x256xf32>, vector<256x256xf32>, vector<16x256xf32> -> vector<16x256xf32>
    %cst_5 = arith.constant dense<0.000000e+00> : vector<16x256xf32>
    %5 = tpu.matmul %3, %4, %cst_5 {dimension_numbers = #tpu.dot_dimension_numbers<[1], [0], [0], [1], [0, 0, 1, 1], [], []>} : vector<16x16xf32>, vector<16x256xf32>, vector<16x256xf32> -> vector<16x256xf32>
    %6 = arith.addf %1, %5 : vector<16x256xf32>
    %c256 = arith.constant 256 : index
    %c0_6 = arith.constant 0 : index
    %7 = vector.load %arg3[%c256, %c0_6] : memref<2320x256xf32, #tpu.memory_space<vmem>>, vector<256x256xf32>
    %c64 = arith.constant 64 : index
    %c0_7 = arith.constant 0 : index
    %8 = vector.load %arg5[%c64, %c0_7] : memref<736x16xf32, #tpu.memory_space<vmem>>, vector<16x16xf32>
    %cst_8 = arith.constant dense<0.000000e+00> : vector<16x256xf32>
    %9 = tpu.matmul %0, %7, %cst_8 {dimension_numbers = #tpu.dot_dimension_numbers<[1], [0], [0], [1], [0, 0, 1, 1], [], []>} : vector<16x256xf32>, vector<256x256xf32>, vector<16x256xf32> -> vector<16x256xf32>
    %cst_9 = arith.constant dense<0.000000e+00> : vector<16x256xf32>
    %10 = tpu.matmul %8, %9, %cst_9 {dimension_numbers = #tpu.dot_dimension_numbers<[1], [0], [0], [1], [0, 0, 1, 1], [], []>} : vector<16x16xf32>, vector<16x256xf32>, vector<16x256xf32> -> vector<16x256xf32>
    %11 = arith.addf %6, %10 : vector<16x256xf32>
    %c512 = arith.constant 512 : index
    %c0_10 = arith.constant 0 : index
    %12 = vector.load %arg3[%c512, %c0_10] : memref<2320x256xf32, #tpu.memory_space<vmem>>, vector<256x256xf32>
    %c80 = arith.constant 80 : index
    %c0_11 = arith.constant 0 : index
    %13 = vector.load %arg5[%c80, %c0_11] : memref<736x16xf32, #tpu.memory_space<vmem>>, vector<16x16xf32>
    %cst_12 = arith.constant dense<0.000000e+00> : vector<16x256xf32>
    %14 = tpu.matmul %0, %12, %cst_12 {dimension_numbers = #tpu.dot_dimension_numbers<[1], [0], [0], [1], [0, 0, 1, 1], [], []>} : vector<16x256xf32>, vector<256x256xf32>, vector<16x256xf32> -> vector<16x256xf32>
    %cst_13 = arith.constant dense<0.000000e+00> : vector<16x256xf32>
    %15 = tpu.matmul %13, %14, %cst_13 {dimension_numbers = #tpu.dot_dimension_numbers<[1], [0], [0], [1], [0, 0, 1, 1], [], []>} : vector<16x16xf32>, vector<16x256xf32>, vector<16x256xf32> -> vector<16x256xf32>
    %16 = arith.addf %11, %15 : vector<16x256xf32>
    %c768 = arith.constant 768 : index
    %c0_14 = arith.constant 0 : index
    %17 = vector.load %arg3[%c768, %c0_14] : memref<2320x256xf32, #tpu.memory_space<vmem>>, vector<256x256xf32>
    %c96 = arith.constant 96 : index
    %c0_15 = arith.constant 0 : index
    %18 = vector.load %arg5[%c96, %c0_15] : memref<736x16xf32, #tpu.memory_space<vmem>>, vector<16x16xf32>
    %cst_16 = arith.constant dense<0.000000e+00> : vector<16x256xf32>
    %19 = tpu.matmul %0, %17, %cst_16 {dimension_numbers = #tpu.dot_dimension_numbers<[1], [0], [0], [1], [0, 0, 1, 1], [], []>} : vector<16x256xf32>, vector<256x256xf32>, vector<16x256xf32> -> vector<16x256xf32>
    %cst_17 = arith.constant dense<0.000000e+00> : vector<16x256xf32>
    %20 = tpu.matmul %18, %19, %cst_17 {dimension_numbers = #tpu.dot_dimension_numbers<[1], [0], [0], [1], [0, 0, 1, 1], [], []>} : vector<16x16xf32>, vector<16x256xf32>, vector<16x256xf32> -> vector<16x256xf32>
    %21 = arith.addf %16, %20 : vector<16x256xf32>
    %c1024 = arith.constant 1024 : index
    %c0_18 = arith.constant 0 : index
    %22 = vector.load %arg3[%c1024, %c0_18] : memref<2320x256xf32, #tpu.memory_space<vmem>>, vector<256x256xf32>
    %c112 = arith.constant 112 : index
    %c0_19 = arith.constant 0 : index
    %23 = vector.load %arg5[%c112, %c0_19] : memref<736x16xf32, #tpu.memory_space<vmem>>, vector<16x16xf32>
    %cst_20 = arith.constant dense<0.000000e+00> : vector<16x256xf32>
    %24 = tpu.matmul %0, %22, %cst_20 {dimension_numbers = #tpu.dot_dimension_numbers<[1], [0], [0], [1], [0, 0, 1, 1], [], []>} : vector<16x256xf32>, vector<256x256xf32>, vector<16x256xf32> -> vector<16x256xf32>
    %cst_21 = arith.constant dense<0.000000e+00> : vector<16x256xf32>
    %25 = tpu.matmul %23, %24, %cst_21 {dimension_numbers = #tpu.dot_dimension_numbers<[1], [0], [0], [1], [0, 0, 1, 1], [], []>} : vector<16x16xf32>, vector<16x256xf32>, vector<16x256xf32> -> vector<16x256xf32>
    %26 = arith.addf %21, %25 : vector<16x256xf32>
    %c1280 = arith.constant 1280 : index
    %c0_22 = arith.constant 0 : index
    %27 = vector.load %arg3[%c1280, %c0_22] : memref<2320x256xf32, #tpu.memory_space<vmem>>, vector<256x256xf32>
    %c128 = arith.constant 128 : index
    %c0_23 = arith.constant 0 : index
    %28 = vector.load %arg5[%c128, %c0_23] : memref<736x16xf32, #tpu.memory_space<vmem>>, vector<16x16xf32>
    %cst_24 = arith.constant dense<0.000000e+00> : vector<16x256xf32>
    %29 = tpu.matmul %0, %27, %cst_24 {dimension_numbers = #tpu.dot_dimension_numbers<[1], [0], [0], [1], [0, 0, 1, 1], [], []>} : vector<16x256xf32>, vector<256x256xf32>, vector<16x256xf32> -> vector<16x256xf32>
    %cst_25 = arith.constant dense<0.000000e+00> : vector<16x256xf32>
    %30 = tpu.matmul %28, %29, %cst_25 {dimension_numbers = #tpu.dot_dimension_numbers<[1], [0], [0], [1], [0, 0, 1, 1], [], []>} : vector<16x16xf32>, vector<16x256xf32>, vector<16x256xf32> -> vector<16x256xf32>
    %31 = arith.addf %26, %30 : vector<16x256xf32>
    %c1536 = arith.constant 1536 : index
    %c0_26 = arith.constant 0 : index
    %32 = vector.load %arg3[%c1536, %c0_26] : memref<2320x256xf32, #tpu.memory_space<vmem>>, vector<256x256xf32>
    %c144 = arith.constant 144 : index
    %c0_27 = arith.constant 0 : index
    %33 = vector.load %arg5[%c144, %c0_27] : memref<736x16xf32, #tpu.memory_space<vmem>>, vector<16x16xf32>
    %cst_28 = arith.constant dense<0.000000e+00> : vector<16x256xf32>
    %34 = tpu.matmul %0, %32, %cst_28 {dimension_numbers = #tpu.dot_dimension_numbers<[1], [0], [0], [1], [0, 0, 1, 1], [], []>} : vector<16x256xf32>, vector<256x256xf32>, vector<16x256xf32> -> vector<16x256xf32>
    %cst_29 = arith.constant dense<0.000000e+00> : vector<16x256xf32>
    %35 = tpu.matmul %33, %34, %cst_29 {dimension_numbers = #tpu.dot_dimension_numbers<[1], [0], [0], [1], [0, 0, 1, 1], [], []>} : vector<16x16xf32>, vector<16x256xf32>, vector<16x256xf32> -> vector<16x256xf32>
    %36 = arith.addf %31, %35 : vector<16x256xf32>
    %c1792 = arith.constant 1792 : index
    %c0_30 = arith.constant 0 : index
    %37 = vector.load %arg3[%c1792, %c0_30] : memref<2320x256xf32, #tpu.memory_space<vmem>>, vector<256x256xf32>
    %c160 = arith.constant 160 : index
    %c0_31 = arith.constant 0 : index
    %38 = vector.load %arg5[%c160, %c0_31] : memref<736x16xf32, #tpu.memory_space<vmem>>, vector<16x16xf32>
    %cst_32 = arith.constant dense<0.000000e+00> : vector<16x256xf32>
    %39 = tpu.matmul %0, %37, %cst_32 {dimension_numbers = #tpu.dot_dimension_numbers<[1], [0], [0], [1], [0, 0, 1, 1], [], []>} : vector<16x256xf32>, vector<256x256xf32>, vector<16x256xf32> -> vector<16x256xf32>
    %cst_33 = arith.constant dense<0.000000e+00> : vector<16x256xf32>
    %40 = tpu.matmul %38, %39, %cst_33 {dimension_numbers = #tpu.dot_dimension_numbers<[1], [0], [0], [1], [0, 0, 1, 1], [], []>} : vector<16x16xf32>, vector<16x256xf32>, vector<16x256xf32> -> vector<16x256xf32>
    %41 = arith.addf %36, %40 : vector<16x256xf32>
    %c2048 = arith.constant 2048 : index
    %c0_34 = arith.constant 0 : index
    %42 = vector.load %arg3[%c2048, %c0_34] : memref<2320x256xf32, #tpu.memory_space<vmem>>, vector<256x256xf32>
    %c176 = arith.constant 176 : index
    %c0_35 = arith.constant 0 : index
    %43 = vector.load %arg5[%c176, %c0_35] : memref<736x16xf32, #tpu.memory_space<vmem>>, vector<16x16xf32>
    %cst_36 = arith.constant dense<0.000000e+00> : vector<16x256xf32>
    %44 = tpu.matmul %0, %42, %cst_36 {dimension_numbers = #tpu.dot_dimension_numbers<[1], [0], [0], [1], [0, 0, 1, 1], [], []>} : vector<16x256xf32>, vector<256x256xf32>, vector<16x256xf32> -> vector<16x256xf32>
    %cst_37 = arith.constant dense<0.000000e+00> : vector<16x256xf32>
    %45 = tpu.matmul %43, %44, %cst_37 {dimension_numbers = #tpu.dot_dimension_numbers<[1], [0], [0], [1], [0, 0, 1, 1], [], []>} : vector<16x16xf32>, vector<16x256xf32>, vector<16x256xf32> -> vector<16x256xf32>
    %46 = arith.addf %41, %45 : vector<16x256xf32>
    %cst_38 = arith.constant 0.000000e+00 : f32
    %47 = vector.broadcast %cst_38 : f32 to vector<16x256xf32>
    %48 = arith.maximumf %46, %47 : vector<16x256xf32>
    %c2304_39 = arith.constant 2304 : index
    %c0_40 = arith.constant 0 : index
    %49 = vector.load %arg4[%c2304_39, %c0_40] : memref<2392x128xf32, #tpu.memory_space<vmem>>, vector<16x128xf32>
    %c0_41 = arith.constant 0 : index
    %c0_42 = arith.constant 0 : index
    %50 = vector.load %arg4[%c0_41, %c0_42] : memref<2392x128xf32, #tpu.memory_space<vmem>>, vector<256x128xf32>
    %c192 = arith.constant 192 : index
    %c0_43 = arith.constant 0 : index
    %51 = vector.load %arg5[%c192, %c0_43] : memref<736x16xf32, #tpu.memory_space<vmem>>, vector<16x16xf32>
    %cst_44 = arith.constant dense<0.000000e+00> : vector<16x128xf32>
    %52 = tpu.matmul %48, %50, %cst_44 {dimension_numbers = #tpu.dot_dimension_numbers<[1], [0], [0], [1], [0, 0, 1, 1], [], []>} : vector<16x256xf32>, vector<256x128xf32>, vector<16x128xf32> -> vector<16x128xf32>
    %cst_45 = arith.constant dense<0.000000e+00> : vector<16x128xf32>
    %53 = tpu.matmul %51, %52, %cst_45 {dimension_numbers = #tpu.dot_dimension_numbers<[1], [0], [0], [1], [0, 0, 1, 1], [], []>} : vector<16x16xf32>, vector<16x128xf32>, vector<16x128xf32> -> vector<16x128xf32>
    %54 = arith.addf %49, %53 : vector<16x128xf32>
    %c256_46 = arith.constant 256 : index
    %c0_47 = arith.constant 0 : index
    %55 = vector.load %arg4[%c256_46, %c0_47] : memref<2392x128xf32, #tpu.memory_space<vmem>>, vector<256x128xf32>
    %c208 = arith.constant 208 : index
    %c0_48 = arith.constant 0 : index
    %56 = vector.load %arg5[%c208, %c0_48] : memref<736x16xf32, #tpu.memory_space<vmem>>, vector<16x16xf32>
    %cst_49 = arith.constant dense<0.000000e+00> : vector<16x128xf32>
    %57 = tpu.matmul %48, %55, %cst_49 {dimension_numbers = #tpu.dot_dimension_numbers<[1], [0], [0], [1], [0, 0, 1, 1], [], []>} : vector<16x256xf32>, vector<256x128xf32>, vector<16x128xf32> -> vector<16x128xf32>
    %cst_50 = arith.constant dense<0.000000e+00> : vector<16x128xf32>
    %58 = tpu.matmul %56, %57, %cst_50 {dimension_numbers = #tpu.dot_dimension_numbers<[1], [0], [0], [1], [0, 0, 1, 1], [], []>} : vector<16x16xf32>, vector<16x128xf32>, vector<16x128xf32> -> vector<16x128xf32>
    %59 = arith.addf %54, %58 : vector<16x128xf32>
    %c512_51 = arith.constant 512 : index
    %c0_52 = arith.constant 0 : index
    %60 = vector.load %arg4[%c512_51, %c0_52] : memref<2392x128xf32, #tpu.memory_space<vmem>>, vector<256x128xf32>
    %c224 = arith.constant 224 : index
    %c0_53 = arith.constant 0 : index
    %61 = vector.load %arg5[%c224, %c0_53] : memref<736x16xf32, #tpu.memory_space<vmem>>, vector<16x16xf32>
    %cst_54 = arith.constant dense<0.000000e+00> : vector<16x128xf32>
    %62 = tpu.matmul %48, %60, %cst_54 {dimension_numbers = #tpu.dot_dimension_numbers<[1], [0], [0], [1], [0, 0, 1, 1], [], []>} : vector<16x256xf32>, vector<256x128xf32>, vector<16x128xf32> -> vector<16x128xf32>
    %cst_55 = arith.constant dense<0.000000e+00> : vector<16x128xf32>
    %63 = tpu.matmul %61, %62, %cst_55 {dimension_numbers = #tpu.dot_dimension_numbers<[1], [0], [0], [1], [0, 0, 1, 1], [], []>} : vector<16x16xf32>, vector<16x128xf32>, vector<16x128xf32> -> vector<16x128xf32>
    %64 = arith.addf %59, %63 : vector<16x128xf32>
    %c768_56 = arith.constant 768 : index
    %c0_57 = arith.constant 0 : index
    %65 = vector.load %arg4[%c768_56, %c0_57] : memref<2392x128xf32, #tpu.memory_space<vmem>>, vector<256x128xf32>
    %c240 = arith.constant 240 : index
    %c0_58 = arith.constant 0 : index
    %66 = vector.load %arg5[%c240, %c0_58] : memref<736x16xf32, #tpu.memory_space<vmem>>, vector<16x16xf32>
    %cst_59 = arith.constant dense<0.000000e+00> : vector<16x128xf32>
    %67 = tpu.matmul %48, %65, %cst_59 {dimension_numbers = #tpu.dot_dimension_numbers<[1], [0], [0], [1], [0, 0, 1, 1], [], []>} : vector<16x256xf32>, vector<256x128xf32>, vector<16x128xf32> -> vector<16x128xf32>
    %cst_60 = arith.constant dense<0.000000e+00> : vector<16x128xf32>
    %68 = tpu.matmul %66, %67, %cst_60 {dimension_numbers = #tpu.dot_dimension_numbers<[1], [0], [0], [1], [0, 0, 1, 1], [], []>} : vector<16x16xf32>, vector<16x128xf32>, vector<16x128xf32> -> vector<16x128xf32>
    %69 = arith.addf %64, %68 : vector<16x128xf32>
    %c1024_61 = arith.constant 1024 : index
    %c0_62 = arith.constant 0 : index
    %70 = vector.load %arg4[%c1024_61, %c0_62] : memref<2392x128xf32, #tpu.memory_space<vmem>>, vector<256x128xf32>
    %c256_63 = arith.constant 256 : index
    %c0_64 = arith.constant 0 : index
    %71 = vector.load %arg5[%c256_63, %c0_64] : memref<736x16xf32, #tpu.memory_space<vmem>>, vector<16x16xf32>
    %cst_65 = arith.constant dense<0.000000e+00> : vector<16x128xf32>
    %72 = tpu.matmul %48, %70, %cst_65 {dimension_numbers = #tpu.dot_dimension_numbers<[1], [0], [0], [1], [0, 0, 1, 1], [], []>} : vector<16x256xf32>, vector<256x128xf32>, vector<16x128xf32> -> vector<16x128xf32>
    %cst_66 = arith.constant dense<0.000000e+00> : vector<16x128xf32>
    %73 = tpu.matmul %71, %72, %cst_66 {dimension_numbers = #tpu.dot_dimension_numbers<[1], [0], [0], [1], [0, 0, 1, 1], [], []>} : vector<16x16xf32>, vector<16x128xf32>, vector<16x128xf32> -> vector<16x128xf32>
    %74 = arith.addf %69, %73 : vector<16x128xf32>
    %c1280_67 = arith.constant 1280 : index
    %c0_68 = arith.constant 0 : index
    %75 = vector.load %arg4[%c1280_67, %c0_68] : memref<2392x128xf32, #tpu.memory_space<vmem>>, vector<256x128xf32>
    %c272 = arith.constant 272 : index
    %c0_69 = arith.constant 0 : index
    %76 = vector.load %arg5[%c272, %c0_69] : memref<736x16xf32, #tpu.memory_space<vmem>>, vector<16x16xf32>
    %cst_70 = arith.constant dense<0.000000e+00> : vector<16x128xf32>
    %77 = tpu.matmul %48, %75, %cst_70 {dimension_numbers = #tpu.dot_dimension_numbers<[1], [0], [0], [1], [0, 0, 1, 1], [], []>} : vector<16x256xf32>, vector<256x128xf32>, vector<16x128xf32> -> vector<16x128xf32>
    %cst_71 = arith.constant dense<0.000000e+00> : vector<16x128xf32>
    %78 = tpu.matmul %76, %77, %cst_71 {dimension_numbers = #tpu.dot_dimension_numbers<[1], [0], [0], [1], [0, 0, 1, 1], [], []>} : vector<16x16xf32>, vector<16x128xf32>, vector<16x128xf32> -> vector<16x128xf32>
    %79 = arith.addf %74, %78 : vector<16x128xf32>
    %c1536_72 = arith.constant 1536 : index
    %c0_73 = arith.constant 0 : index
    %80 = vector.load %arg4[%c1536_72, %c0_73] : memref<2392x128xf32, #tpu.memory_space<vmem>>, vector<256x128xf32>
    %c288 = arith.constant 288 : index
    %c0_74 = arith.constant 0 : index
    %81 = vector.load %arg5[%c288, %c0_74] : memref<736x16xf32, #tpu.memory_space<vmem>>, vector<16x16xf32>
    %cst_75 = arith.constant dense<0.000000e+00> : vector<16x128xf32>
    %82 = tpu.matmul %48, %80, %cst_75 {dimension_numbers = #tpu.dot_dimension_numbers<[1], [0], [0], [1], [0, 0, 1, 1], [], []>} : vector<16x256xf32>, vector<256x128xf32>, vector<16x128xf32> -> vector<16x128xf32>
    %cst_76 = arith.constant dense<0.000000e+00> : vector<16x128xf32>
    %83 = tpu.matmul %81, %82, %cst_76 {dimension_numbers = #tpu.dot_dimension_numbers<[1], [0], [0], [1], [0, 0, 1, 1], [], []>} : vector<16x16xf32>, vector<16x128xf32>, vector<16x128xf32> -> vector<16x128xf32>
    %84 = arith.addf %79, %83 : vector<16x128xf32>
    %c1792_77 = arith.constant 1792 : index
    %c0_78 = arith.constant 0 : index
    %85 = vector.load %arg4[%c1792_77, %c0_78] : memref<2392x128xf32, #tpu.memory_space<vmem>>, vector<256x128xf32>
    %c304 = arith.constant 304 : index
    %c0_79 = arith.constant 0 : index
    %86 = vector.load %arg5[%c304, %c0_79] : memref<736x16xf32, #tpu.memory_space<vmem>>, vector<16x16xf32>
    %cst_80 = arith.constant dense<0.000000e+00> : vector<16x128xf32>
    %87 = tpu.matmul %48, %85, %cst_80 {dimension_numbers = #tpu.dot_dimension_numbers<[1], [0], [0], [1], [0, 0, 1, 1], [], []>} : vector<16x256xf32>, vector<256x128xf32>, vector<16x128xf32> -> vector<16x128xf32>
    %cst_81 = arith.constant dense<0.000000e+00> : vector<16x128xf32>
    %88 = tpu.matmul %86, %87, %cst_81 {dimension_numbers = #tpu.dot_dimension_numbers<[1], [0], [0], [1], [0, 0, 1, 1], [], []>} : vector<16x16xf32>, vector<16x128xf32>, vector<16x128xf32> -> vector<16x128xf32>
    %89 = arith.addf %84, %88 : vector<16x128xf32>
    %c2048_82 = arith.constant 2048 : index
    %c0_83 = arith.constant 0 : index
    %90 = vector.load %arg4[%c2048_82, %c0_83] : memref<2392x128xf32, #tpu.memory_space<vmem>>, vector<256x128xf32>
    %c320 = arith.constant 320 : index
    %c0_84 = arith.constant 0 : index
    %91 = vector.load %arg5[%c320, %c0_84] : memref<736x16xf32, #tpu.memory_space<vmem>>, vector<16x16xf32>
    %cst_85 = arith.constant dense<0.000000e+00> : vector<16x128xf32>
    %92 = tpu.matmul %48, %90, %cst_85 {dimension_numbers = #tpu.dot_dimension_numbers<[1], [0], [0], [1], [0, 0, 1, 1], [], []>} : vector<16x256xf32>, vector<256x128xf32>, vector<16x128xf32> -> vector<16x128xf32>
    %cst_86 = arith.constant dense<0.000000e+00> : vector<16x128xf32>
    %93 = tpu.matmul %91, %92, %cst_86 {dimension_numbers = #tpu.dot_dimension_numbers<[1], [0], [0], [1], [0, 0, 1, 1], [], []>} : vector<16x16xf32>, vector<16x128xf32>, vector<16x128xf32> -> vector<16x128xf32>
    %94 = arith.addf %89, %93 : vector<16x128xf32>
    %cst_87 = arith.constant 0.000000e+00 : f32
    %95 = vector.broadcast %cst_87 : f32 to vector<16x128xf32>
    %96 = arith.maximumf %94, %95 : vector<16x128xf32>
    %c0_88 = arith.constant 0 : index
    %c0_89 = arith.constant 0 : index
    %97 = vector.load %arg6[%c0_88, %c0_89] : memref<128x400xf32, #tpu.memory_space<vmem>>, vector<128x400xf32>
    %cst_90 = arith.constant dense<0.000000e+00> : vector<16x400xf32>
    %98 = tpu.matmul %96, %97, %cst_90 {dimension_numbers = #tpu.dot_dimension_numbers<[1], [0], [0], [1], [0, 0, 1, 1], [], []>} : vector<16x128xf32>, vector<128x400xf32>, vector<16x400xf32> -> vector<16x400xf32>
    %c0_91 = arith.constant 0 : index
    %c0_92 = arith.constant 0 : index
    %99 = vector.load %arg5[%c0_91, %c0_92] : memref<736x16xf32, #tpu.memory_space<vmem>>, vector<16x16xf32>
    %c336 = arith.constant 336 : index
    %c0_93 = arith.constant 0 : index
    %100 = vector.load %arg5[%c336, %c0_93] : memref<736x16xf32, #tpu.memory_space<vmem>>, vector<16x16xf32>
    %101 = vector.extract_strided_slice %98 {offsets = [0, 0], sizes = [16, 16], strides = [1, 1]} : vector<16x400xf32> to vector<16x16xf32>
    %cst_94 = arith.constant dense<0.000000e+00> : vector<16x16xf32>
    %102 = tpu.matmul %100, %101, %cst_94 {dimension_numbers = #tpu.dot_dimension_numbers<[1], [0], [0], [1], [0, 0, 1, 1], [], []>} : vector<16x16xf32>, vector<16x16xf32>, vector<16x16xf32> -> vector<16x16xf32>
    %103 = arith.addf %99, %102 : vector<16x16xf32>
    %c352 = arith.constant 352 : index
    %c0_95 = arith.constant 0 : index
    %104 = vector.load %arg5[%c352, %c0_95] : memref<736x16xf32, #tpu.memory_space<vmem>>, vector<16x16xf32>
    %105 = vector.extract_strided_slice %98 {offsets = [0, 16], sizes = [16, 16], strides = [1, 1]} : vector<16x400xf32> to vector<16x16xf32>
    %cst_96 = arith.constant dense<0.000000e+00> : vector<16x16xf32>
    %106 = tpu.matmul %104, %105, %cst_96 {dimension_numbers = #tpu.dot_dimension_numbers<[1], [0], [0], [1], [0, 0, 1, 1], [], []>} : vector<16x16xf32>, vector<16x16xf32>, vector<16x16xf32> -> vector<16x16xf32>
    %107 = arith.addf %103, %106 : vector<16x16xf32>
    %c368 = arith.constant 368 : index
    %c0_97 = arith.constant 0 : index
    %108 = vector.load %arg5[%c368, %c0_97] : memref<736x16xf32, #tpu.memory_space<vmem>>, vector<16x16xf32>
    %109 = vector.extract_strided_slice %98 {offsets = [0, 32], sizes = [16, 16], strides = [1, 1]} : vector<16x400xf32> to vector<16x16xf32>
    %cst_98 = arith.constant dense<0.000000e+00> : vector<16x16xf32>
    %110 = tpu.matmul %108, %109, %cst_98 {dimension_numbers = #tpu.dot_dimension_numbers<[1], [0], [0], [1], [0, 0, 1, 1], [], []>} : vector<16x16xf32>, vector<16x16xf32>, vector<16x16xf32> -> vector<16x16xf32>
    %111 = arith.addf %107, %110 : vector<16x16xf32>
    %c384 = arith.constant 384 : index
    %c0_99 = arith.constant 0 : index
    %112 = vector.load %arg5[%c384, %c0_99] : memref<736x16xf32, #tpu.memory_space<vmem>>, vector<16x16xf32>
    %113 = vector.extract_strided_slice %98 {offsets = [0, 48], sizes = [16, 16], strides = [1, 1]} : vector<16x400xf32> to vector<16x16xf32>
    %cst_100 = arith.constant dense<0.000000e+00> : vector<16x16xf32>
    %114 = tpu.matmul %112, %113, %cst_100 {dimension_numbers = #tpu.dot_dimension_numbers<[1], [0], [0], [1], [0, 0, 1, 1], [], []>} : vector<16x16xf32>, vector<16x16xf32>, vector<16x16xf32> -> vector<16x16xf32>
    %115 = arith.addf %111, %114 : vector<16x16xf32>
    %c400 = arith.constant 400 : index
    %c0_101 = arith.constant 0 : index
    %116 = vector.load %arg5[%c400, %c0_101] : memref<736x16xf32, #tpu.memory_space<vmem>>, vector<16x16xf32>
    %117 = vector.extract_strided_slice %98 {offsets = [0, 64], sizes = [16, 16], strides = [1, 1]} : vector<16x400xf32> to vector<16x16xf32>
    %cst_102 = arith.constant dense<0.000000e+00> : vector<16x16xf32>
    %118 = tpu.matmul %116, %117, %cst_102 {dimension_numbers = #tpu.dot_dimension_numbers<[1], [0], [0], [1], [0, 0, 1, 1], [], []>} : vector<16x16xf32>, vector<16x16xf32>, vector<16x16xf32> -> vector<16x16xf32>
    %119 = arith.addf %115, %118 : vector<16x16xf32>
    %c416 = arith.constant 416 : index
    %c0_103 = arith.constant 0 : index
    %120 = vector.load %arg5[%c416, %c0_103] : memref<736x16xf32, #tpu.memory_space<vmem>>, vector<16x16xf32>
    %121 = vector.extract_strided_slice %98 {offsets = [0, 80], sizes = [16, 16], strides = [1, 1]} : vector<16x400xf32> to vector<16x16xf32>
    %cst_104 = arith.constant dense<0.000000e+00> : vector<16x16xf32>
    %122 = tpu.matmul %120, %121, %cst_104 {dimension_numbers = #tpu.dot_dimension_numbers<[1], [0], [0], [1], [0, 0, 1, 1], [], []>} : vector<16x16xf32>, vector<16x16xf32>, vector<16x16xf32> -> vector<16x16xf32>
    %123 = arith.addf %119, %122 : vector<16x16xf32>
    %c432 = arith.constant 432 : index
    %c0_105 = arith.constant 0 : index
    %124 = vector.load %arg5[%c432, %c0_105] : memref<736x16xf32, #tpu.memory_space<vmem>>, vector<16x16xf32>
    %125 = vector.extract_strided_slice %98 {offsets = [0, 96], sizes = [16, 16], strides = [1, 1]} : vector<16x400xf32> to vector<16x16xf32>
    %cst_106 = arith.constant dense<0.000000e+00> : vector<16x16xf32>
    %126 = tpu.matmul %124, %125, %cst_106 {dimension_numbers = #tpu.dot_dimension_numbers<[1], [0], [0], [1], [0, 0, 1, 1], [], []>} : vector<16x16xf32>, vector<16x16xf32>, vector<16x16xf32> -> vector<16x16xf32>
    %127 = arith.addf %123, %126 : vector<16x16xf32>
    %c448 = arith.constant 448 : index
    %c0_107 = arith.constant 0 : index
    %128 = vector.load %arg5[%c448, %c0_107] : memref<736x16xf32, #tpu.memory_space<vmem>>, vector<16x16xf32>
    %129 = vector.extract_strided_slice %98 {offsets = [0, 112], sizes = [16, 16], strides = [1, 1]} : vector<16x400xf32> to vector<16x16xf32>
    %cst_108 = arith.constant dense<0.000000e+00> : vector<16x16xf32>
    %130 = tpu.matmul %128, %129, %cst_108 {dimension_numbers = #tpu.dot_dimension_numbers<[1], [0], [0], [1], [0, 0, 1, 1], [], []>} : vector<16x16xf32>, vector<16x16xf32>, vector<16x16xf32> -> vector<16x16xf32>
    %131 = arith.addf %127, %130 : vector<16x16xf32>
    %c464 = arith.constant 464 : index
    %c0_109 = arith.constant 0 : index
    %132 = vector.load %arg5[%c464, %c0_109] : memref<736x16xf32, #tpu.memory_space<vmem>>, vector<16x16xf32>
    %133 = vector.extract_strided_slice %98 {offsets = [0, 128], sizes = [16, 16], strides = [1, 1]} : vector<16x400xf32> to vector<16x16xf32>
    %cst_110 = arith.constant dense<0.000000e+00> : vector<16x16xf32>
    %134 = tpu.matmul %132, %133, %cst_110 {dimension_numbers = #tpu.dot_dimension_numbers<[1], [0], [0], [1], [0, 0, 1, 1], [], []>} : vector<16x16xf32>, vector<16x16xf32>, vector<16x16xf32> -> vector<16x16xf32>
    %135 = arith.addf %131, %134 : vector<16x16xf32>
    %c480 = arith.constant 480 : index
    %c0_111 = arith.constant 0 : index
    %136 = vector.load %arg5[%c480, %c0_111] : memref<736x16xf32, #tpu.memory_space<vmem>>, vector<16x16xf32>
    %137 = vector.extract_strided_slice %98 {offsets = [0, 144], sizes = [16, 16], strides = [1, 1]} : vector<16x400xf32> to vector<16x16xf32>
    %cst_112 = arith.constant dense<0.000000e+00> : vector<16x16xf32>
    %138 = tpu.matmul %136, %137, %cst_112 {dimension_numbers = #tpu.dot_dimension_numbers<[1], [0], [0], [1], [0, 0, 1, 1], [], []>} : vector<16x16xf32>, vector<16x16xf32>, vector<16x16xf32> -> vector<16x16xf32>
    %139 = arith.addf %135, %138 : vector<16x16xf32>
    %c496 = arith.constant 496 : index
    %c0_113 = arith.constant 0 : index
    %140 = vector.load %arg5[%c496, %c0_113] : memref<736x16xf32, #tpu.memory_space<vmem>>, vector<16x16xf32>
    %141 = vector.extract_strided_slice %98 {offsets = [0, 160], sizes = [16, 16], strides = [1, 1]} : vector<16x400xf32> to vector<16x16xf32>
    %cst_114 = arith.constant dense<0.000000e+00> : vector<16x16xf32>
    %142 = tpu.matmul %140, %141, %cst_114 {dimension_numbers = #tpu.dot_dimension_numbers<[1], [0], [0], [1], [0, 0, 1, 1], [], []>} : vector<16x16xf32>, vector<16x16xf32>, vector<16x16xf32> -> vector<16x16xf32>
    %143 = arith.addf %139, %142 : vector<16x16xf32>
    %c512_115 = arith.constant 512 : index
    %c0_116 = arith.constant 0 : index
    %144 = vector.load %arg5[%c512_115, %c0_116] : memref<736x16xf32, #tpu.memory_space<vmem>>, vector<16x16xf32>
    %145 = vector.extract_strided_slice %98 {offsets = [0, 176], sizes = [16, 16], strides = [1, 1]} : vector<16x400xf32> to vector<16x16xf32>
    %cst_117 = arith.constant dense<0.000000e+00> : vector<16x16xf32>
    %146 = tpu.matmul %144, %145, %cst_117 {dimension_numbers = #tpu.dot_dimension_numbers<[1], [0], [0], [1], [0, 0, 1, 1], [], []>} : vector<16x16xf32>, vector<16x16xf32>, vector<16x16xf32> -> vector<16x16xf32>
    %147 = arith.addf %143, %146 : vector<16x16xf32>
    %c528 = arith.constant 528 : index
    %c0_118 = arith.constant 0 : index
    %148 = vector.load %arg5[%c528, %c0_118] : memref<736x16xf32, #tpu.memory_space<vmem>>, vector<16x16xf32>
    %149 = vector.extract_strided_slice %98 {offsets = [0, 192], sizes = [16, 16], strides = [1, 1]} : vector<16x400xf32> to vector<16x16xf32>
    %cst_119 = arith.constant dense<0.000000e+00> : vector<16x16xf32>
    %150 = tpu.matmul %148, %149, %cst_119 {dimension_numbers = #tpu.dot_dimension_numbers<[1], [0], [0], [1], [0, 0, 1, 1], [], []>} : vector<16x16xf32>, vector<16x16xf32>, vector<16x16xf32> -> vector<16x16xf32>
    %151 = arith.addf %147, %150 : vector<16x16xf32>
    %c544 = arith.constant 544 : index
    %c0_120 = arith.constant 0 : index
    %152 = vector.load %arg5[%c544, %c0_120] : memref<736x16xf32, #tpu.memory_space<vmem>>, vector<16x16xf32>
    %153 = vector.extract_strided_slice %98 {offsets = [0, 208], sizes = [16, 16], strides = [1, 1]} : vector<16x400xf32> to vector<16x16xf32>
    %cst_121 = arith.constant dense<0.000000e+00> : vector<16x16xf32>
    %154 = tpu.matmul %152, %153, %cst_121 {dimension_numbers = #tpu.dot_dimension_numbers<[1], [0], [0], [1], [0, 0, 1, 1], [], []>} : vector<16x16xf32>, vector<16x16xf32>, vector<16x16xf32> -> vector<16x16xf32>
    %155 = arith.addf %151, %154 : vector<16x16xf32>
    %c560 = arith.constant 560 : index
    %c0_122 = arith.constant 0 : index
    %156 = vector.load %arg5[%c560, %c0_122] : memref<736x16xf32, #tpu.memory_space<vmem>>, vector<16x16xf32>
    %157 = vector.extract_strided_slice %98 {offsets = [0, 224], sizes = [16, 16], strides = [1, 1]} : vector<16x400xf32> to vector<16x16xf32>
    %cst_123 = arith.constant dense<0.000000e+00> : vector<16x16xf32>
    %158 = tpu.matmul %156, %157, %cst_123 {dimension_numbers = #tpu.dot_dimension_numbers<[1], [0], [0], [1], [0, 0, 1, 1], [], []>} : vector<16x16xf32>, vector<16x16xf32>, vector<16x16xf32> -> vector<16x16xf32>
    %159 = arith.addf %155, %158 : vector<16x16xf32>
    %c576 = arith.constant 576 : index
    %c0_124 = arith.constant 0 : index
    %160 = vector.load %arg5[%c576, %c0_124] : memref<736x16xf32, #tpu.memory_space<vmem>>, vector<16x16xf32>
    %161 = vector.extract_strided_slice %98 {offsets = [0, 240], sizes = [16, 16], strides = [1, 1]} : vector<16x400xf32> to vector<16x16xf32>
    %cst_125 = arith.constant dense<0.000000e+00> : vector<16x16xf32>
    %162 = tpu.matmul %160, %161, %cst_125 {dimension_numbers = #tpu.dot_dimension_numbers<[1], [0], [0], [1], [0, 0, 1, 1], [], []>} : vector<16x16xf32>, vector<16x16xf32>, vector<16x16xf32> -> vector<16x16xf32>
    %163 = arith.addf %159, %162 : vector<16x16xf32>
    %c592 = arith.constant 592 : index
    %c0_126 = arith.constant 0 : index
    %164 = vector.load %arg5[%c592, %c0_126] : memref<736x16xf32, #tpu.memory_space<vmem>>, vector<16x16xf32>
    %165 = vector.extract_strided_slice %98 {offsets = [0, 256], sizes = [16, 16], strides = [1, 1]} : vector<16x400xf32> to vector<16x16xf32>
    %cst_127 = arith.constant dense<0.000000e+00> : vector<16x16xf32>
    %166 = tpu.matmul %164, %165, %cst_127 {dimension_numbers = #tpu.dot_dimension_numbers<[1], [0], [0], [1], [0, 0, 1, 1], [], []>} : vector<16x16xf32>, vector<16x16xf32>, vector<16x16xf32> -> vector<16x16xf32>
    %167 = arith.addf %163, %166 : vector<16x16xf32>
    %c608 = arith.constant 608 : index
    %c0_128 = arith.constant 0 : index
    %168 = vector.load %arg5[%c608, %c0_128] : memref<736x16xf32, #tpu.memory_space<vmem>>, vector<16x16xf32>
    %169 = vector.extract_strided_slice %98 {offsets = [0, 272], sizes = [16, 16], strides = [1, 1]} : vector<16x400xf32> to vector<16x16xf32>
    %cst_129 = arith.constant dense<0.000000e+00> : vector<16x16xf32>
    %170 = tpu.matmul %168, %169, %cst_129 {dimension_numbers = #tpu.dot_dimension_numbers<[1], [0], [0], [1], [0, 0, 1, 1], [], []>} : vector<16x16xf32>, vector<16x16xf32>, vector<16x16xf32> -> vector<16x16xf32>
    %171 = arith.addf %167, %170 : vector<16x16xf32>
    %c624 = arith.constant 624 : index
    %c0_130 = arith.constant 0 : index
    %172 = vector.load %arg5[%c624, %c0_130] : memref<736x16xf32, #tpu.memory_space<vmem>>, vector<16x16xf32>
    %173 = vector.extract_strided_slice %98 {offsets = [0, 288], sizes = [16, 16], strides = [1, 1]} : vector<16x400xf32> to vector<16x16xf32>
    %cst_131 = arith.constant dense<0.000000e+00> : vector<16x16xf32>
    %174 = tpu.matmul %172, %173, %cst_131 {dimension_numbers = #tpu.dot_dimension_numbers<[1], [0], [0], [1], [0, 0, 1, 1], [], []>} : vector<16x16xf32>, vector<16x16xf32>, vector<16x16xf32> -> vector<16x16xf32>
    %175 = arith.addf %171, %174 : vector<16x16xf32>
    %c640 = arith.constant 640 : index
    %c0_132 = arith.constant 0 : index
    %176 = vector.load %arg5[%c640, %c0_132] : memref<736x16xf32, #tpu.memory_space<vmem>>, vector<16x16xf32>
    %177 = vector.extract_strided_slice %98 {offsets = [0, 304], sizes = [16, 16], strides = [1, 1]} : vector<16x400xf32> to vector<16x16xf32>
    %cst_133 = arith.constant dense<0.000000e+00> : vector<16x16xf32>
    %178 = tpu.matmul %176, %177, %cst_133 {dimension_numbers = #tpu.dot_dimension_numbers<[1], [0], [0], [1], [0, 0, 1, 1], [], []>} : vector<16x16xf32>, vector<16x16xf32>, vector<16x16xf32> -> vector<16x16xf32>
    %179 = arith.addf %175, %178 : vector<16x16xf32>
    %c656 = arith.constant 656 : index
    %c0_134 = arith.constant 0 : index
    %180 = vector.load %arg5[%c656, %c0_134] : memref<736x16xf32, #tpu.memory_space<vmem>>, vector<16x16xf32>
    %181 = vector.extract_strided_slice %98 {offsets = [0, 320], sizes = [16, 16], strides = [1, 1]} : vector<16x400xf32> to vector<16x16xf32>
    %cst_135 = arith.constant dense<0.000000e+00> : vector<16x16xf32>
    %182 = tpu.matmul %180, %181, %cst_135 {dimension_numbers = #tpu.dot_dimension_numbers<[1], [0], [0], [1], [0, 0, 1, 1], [], []>} : vector<16x16xf32>, vector<16x16xf32>, vector<16x16xf32> -> vector<16x16xf32>
    %183 = arith.addf %179, %182 : vector<16x16xf32>
    %c672 = arith.constant 672 : index
    %c0_136 = arith.constant 0 : index
    %184 = vector.load %arg5[%c672, %c0_136] : memref<736x16xf32, #tpu.memory_space<vmem>>, vector<16x16xf32>
    %185 = vector.extract_strided_slice %98 {offsets = [0, 336], sizes = [16, 16], strides = [1, 1]} : vector<16x400xf32> to vector<16x16xf32>
    %cst_137 = arith.constant dense<0.000000e+00> : vector<16x16xf32>
    %186 = tpu.matmul %184, %185, %cst_137 {dimension_numbers = #tpu.dot_dimension_numbers<[1], [0], [0], [1], [0, 0, 1, 1], [], []>} : vector<16x16xf32>, vector<16x16xf32>, vector<16x16xf32> -> vector<16x16xf32>
    %187 = arith.addf %183, %186 : vector<16x16xf32>
    %c688 = arith.constant 688 : index
    %c0_138 = arith.constant 0 : index
    %188 = vector.load %arg5[%c688, %c0_138] : memref<736x16xf32, #tpu.memory_space<vmem>>, vector<16x16xf32>
    %189 = vector.extract_strided_slice %98 {offsets = [0, 352], sizes = [16, 16], strides = [1, 1]} : vector<16x400xf32> to vector<16x16xf32>
    %cst_139 = arith.constant dense<0.000000e+00> : vector<16x16xf32>
    %190 = tpu.matmul %188, %189, %cst_139 {dimension_numbers = #tpu.dot_dimension_numbers<[1], [0], [0], [1], [0, 0, 1, 1], [], []>} : vector<16x16xf32>, vector<16x16xf32>, vector<16x16xf32> -> vector<16x16xf32>
    %191 = arith.addf %187, %190 : vector<16x16xf32>
    %c704 = arith.constant 704 : index
    %c0_140 = arith.constant 0 : index
    %192 = vector.load %arg5[%c704, %c0_140] : memref<736x16xf32, #tpu.memory_space<vmem>>, vector<16x16xf32>
    %193 = vector.extract_strided_slice %98 {offsets = [0, 368], sizes = [16, 16], strides = [1, 1]} : vector<16x400xf32> to vector<16x16xf32>
    %cst_141 = arith.constant dense<0.000000e+00> : vector<16x16xf32>
    %194 = tpu.matmul %192, %193, %cst_141 {dimension_numbers = #tpu.dot_dimension_numbers<[1], [0], [0], [1], [0, 0, 1, 1], [], []>} : vector<16x16xf32>, vector<16x16xf32>, vector<16x16xf32> -> vector<16x16xf32>
    %195 = arith.addf %191, %194 : vector<16x16xf32>
    %c720 = arith.constant 720 : index
    %c0_142 = arith.constant 0 : index
    %196 = vector.load %arg5[%c720, %c0_142] : memref<736x16xf32, #tpu.memory_space<vmem>>, vector<16x16xf32>
    %197 = vector.extract_strided_slice %98 {offsets = [0, 384], sizes = [16, 16], strides = [1, 1]} : vector<16x400xf32> to vector<16x16xf32>
    %cst_143 = arith.constant dense<0.000000e+00> : vector<16x16xf32>
    %198 = tpu.matmul %196, %197, %cst_143 {dimension_numbers = #tpu.dot_dimension_numbers<[1], [0], [0], [1], [0, 0, 1, 1], [], []>} : vector<16x16xf32>, vector<16x16xf32>, vector<16x16xf32> -> vector<16x16xf32>
    %199 = arith.addf %195, %198 : vector<16x16xf32>
    %c2320 = arith.constant 2320 : index
    %c0_144 = arith.constant 0 : index
    %200 = vector.load %arg4[%c2320, %c0_144] : memref<2392x128xf32, #tpu.memory_space<vmem>>, vector<16x128xf32>
    %c2336 = arith.constant 2336 : index
    %c0_145 = arith.constant 0 : index
    %201 = vector.load %arg4[%c2336, %c0_145] : memref<2392x128xf32, #tpu.memory_space<vmem>>, vector<32x128xf32>
    %c2368 = arith.constant 2368 : index
    %c0_146 = arith.constant 0 : index
    %202 = vector.load %arg4[%c2368, %c0_146] : memref<2392x128xf32, #tpu.memory_space<vmem>>, vector<1x128xf32>
    %c0_147 = arith.constant 0 : index
    %c0_148 = arith.constant 0 : index
    %203 = vector.load %arg1[%c0_147, %c0_148] : memref<8x16xf32, #tpu.memory_space<vmem>>, vector<8x16xf32>
    %cst_149 = arith.constant dense<0.000000e+00> : vector<8x128xf32>
    %204 = tpu.matmul %203, %200, %cst_149 {dimension_numbers = #tpu.dot_dimension_numbers<[1], [0], [0], [1], [0, 0, 1, 1], [], []>} : vector<8x16xf32>, vector<16x128xf32>, vector<8x128xf32> -> vector<8x128xf32>
    %205 = vector.broadcast %202 : vector<1x128xf32> to vector<8x128xf32>
    %206 = arith.addf %204, %205 : vector<8x128xf32>
    %cst_150 = arith.constant 0.000000e+00 : f32
    %207 = vector.broadcast %cst_150 : f32 to vector<1x32xf32>
    %cst_151 = arith.constant 0.000000e+00 : f32
    %208 = vector.broadcast %cst_151 : f32 to vector<1x32xf32>
    %209 = vector.extract_strided_slice %206 {offsets = [0, 0], sizes = [1, 128], strides = [1, 1]} : vector<8x128xf32> to vector<1x128xf32>
    %cst_152 = arith.constant dense<0.000000e+00> : vector<1x128xf32>
    %210 = tpu.matmul %207, %201, %cst_152 {dimension_numbers = #tpu.dot_dimension_numbers<[1], [0], [0], [1], [0, 0, 1, 1], [], []>} : vector<1x32xf32>, vector<32x128xf32>, vector<1x128xf32> -> vector<1x128xf32>
    %211 = arith.addf %209, %210 : vector<1x128xf32>
    %212 = arith.negf %211 : vector<1x128xf32>
    %213 = math.exp %212 : vector<1x128xf32>
    %cst_153 = arith.constant 1.000000e+00 : f32
    %214 = vector.broadcast %cst_153 : f32 to vector<1x128xf32>
    %215 = arith.addf %214, %213 : vector<1x128xf32>
    %216 = arith.divf %214, %215 : vector<1x128xf32>
    %217 = math.tanh %211 : vector<1x128xf32>
    %218 = vector.extract_strided_slice %216 {offsets = [0, 0], sizes = [1, 32], strides = [1, 1]} : vector<1x128xf32> to vector<1x32xf32>
    %219 = vector.extract_strided_slice %216 {offsets = [0, 32], sizes = [1, 32], strides = [1, 1]} : vector<1x128xf32> to vector<1x32xf32>
    %220 = vector.extract_strided_slice %217 {offsets = [0, 64], sizes = [1, 32], strides = [1, 1]} : vector<1x128xf32> to vector<1x32xf32>
    %221 = vector.extract_strided_slice %216 {offsets = [0, 96], sizes = [1, 32], strides = [1, 1]} : vector<1x128xf32> to vector<1x32xf32>
    %222 = arith.mulf %219, %208 : vector<1x32xf32>
    %223 = arith.mulf %218, %220 : vector<1x32xf32>
    %224 = arith.addf %222, %223 : vector<1x32xf32>
    %225 = math.tanh %224 : vector<1x32xf32>
    %226 = arith.mulf %221, %225 : vector<1x32xf32>
    %227 = vector.extract_strided_slice %206 {offsets = [1, 0], sizes = [1, 128], strides = [1, 1]} : vector<8x128xf32> to vector<1x128xf32>
    %cst_154 = arith.constant dense<0.000000e+00> : vector<1x128xf32>
    %228 = tpu.matmul %226, %201, %cst_154 {dimension_numbers = #tpu.dot_dimension_numbers<[1], [0], [0], [1], [0, 0, 1, 1], [], []>} : vector<1x32xf32>, vector<32x128xf32>, vector<1x128xf32> -> vector<1x128xf32>
    %229 = arith.addf %227, %228 : vector<1x128xf32>
    %230 = arith.negf %229 : vector<1x128xf32>
    %231 = math.exp %230 : vector<1x128xf32>
    %cst_155 = arith.constant 1.000000e+00 : f32
    %232 = vector.broadcast %cst_155 : f32 to vector<1x128xf32>
    %233 = arith.addf %232, %231 : vector<1x128xf32>
    %234 = arith.divf %232, %233 : vector<1x128xf32>
    %235 = math.tanh %229 : vector<1x128xf32>
    %236 = vector.extract_strided_slice %234 {offsets = [0, 0], sizes = [1, 32], strides = [1, 1]} : vector<1x128xf32> to vector<1x32xf32>
    %237 = vector.extract_strided_slice %234 {offsets = [0, 32], sizes = [1, 32], strides = [1, 1]} : vector<1x128xf32> to vector<1x32xf32>
    %238 = vector.extract_strided_slice %235 {offsets = [0, 64], sizes = [1, 32], strides = [1, 1]} : vector<1x128xf32> to vector<1x32xf32>
    %239 = vector.extract_strided_slice %234 {offsets = [0, 96], sizes = [1, 32], strides = [1, 1]} : vector<1x128xf32> to vector<1x32xf32>
    %240 = arith.mulf %237, %224 : vector<1x32xf32>
    %241 = arith.mulf %236, %238 : vector<1x32xf32>
    %242 = arith.addf %240, %241 : vector<1x32xf32>
    %243 = math.tanh %242 : vector<1x32xf32>
    %244 = arith.mulf %239, %243 : vector<1x32xf32>
    %245 = vector.extract_strided_slice %206 {offsets = [2, 0], sizes = [1, 128], strides = [1, 1]} : vector<8x128xf32> to vector<1x128xf32>
    %cst_156 = arith.constant dense<0.000000e+00> : vector<1x128xf32>
    %246 = tpu.matmul %244, %201, %cst_156 {dimension_numbers = #tpu.dot_dimension_numbers<[1], [0], [0], [1], [0, 0, 1, 1], [], []>} : vector<1x32xf32>, vector<32x128xf32>, vector<1x128xf32> -> vector<1x128xf32>
    %247 = arith.addf %245, %246 : vector<1x128xf32>
    %248 = arith.negf %247 : vector<1x128xf32>
    %249 = math.exp %248 : vector<1x128xf32>
    %cst_157 = arith.constant 1.000000e+00 : f32
    %250 = vector.broadcast %cst_157 : f32 to vector<1x128xf32>
    %251 = arith.addf %250, %249 : vector<1x128xf32>
    %252 = arith.divf %250, %251 : vector<1x128xf32>
    %253 = math.tanh %247 : vector<1x128xf32>
    %254 = vector.extract_strided_slice %252 {offsets = [0, 0], sizes = [1, 32], strides = [1, 1]} : vector<1x128xf32> to vector<1x32xf32>
    %255 = vector.extract_strided_slice %252 {offsets = [0, 32], sizes = [1, 32], strides = [1, 1]} : vector<1x128xf32> to vector<1x32xf32>
    %256 = vector.extract_strided_slice %253 {offsets = [0, 64], sizes = [1, 32], strides = [1, 1]} : vector<1x128xf32> to vector<1x32xf32>
    %257 = vector.extract_strided_slice %252 {offsets = [0, 96], sizes = [1, 32], strides = [1, 1]} : vector<1x128xf32> to vector<1x32xf32>
    %258 = arith.mulf %255, %242 : vector<1x32xf32>
    %259 = arith.mulf %254, %256 : vector<1x32xf32>
    %260 = arith.addf %258, %259 : vector<1x32xf32>
    %261 = math.tanh %260 : vector<1x32xf32>
    %262 = arith.mulf %257, %261 : vector<1x32xf32>
    %263 = vector.extract_strided_slice %206 {offsets = [3, 0], sizes = [1, 128], strides = [1, 1]} : vector<8x128xf32> to vector<1x128xf32>
    %cst_158 = arith.constant dense<0.000000e+00> : vector<1x128xf32>
    %264 = tpu.matmul %262, %201, %cst_158 {dimension_numbers = #tpu.dot_dimension_numbers<[1], [0], [0], [1], [0, 0, 1, 1], [], []>} : vector<1x32xf32>, vector<32x128xf32>, vector<1x128xf32> -> vector<1x128xf32>
    %265 = arith.addf %263, %264 : vector<1x128xf32>
    %266 = arith.negf %265 : vector<1x128xf32>
    %267 = math.exp %266 : vector<1x128xf32>
    %cst_159 = arith.constant 1.000000e+00 : f32
    %268 = vector.broadcast %cst_159 : f32 to vector<1x128xf32>
    %269 = arith.addf %268, %267 : vector<1x128xf32>
    %270 = arith.divf %268, %269 : vector<1x128xf32>
    %271 = math.tanh %265 : vector<1x128xf32>
    %272 = vector.extract_strided_slice %270 {offsets = [0, 0], sizes = [1, 32], strides = [1, 1]} : vector<1x128xf32> to vector<1x32xf32>
    %273 = vector.extract_strided_slice %270 {offsets = [0, 32], sizes = [1, 32], strides = [1, 1]} : vector<1x128xf32> to vector<1x32xf32>
    %274 = vector.extract_strided_slice %271 {offsets = [0, 64], sizes = [1, 32], strides = [1, 1]} : vector<1x128xf32> to vector<1x32xf32>
    %275 = vector.extract_strided_slice %270 {offsets = [0, 96], sizes = [1, 32], strides = [1, 1]} : vector<1x128xf32> to vector<1x32xf32>
    %276 = arith.mulf %273, %260 : vector<1x32xf32>
    %277 = arith.mulf %272, %274 : vector<1x32xf32>
    %278 = arith.addf %276, %277 : vector<1x32xf32>
    %279 = math.tanh %278 : vector<1x32xf32>
    %280 = arith.mulf %275, %279 : vector<1x32xf32>
    %281 = vector.extract_strided_slice %206 {offsets = [4, 0], sizes = [1, 128], strides = [1, 1]} : vector<8x128xf32> to vector<1x128xf32>
    %cst_160 = arith.constant dense<0.000000e+00> : vector<1x128xf32>
    %282 = tpu.matmul %280, %201, %cst_160 {dimension_numbers = #tpu.dot_dimension_numbers<[1], [0], [0], [1], [0, 0, 1, 1], [], []>} : vector<1x32xf32>, vector<32x128xf32>, vector<1x128xf32> -> vector<1x128xf32>
    %283 = arith.addf %281, %282 : vector<1x128xf32>
    %284 = arith.negf %283 : vector<1x128xf32>
    %285 = math.exp %284 : vector<1x128xf32>
    %cst_161 = arith.constant 1.000000e+00 : f32
    %286 = vector.broadcast %cst_161 : f32 to vector<1x128xf32>
    %287 = arith.addf %286, %285 : vector<1x128xf32>
    %288 = arith.divf %286, %287 : vector<1x128xf32>
    %289 = math.tanh %283 : vector<1x128xf32>
    %290 = vector.extract_strided_slice %288 {offsets = [0, 0], sizes = [1, 32], strides = [1, 1]} : vector<1x128xf32> to vector<1x32xf32>
    %291 = vector.extract_strided_slice %288 {offsets = [0, 32], sizes = [1, 32], strides = [1, 1]} : vector<1x128xf32> to vector<1x32xf32>
    %292 = vector.extract_strided_slice %289 {offsets = [0, 64], sizes = [1, 32], strides = [1, 1]} : vector<1x128xf32> to vector<1x32xf32>
    %293 = vector.extract_strided_slice %288 {offsets = [0, 96], sizes = [1, 32], strides = [1, 1]} : vector<1x128xf32> to vector<1x32xf32>
    %294 = arith.mulf %291, %278 : vector<1x32xf32>
    %295 = arith.mulf %290, %292 : vector<1x32xf32>
    %296 = arith.addf %294, %295 : vector<1x32xf32>
    %297 = math.tanh %296 : vector<1x32xf32>
    %298 = arith.mulf %293, %297 : vector<1x32xf32>
    %299 = vector.extract_strided_slice %206 {offsets = [5, 0], sizes = [1, 128], strides = [1, 1]} : vector<8x128xf32> to vector<1x128xf32>
    %cst_162 = arith.constant dense<0.000000e+00> : vector<1x128xf32>
    %300 = tpu.matmul %298, %201, %cst_162 {dimension_numbers = #tpu.dot_dimension_numbers<[1], [0], [0], [1], [0, 0, 1, 1], [], []>} : vector<1x32xf32>, vector<32x128xf32>, vector<1x128xf32> -> vector<1x128xf32>
    %301 = arith.addf %299, %300 : vector<1x128xf32>
    %302 = arith.negf %301 : vector<1x128xf32>
    %303 = math.exp %302 : vector<1x128xf32>
    %cst_163 = arith.constant 1.000000e+00 : f32
    %304 = vector.broadcast %cst_163 : f32 to vector<1x128xf32>
    %305 = arith.addf %304, %303 : vector<1x128xf32>
    %306 = arith.divf %304, %305 : vector<1x128xf32>
    %307 = math.tanh %301 : vector<1x128xf32>
    %308 = vector.extract_strided_slice %306 {offsets = [0, 0], sizes = [1, 32], strides = [1, 1]} : vector<1x128xf32> to vector<1x32xf32>
    %309 = vector.extract_strided_slice %306 {offsets = [0, 32], sizes = [1, 32], strides = [1, 1]} : vector<1x128xf32> to vector<1x32xf32>
    %310 = vector.extract_strided_slice %307 {offsets = [0, 64], sizes = [1, 32], strides = [1, 1]} : vector<1x128xf32> to vector<1x32xf32>
    %311 = vector.extract_strided_slice %306 {offsets = [0, 96], sizes = [1, 32], strides = [1, 1]} : vector<1x128xf32> to vector<1x32xf32>
    %312 = arith.mulf %309, %296 : vector<1x32xf32>
    %313 = arith.mulf %308, %310 : vector<1x32xf32>
    %314 = arith.addf %312, %313 : vector<1x32xf32>
    %315 = math.tanh %314 : vector<1x32xf32>
    %316 = arith.mulf %311, %315 : vector<1x32xf32>
    %317 = vector.extract_strided_slice %206 {offsets = [6, 0], sizes = [1, 128], strides = [1, 1]} : vector<8x128xf32> to vector<1x128xf32>
    %cst_164 = arith.constant dense<0.000000e+00> : vector<1x128xf32>
    %318 = tpu.matmul %316, %201, %cst_164 {dimension_numbers = #tpu.dot_dimension_numbers<[1], [0], [0], [1], [0, 0, 1, 1], [], []>} : vector<1x32xf32>, vector<32x128xf32>, vector<1x128xf32> -> vector<1x128xf32>
    %319 = arith.addf %317, %318 : vector<1x128xf32>
    %320 = arith.negf %319 : vector<1x128xf32>
    %321 = math.exp %320 : vector<1x128xf32>
    %cst_165 = arith.constant 1.000000e+00 : f32
    %322 = vector.broadcast %cst_165 : f32 to vector<1x128xf32>
    %323 = arith.addf %322, %321 : vector<1x128xf32>
    %324 = arith.divf %322, %323 : vector<1x128xf32>
    %325 = math.tanh %319 : vector<1x128xf32>
    %326 = vector.extract_strided_slice %324 {offsets = [0, 0], sizes = [1, 32], strides = [1, 1]} : vector<1x128xf32> to vector<1x32xf32>
    %327 = vector.extract_strided_slice %324 {offsets = [0, 32], sizes = [1, 32], strides = [1, 1]} : vector<1x128xf32> to vector<1x32xf32>
    %328 = vector.extract_strided_slice %325 {offsets = [0, 64], sizes = [1, 32], strides = [1, 1]} : vector<1x128xf32> to vector<1x32xf32>
    %329 = vector.extract_strided_slice %324 {offsets = [0, 96], sizes = [1, 32], strides = [1, 1]} : vector<1x128xf32> to vector<1x32xf32>
    %330 = arith.mulf %327, %314 : vector<1x32xf32>
    %331 = arith.mulf %326, %328 : vector<1x32xf32>
    %332 = arith.addf %330, %331 : vector<1x32xf32>
    %333 = math.tanh %332 : vector<1x32xf32>
    %334 = arith.mulf %329, %333 : vector<1x32xf32>
    %335 = vector.extract_strided_slice %206 {offsets = [7, 0], sizes = [1, 128], strides = [1, 1]} : vector<8x128xf32> to vector<1x128xf32>
    %cst_166 = arith.constant dense<0.000000e+00> : vector<1x128xf32>
    %336 = tpu.matmul %334, %201, %cst_166 {dimension_numbers = #tpu.dot_dimension_numbers<[1], [0], [0], [1], [0, 0, 1, 1], [], []>} : vector<1x32xf32>, vector<32x128xf32>, vector<1x128xf32> -> vector<1x128xf32>
    %337 = arith.addf %335, %336 : vector<1x128xf32>
    %338 = arith.negf %337 : vector<1x128xf32>
    %339 = math.exp %338 : vector<1x128xf32>
    %cst_167 = arith.constant 1.000000e+00 : f32
    %340 = vector.broadcast %cst_167 : f32 to vector<1x128xf32>
    %341 = arith.addf %340, %339 : vector<1x128xf32>
    %342 = arith.divf %340, %341 : vector<1x128xf32>
    %343 = math.tanh %337 : vector<1x128xf32>
    %344 = vector.extract_strided_slice %342 {offsets = [0, 0], sizes = [1, 32], strides = [1, 1]} : vector<1x128xf32> to vector<1x32xf32>
    %345 = vector.extract_strided_slice %342 {offsets = [0, 32], sizes = [1, 32], strides = [1, 1]} : vector<1x128xf32> to vector<1x32xf32>
    %346 = vector.extract_strided_slice %343 {offsets = [0, 64], sizes = [1, 32], strides = [1, 1]} : vector<1x128xf32> to vector<1x32xf32>
    %347 = vector.extract_strided_slice %342 {offsets = [0, 96], sizes = [1, 32], strides = [1, 1]} : vector<1x128xf32> to vector<1x32xf32>
    %348 = arith.mulf %345, %332 : vector<1x32xf32>
    %349 = arith.mulf %344, %346 : vector<1x32xf32>
    %350 = arith.addf %348, %349 : vector<1x32xf32>
    %351 = math.tanh %350 : vector<1x32xf32>
    %352 = arith.mulf %347, %351 : vector<1x32xf32>
    %c0_168 = arith.constant 0 : index
    %c0_169 = arith.constant 0 : index
    %353 = vector.load %arg0[%c0_168, %c0_169] : memref<1x32xf32, #tpu.memory_space<vmem>>, vector<1x32xf32>
    %354 = vector.shape_cast %353 : vector<1x32xf32> to vector<1x1x32xf32>
    %cst_170 = arith.constant dense<0.000000e+00> : vector<1xf32>
    %355 = vector.multi_reduction <add>, %354, %cst_170 [1, 2] : vector<1x1x32xf32> to vector<1xf32>
    %356 = vector.shape_cast %355 : vector<1xf32> to vector<1x1x1xf32>
    %357 = vector.extract %356[0, 0, 0] : f32 from vector<1x1x1xf32>
    %358 = vector.shape_cast %352 : vector<1x32xf32> to vector<1x1x32xf32>
    %cst_171 = arith.constant dense<0.000000e+00> : vector<1xf32>
    %359 = vector.multi_reduction <add>, %358, %cst_171 [1, 2] : vector<1x1x32xf32> to vector<1xf32>
    %360 = vector.shape_cast %359 : vector<1xf32> to vector<1x1x1xf32>
    %361 = vector.extract %360[0, 0, 0] : f32 from vector<1x1x1xf32>
    %362 = arith.addf %357, %361 : f32
    %363 = vector.shape_cast %199 : vector<16x16xf32> to vector<1x16x16xf32>
    %cst_172 = arith.constant dense<0.000000e+00> : vector<1xf32>
    %364 = vector.multi_reduction <add>, %363, %cst_172 [1, 2] : vector<1x16x16xf32> to vector<1xf32>
    %365 = vector.shape_cast %364 : vector<1xf32> to vector<1x1x1xf32>
    %366 = vector.extract %365[0, 0, 0] : f32 from vector<1x1x1xf32>
    %367 = arith.addf %362, %366 : f32
    %cst_173 = arith.constant 3.125000e-03 : f32
    %368 = arith.mulf %367, %cst_173 : f32
    %369 = vector.broadcast %368 : f32 to vector<1x32xf32>
    %370 = arith.subf %353, %369 : vector<1x32xf32>
    %371 = vector.broadcast %368 : f32 to vector<1x32xf32>
    %372 = arith.subf %352, %371 : vector<1x32xf32>
    %373 = vector.broadcast %368 : f32 to vector<16x16xf32>
    %374 = arith.subf %199, %373 : vector<16x16xf32>
    %375 = arith.mulf %370, %370 : vector<1x32xf32>
    %376 = vector.shape_cast %375 : vector<1x32xf32> to vector<1x1x32xf32>
    %cst_174 = arith.constant dense<0.000000e+00> : vector<1xf32>
    %377 = vector.multi_reduction <add>, %376, %cst_174 [1, 2] : vector<1x1x32xf32> to vector<1xf32>
    %378 = vector.shape_cast %377 : vector<1xf32> to vector<1x1x1xf32>
    %379 = vector.extract %378[0, 0, 0] : f32 from vector<1x1x1xf32>
    %380 = arith.mulf %372, %372 : vector<1x32xf32>
    %381 = vector.shape_cast %380 : vector<1x32xf32> to vector<1x1x32xf32>
    %cst_175 = arith.constant dense<0.000000e+00> : vector<1xf32>
    %382 = vector.multi_reduction <add>, %381, %cst_175 [1, 2] : vector<1x1x32xf32> to vector<1xf32>
    %383 = vector.shape_cast %382 : vector<1xf32> to vector<1x1x1xf32>
    %384 = vector.extract %383[0, 0, 0] : f32 from vector<1x1x1xf32>
    %385 = arith.addf %379, %384 : f32
    %386 = arith.mulf %374, %374 : vector<16x16xf32>
    %387 = vector.shape_cast %386 : vector<16x16xf32> to vector<1x16x16xf32>
    %cst_176 = arith.constant dense<0.000000e+00> : vector<1xf32>
    %388 = vector.multi_reduction <add>, %387, %cst_176 [1, 2] : vector<1x16x16xf32> to vector<1xf32>
    %389 = vector.shape_cast %388 : vector<1xf32> to vector<1x1x1xf32>
    %390 = vector.extract %389[0, 0, 0] : f32 from vector<1x1x1xf32>
    %391 = arith.addf %385, %390 : f32
    %cst_177 = arith.constant 3.125000e-03 : f32
    %392 = arith.mulf %391, %cst_177 : f32
    %cst_178 = arith.constant 9.99999974E-6 : f32
    %393 = arith.addf %392, %cst_178 : f32
    %394 = math.rsqrt %393 : f32
    %395 = vector.broadcast %394 : f32 to vector<1x32xf32>
    %396 = arith.mulf %370, %395 : vector<1x32xf32>
    %c2369 = arith.constant 2369 : index
    %c0_179 = arith.constant 0 : index
    %397 = vector.load %arg4[%c2369, %c0_179] : memref<2392x128xf32, #tpu.memory_space<vmem>>, vector<1x128xf32>
    %398 = vector.extract_strided_slice %397 {offsets = [0, 0], sizes = [1, 32], strides = [1, 1]} : vector<1x128xf32> to vector<1x32xf32>
    %399 = arith.mulf %396, %398 : vector<1x32xf32>
    %c2370 = arith.constant 2370 : index
    %c0_180 = arith.constant 0 : index
    %400 = vector.load %arg4[%c2370, %c0_180] : memref<2392x128xf32, #tpu.memory_space<vmem>>, vector<1x128xf32>
    %401 = vector.extract_strided_slice %400 {offsets = [0, 0], sizes = [1, 32], strides = [1, 1]} : vector<1x128xf32> to vector<1x32xf32>
    %402 = arith.addf %399, %401 : vector<1x32xf32>
    %403 = vector.broadcast %394 : f32 to vector<1x32xf32>
    %404 = arith.mulf %372, %403 : vector<1x32xf32>
    %c2371 = arith.constant 2371 : index
    %c0_181 = arith.constant 0 : index
    %405 = vector.load %arg4[%c2371, %c0_181] : memref<2392x128xf32, #tpu.memory_space<vmem>>, vector<1x128xf32>
    %406 = vector.extract_strided_slice %405 {offsets = [0, 0], sizes = [1, 32], strides = [1, 1]} : vector<1x128xf32> to vector<1x32xf32>
    %407 = arith.mulf %404, %406 : vector<1x32xf32>
    %c2372 = arith.constant 2372 : index
    %c0_182 = arith.constant 0 : index
    %408 = vector.load %arg4[%c2372, %c0_182] : memref<2392x128xf32, #tpu.memory_space<vmem>>, vector<1x128xf32>
    %409 = vector.extract_strided_slice %408 {offsets = [0, 0], sizes = [1, 32], strides = [1, 1]} : vector<1x128xf32> to vector<1x32xf32>
    %410 = arith.addf %407, %409 : vector<1x32xf32>
    %c16 = arith.constant 16 : index
    %c0_183 = arith.constant 0 : index
    %411 = vector.load %arg5[%c16, %c0_183] : memref<736x16xf32, #tpu.memory_space<vmem>>, vector<16x16xf32>
    %c32 = arith.constant 32 : index
    %c0_184 = arith.constant 0 : index
    %412 = vector.load %arg5[%c32, %c0_184] : memref<736x16xf32, #tpu.memory_space<vmem>>, vector<16x16xf32>
    %413 = vector.broadcast %394 : f32 to vector<16x16xf32>
    %414 = arith.mulf %374, %413 : vector<16x16xf32>
    %415 = arith.mulf %414, %411 : vector<16x16xf32>
    %416 = arith.addf %415, %412 : vector<16x16xf32>
    %c0_185 = arith.constant 0 : index
    %c0_186 = arith.constant 0 : index
    %417 = vector.load %arg7[%c0_185, %c0_186] : memref<512x64xf32, #tpu.memory_space<vmem>>, vector<32x64xf32>
    %cst_187 = arith.constant dense<0.000000e+00> : vector<1x64xf32>
    %418 = tpu.matmul %402, %417, %cst_187 {dimension_numbers = #tpu.dot_dimension_numbers<[1], [0], [0], [1], [0, 0, 1, 1], [], []>} : vector<1x32xf32>, vector<32x64xf32>, vector<1x64xf32> -> vector<1x64xf32>
    %c32_188 = arith.constant 32 : index
    %c0_189 = arith.constant 0 : index
    %419 = vector.load %arg7[%c32_188, %c0_189] : memref<512x64xf32, #tpu.memory_space<vmem>>, vector<32x64xf32>
    %cst_190 = arith.constant dense<0.000000e+00> : vector<1x64xf32>
    %420 = tpu.matmul %410, %419, %cst_190 {dimension_numbers = #tpu.dot_dimension_numbers<[1], [0], [0], [1], [0, 0, 1, 1], [], []>} : vector<1x32xf32>, vector<32x64xf32>, vector<1x64xf32> -> vector<1x64xf32>
    %421 = arith.addf %418, %420 : vector<1x64xf32>
    %c64_191 = arith.constant 64 : index
    %c0_192 = arith.constant 0 : index
    %422 = vector.load %arg7[%c64_191, %c0_192] : memref<512x64xf32, #tpu.memory_space<vmem>>, vector<16x64xf32>
    %423 = vector.extract_strided_slice %416 {offsets = [0, 0], sizes = [1, 16], strides = [1, 1]} : vector<16x16xf32> to vector<1x16xf32>
    %cst_193 = arith.constant dense<0.000000e+00> : vector<1x64xf32>
    %424 = tpu.matmul %423, %422, %cst_193 {dimension_numbers = #tpu.dot_dimension_numbers<[1], [0], [0], [1], [0, 0, 1, 1], [], []>} : vector<1x16xf32>, vector<16x64xf32>, vector<1x64xf32> -> vector<1x64xf32>
    %425 = arith.addf %421, %424 : vector<1x64xf32>
    %c80_194 = arith.constant 80 : index
    %c0_195 = arith.constant 0 : index
    %426 = vector.load %arg7[%c80_194, %c0_195] : memref<512x64xf32, #tpu.memory_space<vmem>>, vector<16x64xf32>
    %427 = vector.extract_strided_slice %416 {offsets = [1, 0], sizes = [1, 16], strides = [1, 1]} : vector<16x16xf32> to vector<1x16xf32>
    %cst_196 = arith.constant dense<0.000000e+00> : vector<1x64xf32>
    %428 = tpu.matmul %427, %426, %cst_196 {dimension_numbers = #tpu.dot_dimension_numbers<[1], [0], [0], [1], [0, 0, 1, 1], [], []>} : vector<1x16xf32>, vector<16x64xf32>, vector<1x64xf32> -> vector<1x64xf32>
    %429 = arith.addf %425, %428 : vector<1x64xf32>
    %c96_197 = arith.constant 96 : index
    %c0_198 = arith.constant 0 : index
    %430 = vector.load %arg7[%c96_197, %c0_198] : memref<512x64xf32, #tpu.memory_space<vmem>>, vector<16x64xf32>
    %431 = vector.extract_strided_slice %416 {offsets = [2, 0], sizes = [1, 16], strides = [1, 1]} : vector<16x16xf32> to vector<1x16xf32>
    %cst_199 = arith.constant dense<0.000000e+00> : vector<1x64xf32>
    %432 = tpu.matmul %431, %430, %cst_199 {dimension_numbers = #tpu.dot_dimension_numbers<[1], [0], [0], [1], [0, 0, 1, 1], [], []>} : vector<1x16xf32>, vector<16x64xf32>, vector<1x64xf32> -> vector<1x64xf32>
    %433 = arith.addf %429, %432 : vector<1x64xf32>
    %c112_200 = arith.constant 112 : index
    %c0_201 = arith.constant 0 : index
    %434 = vector.load %arg7[%c112_200, %c0_201] : memref<512x64xf32, #tpu.memory_space<vmem>>, vector<16x64xf32>
    %435 = vector.extract_strided_slice %416 {offsets = [3, 0], sizes = [1, 16], strides = [1, 1]} : vector<16x16xf32> to vector<1x16xf32>
    %cst_202 = arith.constant dense<0.000000e+00> : vector<1x64xf32>
    %436 = tpu.matmul %435, %434, %cst_202 {dimension_numbers = #tpu.dot_dimension_numbers<[1], [0], [0], [1], [0, 0, 1, 1], [], []>} : vector<1x16xf32>, vector<16x64xf32>, vector<1x64xf32> -> vector<1x64xf32>
    %437 = arith.addf %433, %436 : vector<1x64xf32>
    %c128_203 = arith.constant 128 : index
    %c0_204 = arith.constant 0 : index
    %438 = vector.load %arg7[%c128_203, %c0_204] : memref<512x64xf32, #tpu.memory_space<vmem>>, vector<16x64xf32>
    %439 = vector.extract_strided_slice %416 {offsets = [4, 0], sizes = [1, 16], strides = [1, 1]} : vector<16x16xf32> to vector<1x16xf32>
    %cst_205 = arith.constant dense<0.000000e+00> : vector<1x64xf32>
    %440 = tpu.matmul %439, %438, %cst_205 {dimension_numbers = #tpu.dot_dimension_numbers<[1], [0], [0], [1], [0, 0, 1, 1], [], []>} : vector<1x16xf32>, vector<16x64xf32>, vector<1x64xf32> -> vector<1x64xf32>
    %441 = arith.addf %437, %440 : vector<1x64xf32>
    %c144_206 = arith.constant 144 : index
    %c0_207 = arith.constant 0 : index
    %442 = vector.load %arg7[%c144_206, %c0_207] : memref<512x64xf32, #tpu.memory_space<vmem>>, vector<16x64xf32>
    %443 = vector.extract_strided_slice %416 {offsets = [5, 0], sizes = [1, 16], strides = [1, 1]} : vector<16x16xf32> to vector<1x16xf32>
    %cst_208 = arith.constant dense<0.000000e+00> : vector<1x64xf32>
    %444 = tpu.matmul %443, %442, %cst_208 {dimension_numbers = #tpu.dot_dimension_numbers<[1], [0], [0], [1], [0, 0, 1, 1], [], []>} : vector<1x16xf32>, vector<16x64xf32>, vector<1x64xf32> -> vector<1x64xf32>
    %445 = arith.addf %441, %444 : vector<1x64xf32>
    %c160_209 = arith.constant 160 : index
    %c0_210 = arith.constant 0 : index
    %446 = vector.load %arg7[%c160_209, %c0_210] : memref<512x64xf32, #tpu.memory_space<vmem>>, vector<16x64xf32>
    %447 = vector.extract_strided_slice %416 {offsets = [6, 0], sizes = [1, 16], strides = [1, 1]} : vector<16x16xf32> to vector<1x16xf32>
    %cst_211 = arith.constant dense<0.000000e+00> : vector<1x64xf32>
    %448 = tpu.matmul %447, %446, %cst_211 {dimension_numbers = #tpu.dot_dimension_numbers<[1], [0], [0], [1], [0, 0, 1, 1], [], []>} : vector<1x16xf32>, vector<16x64xf32>, vector<1x64xf32> -> vector<1x64xf32>
    %449 = arith.addf %445, %448 : vector<1x64xf32>
    %c176_212 = arith.constant 176 : index
    %c0_213 = arith.constant 0 : index
    %450 = vector.load %arg7[%c176_212, %c0_213] : memref<512x64xf32, #tpu.memory_space<vmem>>, vector<16x64xf32>
    %451 = vector.extract_strided_slice %416 {offsets = [7, 0], sizes = [1, 16], strides = [1, 1]} : vector<16x16xf32> to vector<1x16xf32>
    %cst_214 = arith.constant dense<0.000000e+00> : vector<1x64xf32>
    %452 = tpu.matmul %451, %450, %cst_214 {dimension_numbers = #tpu.dot_dimension_numbers<[1], [0], [0], [1], [0, 0, 1, 1], [], []>} : vector<1x16xf32>, vector<16x64xf32>, vector<1x64xf32> -> vector<1x64xf32>
    %453 = arith.addf %449, %452 : vector<1x64xf32>
    %c192_215 = arith.constant 192 : index
    %c0_216 = arith.constant 0 : index
    %454 = vector.load %arg7[%c192_215, %c0_216] : memref<512x64xf32, #tpu.memory_space<vmem>>, vector<16x64xf32>
    %455 = vector.extract_strided_slice %416 {offsets = [8, 0], sizes = [1, 16], strides = [1, 1]} : vector<16x16xf32> to vector<1x16xf32>
    %cst_217 = arith.constant dense<0.000000e+00> : vector<1x64xf32>
    %456 = tpu.matmul %455, %454, %cst_217 {dimension_numbers = #tpu.dot_dimension_numbers<[1], [0], [0], [1], [0, 0, 1, 1], [], []>} : vector<1x16xf32>, vector<16x64xf32>, vector<1x64xf32> -> vector<1x64xf32>
    %457 = arith.addf %453, %456 : vector<1x64xf32>
    %c208_218 = arith.constant 208 : index
    %c0_219 = arith.constant 0 : index
    %458 = vector.load %arg7[%c208_218, %c0_219] : memref<512x64xf32, #tpu.memory_space<vmem>>, vector<16x64xf32>
    %459 = vector.extract_strided_slice %416 {offsets = [9, 0], sizes = [1, 16], strides = [1, 1]} : vector<16x16xf32> to vector<1x16xf32>
    %cst_220 = arith.constant dense<0.000000e+00> : vector<1x64xf32>
    %460 = tpu.matmul %459, %458, %cst_220 {dimension_numbers = #tpu.dot_dimension_numbers<[1], [0], [0], [1], [0, 0, 1, 1], [], []>} : vector<1x16xf32>, vector<16x64xf32>, vector<1x64xf32> -> vector<1x64xf32>
    %461 = arith.addf %457, %460 : vector<1x64xf32>
    %c224_221 = arith.constant 224 : index
    %c0_222 = arith.constant 0 : index
    %462 = vector.load %arg7[%c224_221, %c0_222] : memref<512x64xf32, #tpu.memory_space<vmem>>, vector<16x64xf32>
    %463 = vector.extract_strided_slice %416 {offsets = [10, 0], sizes = [1, 16], strides = [1, 1]} : vector<16x16xf32> to vector<1x16xf32>
    %cst_223 = arith.constant dense<0.000000e+00> : vector<1x64xf32>
    %464 = tpu.matmul %463, %462, %cst_223 {dimension_numbers = #tpu.dot_dimension_numbers<[1], [0], [0], [1], [0, 0, 1, 1], [], []>} : vector<1x16xf32>, vector<16x64xf32>, vector<1x64xf32> -> vector<1x64xf32>
    %465 = arith.addf %461, %464 : vector<1x64xf32>
    %c240_224 = arith.constant 240 : index
    %c0_225 = arith.constant 0 : index
    %466 = vector.load %arg7[%c240_224, %c0_225] : memref<512x64xf32, #tpu.memory_space<vmem>>, vector<16x64xf32>
    %467 = vector.extract_strided_slice %416 {offsets = [11, 0], sizes = [1, 16], strides = [1, 1]} : vector<16x16xf32> to vector<1x16xf32>
    %cst_226 = arith.constant dense<0.000000e+00> : vector<1x64xf32>
    %468 = tpu.matmul %467, %466, %cst_226 {dimension_numbers = #tpu.dot_dimension_numbers<[1], [0], [0], [1], [0, 0, 1, 1], [], []>} : vector<1x16xf32>, vector<16x64xf32>, vector<1x64xf32> -> vector<1x64xf32>
    %469 = arith.addf %465, %468 : vector<1x64xf32>
    %c256_227 = arith.constant 256 : index
    %c0_228 = arith.constant 0 : index
    %470 = vector.load %arg7[%c256_227, %c0_228] : memref<512x64xf32, #tpu.memory_space<vmem>>, vector<16x64xf32>
    %471 = vector.extract_strided_slice %416 {offsets = [12, 0], sizes = [1, 16], strides = [1, 1]} : vector<16x16xf32> to vector<1x16xf32>
    %cst_229 = arith.constant dense<0.000000e+00> : vector<1x64xf32>
    %472 = tpu.matmul %471, %470, %cst_229 {dimension_numbers = #tpu.dot_dimension_numbers<[1], [0], [0], [1], [0, 0, 1, 1], [], []>} : vector<1x16xf32>, vector<16x64xf32>, vector<1x64xf32> -> vector<1x64xf32>
    %473 = arith.addf %469, %472 : vector<1x64xf32>
    %c272_230 = arith.constant 272 : index
    %c0_231 = arith.constant 0 : index
    %474 = vector.load %arg7[%c272_230, %c0_231] : memref<512x64xf32, #tpu.memory_space<vmem>>, vector<16x64xf32>
    %475 = vector.extract_strided_slice %416 {offsets = [13, 0], sizes = [1, 16], strides = [1, 1]} : vector<16x16xf32> to vector<1x16xf32>
    %cst_232 = arith.constant dense<0.000000e+00> : vector<1x64xf32>
    %476 = tpu.matmul %475, %474, %cst_232 {dimension_numbers = #tpu.dot_dimension_numbers<[1], [0], [0], [1], [0, 0, 1, 1], [], []>} : vector<1x16xf32>, vector<16x64xf32>, vector<1x64xf32> -> vector<1x64xf32>
    %477 = arith.addf %473, %476 : vector<1x64xf32>
    %c288_233 = arith.constant 288 : index
    %c0_234 = arith.constant 0 : index
    %478 = vector.load %arg7[%c288_233, %c0_234] : memref<512x64xf32, #tpu.memory_space<vmem>>, vector<16x64xf32>
    %479 = vector.extract_strided_slice %416 {offsets = [14, 0], sizes = [1, 16], strides = [1, 1]} : vector<16x16xf32> to vector<1x16xf32>
    %cst_235 = arith.constant dense<0.000000e+00> : vector<1x64xf32>
    %480 = tpu.matmul %479, %478, %cst_235 {dimension_numbers = #tpu.dot_dimension_numbers<[1], [0], [0], [1], [0, 0, 1, 1], [], []>} : vector<1x16xf32>, vector<16x64xf32>, vector<1x64xf32> -> vector<1x64xf32>
    %481 = arith.addf %477, %480 : vector<1x64xf32>
    %c304_236 = arith.constant 304 : index
    %c0_237 = arith.constant 0 : index
    %482 = vector.load %arg7[%c304_236, %c0_237] : memref<512x64xf32, #tpu.memory_space<vmem>>, vector<16x64xf32>
    %483 = vector.extract_strided_slice %416 {offsets = [15, 0], sizes = [1, 16], strides = [1, 1]} : vector<16x16xf32> to vector<1x16xf32>
    %cst_238 = arith.constant dense<0.000000e+00> : vector<1x64xf32>
    %484 = tpu.matmul %483, %482, %cst_238 {dimension_numbers = #tpu.dot_dimension_numbers<[1], [0], [0], [1], [0, 0, 1, 1], [], []>} : vector<1x16xf32>, vector<16x64xf32>, vector<1x64xf32> -> vector<1x64xf32>
    %485 = arith.addf %481, %484 : vector<1x64xf32>
    %c2373 = arith.constant 2373 : index
    %c0_239 = arith.constant 0 : index
    %486 = vector.load %arg4[%c2373, %c0_239] : memref<2392x128xf32, #tpu.memory_space<vmem>>, vector<1x128xf32>
    %487 = vector.extract_strided_slice %486 {offsets = [0, 0], sizes = [1, 64], strides = [1, 1]} : vector<1x128xf32> to vector<1x64xf32>
    %488 = arith.addf %485, %487 : vector<1x64xf32>
    %489 = math.tanh %488 : vector<1x64xf32>
    %c320_240 = arith.constant 320 : index
    %c0_241 = arith.constant 0 : index
    %490 = vector.load %arg7[%c320_240, %c0_241] : memref<512x64xf32, #tpu.memory_space<vmem>>, vector<64x64xf32>
    %cst_242 = arith.constant dense<0.000000e+00> : vector<1x64xf32>
    %491 = tpu.matmul %489, %490, %cst_242 {dimension_numbers = #tpu.dot_dimension_numbers<[1], [0], [0], [1], [0, 0, 1, 1], [], []>} : vector<1x64xf32>, vector<64x64xf32>, vector<1x64xf32> -> vector<1x64xf32>
    %c2374 = arith.constant 2374 : index
    %c0_243 = arith.constant 0 : index
    %492 = vector.load %arg4[%c2374, %c0_243] : memref<2392x128xf32, #tpu.memory_space<vmem>>, vector<1x128xf32>
    %493 = vector.extract_strided_slice %492 {offsets = [0, 0], sizes = [1, 64], strides = [1, 1]} : vector<1x128xf32> to vector<1x64xf32>
    %494 = arith.addf %491, %493 : vector<1x64xf32>
    %cst_244 = arith.constant dense<0.000000e+00> : vector<1xf32>
    %495 = vector.multi_reduction <add>, %494, %cst_244 [1] : vector<1x64xf32> to vector<1xf32>
    %496 = vector.shape_cast %495 : vector<1xf32> to vector<1x1xf32>
    %cst_245 = arith.constant 6.400000e+01 : f32
    %497 = vector.broadcast %cst_245 : f32 to vector<1x1xf32>
    %498 = arith.divf %496, %497 : vector<1x1xf32>
    %499 = vector.broadcast %498 : vector<1x1xf32> to vector<1x64xf32>
    %500 = arith.subf %494, %499 : vector<1x64xf32>
    %501 = arith.mulf %500, %500 : vector<1x64xf32>
    %cst_246 = arith.constant dense<0.000000e+00> : vector<1xf32>
    %502 = vector.multi_reduction <add>, %501, %cst_246 [1] : vector<1x64xf32> to vector<1xf32>
    %503 = vector.shape_cast %502 : vector<1xf32> to vector<1x1xf32>
    %cst_247 = arith.constant 6.400000e+01 : f32
    %504 = vector.broadcast %cst_247 : f32 to vector<1x1xf32>
    %505 = arith.divf %503, %504 : vector<1x1xf32>
    %cst_248 = arith.constant 9.99999974E-6 : f32
    %506 = vector.broadcast %cst_248 : f32 to vector<1x1xf32>
    %507 = arith.addf %505, %506 : vector<1x1xf32>
    %508 = math.rsqrt %507 : vector<1x1xf32>
    %509 = vector.broadcast %508 : vector<1x1xf32> to vector<1x64xf32>
    %510 = arith.mulf %500, %509 : vector<1x64xf32>
    %c2375 = arith.constant 2375 : index
    %c0_249 = arith.constant 0 : index
    %511 = vector.load %arg4[%c2375, %c0_249] : memref<2392x128xf32, #tpu.memory_space<vmem>>, vector<1x128xf32>
    %512 = vector.extract_strided_slice %511 {offsets = [0, 0], sizes = [1, 64], strides = [1, 1]} : vector<1x128xf32> to vector<1x64xf32>
    %513 = arith.mulf %510, %512 : vector<1x64xf32>
    %c2376 = arith.constant 2376 : index
    %c0_250 = arith.constant 0 : index
    %514 = vector.load %arg4[%c2376, %c0_250] : memref<2392x128xf32, #tpu.memory_space<vmem>>, vector<1x128xf32>
    %515 = vector.extract_strided_slice %514 {offsets = [0, 0], sizes = [1, 64], strides = [1, 1]} : vector<1x128xf32> to vector<1x64xf32>
    %516 = arith.addf %513, %515 : vector<1x64xf32>
    %517 = math.tanh %516 : vector<1x64xf32>
    %c384_251 = arith.constant 384 : index
    %c0_252 = arith.constant 0 : index
    %518 = vector.load %arg7[%c384_251, %c0_252] : memref<512x64xf32, #tpu.memory_space<vmem>>, vector<64x64xf32>
    %cst_253 = arith.constant dense<0.000000e+00> : vector<1x64xf32>
    %519 = tpu.matmul %517, %518, %cst_253 {dimension_numbers = #tpu.dot_dimension_numbers<[1], [0], [0], [1], [0, 0, 1, 1], [], []>} : vector<1x64xf32>, vector<64x64xf32>, vector<1x64xf32> -> vector<1x64xf32>
    %c2377 = arith.constant 2377 : index
    %c0_254 = arith.constant 0 : index
    %520 = vector.load %arg4[%c2377, %c0_254] : memref<2392x128xf32, #tpu.memory_space<vmem>>, vector<1x128xf32>
    %521 = vector.extract_strided_slice %520 {offsets = [0, 0], sizes = [1, 64], strides = [1, 1]} : vector<1x128xf32> to vector<1x64xf32>
    %522 = arith.addf %519, %521 : vector<1x64xf32>
    %cst_255 = arith.constant dense<0.000000e+00> : vector<1xf32>
    %523 = vector.multi_reduction <add>, %522, %cst_255 [1] : vector<1x64xf32> to vector<1xf32>
    %524 = vector.shape_cast %523 : vector<1xf32> to vector<1x1xf32>
    %cst_256 = arith.constant 6.400000e+01 : f32
    %525 = vector.broadcast %cst_256 : f32 to vector<1x1xf32>
    %526 = arith.divf %524, %525 : vector<1x1xf32>
    %527 = vector.broadcast %526 : vector<1x1xf32> to vector<1x64xf32>
    %528 = arith.subf %522, %527 : vector<1x64xf32>
    %529 = arith.mulf %528, %528 : vector<1x64xf32>
    %cst_257 = arith.constant dense<0.000000e+00> : vector<1xf32>
    %530 = vector.multi_reduction <add>, %529, %cst_257 [1] : vector<1x64xf32> to vector<1xf32>
    %531 = vector.shape_cast %530 : vector<1xf32> to vector<1x1xf32>
    %cst_258 = arith.constant 6.400000e+01 : f32
    %532 = vector.broadcast %cst_258 : f32 to vector<1x1xf32>
    %533 = arith.divf %531, %532 : vector<1x1xf32>
    %cst_259 = arith.constant 9.99999974E-6 : f32
    %534 = vector.broadcast %cst_259 : f32 to vector<1x1xf32>
    %535 = arith.addf %533, %534 : vector<1x1xf32>
    %536 = math.rsqrt %535 : vector<1x1xf32>
    %537 = vector.broadcast %536 : vector<1x1xf32> to vector<1x64xf32>
    %538 = arith.mulf %528, %537 : vector<1x64xf32>
    %c2378 = arith.constant 2378 : index
    %c0_260 = arith.constant 0 : index
    %539 = vector.load %arg4[%c2378, %c0_260] : memref<2392x128xf32, #tpu.memory_space<vmem>>, vector<1x128xf32>
    %540 = vector.extract_strided_slice %539 {offsets = [0, 0], sizes = [1, 64], strides = [1, 1]} : vector<1x128xf32> to vector<1x64xf32>
    %541 = arith.mulf %538, %540 : vector<1x64xf32>
    %c2379 = arith.constant 2379 : index
    %c0_261 = arith.constant 0 : index
    %542 = vector.load %arg4[%c2379, %c0_261] : memref<2392x128xf32, #tpu.memory_space<vmem>>, vector<1x128xf32>
    %543 = vector.extract_strided_slice %542 {offsets = [0, 0], sizes = [1, 64], strides = [1, 1]} : vector<1x128xf32> to vector<1x64xf32>
    %544 = arith.addf %541, %543 : vector<1x64xf32>
    %545 = math.tanh %544 : vector<1x64xf32>
    %c448_262 = arith.constant 448 : index
    %c0_263 = arith.constant 0 : index
    %546 = vector.load %arg7[%c448_262, %c0_263] : memref<512x64xf32, #tpu.memory_space<vmem>>, vector<64x64xf32>
    %cst_264 = arith.constant dense<0.000000e+00> : vector<1x64xf32>
    %547 = tpu.matmul %545, %546, %cst_264 {dimension_numbers = #tpu.dot_dimension_numbers<[1], [0], [0], [1], [0, 0, 1, 1], [], []>} : vector<1x64xf32>, vector<64x64xf32>, vector<1x64xf32> -> vector<1x64xf32>
    %c2380 = arith.constant 2380 : index
    %c0_265 = arith.constant 0 : index
    %548 = vector.load %arg4[%c2380, %c0_265] : memref<2392x128xf32, #tpu.memory_space<vmem>>, vector<1x128xf32>
    %549 = vector.extract_strided_slice %548 {offsets = [0, 0], sizes = [1, 64], strides = [1, 1]} : vector<1x128xf32> to vector<1x64xf32>
    %550 = arith.addf %547, %549 : vector<1x64xf32>
    %cst_266 = arith.constant dense<0.000000e+00> : vector<1xf32>
    %551 = vector.multi_reduction <add>, %550, %cst_266 [1] : vector<1x64xf32> to vector<1xf32>
    %552 = vector.shape_cast %551 : vector<1xf32> to vector<1x1xf32>
    %cst_267 = arith.constant 6.400000e+01 : f32
    %553 = vector.broadcast %cst_267 : f32 to vector<1x1xf32>
    %554 = arith.divf %552, %553 : vector<1x1xf32>
    %555 = vector.broadcast %554 : vector<1x1xf32> to vector<1x64xf32>
    %556 = arith.subf %550, %555 : vector<1x64xf32>
    %557 = arith.mulf %556, %556 : vector<1x64xf32>
    %cst_268 = arith.constant dense<0.000000e+00> : vector<1xf32>
    %558 = vector.multi_reduction <add>, %557, %cst_268 [1] : vector<1x64xf32> to vector<1xf32>
    %559 = vector.shape_cast %558 : vector<1xf32> to vector<1x1xf32>
    %cst_269 = arith.constant 6.400000e+01 : f32
    %560 = vector.broadcast %cst_269 : f32 to vector<1x1xf32>
    %561 = arith.divf %559, %560 : vector<1x1xf32>
    %cst_270 = arith.constant 9.99999974E-6 : f32
    %562 = vector.broadcast %cst_270 : f32 to vector<1x1xf32>
    %563 = arith.addf %561, %562 : vector<1x1xf32>
    %564 = math.rsqrt %563 : vector<1x1xf32>
    %565 = vector.broadcast %564 : vector<1x1xf32> to vector<1x64xf32>
    %566 = arith.mulf %556, %565 : vector<1x64xf32>
    %c2381 = arith.constant 2381 : index
    %c0_271 = arith.constant 0 : index
    %567 = vector.load %arg4[%c2381, %c0_271] : memref<2392x128xf32, #tpu.memory_space<vmem>>, vector<1x128xf32>
    %568 = vector.extract_strided_slice %567 {offsets = [0, 0], sizes = [1, 64], strides = [1, 1]} : vector<1x128xf32> to vector<1x64xf32>
    %569 = arith.mulf %566, %568 : vector<1x64xf32>
    %c2382 = arith.constant 2382 : index
    %c0_272 = arith.constant 0 : index
    %570 = vector.load %arg4[%c2382, %c0_272] : memref<2392x128xf32, #tpu.memory_space<vmem>>, vector<1x128xf32>
    %571 = vector.extract_strided_slice %570 {offsets = [0, 0], sizes = [1, 64], strides = [1, 1]} : vector<1x128xf32> to vector<1x64xf32>
    %572 = arith.addf %569, %571 : vector<1x64xf32>
    %573 = math.tanh %572 : vector<1x64xf32>
    %c2383 = arith.constant 2383 : index
    %c0_273 = arith.constant 0 : index
    %574 = vector.load %arg4[%c2383, %c0_273] : memref<2392x128xf32, #tpu.memory_space<vmem>>, vector<1x128xf32>
    %575 = vector.extract_strided_slice %574 {offsets = [0, 0], sizes = [1, 64], strides = [1, 1]} : vector<1x128xf32> to vector<1x64xf32>
    %576 = arith.mulf %573, %575 : vector<1x64xf32>
    %cst_274 = arith.constant dense<0.000000e+00> : vector<1xf32>
    %577 = vector.multi_reduction <add>, %576, %cst_274 [1] : vector<1x64xf32> to vector<1xf32>
    %578 = vector.shape_cast %577 : vector<1xf32> to vector<1x1xf32>
    %c2384 = arith.constant 2384 : index
    %c0_275 = arith.constant 0 : index
    %579 = vector.load %arg4[%c2384, %c0_275] : memref<2392x128xf32, #tpu.memory_space<vmem>>, vector<1x128xf32>
    %580 = vector.extract_strided_slice %579 {offsets = [0, 0], sizes = [1, 1], strides = [1, 1]} : vector<1x128xf32> to vector<1x1xf32>
    %581 = arith.addf %578, %580 : vector<1x1xf32>
    %c0_276 = arith.constant 0 : index
    %c0_277 = arith.constant 0 : index
    %582 = vector.load %arg8[%c0_276, %c0_277] : memref<1x1xf32, #tpu.memory_space<vmem>>, vector<1x1xf32>
    tpu.vector_store %arg8[%c0_276, %c0_277], %581 {strides = array<i32>} : memref<1x1xf32, #tpu.memory_space<vmem>>, vector<1x1xf32>,
    return
  }
}

</mosaic_0001>

<llo_original>
// kernel: forward.1
$region0: #{forward.1}
  #allocation0 [shape = 'u32[]', space=smem, size = 0x4, offset = 0x4, fixed_abs, tag = 'smem constant byte address 0x4 - core index']
  #allocation1 [shape = 'u32[144,128]{1,0:T(1,128)}', space=vmem, size = 0x12000, scoped, tag = 'internal scratch']
  %s0 = inlined_call_operand.hbm [shape: f32[1,32], index: 0, kind: input, shape index: {}]
  %s1 = inlined_call_operand.hbm [shape: f32[8,16], index: 1, kind: input, shape index: {}]
  %s2 = inlined_call_operand.vmem [shape: f32[16,256], index: 2, kind: input, shape index: {}]
  %s3 = inlined_call_operand.hbm [shape: f32[2320,256], index: 3, kind: input, shape index: {}]
  %s4 = inlined_call_operand.hbm [shape: f32[2392,128], index: 4, kind: input, shape index: {}]
  %s5 = inlined_call_operand.vmem [shape: f32[736,16], index: 5, kind: input, shape index: {}]
  %s6 = inlined_call_operand.vmem [shape: f32[128,400], index: 6, kind: input, shape index: {}]
  %s7 = inlined_call_operand.vmem [shape: f32[512,64], index: 7, kind: input, shape index: {}]
  %s8 = inlined_call_operand.hbm [shape: f32[1,1], index: 8, kind: output, shape index: {}]
  %s9 = sld [smem:[#allocation0]]
  $region58: #{forward.1} parent=0
    _
  %s11 = ssub.s32 1, %s9
  %s12 = scalar_select 0, %s11, %s9
  $region1: #{forward.1} parent=0
    #allocation2 [shape = 'u8[512]{0}', space=vmem, size = 0x400, scoped, tag = 'input window, operand 0, single buffered']
    #allocation3 [shape = 's32[1]{0}', space=sflag, size = 0x4, scoped, tag = 'scoped memory for forward.1']
    #allocation4 [shape = 's32[1]{0}', space=sflag, size = 0x4, scoped, tag = 'scoped memory for forward.1']
    #allocation5 [shape = 'u8[4096]{0}', space=vmem, size = 0x1000, scoped, tag = 'input window, operand 1, single buffered']
    #allocation6 [shape = 's32[1]{0}', space=sflag, size = 0x4, scoped, tag = 'scoped memory for forward.1']
    #allocation7 [shape = 'u8[2375680]{0}', space=vmem, size = 0x244000, scoped, tag = 'input window, operand 3, single buffered']
    #allocation8 [shape = 'u8[1224704]{0}', space=vmem, size = 0x12b000, scoped, tag = 'input window, operand 4, single buffered']
    #allocation9 [shape = 's32[1]{0}', space=sflag, size = 0x4, scoped, tag = 'scoped memory for forward.1']
    #allocation10 [shape = 'u8[512]{0}', space=vmem, size = 0x400, scoped, tag = 'output window, operand 0, single buffered']
    %13 = vsyncpa [#allocation3], 0
    %14 = vsyncpa [#allocation6], 0
    %15 = vsyncpa [#allocation9], 0
    %16 = vsyncpa [#allocation4], 0
    // Predicated region
    $region2: #{forward.1} parent=1 // pred_check
      _
    $region3: #{forward.1} parent=1 // pred_check_branch
      %18 = sbr.rel (0) target = $region5
    $region4: #{forward.1} parent=1 // pred_region
      %s20 = ssub.s32 16, 16
      %21 = vsyncadd [#allocation3], %s20
      %s23 = sshll.u32 [#allocation2], 4
      %s24 = int_to_ptr.vmem [resolvable:$true] %s23
      %26 = dma.hbm_to_vmem [thread:$0]  %s0, 16, %s24, [#allocation3]
    $region5: #{forward.1} parent=1 // pred_fallthru
      _
    // Predicated region
    $region6: #{forward.1} parent=1 // pred_check
      _
    $region7: #{forward.1} parent=1 // pred_check_branch
      %28 = sbr.rel (0) target = $region9
    $region8: #{forward.1} parent=1 // pred_region
      %s30 = ssub.s32 128, 128
      %31 = vsyncadd [#allocation6], %s30
      %s33 = sshll.u32 [#allocation5], 4
      %s34 = int_to_ptr.vmem [resolvable:$true] %s33
      %36 = dma.hbm_to_vmem [thread:$0]  %s1, 128, %s34, [#allocation6]
    $region9: #{forward.1} parent=1 // pred_fallthru
      _
    // Predicated region
    $region10: #{forward.1} parent=1 // pred_check
      _
    $region11: #{forward.1} parent=1 // pred_check_branch
      %38 = sbr.rel (0) target = $region13
    $region12: #{forward.1} parent=1 // pred_region
      _
    $region13: #{forward.1} parent=1 // pred_fallthru
      _
    // Predicated region
    $region14: #{forward.1} parent=1 // pred_check
      _
    $region15: #{forward.1} parent=1 // pred_check_branch
      %40 = sbr.rel (0) target = $region17
    $region16: #{forward.1} parent=1 // pred_region
      %s42 = ssub.s32 74240, 74240
      %43 = vsyncadd [#allocation6], %s42
      %s44 = sshll.u32 [#allocation7], 4
      %s45 = int_to_ptr.vmem [resolvable:$true] %s44
      %50 = dma.hbm_to_vmem [thread:$0]  %s3, 74240, %s45, [#allocation6], 256, 256, 16
    $region17: #{forward.1} parent=1 // pred_fallthru
      _
    // Predicated region
    $region18: #{forward.1} parent=1 // pred_check
      _
    $region19: #{forward.1} parent=1 // pred_check_branch
      %52 = sbr.rel (0) target = $region21
    $region20: #{forward.1} parent=1 // pred_region
      %s54 = ssub.s32 38272, 38272
      %55 = vsyncadd [#allocation9], %s54
      %s56 = sshll.u32 [#allocation8], 4
      %s57 = int_to_ptr.vmem [resolvable:$true] %s56
      %62 = dma.hbm_to_vmem [thread:$0]  %s4, 38272, %s57, [#allocation9], 128, 128, 8
    $region21: #{forward.1} parent=1 // pred_fallthru
      _
    // Predicated region
    $region22: #{forward.1} parent=1 // pred_check
      _
    $region23: #{forward.1} parent=1 // pred_check_branch
      %64 = sbr.rel (0) target = $region25
    $region24: #{forward.1} parent=1 // pred_region
      _
    $region25: #{forward.1} parent=1 // pred_fallthru
      _
    // Predicated region
    $region26: #{forward.1} parent=1 // pred_check
      _
    $region27: #{forward.1} parent=1 // pred_check_branch
      %66 = sbr.rel (0) target = $region29
    $region28: #{forward.1} parent=1 // pred_region
      _
    $region29: #{forward.1} parent=1 // pred_fallthru
      _
    // Predicated region
    $region30: #{forward.1} parent=1 // pred_check
      _
    $region31: #{forward.1} parent=1 // pred_check_branch
      %68 = sbr.rel (0) target = $region33
    $region32: #{forward.1} parent=1 // pred_region
      _
    $region33: #{forward.1} parent=1 // pred_fallthru
      _
    // Predicated region
    $region34: #{forward.1} parent=1 // pred_check
      _
    $region35: #{forward.1} parent=1 // pred_check_branch
      %70 = sbr.rel (0) target = $region37
    $region36: #{forward.1} parent=1 // pred_region
      %71 = dma.done [#allocation3], 16
    $region37: #{forward.1} parent=1 // pred_fallthru
      _
    // Predicated region
    $region38: #{forward.1} parent=1 // pred_check
      _
    $region39: #{forward.1} parent=1 // pred_check_branch
      %73 = sbr.rel (0) target = $region41
    $region40: #{forward.1} parent=1 // pred_region
      %74 = dma.done [#allocation6], 128
    $region41: #{forward.1} parent=1 // pred_fallthru
      _
    // Predicated region
    $region42: #{forward.1} parent=1 // pred_check
      _
    $region43: #{forward.1} parent=1 // pred_check_branch
      %76 = sbr.rel (0) target = $region45
    $region44: #{forward.1} parent=1 // pred_region
      %77 = dma.done [#allocation6], 74240
    $region45: #{forward.1} parent=1 // pred_fallthru
      _
    // Predicated region
    $region46: #{forward.1} parent=1 // pred_check
      _
    $region47: #{forward.1} parent=1 // pred_check_branch
      %79 = sbr.rel (0) target = $region49
    $region48: #{forward.1} parent=1 // pred_region
      %80 = dma.done [#allocation9], 38272
    $region49: #{forward.1} parent=1 // pred_fallthru
      _
    %v81 = vld [vmem:[%s2] sm:$0xff]
    %v82 = vld [vmem:[%s2 + $0x8] sm:$0xff]
    %v83 = vld [vmem:[%s2 + $0x10] sm:$0xff]
    %v84 = vld [vmem:[%s2 + $0x18] sm:$0xff]
    %v85 = vld [vmem:[#allocation7 + $0x1200] sm:$0xff]
    %v86 = vld [vmem:[#allocation7 + $0x1208] sm:$0xff]
    %v87 = vld [vmem:[#allocation7 + $0x1210] sm:$0xff]
    %v88 = vld [vmem:[#allocation7 + $0x1218] sm:$0xff]
    %v89 = vld [vmem:[#allocation7] sm:$0xff]
    %v90 = vld [vmem:[#allocation7 + $0x8] sm:$0xff]
    %v91 = vld [vmem:[#allocation7 + $0x10] sm:$0xff]
    %v92 = vld [vmem:[#allocation7 + $0x18] sm:$0xff]
    %v93 = vld [vmem:[#allocation7 + $0x20] sm:$0xff]
    %v94 = vld [vmem:[#allocation7 + $0x28] sm:$0xff]
    %v95 = vld [vmem:[#allocation7 + $0x30] sm:$0xff]
    %v96 = vld [vmem:[#allocation7 + $0x38] sm:$0xff]
    %v97 = vld [vmem:[#allocation7 + $0x40] sm:$0xff]
    %v98 = vld [vmem:[#allocation7 + $0x48] sm:$0xff]
    %v99 = vld [vmem:[#allocation7 + $0x50] sm:$0xff]
    %v100 = vld [vmem:[#allocation7 + $0x58] sm:$0xff]
    %v101 = vld [vmem:[#allocation7 + $0x60] sm:$0xff]
    %v102 = vld [vmem:[#allocation7 + $0x68] sm:$0xff]
    %v103 = vld [vmem:[#allocation7 + $0x70] sm:$0xff]
    %v104 = vld [vmem:[#allocation7 + $0x78] sm:$0xff]
    %v105 = vld [vmem:[#allocation7 + $0x80] sm:$0xff]
    %v106 = vld [vmem:[#allocation7 + $0x88] sm:$0xff]
    %v107 = vld [vmem:[#allocation7 + $0x90] sm:$0xff]
    %v108 = vld [vmem:[#allocation7 + $0x98] sm:$0xff]
    %v109 = vld [vmem:[#allocation7 + $0xa0] sm:$0xff]
    %v110 = vld [vmem:[#allocation7 + $0xa8] sm:$0xff]
    %v111 = vld [vmem:[#allocation7 + $0xb0] sm:$0xff]
    %v112 = vld [vmem:[#allocation7 + $0xb8] sm:$0xff]
    %v113 = vld [vmem:[#allocation7 + $0xc0] sm:$0xff]
    %v114 = vld [vmem:[#allocation7 + $0xc8] sm:$0xff]
    %v115 = vld [vmem:[#allocation7 + $0xd0] sm:$0xff]
    %v116 = vld [vmem:[#allocation7 + $0xd8] sm:$0xff]
    %v117 = vld [vmem:[#allocation7 + $0xe0] sm:$0xff]
    %v118 = vld [vmem:[#allocation7 + $0xe8] sm:$0xff]
    %v119 = vld [vmem:[#allocation7 + $0xf0] sm:$0xff]
    %v120 = vld [vmem:[#allocation7 + $0xf8] sm:$0xff]
    %v121 = vld [vmem:[#allocation7 + $0x100] sm:$0xff]
    %v122 = vld [vmem:[#allocation7 + $0x108] sm:$0xff]
    %v123 = vld [vmem:[#allocation7 + $0x110] sm:$0xff]
    %v124 = vld [vmem:[#allocation7 + $0x118] sm:$0xff]
    %v125 = vld [vmem:[#allocation7 + $0x120] sm:$0xff]
    %v126 = vld [vmem:[#allocation7 + $0x128] sm:$0xff]
    %v127 = vld [vmem:[#allocation7 + $0x130] sm:$0xff]
    %v128 = vld [vmem:[#allocation7 + $0x138] sm:$0xff]
    %v129 = vld [vmem:[#allocation7 + $0x140] sm:$0xff]
    %v130 = vld [vmem:[#allocation7 + $0x148] sm:$0xff]
    %v131 = vld [vmem:[#allocation7 + $0x150] sm:$0xff]
    %v132 = vld [vmem:[#allocation7 + $0x158] sm:$0xff]
    %v133 = vld [vmem:[#allocation7 + $0x160] sm:$0xff]
    %v134 = vld [vmem:[#allocation7 + $0x168] sm:$0xff]
    %v135 = vld [vmem:[#allocation7 + $0x170] sm:$0xff]
    %v136 = vld [vmem:[#allocation7 + $0x178] sm:$0xff]
    %v137 = vld [vmem:[#allocation7 + $0x180] sm:$0xff]
    %v138 = vld [vmem:[#allocation7 + $0x188] sm:$0xff]
    %v139 = vld [vmem:[#allocation7 + $0x190] sm:$0xff]
    %v140 = vld [vmem:[#allocation7 + $0x198] sm:$0xff]
    %v141 = vld [vmem:[#allocation7 + $0x1a0] sm:$0xff]
    %v142 = vld [vmem:[#allocation7 + $0x1a8] sm:$0xff]
    %v143 = vld [vmem:[#allocation7 + $0x1b0] sm:$0xff]
    %v144 = vld [vmem:[#allocation7 + $0x1b8] sm:$0xff]
    %v145 = vld [vmem:[#allocation7 + $0x1c0] sm:$0xff]
    %v146 = vld [vmem:[#allocation7 + $0x1c8] sm:$0xff]
    %v147 = vld [vmem:[#allocation7 + $0x1d0] sm:$0xff]
    %v148 = vld [vmem:[#allocation7 + $0x1d8] sm:$0xff]
    %v149 = vld [vmem:[#allocation7 + $0x1e0] sm:$0xff]
    %v150 = vld [vmem:[#allocation7 + $0x1e8] sm:$0xff]
    %v151 = vld [vmem:[#allocation7 + $0x1f0] sm:$0xff]
    %v152 = vld [vmem:[#allocation7 + $0x1f8] sm:$0xff]
    %v153 = vld [vmem:[%s5 + $0x30] sm:$0xff]
    %v154 = vld [vmem:[%s5 + $0x38] sm:$0xff]
    %155 = vmatprep.subr.mxu0 %v90
    %156 = vmatpush1.msra.mxu0 %v89
    %157 = vmatprep.subr.mxu0 %v92
    %158 = vmatpush1.msra.mxu0 %v91
    %159 = vmatprep.subr.mxu0 %v94
    %160 = vmatpush1.msra.mxu0 %v93
    %161 = vmatprep.subr.mxu0 %v96
    %162 = vmatpush1.msra.mxu0 %v95
    %163 = vmatprep.subr.mxu0 %v98
    %164 = vmatpush1.msra.mxu0 %v97
    %165 = vmatprep.subr.mxu0 %v100
    %166 = vmatpush1.msra.mxu0 %v99
    %167 = vmatprep.subr.mxu0 %v102
    %168 = vmatpush1.msra.mxu0 %v101
    %169 = vmatprep.subr.mxu0 %v104
    %170 = vmatpush1.msra.mxu0 %v103
    %171 = vmatprep.subr.mxu0 %v106
    %172 = vmatpush1.msra.mxu0 %v105
    %173 = vmatprep.subr.mxu0 %v108
    %174 = vmatpush1.msra.mxu0 %v107
    %175 = vmatprep.subr.mxu0 %v110
    %176 = vmatpush1.msra.mxu0 %v109
    %177 = vmatprep.subr.mxu0 %v112
    %178 = vmatpush1.msra.mxu0 %v111
    %179 = vmatprep.subr.mxu0 %v114
    %180 = vmatpush1.msra.mxu0 %v113
    %181 = vmatprep.subr.mxu0 %v116
    %182 = vmatpush1.msra.mxu0 %v115
    %183 = vmatprep.subr.mxu0 %v118
    %184 = vmatpush1.msra.mxu0 %v117
    %185 = vmatprep.subr.mxu0 %v120
    %186 = vmatpush1.msra.mxu0 %v119
    %187 = vmatprep.subr.mxu0 %v122
    %188 = vmatpush1.msra.mxu0 %v121
    %189 = vmatprep.subr.mxu0 %v124
    %190 = vmatpush1.msra.mxu0 %v123
    %191 = vmatprep.subr.mxu0 %v126
    %192 = vmatpush1.msra.mxu0 %v125
    %193 = vmatprep.subr.mxu0 %v128
    %194 = vmatpush1.msra.mxu0 %v127
    %195 = vmatprep.subr.mxu0 %v130
    %196 = vmatpush1.msra.mxu0 %v129
    %197 = vmatprep.subr.mxu0 %v132
    %198 = vmatpush1.msra.mxu0 %v131
    %199 = vmatprep.subr.mxu0 %v134
    %200 = vmatpush1.msra.mxu0 %v133
    %201 = vmatprep.subr.mxu0 %v136
    %202 = vmatpush1.msra.mxu0 %v135
    %203 = vmatprep.subr.mxu0 %v138
    %204 = vmatpush1.msra.mxu0 %v137
    %205 = vmatprep.subr.mxu0 %v140
    %206 = vmatpush1.msra.mxu0 %v139
    %207 = vmatprep.subr.mxu0 %v142
    %208 = vmatpush1.msra.mxu0 %v141
    %209 = vmatprep.subr.mxu0 %v144
    %210 = vmatpush1.msra.mxu0 %v143
    %211 = vmatprep.subr.mxu0 %v146
    %212 = vmatpush1.msra.mxu0 %v145
    %213 = vmatprep.subr.mxu0 %v148
    %214 = vmatpush1.msra.mxu0 %v147
    %215 = vmatprep.subr.mxu0 %v150
    %216 = vmatpush1.msra.mxu0 %v149
    %217 = vmatprep.subr.mxu0 %v152
    %218 = vmatpush1.msra.mxu0 %v151
    %219 = vmatprep.mubr.f32.mxu0 %v82
    %220 = vmatmul.mubr.f32.gmra.mrb[0].mxu0 %v81
    %v221 = vpop.f32.mrb[0].mxu0
    %v222 = vadd.f32 0.0, %v221
    %v223 = vpop.f32.mrb[0].mxu0
    %v224 = vadd.f32 0.0, %v223
    %225 = vmatprep.mubr.f32.mxu0 %v84
    %226 = vmatmul.mubr.f32.gmra.mrb[0].mxu0 %v83
    %v227 = vpop.f32.mrb[0].mxu0
    %v228 = vadd.f32 0.0, %v227
    %v229 = vpop.f32.mrb[0].mxu0
    %v230 = vadd.f32 0.0, %v229
    %231 = vdwg.mxu0
    %vm232 = vcmask 130048
    %v234 = vsel %vm232, %v153, 0
    %v237 = vsel %vm232, %v154, 0
    %239 = vmatprep.subr.mxu0 %v224
    %240 = vmatpush1.msra.mxu0 %v222
    %241 = vmatprep.subr.mxu0 %v230
    %242 = vmatpush1.msra.mxu0 %v228
    %243 = vmatprep.subr.mxu0 0.0
    %244 = vmatpush1.msra.mxu0 0.0
    %245 = vmatprep.subr.mxu0 0.0
    %246 = vmatpush1.msra.mxu0 0.0
    %247 = vmatprep.subr.mxu0 0.0
    %248 = vmatpush1.msra.mxu0 0.0
    %249 = vmatprep.subr.mxu0 0.0
    %250 = vmatpush1.msra.mxu0 0.0
    %251 = vmatprep.subr.mxu0 0.0
    %252 = vmatpush1.msra.mxu0 0.0
    %253 = vmatprep.subr.mxu0 0.0
    %254 = vmatpush1.msra.mxu0 0.0
    %255 = vmatprep.subr.mxu0 0.0
    %256 = vmatpush1.msra.mxu0 0.0
    %257 = vmatprep.subr.mxu0 0.0
    %258 = vmatpush1.msra.mxu0 0.0
    %259 = vmatprep.subr.mxu0 0.0
    %260 = vmatpush1.msra.mxu0 0.0
    %261 = vmatprep.subr.mxu0 0.0
    %262 = vmatpush1.msra.mxu0 0.0
    %263 = vmatprep.subr.mxu0 0.0
    %264 = vmatpush1.msra.mxu0 0.0
    %265 = vmatprep.subr.mxu0 0.0
    %266 = vmatpush1.msra.mxu0 0.0
    %267 = vmatprep.subr.mxu0 0.0
    %268 = vmatpush1.msra.mxu0 0.0
    %269 = vmatprep.subr.mxu0 0.0
    %270 = vmatpush1.msra.mxu0 0.0
    %271 = vmatprep.subr.mxu0 0.0
    %272 = vmatpush1.msra.mxu0 0.0
    %273 = vmatprep.subr.mxu0 0.0
    %274 = vmatpush1.msra.mxu0 0.0
    %275 = vmatprep.subr.mxu0 0.0
    %276 = vmatpush1.msra.mxu0 0.0
    %277 = vmatprep.subr.mxu0 0.0
    %278 = vmatpush1.msra.mxu0 0.0
    %279 = vmatprep.subr.mxu0 0.0
    %280 = vmatpush1.msra.mxu0 0.0
    %281 = vmatprep.subr.mxu0 0.0
    %282 = vmatpush1.msra.mxu0 0.0
    %283 = vmatprep.subr.mxu0 0.0
    %284 = vmatpush1.msra.mxu0 0.0
    %285 = vmatprep.subr.mxu0 0.0
    %286 = vmatpush1.msra.mxu0 0.0
    %287 = vmatprep.subr.mxu0 0.0
    %288 = vmatpush1.msra.mxu0 0.0
    %289 = vmatprep.subr.mxu0 0.0
    %290 = vmatpush1.msra.mxu0 0.0
    %291 = vmatprep.subr.mxu0 0.0
    %292 = vmatpush1.msra.mxu0 0.0
    %293 = vmatprep.subr.mxu0 0.0
    %294 = vmatpush1.msra.mxu0 0.0
    %295 = vmatprep.subr.mxu0 0.0
    %296 = vmatpush1.msra.mxu0 0.0
    %297 = vmatprep.subr.mxu0 0.0
    %298 = vmatpush1.msra.mxu0 0.0
    %299 = vmatprep.subr.mxu0 0.0
    %300 = vmatpush1.msra.mxu0 0.0
    %301 = vmatprep.subr.mxu0 0.0
    %302 = vmatpush1.msra.mxu0 0.0
    %303 = vmatprep.mubr.f32.mxu0 0.0
    %304 = vmatmul.mubr.f32.gmra.mrb[0].mxu0 %v234
    %v305 = vpop.f32.mrb[0].mxu0
    %v306 = vadd.f32 0.0, %v305
    %v307 = vpop.f32.mrb[0].mxu0
    %v308 = vadd.f32 0.0, %v307
    %309 = vmatprep.mubr.f32.mxu0 0.0
    %310 = vmatmul.mubr.f32.gmra.mrb[0].mxu0 %v237
    %v311 = vpop.f32.mrb[0].mxu0
    %v312 = vadd.f32 0.0, %v311
    %v313 = vpop.f32.mrb[0].mxu0
    %v314 = vadd.f32 0.0, %v313
    %315 = vdwg.mxu0
    %v316 = vadd.f32 %v85, %v306
    %v317 = vadd.f32 %v86, %v308
    %v318 = vadd.f32 %v87, %v312
    %v319 = vadd.f32 %v88, %v314
    %v320 = vld [vmem:[#allocation7 + $0x200] sm:$0xff]
    %v321 = vld [vmem:[#allocation7 + $0x208] sm:$0xff]
    %v322 = vld [vmem:[#allocation7 + $0x210] sm:$0xff]
    %v323 = vld [vmem:[#allocation7 + $0x218] sm:$0xff]
    %v324 = vld [vmem:[#allocation7 + $0x220] sm:$0xff]
    %v325 = vld [vmem:[#allocation7 + $0x228] sm:$0xff]
    %v326 = vld [vmem:[#allocation7 + $0x230] sm:$0xff]
    %v327 = vld [vmem:[#allocation7 + $0x238] sm:$0xff]
    %v328 = vld [vmem:[#allocation7 + $0x240] sm:$0xff]
    %v329 = vld [vmem:[#allocation7 + $0x248] sm:$0xff]
    %v330 = vld [vmem:[#allocation7 + $0x250] sm:$0xff]
    %v331 = vld [vmem:[#allocation7 + $0x258] sm:$0xff]
    %v332 = vld [vmem:[#allocation7 + $0x260] sm:$0xff]
    %v333 = vld [vmem:[#allocation7 + $0x268] sm:$0xff]
    %v334 = vld [vmem:[#allocation7 + $0x270] sm:$0xff]
    %v335 = vld [vmem:[#allocation7 + $0x278] sm:$0xff]
    %v336 = vld [vmem:[#allocation7 + $0x280] sm:$0xff]
    %v337 = vld [vmem:[#allocation7 + $0x288] sm:$0xff]
    %v338 = vld [vmem:[#allocation7 + $0x290] sm:$0xff]
    %v339 = vld [vmem:[#allocation7 + $0x298] sm:$0xff]
    %v340 = vld [vmem:[#allocation7 + $0x2a0] sm:$0xff]
    %v341 = vld [vmem:[#allocation7 + $0x2a8] sm:$0xff]
    %v342 = vld [vmem:[#allocation7 + $0x2b0] sm:$0xff]
    %v343 = vld [vmem:[#allocation7 + $0x2b8] sm:$0xff]
    %v344 = vld [vmem:[#allocation7 + $0x2c0] sm:$0xff]
    %v345 = vld [vmem:[#allocation7 + $0x2c8] sm:$0xff]
    %v346 = vld [vmem:[#allocation7 + $0x2d0] sm:$0xff]
    %v347 = vld [vmem:[#allocation7 + $0x2d8] sm:$0xff]
    %v348 = vld [vmem:[#allocation7 + $0x2e0] sm:$0xff]
    %v349 = vld [vmem:[#allocation7 + $0x2e8] sm:$0xff]
    %v350 = vld [vmem:[#allocation7 + $0x2f0] sm:$0xff]
    %v351 = vld [vmem:[#allocation7 + $0x2f8] sm:$0xff]
    %v352 = vld [vmem:[#allocation7 + $0x300] sm:$0xff]
    %v353 = vld [vmem:[#allocation7 + $0x308] sm:$0xff]
    %v354 = vld [vmem:[#allocation7 + $0x310] sm:$0xff]
    %v355 = vld [vmem:[#allocation7 + $0x318] sm:$0xff]
    %v356 = vld [vmem:[#allocation7 + $0x320] sm:$0xff]
    %v357 = vld [vmem:[#allocation7 + $0x328] sm:$0xff]
    %v358 = vld [vmem:[#allocation7 + $0x330] sm:$0xff]
    %v359 = vld [vmem:[#allocation7 + $0x338] sm:$0xff]
    %v360 = vld [vmem:[#allocation7 + $0x340] sm:$0xff]
    %v361 = vld [vmem:[#allocation7 + $0x348] sm:$0xff]
    %v362 = vld [vmem:[#allocation7 + $0x350] sm:$0xff]
    %v363 = vld [vmem:[#allocation7 + $0x358] sm:$0xff]
    %v364 = vld [vmem:[#allocation7 + $0x360] sm:$0xff]
    %v365 = vld [vmem:[#allocation7 + $0x368] sm:$0xff]
    %v366 = vld [vmem:[#allocation7 + $0x370] sm:$0xff]
    %v367 = vld [vmem:[#allocation7 + $0x378] sm:$0xff]
    %v368 = vld [vmem:[#allocation7 + $0x380] sm:$0xff]
    %v369 = vld [vmem:[#allocation7 + $0x388] sm:$0xff]
    %v370 = vld [vmem:[#allocation7 + $0x390] sm:$0xff]
    %v371 = vld [vmem:[#allocation7 + $0x398] sm:$0xff]
    %v372 = vld [vmem:[#allocation7 + $0x3a0] sm:$0xff]
    %v373 = vld [vmem:[#allocation7 + $0x3a8] sm:$0xff]
    %v374 = vld [vmem:[#allocation7 + $0x3b0] sm:$0xff]
    %v375 = vld [vmem:[#allocation7 + $0x3b8] sm:$0xff]
    %v376 = vld [vmem:[#allocation7 + $0x3c0] sm:$0xff]
    %v377 = vld [vmem:[#allocation7 + $0x3c8] sm:$0xff]
    %v378 = vld [vmem:[#allocation7 + $0x3d0] sm:$0xff]
    %v379 = vld [vmem:[#allocation7 + $0x3d8] sm:$0xff]
    %v380 = vld [vmem:[#allocation7 + $0x3e0] sm:$0xff]
    %v381 = vld [vmem:[#allocation7 + $0x3e8] sm:$0xff]
    %v382 = vld [vmem:[#allocation7 + $0x3f0] sm:$0xff]
    %v383 = vld [vmem:[#allocation7 + $0x3f8] sm:$0xff]
    %v384 = vld [vmem:[%s5 + $0x40] sm:$0xff]
    %v385 = vld [vmem:[%s5 + $0x48] sm:$0xff]
    %386 = vmatprep.subr.mxu0 %v321
    %387 = vmatpush1.msra.mxu0 %v320
    %388 = vmatprep.subr.mxu0 %v323
    %389 = vmatpush1.msra.mxu0 %v322
    %390 = vmatprep.subr.mxu0 %v325
    %391 = vmatpush1.msra.mxu0 %v324
    %392 = vmatprep.subr.mxu0 %v327
    %393 = vmatpush1.msra.mxu0 %v326
    %394 = vmatprep.subr.mxu0 %v329
    %395 = vmatpush1.msra.mxu0 %v328
    %396 = vmatprep.subr.mxu0 %v331
    %397 = vmatpush1.msra.mxu0 %v330
    %398 = vmatprep.subr.mxu0 %v333
    %399 = vmatpush1.msra.mxu0 %v332
    %400 = vmatprep.subr.mxu0 %v335
    %401 = vmatpush1.msra.mxu0 %v334
    %402 = vmatprep.subr.mxu0 %v337
    %403 = vmatpush1.msra.mxu0 %v336
    %404 = vmatprep.subr.mxu0 %v339
    %405 = vmatpush1.msra.mxu0 %v338
    %406 = vmatprep.subr.mxu0 %v341
    %407 = vmatpush1.msra.mxu0 %v340
    %408 = vmatprep.subr.mxu0 %v343
    %409 = vmatpush1.msra.mxu0 %v342
    %410 = vmatprep.subr.mxu0 %v345
    %411 = vmatpush1.msra.mxu0 %v344
    %412 = vmatprep.subr.mxu0 %v347
    %413 = vmatpush1.msra.mxu0 %v346
    %414 = vmatprep.subr.mxu0 %v349
    %415 = vmatpush1.msra.mxu0 %v348
    %416 = vmatprep.subr.mxu0 %v351
    %417 = vmatpush1.msra.mxu0 %v350
    %418 = vmatprep.subr.mxu0 %v353
    %419 = vmatpush1.msra.mxu0 %v352
    %420 = vmatprep.subr.mxu0 %v355
    %421 = vmatpush1.msra.mxu0 %v354
    %422 = vmatprep.subr.mxu0 %v357
    %423 = vmatpush1.msra.mxu0 %v356
    %424 = vmatprep.subr.mxu0 %v359
    %425 = vmatpush1.msra.mxu0 %v358
    %426 = vmatprep.subr.mxu0 %v361
    %427 = vmatpush1.msra.mxu0 %v360
    %428 = vmatprep.subr.mxu0 %v363
    %429 = vmatpush1.msra.mxu0 %v362
    %430 = vmatprep.subr.mxu0 %v365
    %431 = vmatpush1.msra.mxu0 %v364
    %432 = vmatprep.subr.mxu0 %v367
    %433 = vmatpush1.msra.mxu0 %v366
    %434 = vmatprep.subr.mxu0 %v369
    %435 = vmatpush1.msra.mxu0 %v368
    %436 = vmatprep.subr.mxu0 %v371
    %437 = vmatpush1.msra.mxu0 %v370
    %438 = vmatprep.subr.mxu0 %v373
    %439 = vmatpush1.msra.mxu0 %v372
    %440 = vmatprep.subr.mxu0 %v375
    %441 = vmatpush1.msra.mxu0 %v374
    %442 = vmatprep.subr.mxu0 %v377
    %443 = vmatpush1.msra.mxu0 %v376
    %444 = vmatprep.subr.mxu0 %v379
    %445 = vmatpush1.msra.mxu0 %v378
    %446 = vmatprep.subr.mxu0 %v381
    %447 = vmatpush1.msra.mxu0 %v380
    %448 = vmatprep.subr.mxu0 %v383
    %449 = vmatpush1.msra.mxu0 %v382
    %450 = vmatprep.mubr.f32.mxu0 %v82
    %451 = vmatmul.mubr.f32.gmra.mrb[0].mxu0 %v81
    %v452 = vpop.f32.mrb[0].mxu0
    %v453 = vadd.f32 0.0, %v452
    %v454 = vpop.f32.mrb[0].mxu0
    %v455 = vadd.f32 0.0, %v454
    %456 = vmatprep.mubr.f32.mxu0 %v84
    %457 = vmatmul.mubr.f32.gmra.mrb[0].mxu0 %v83
    %v458 = vpop.f32.mrb[0].mxu0
    %v459 = vadd.f32 0.0, %v458
    %v460 = vpop.f32.mrb[0].mxu0
    %v461 = vadd.f32 0.0, %v460
    %462 = vdwg.mxu0
    %v464 = vsel %vm232, %v384, 0
    %v467 = vsel %vm232, %v385, 0
    %469 = vmatprep.subr.mxu0 %v455
    %470 = vmatpush1.msra.mxu0 %v453
    %471 = vmatprep.subr.mxu0 %v461
    %472 = vmatpush1.msra.mxu0 %v459
    %473 = vmatprep.subr.mxu0 0.0
    %474 = vmatpush1.msra.mxu0 0.0
    %475 = vmatprep.subr.mxu0 0.0
    %476 = vmatpush1.msra.mxu0 0.0
    %477 = vmatprep.subr.mxu0 0.0
    %478 = vmatpush1.msra.mxu0 0.0
    %479 = vmatprep.subr.mxu0 0.0
    %480 = vmatpush1.msra.mxu0 0.0
    %481 = vmatprep.subr.mxu0 0.0
    %482 = vmatpush1.msra.mxu0 0.0
    %483 = vmatprep.subr.mxu0 0.0
    %484 = vmatpush1.msra.mxu0 0.0
    %485 = vmatprep.subr.mxu0 0.0
    %486 = vmatpush1.msra.mxu0 0.0
    %487 = vmatprep.subr.mxu0 0.0
    %488 = vmatpush1.msra.mxu0 0.0
    %489 = vmatprep.subr.mxu0 0.0
    %490 = vmatpush1.msra.mxu0 0.0
    %491 = vmatprep.subr.mxu0 0.0
    %492 = vmatpush1.msra.mxu0 0.0
    %493 = vmatprep.subr.mxu0 0.0
    %494 = vmatpush1.msra.mxu0 0.0
    %495 = vmatprep.subr.mxu0 0.0
    %496 = vmatpush1.msra.mxu0 0.0
    %497 = vmatprep.subr.mxu0 0.0
    %498 = vmatpush1.msra.mxu0 0.0
    %499 = vmatprep.subr.mxu0 0.0
    %500 = vmatpush1.msra.mxu0 0.0
    %501 = vmatprep.subr.mxu0 0.0
    %502 = vmatpush1.msra.mxu0 0.0
    %503 = vmatprep.subr.mxu0 0.0
    %504 = vmatpush1.msra.mxu0 0.0
    %505 = vmatprep.subr.mxu0 0.0
    %506 = vmatpush1.msra.mxu0 0.0
    %507 = vmatprep.subr.mxu0 0.0
    %508 = vmatpush1.msra.mxu0 0.0
    %509 = vmatprep.subr.mxu0 0.0
    %510 = vmatpush1.msra.mxu0 0.0
    %511 = vmatprep.subr.mxu0 0.0
    %512 = vmatpush1.msra.mxu0 0.0
    %513 = vmatprep.subr.mxu0 0.0
    %514 = vmatpush1.msra.mxu0 0.0
    %515 = vmatprep.subr.mxu0 0.0
    %516 = vmatpush1.msra.mxu0 0.0
    %517 = vmatprep.subr.mxu0 0.0
    %518 = vmatpush1.msra.mxu0 0.0
    %519 = vmatprep.subr.mxu0 0.0
    %520 = vmatpush1.msra.mxu0 0.0
    %521 = vmatprep.subr.mxu0 0.0
    %522 = vmatpush1.msra.mxu0 0.0
    %523 = vmatprep.subr.mxu0 0.0
    %524 = vmatpush1.msra.mxu0 0.0
    %525 = vmatprep.subr.mxu0 0.0
    %526 = vmatpush1.msra.mxu0 0.0
    %527 = vmatprep.subr.mxu0 0.0
    %528 = vmatpush1.msra.mxu0 0.0
    %529 = vmatprep.subr.mxu0 0.0
    %530 = vmatpush1.msra.mxu0 0.0
    %531 = vmatprep.subr.mxu0 0.0
    %532 = vmatpush1.msra.mxu0 0.0
    %533 = vmatprep.mubr.f32.mxu0 0.0
    %534 = vmatmul.mubr.f32.gmra.mrb[0].mxu0 %v464
    %v535 = vpop.f32.mrb[0].mxu0
    %v536 = vadd.f32 0.0, %v535
    %v537 = vpop.f32.mrb[0].mxu0
    %v538 = vadd.f32 0.0, %v537
    %539 = vmatprep.mubr.f32.mxu0 0.0
    %540 = vmatmul.mubr.f32.gmra.mrb[0].mxu0 %v467
    %v541 = vpop.f32.mrb[0].mxu0
    %v542 = vadd.f32 0.0, %v541
    %v543 = vpop.f32.mrb[0].mxu0
    %v544 = vadd.f32 0.0, %v543
    %545 = vdwg.mxu0
    %v546 = vadd.f32 %v316, %v536
    %v547 = vadd.f32 %v317, %v538
    %v548 = vadd.f32 %v318, %v542
    %v549 = vadd.f32 %v319, %v544
    %v550 = vld [vmem:[#allocation7 + $0x400] sm:$0xff]
    %v551 = vld [vmem:[#allocation7 + $0x408] sm:$0xff]
    %v552 = vld [vmem:[#allocation7 + $0x410] sm:$0xff]
    %v553 = vld [vmem:[#allocation7 + $0x418] sm:$0xff]
    %v554 = vld [vmem:[#allocation7 + $0x420] sm:$0xff]
    %v555 = vld [vmem:[#allocation7 + $0x428] sm:$0xff]
    %v556 = vld [vmem:[#allocation7 + $0x430] sm:$0xff]
    %v557 = vld [vmem:[#allocation7 + $0x438] sm:$0xff]
    %v558 = vld [vmem:[#allocation7 + $0x440] sm:$0xff]
    %v559 = vld [vmem:[#allocation7 + $0x448] sm:$0xff]
    %v560 = vld [vmem:[#allocation7 + $0x450] sm:$0xff]
    %v561 = vld [vmem:[#allocation7 + $0x458] sm:$0xff]
    %v562 = vld [vmem:[#allocation7 + $0x460] sm:$0xff]
    %v563 = vld [vmem:[#allocation7 + $0x468] sm:$0xff]
    %v564 = vld [vmem:[#allocation7 + $0x470] sm:$0xff]
    %v565 = vld [vmem:[#allocation7 + $0x478] sm:$0xff]
    %v566 = vld [vmem:[#allocation7 + $0x480] sm:$0xff]
    %v567 = vld [vmem:[#allocation7 + $0x488] sm:$0xff]
    %v568 = vld [vmem:[#allocation7 + $0x490] sm:$0xff]
    %v569 = vld [vmem:[#allocation7 + $0x498] sm:$0xff]
    %v570 = vld [vmem:[#allocation7 + $0x4a0] sm:$0xff]
    %v571 = vld [vmem:[#allocation7 + $0x4a8] sm:$0xff]
    %v572 = vld [vmem:[#allocation7 + $0x4b0] sm:$0xff]
    %v573 = vld [vmem:[#allocation7 + $0x4b8] sm:$0xff]
    %v574 = vld [vmem:[#allocation7 + $0x4c0] sm:$0xff]
    %v575 = vld [vmem:[#allocation7 + $0x4c8] sm:$0xff]
    %v576 = vld [vmem:[#allocation7 + $0x4d0] sm:$0xff]
    %v577 = vld [vmem:[#allocation7 + $0x4d8] sm:$0xff]
    %v578 = vld [vmem:[#allocation7 + $0x4e0] sm:$0xff]
    %v579 = vld [vmem:[#allocation7 + $0x4e8] sm:$0xff]
    %v580 = vld [vmem:[#allocation7 + $0x4f0] sm:$0xff]
    %v581 = vld [vmem:[#allocation7 + $0x4f8] sm:$0xff]
    %v582 = vld [vmem:[#allocation7 + $0x500] sm:$0xff]
    %v583 = vld [vmem:[#allocation7 + $0x508] sm:$0xff]
    %v584 = vld [vmem:[#allocation7 + $0x510] sm:$0xff]
    %v585 = vld [vmem:[#allocation7 + $0x518] sm:$0xff]
    %v586 = vld [vmem:[#allocation7 + $0x520] sm:$0xff]
    %v587 = vld [vmem:[#allocation7 + $0x528] sm:$0xff]
    %v588 = vld [vmem:[#allocation7 + $0x530] sm:$0xff]
    %v589 = vld [vmem:[#allocation7 + $0x538] sm:$0xff]
    %v590 = vld [vmem:[#allocation7 + $0x540] sm:$0xff]
    %v591 = vld [vmem:[#allocation7 + $0x548] sm:$0xff]
    %v592 = vld [vmem:[#allocation7 + $0x550] sm:$0xff]
    %v593 = vld [vmem:[#allocation7 + $0x558] sm:$0xff]
    %v594 = vld [vmem:[#allocation7 + $0x560] sm:$0xff]
    %v595 = vld [vmem:[#allocation7 + $0x568] sm:$0xff]
    %v596 = vld [vmem:[#allocation7 + $0x570] sm:$0xff]
    %v597 = vld [vmem:[#allocation7 + $0x578] sm:$0xff]
    %v598 = vld [vmem:[#allocation7 + $0x580] sm:$0xff]
    %v599 = vld [vmem:[#allocation7 + $0x588] sm:$0xff]
    %v600 = vld [vmem:[#allocation7 + $0x590] sm:$0xff]
    %v601 = vld [vmem:[#allocation7 + $0x598] sm:$0xff]
    %v602 = vld [vmem:[#allocation7 + $0x5a0] sm:$0xff]
    %v603 = vld [vmem:[#allocation7 + $0x5a8] sm:$0xff]
    %v604 = vld [vmem:[#allocation7 + $0x5b0] sm:$0xff]
    %v605 = vld [vmem:[#allocation7 + $0x5b8] sm:$0xff]
    %v606 = vld [vmem:[#allocation7 + $0x5c0] sm:$0xff]
    %v607 = vld [vmem:[#allocation7 + $0x5c8] sm:$0xff]
    %v608 = vld [vmem:[#allocation7 + $0x5d0] sm:$0xff]
    %v609 = vld [vmem:[#allocation7 + $0x5d8] sm:$0xff]
    %v610 = vld [vmem:[#allocation7 + $0x5e0] sm:$0xff]
    %v611 = vld [vmem:[#allocation7 + $0x5e8] sm:$0xff]
    %v612 = vld [vmem:[#allocation7 + $0x5f0] sm:$0xff]
    %v613 = vld [vmem:[#allocation7 + $0x5f8] sm:$0xff]
    %v614 = vld [vmem:[%s5 + $0x50] sm:$0xff]
    %v615 = vld [vmem:[%s5 + $0x58] sm:$0xff]
    %616 = vmatprep.subr.mxu0 %v551
    %617 = vmatpush1.msra.mxu0 %v550
    %618 = vmatprep.subr.mxu0 %v553
    %619 = vmatpush1.msra.mxu0 %v552
    %620 = vmatprep.subr.mxu0 %v555
    %621 = vmatpush1.msra.mxu0 %v554
    %622 = vmatprep.subr.mxu0 %v557
    %623 = vmatpush1.msra.mxu0 %v556
    %624 = vmatprep.subr.mxu0 %v559
    %625 = vmatpush1.msra.mxu0 %v558
    %626 = vmatprep.subr.mxu0 %v561
    %627 = vmatpush1.msra.mxu0 %v560
    %628 = vmatprep.subr.mxu0 %v563
    %629 = vmatpush1.msra.mxu0 %v562
    %630 = vmatprep.subr.mxu0 %v565
    %631 = vmatpush1.msra.mxu0 %v564
    %632 = vmatprep.subr.mxu0 %v567
    %633 = vmatpush1.msra.mxu0 %v566
    %634 = vmatprep.subr.mxu0 %v569
    %635 = vmatpush1.msra.mxu0 %v568
    %636 = vmatprep.subr.mxu0 %v571
    %637 = vmatpush1.msra.mxu0 %v570
    %638 = vmatprep.subr.mxu0 %v573
    %639 = vmatpush1.msra.mxu0 %v572
    %640 = vmatprep.subr.mxu0 %v575
    %641 = vmatpush1.msra.mxu0 %v574
    %642 = vmatprep.subr.mxu0 %v577
    %643 = vmatpush1.msra.mxu0 %v576
    %644 = vmatprep.subr.mxu0 %v579
    %645 = vmatpush1.msra.mxu0 %v578
    %646 = vmatprep.subr.mxu0 %v581
    %647 = vmatpush1.msra.mxu0 %v580
    %648 = vmatprep.subr.mxu0 %v583
    %649 = vmatpush1.msra.mxu0 %v582
    %650 = vmatprep.subr.mxu0 %v585
    %651 = vmatpush1.msra.mxu0 %v584
    %652 = vmatprep.subr.mxu0 %v587
    %653 = vmatpush1.msra.mxu0 %v586
    %654 = vmatprep.subr.mxu0 %v589
    %655 = vmatpush1.msra.mxu0 %v588
    %656 = vmatprep.subr.mxu0 %v591
    %657 = vmatpush1.msra.mxu0 %v590
    %658 = vmatprep.subr.mxu0 %v593
    %659 = vmatpush1.msra.mxu0 %v592
    %660 = vmatprep.subr.mxu0 %v595
    %661 = vmatpush1.msra.mxu0 %v594
    %662 = vmatprep.subr.mxu0 %v597
    %663 = vmatpush1.msra.mxu0 %v596
    %664 = vmatprep.subr.mxu0 %v599
    %665 = vmatpush1.msra.mxu0 %v598
    %666 = vmatprep.subr.mxu0 %v601
    %667 = vmatpush1.msra.mxu0 %v600
    %668 = vmatprep.subr.mxu0 %v603
    %669 = vmatpush1.msra.mxu0 %v602
    %670 = vmatprep.subr.mxu0 %v605
    %671 = vmatpush1.msra.mxu0 %v604
    %672 = vmatprep.subr.mxu0 %v607
    %673 = vmatpush1.msra.mxu0 %v606
    %674 = vmatprep.subr.mxu0 %v609
    %675 = vmatpush1.msra.mxu0 %v608
    %676 = vmatprep.subr.mxu0 %v611
    %677 = vmatpush1.msra.mxu0 %v610
    %678 = vmatprep.subr.mxu0 %v613
    %679 = vmatpush1.msra.mxu0 %v612
    %680 = vmatprep.mubr.f32.mxu0 %v82
    %681 = vmatmul.mubr.f32.gmra.mrb[0].mxu0 %v81
    %v682 = vpop.f32.mrb[0].mxu0
    %v683 = vadd.f32 0.0, %v682
    %v684 = vpop.f32.mrb[0].mxu0
    %v685 = vadd.f32 0.0, %v684
    %686 = vmatprep.mubr.f32.mxu0 %v84
    %687 = vmatmul.mubr.f32.gmra.mrb[0].mxu0 %v83
    %v688 = vpop.f32.mrb[0].mxu0
    %v689 = vadd.f32 0.0, %v688
    %v690 = vpop.f32.mrb[0].mxu0
    %v691 = vadd.f32 0.0, %v690
    %692 = vdwg.mxu0
    %v694 = vsel %vm232, %v614, 0
    %v697 = vsel %vm232, %v615, 0
    %699 = vmatprep.subr.mxu0 %v685
    %700 = vmatpush1.msra.mxu0 %v683
    %701 = vmatprep.subr.mxu0 %v691
    %702 = vmatpush1.msra.mxu0 %v689
    %703 = vmatprep.subr.mxu0 0.0
    %704 = vmatpush1.msra.mxu0 0.0
    %705 = vmatprep.subr.mxu0 0.0
    %706 = vmatpush1.msra.mxu0 0.0
    %707 = vmatprep.subr.mxu0 0.0
    %708 = vmatpush1.msra.mxu0 0.0
    %709 = vmatprep.subr.mxu0 0.0
    %710 = vmatpush1.msra.mxu0 0.0
    %711 = vmatprep.subr.mxu0 0.0
    %712 = vmatpush1.msra.mxu0 0.0
    %713 = vmatprep.subr.mxu0 0.0
    %714 = vmatpush1.msra.mxu0 0.0
    %715 = vmatprep.subr.mxu0 0.0
    %716 = vmatpush1.msra.mxu0 0.0
    %717 = vmatprep.subr.mxu0 0.0
    %718 = vmatpush1.msra.mxu0 0.0
    %719 = vmatprep.subr.mxu0 0.0
    %720 = vmatpush1.msra.mxu0 0.0
    %721 = vmatprep.subr.mxu0 0.0
    %722 = vmatpush1.msra.mxu0 0.0
    %723 = vmatprep.subr.mxu0 0.0
    %724 = vmatpush1.msra.mxu0 0.0
    %725 = vmatprep.subr.mxu0 0.0
    %726 = vmatpush1.msra.mxu0 0.0
    %727 = vmatprep.subr.mxu0 0.0
    %728 = vmatpush1.msra.mxu0 0.0
    %729 = vmatprep.subr.mxu0 0.0
    %730 = vmatpush1.msra.mxu0 0.0
    %731 = vmatprep.subr.mxu0 0.0
    %732 = vmatpush1.msra.mxu0 0.0
    %733 = vmatprep.subr.mxu0 0.0
    %734 = vmatpush1.msra.mxu0 0.0
    %735 = vmatprep.subr.mxu0 0.0
    %736 = vmatpush1.msra.mxu0 0.0
    %737 = vmatprep.subr.mxu0 0.0
    %738 = vmatpush1.msra.mxu0 0.0
    %739 = vmatprep.subr.mxu0 0.0
    %740 = vmatpush1.msra.mxu0 0.0
    %741 = vmatprep.subr.mxu0 0.0
    %742 = vmatpush1.msra.mxu0 0.0
    %743 = vmatprep.subr.mxu0 0.0
    %744 = vmatpush1.msra.mxu0 0.0
    %745 = vmatprep.subr.mxu0 0.0
    %746 = vmatpush1.msra.mxu0 0.0
    %747 = vmatprep.subr.mxu0 0.0
    %748 = vmatpush1.msra.mxu0 0.0
    %749 = vmatprep.subr.mxu0 0.0
    %750 = vmatpush1.msra.mxu0 0.0
    %751 = vmatprep.subr.mxu0 0.0
    %752 = vmatpush1.msra.mxu0 0.0
    %753 = vmatprep.subr.mxu0 0.0
    %754 = vmatpush1.msra.mxu0 0.0
    %755 = vmatprep.subr.mxu0 0.0
    %756 = vmatpush1.msra.mxu0 0.0
    %757 = vmatprep.subr.mxu0 0.0
    %758 = vmatpush1.msra.mxu0 0.0
    %759 = vmatprep.subr.mxu0 0.0
    %760 = vmatpush1.msra.mxu0 0.0
    %761 = vmatprep.subr.mxu0 0.0
    %762 = vmatpush1.msra.mxu0 0.0
    %763 = vmatprep.mubr.f32.mxu0 0.0
    %764 = vmatmul.mubr.f32.gmra.mrb[0].mxu0 %v694
    %v765 = vpop.f32.mrb[0].mxu0
    %v766 = vadd.f32 0.0, %v765
    %v767 = vpop.f32.mrb[0].mxu0
    %v768 = vadd.f32 0.0, %v767
    %769 = vmatprep.mubr.f32.mxu0 0.0
    %770 = vmatmul.mubr.f32.gmra.mrb[0].mxu0 %v697
    %v771 = vpop.f32.mrb[0].mxu0
    %v772 = vadd.f32 0.0, %v771
    %v773 = vpop.f32.mrb[0].mxu0
    %v774 = vadd.f32 0.0, %v773
    %775 = vdwg.mxu0
    %v776 = vadd.f32 %v546, %v766
    %v777 = vadd.f32 %v547, %v768
    %v778 = vadd.f32 %v548, %v772
    %v779 = vadd.f32 %v549, %v774
    %v780 = vld [vmem:[#allocation7 + $0x600] sm:$0xff]
    %v781 = vld [vmem:[#allocation7 + $0x608] sm:$0xff]
    %v782 = vld [vmem:[#allocation7 + $0x610] sm:$0xff]
    %v783 = vld [vmem:[#allocation7 + $0x618] sm:$0xff]
    %v784 = vld [vmem:[#allocation7 + $0x620] sm:$0xff]
    %v785 = vld [vmem:[#allocation7 + $0x628] sm:$0xff]
    %v786 = vld [vmem:[#allocation7 + $0x630] sm:$0xff]
    %v787 = vld [vmem:[#allocation7 + $0x638] sm:$0xff]
    %v788 = vld [vmem:[#allocation7 + $0x640] sm:$0xff]
    %v789 = vld [vmem:[#allocation7 + $0x648] sm:$0xff]
    %v790 = vld [vmem:[#allocation7 + $0x650] sm:$0xff]
    %v791 = vld [vmem:[#allocation7 + $0x658] sm:$0xff]
    %v792 = vld [vmem:[#allocation7 + $0x660] sm:$0xff]
    %v793 = vld [vmem:[#allocation7 + $0x668] sm:$0xff]
    %v794 = vld [vmem:[#allocation7 + $0x670] sm:$0xff]
    %v795 = vld [vmem:[#allocation7 + $0x678] sm:$0xff]
    %v796 = vld [vmem:[#allocation7 + $0x680] sm:$0xff]
    %v797 = vld [vmem:[#allocation7 + $0x688] sm:$0xff]
    %v798 = vld [vmem:[#allocation7 + $0x690] sm:$0xff]
    %v799 = vld [vmem:[#allocation7 + $0x698] sm:$0xff]
    %v800 = vld [vmem:[#allocation7 + $0x6a0] sm:$0xff]
    %v801 = vld [vmem:[#allocation7 + $0x6a8] sm:$0xff]
    %v802 = vld [vmem:[#allocation7 + $0x6b0] sm:$0xff]
    %v803 = vld [vmem:[#allocation7 + $0x6b8] sm:$0xff]
    %v804 = vld [vmem:[#allocation7 + $0x6c0] sm:$0xff]
    %v805 = vld [vmem:[#allocation7 + $0x6c8] sm:$0xff]
    %v806 = vld [vmem:[#allocation7 + $0x6d0] sm:$0xff]
    %v807 = vld [vmem:[#allocation7 + $0x6d8] sm:$0xff]
    %v808 = vld [vmem:[#allocation7 + $0x6e0] sm:$0xff]
    %v809 = vld [vmem:[#allocation7 + $0x6e8] sm:$0xff]
    %v810 = vld [vmem:[#allocation7 + $0x6f0] sm:$0xff]
    %v811 = vld [vmem:[#allocation7 + $0x6f8] sm:$0xff]
    %v812 = vld [vmem:[#allocation7 + $0x700] sm:$0xff]
    %v813 = vld [vmem:[#allocation7 + $0x708] sm:$0xff]
    %v814 = vld [vmem:[#allocation7 + $0x710] sm:$0xff]
    %v815 = vld [vmem:[#allocation7 + $0x718] sm:$0xff]
    %v816 = vld [vmem:[#allocation7 + $0x720] sm:$0xff]
    %v817 = vld [vmem:[#allocation7 + $0x728] sm:$0xff]
    %v818 = vld [vmem:[#allocation7 + $0x730] sm:$0xff]
    %v819 = vld [vmem:[#allocation7 + $0x738] sm:$0xff]
    %v820 = vld [vmem:[#allocation7 + $0x740] sm:$0xff]
    %v821 = vld [vmem:[#allocation7 + $0x748] sm:$0xff]
    %v822 = vld [vmem:[#allocation7 + $0x750] sm:$0xff]
    %v823 = vld [vmem:[#allocation7 + $0x758] sm:$0xff]
    %v824 = vld [vmem:[#allocation7 + $0x760] sm:$0xff]
    %v825 = vld [vmem:[#allocation7 + $0x768] sm:$0xff]
    %v826 = vld [vmem:[#allocation7 + $0x770] sm:$0xff]
    %v827 = vld [vmem:[#allocation7 + $0x778] sm:$0xff]
    %v828 = vld [vmem:[#allocation7 + $0x780] sm:$0xff]
    %v829 = vld [vmem:[#allocation7 + $0x788] sm:$0xff]
    %v830 = vld [vmem:[#allocation7 + $0x790] sm:$0xff]
    %v831 = vld [vmem:[#allocation7 + $0x798] sm:$0xff]
    %v832 = vld [vmem:[#allocation7 + $0x7a0] sm:$0xff]
    %v833 = vld [vmem:[#allocation7 + $0x7a8] sm:$0xff]
    %v834 = vld [vmem:[#allocation7 + $0x7b0] sm:$0xff]
    %v835 = vld [vmem:[#allocation7 + $0x7b8] sm:$0xff]
    %v836 = vld [vmem:[#allocation7 + $0x7c0] sm:$0xff]
    %v837 = vld [vmem:[#allocation7 + $0x7c8] sm:$0xff]
    %v838 = vld [vmem:[#allocation7 + $0x7d0] sm:$0xff]
    %v839 = vld [vmem:[#allocation7 + $0x7d8] sm:$0xff]
    %v840 = vld [vmem:[#allocation7 + $0x7e0] sm:$0xff]
    %v841 = vld [vmem:[#allocation7 + $0x7e8] sm:$0xff]
    %v842 = vld [vmem:[#allocation7 + $0x7f0] sm:$0xff]
    %v843 = vld [vmem:[#allocation7 + $0x7f8] sm:$0xff]
    %v844 = vld [vmem:[%s5 + $0x60] sm:$0xff]
    %v845 = vld [vmem:[%s5 + $0x68] sm:$0xff]
    %846 = vmatprep.subr.mxu0 %v781
    %847 = vmatpush1.msra.mxu0 %v780
    %848 = vmatprep.subr.mxu0 %v783
    %849 = vmatpush1.msra.mxu0 %v782
    %850 = vmatprep.subr.mxu0 %v785
    %851 = vmatpush1.msra.mxu0 %v784
    %852 = vmatprep.subr.mxu0 %v787
    %853 = vmatpush1.msra.mxu0 %v786
    %854 = vmatprep.subr.mxu0 %v789
    %855 = vmatpush1.msra.mxu0 %v788
    %856 = vmatprep.subr.mxu0 %v791
    %857 = vmatpush1.msra.mxu0 %v790
    %858 = vmatprep.subr.mxu0 %v793
    %859 = vmatpush1.msra.mxu0 %v792
    %860 = vmatprep.subr.mxu0 %v795
    %861 = vmatpush1.msra.mxu0 %v794
    %862 = vmatprep.subr.mxu0 %v797
    %863 = vmatpush1.msra.mxu0 %v796
    %864 = vmatprep.subr.mxu0 %v799
    %865 = vmatpush1.msra.mxu0 %v798
    %866 = vmatprep.subr.mxu0 %v801
    %867 = vmatpush1.msra.mxu0 %v800
    %868 = vmatprep.subr.mxu0 %v803
    %869 = vmatpush1.msra.mxu0 %v802
    %870 = vmatprep.subr.mxu0 %v805
    %871 = vmatpush1.msra.mxu0 %v804
    %872 = vmatprep.subr.mxu0 %v807
    %873 = vmatpush1.msra.mxu0 %v806
    %874 = vmatprep.subr.mxu0 %v809
    %875 = vmatpush1.msra.mxu0 %v808
    %876 = vmatprep.subr.mxu0 %v811
    %877 = vmatpush1.msra.mxu0 %v810
    %878 = vmatprep.subr.mxu0 %v813
    %879 = vmatpush1.msra.mxu0 %v812
    %880 = vmatprep.subr.mxu0 %v815
    %881 = vmatpush1.msra.mxu0 %v814
    %882 = vmatprep.subr.mxu0 %v817
    %883 = vmatpush1.msra.mxu0 %v816
    %884 = vmatprep.subr.mxu0 %v819
    %885 = vmatpush1.msra.mxu0 %v818
    %886 = vmatprep.subr.mxu0 %v821
    %887 = vmatpush1.msra.mxu0 %v820
    %888 = vmatprep.subr.mxu0 %v823
    %889 = vmatpush1.msra.mxu0 %v822
    %890 = vmatprep.subr.mxu0 %v825
    %891 = vmatpush1.msra.mxu0 %v824
    %892 = vmatprep.subr.mxu0 %v827
    %893 = vmatpush1.msra.mxu0 %v826
    %894 = vmatprep.subr.mxu0 %v829
    %895 = vmatpush1.msra.mxu0 %v828
    %896 = vmatprep.subr.mxu0 %v831
    %897 = vmatpush1.msra.mxu0 %v830
    %898 = vmatprep.subr.mxu0 %v833
    %899 = vmatpush1.msra.mxu0 %v832
    %900 = vmatprep.subr.mxu0 %v835
    %901 = vmatpush1.msra.mxu0 %v834
    %902 = vmatprep.subr.mxu0 %v837
    %903 = vmatpush1.msra.mxu0 %v836
    %904 = vmatprep.subr.mxu0 %v839
    %905 = vmatpush1.msra.mxu0 %v838
    %906 = vmatprep.subr.mxu0 %v841
    %907 = vmatpush1.msra.mxu0 %v840
    %908 = vmatprep.subr.mxu0 %v843
    %909 = vmatpush1.msra.mxu0 %v842
    %910 = vmatprep.mubr.f32.mxu0 %v82
    %911 = vmatmul.mubr.f32.gmra.mrb[0].mxu0 %v81
    %v912 = vpop.f32.mrb[0].mxu0
    %v913 = vadd.f32 0.0, %v912
    %v914 = vpop.f32.mrb[0].mxu0
    %v915 = vadd.f32 0.0, %v914
    %916 = vmatprep.mubr.f32.mxu0 %v84
    %917 = vmatmul.mubr.f32.gmra.mrb[0].mxu0 %v83
    %v918 = vpop.f32.mrb[0].mxu0
    %v919 = vadd.f32 0.0, %v918
    %v920 = vpop.f32.mrb[0].mxu0
    %v921 = vadd.f32 0.0, %v920
    %922 = vdwg.mxu0
    %v924 = vsel %vm232, %v844, 0
    %v927 = vsel %vm232, %v845, 0
    %929 = vmatprep.subr.mxu0 %v915
    %930 = vmatpush1.msra.mxu0 %v913
    %931 = vmatprep.subr.mxu0 %v921
    %932 = vmatpush1.msra.mxu0 %v919
    %933 = vmatprep.subr.mxu0 0.0
    %934 = vmatpush1.msra.mxu0 0.0
    %935 = vmatprep.subr.mxu0 0.0
    %936 = vmatpush1.msra.mxu0 0.0
    %937 = vmatprep.subr.mxu0 0.0
    %938 = vmatpush1.msra.mxu0 0.0
    %939 = vmatprep.subr.mxu0 0.0
    %940 = vmatpush1.msra.mxu0 0.0
    %941 = vmatprep.subr.mxu0 0.0
    %942 = vmatpush1.msra.mxu0 0.0
    %943 = vmatprep.subr.mxu0 0.0
    %944 = vmatpush1.msra.mxu0 0.0
    %945 = vmatprep.subr.mxu0 0.0
    %946 = vmatpush1.msra.mxu0 0.0
    %947 = vmatprep.subr.mxu0 0.0
    %948 = vmatpush1.msra.mxu0 0.0
    %949 = vmatprep.subr.mxu0 0.0
    %950 = vmatpush1.msra.mxu0 0.0
    %951 = vmatprep.subr.mxu0 0.0
    %952 = vmatpush1.msra.mxu0 0.0
    %953 = vmatprep.subr.mxu0 0.0
    %954 = vmatpush1.msra.mxu0 0.0
    %955 = vmatprep.subr.mxu0 0.0
    %956 = vmatpush1.msra.mxu0 0.0
    %957 = vmatprep.subr.mxu0 0.0
    %958 = vmatpush1.msra.mxu0 0.0
    %959 = vmatprep.subr.mxu0 0.0
    %960 = vmatpush1.msra.mxu0 0.0
    %961 = vmatprep.subr.mxu0 0.0
    %962 = vmatpush1.msra.mxu0 0.0
    %963 = vmatprep.subr.mxu0 0.0
    %964 = vmatpush1.msra.mxu0 0.0
    %965 = vmatprep.subr.mxu0 0.0
    %966 = vmatpush1.msra.mxu0 0.0
    %967 = vmatprep.subr.mxu0 0.0
    %968 = vmatpush1.msra.mxu0 0.0
    %969 = vmatprep.subr.mxu0 0.0
    %970 = vmatpush1.msra.mxu0 0.0
    %971 = vmatprep.subr.mxu0 0.0
    %972 = vmatpush1.msra.mxu0 0.0
    %973 = vmatprep.subr.mxu0 0.0
    %974 = vmatpush1.msra.mxu0 0.0
    %975 = vmatprep.subr.mxu0 0.0
    %976 = vmatpush1.msra.mxu0 0.0
    %977 = vmatprep.subr.mxu0 0.0
    %978 = vmatpush1.msra.mxu0 0.0
    %979 = vmatprep.subr.mxu0 0.0
    %980 = vmatpush1.msra.mxu0 0.0
    %981 = vmatprep.subr.mxu0 0.0
    %982 = vmatpush1.msra.mxu0 0.0
    %983 = vmatprep.subr.mxu0 0.0
    %984 = vmatpush1.msra.mxu0 0.0
    %985 = vmatprep.subr.mxu0 0.0
    %986 = vmatpush1.msra.mxu0 0.0
    %987 = vmatprep.subr.mxu0 0.0
    %988 = vmatpush1.msra.mxu0 0.0
    %989 = vmatprep.subr.mxu0 0.0
    %990 = vmatpush1.msra.mxu0 0.0
    %991 = vmatprep.subr.mxu0 0.0
    %992 = vmatpush1.msra.mxu0 0.0
    %993 = vmatprep.mubr.f32.mxu0 0.0
    %994 = vmatmul.mubr.f32.gmra.mrb[0].mxu0 %v924
    %v995 = vpop.f32.mrb[0].mxu0
    %v996 = vadd.f32 0.0, %v995
    %v997 = vpop.f32.mrb[0].mxu0
    %v998 = vadd.f32 0.0, %v997
    %999 = vmatprep.mubr.f32.mxu0 0.0
    %1000 = vmatmul.mubr.f32.gmra.mrb[0].mxu0 %v927
    %v1001 = vpop.f32.mrb[0].mxu0
    %v1002 = vadd.f32 0.0, %v1001
    %v1003 = vpop.f32.mrb[0].mxu0
    %v1004 = vadd.f32 0.0, %v1003
    %1005 = vdwg.mxu0
    %v1006 = vadd.f32 %v776, %v996
    %v1007 = vadd.f32 %v777, %v998
    %v1008 = vadd.f32 %v778, %v1002
    %v1009 = vadd.f32 %v779, %v1004
    %v1010 = vld [vmem:[#allocation7 + $0x800] sm:$0xff]
    %v1011 = vld [vmem:[#allocation7 + $0x808] sm:$0xff]
    %v1012 = vld [vmem:[#allocation7 + $0x810] sm:$0xff]
    %v1013 = vld [vmem:[#allocation7 + $0x818] sm:$0xff]
    %v1014 = vld [vmem:[#allocation7 + $0x820] sm:$0xff]
    %v1015 = vld [vmem:[#allocation7 + $0x828] sm:$0xff]
    %v1016 = vld [vmem:[#allocation7 + $0x830] sm:$0xff]
    %v1017 = vld [vmem:[#allocation7 + $0x838] sm:$0xff]
    %v1018 = vld [vmem:[#allocation7 + $0x840] sm:$0xff]
    %v1019 = vld [vmem:[#allocation7 + $0x848] sm:$0xff]
    %v1020 = vld [vmem:[#allocation7 + $0x850] sm:$0xff]
    %v1021 = vld [vmem:[#allocation7 + $0x858] sm:$0xff]
    %v1022 = vld [vmem:[#allocation7 + $0x860] sm:$0xff]
    %v1023 = vld [vmem:[#allocation7 + $0x868] sm:$0xff]
    %v1024 = vld [vmem:[#allocation7 + $0x870] sm:$0xff]
    %v1025 = vld [vmem:[#allocation7 + $0x878] sm:$0xff]
    %v1026 = vld [vmem:[#allocation7 + $0x880] sm:$0xff]
    %v1027 = vld [vmem:[#allocation7 + $0x888] sm:$0xff]
    %v1028 = vld [vmem:[#allocation7 + $0x890] sm:$0xff]
    %v1029 = vld [vmem:[#allocation7 + $0x898] sm:$0xff]
    %v1030 = vld [vmem:[#allocation7 + $0x8a0] sm:$0xff]
    %v1031 = vld [vmem:[#allocation7 + $0x8a8] sm:$0xff]
    %v1032 = vld [vmem:[#allocation7 + $0x8b0] sm:$0xff]
    %v1033 = vld [vmem:[#allocation7 + $0x8b8] sm:$0xff]
    %v1034 = vld [vmem:[#allocation7 + $0x8c0] sm:$0xff]
    %v1035 = vld [vmem:[#allocation7 + $0x8c8] sm:$0xff]
    %v1036 = vld [vmem:[#allocation7 + $0x8d0] sm:$0xff]
    %v1037 = vld [vmem:[#allocation7 + $0x8d8] sm:$0xff]
    %v1038 = vld [vmem:[#allocation7 + $0x8e0] sm:$0xff]
    %v1039 = vld [vmem:[#allocation7 + $0x8e8] sm:$0xff]
    %v1040 = vld [vmem:[#allocation7 + $0x8f0] sm:$0xff]
    %v1041 = vld [vmem:[#allocation7 + $0x8f8] sm:$0xff]
    %v1042 = vld [vmem:[#allocation7 + $0x900] sm:$0xff]
    %v1043 = vld [vmem:[#allocation7 + $0x908] sm:$0xff]
    %v1044 = vld [vmem:[#allocation7 + $0x910] sm:$0xff]
    %v1045 = vld [vmem:[#allocation7 + $0x918] sm:$0xff]
    %v1046 = vld [vmem:[#allocation7 + $0x920] sm:$0xff]
    %v1047 = vld [vmem:[#allocation7 + $0x928] sm:$0xff]
    %v1048 = vld [vmem:[#allocation7 + $0x930] sm:$0xff]
    %v1049 = vld [vmem:[#allocation7 + $0x938] sm:$0xff]
    %v1050 = vld [vmem:[#allocation7 + $0x940] sm:$0xff]
    %v1051 = vld [vmem:[#allocation7 + $0x948] sm:$0xff]
    %v1052 = vld [vmem:[#allocation7 + $0x950] sm:$0xff]
    %v1053 = vld [vmem:[#allocation7 + $0x958] sm:$0xff]
    %v1054 = vld [vmem:[#allocation7 + $0x960] sm:$0xff]
    %v1055 = vld [vmem:[#allocation7 + $0x968] sm:$0xff]
    %v1056 = vld [vmem:[#allocation7 + $0x970] sm:$0xff]
    %v1057 = vld [vmem:[#allocation7 + $0x978] sm:$0xff]
    %v1058 = vld [vmem:[#allocation7 + $0x980] sm:$0xff]
    %v1059 = vld [vmem:[#allocation7 + $0x988] sm:$0xff]
    %v1060 = vld [vmem:[#allocation7 + $0x990] sm:$0xff]
    %v1061 = vld [vmem:[#allocation7 + $0x998] sm:$0xff]
    %v1062 = vld [vmem:[#allocation7 + $0x9a0] sm:$0xff]
    %v1063 = vld [vmem:[#allocation7 + $0x9a8] sm:$0xff]
    %v1064 = vld [vmem:[#allocation7 + $0x9b0] sm:$0xff]
    %v1065 = vld [vmem:[#allocation7 + $0x9b8] sm:$0xff]
    %v1066 = vld [vmem:[#allocation7 + $0x9c0] sm:$0xff]
    %v1067 = vld [vmem:[#allocation7 + $0x9c8] sm:$0xff]
    %v1068 = vld [vmem:[#allocation7 + $0x9d0] sm:$0xff]
    %v1069 = vld [vmem:[#allocation7 + $0x9d8] sm:$0xff]
    %v1070 = vld [vmem:[#allocation7 + $0x9e0] sm:$0xff]
    %v1071 = vld [vmem:[#allocation7 + $0x9e8] sm:$0xff]
    %v1072 = vld [vmem:[#allocation7 + $0x9f0] sm:$0xff]
    %v1073 = vld [vmem:[#allocation7 + $0x9f8] sm:$0xff]
    %v1074 = vld [vmem:[%s5 + $0x70] sm:$0xff]
    %v1075 = vld [vmem:[%s5 + $0x78] sm:$0xff]
    %1076 = vmatprep.subr.mxu0 %v1011
    %1077 = vmatpush1.msra.mxu0 %v1010
    %1078 = vmatprep.subr.mxu0 %v1013
    %1079 = vmatpush1.msra.mxu0 %v1012
    %1080 = vmatprep.subr.mxu0 %v1015
    %1081 = vmatpush1.msra.mxu0 %v1014
    %1082 = vmatprep.subr.mxu0 %v1017
    %1083 = vmatpush1.msra.mxu0 %v1016
    %1084 = vmatprep.subr.mxu0 %v1019
    %1085 = vmatpush1.msra.mxu0 %v1018
    %1086 = vmatprep.subr.mxu0 %v1021
    %1087 = vmatpush1.msra.mxu0 %v1020
    %1088 = vmatprep.subr.mxu0 %v1023
    %1089 = vmatpush1.msra.mxu0 %v1022
    %1090 = vmatprep.subr.mxu0 %v1025
    %1091 = vmatpush1.msra.mxu0 %v1024
    %1092 = vmatprep.subr.mxu0 %v1027
    %1093 = vmatpush1.msra.mxu0 %v1026
    %1094 = vmatprep.subr.mxu0 %v1029
    %1095 = vmatpush1.msra.mxu0 %v1028
    %1096 = vmatprep.subr.mxu0 %v1031
    %1097 = vmatpush1.msra.mxu0 %v1030
    %1098 = vmatprep.subr.mxu0 %v1033
    %1099 = vmatpush1.msra.mxu0 %v1032
    %1100 = vmatprep.subr.mxu0 %v1035
    %1101 = vmatpush1.msra.mxu0 %v1034
    %1102 = vmatprep.subr.mxu0 %v1037
    %1103 = vmatpush1.msra.mxu0 %v1036
    %1104 = vmatprep.subr.mxu0 %v1039
    %1105 = vmatpush1.msra.mxu0 %v1038
    %1106 = vmatprep.subr.mxu0 %v1041
    %1107 = vmatpush1.msra.mxu0 %v1040
    %1108 = vmatprep.subr.mxu0 %v1043
    %1109 = vmatpush1.msra.mxu0 %v1042
    %1110 = vmatprep.subr.mxu0 %v1045
    %1111 = vmatpush1.msra.mxu0 %v1044
    %1112 = vmatprep.subr.mxu0 %v1047
    %1113 = vmatpush1.msra.mxu0 %v1046
    %1114 = vmatprep.subr.mxu0 %v1049
    %1115 = vmatpush1.msra.mxu0 %v1048
    %1116 = vmatprep.subr.mxu0 %v1051
    %1117 = vmatpush1.msra.mxu0 %v1050
    %1118 = vmatprep.subr.mxu0 %v1053
    %1119 = vmatpush1.msra.mxu0 %v1052
    %1120 = vmatprep.subr.mxu0 %v1055
    %1121 = vmatpush1.msra.mxu0 %v1054
    %1122 = vmatprep.subr.mxu0 %v1057
    %1123 = vmatpush1.msra.mxu0 %v1056
    %1124 = vmatprep.subr.mxu0 %v1059
    %1125 = vmatpush1.msra.mxu0 %v1058
    %1126 = vmatprep.subr.mxu0 %v1061
    %1127 = vmatpush1.msra.mxu0 %v1060
    %1128 = vmatprep.subr.mxu0 %v1063
    %1129 = vmatpush1.msra.mxu0 %v1062
    %1130 = vmatprep.subr.mxu0 %v1065
    %1131 = vmatpush1.msra.mxu0 %v1064
    %1132 = vmatprep.subr.mxu0 %v1067
    %1133 = vmatpush1.msra.mxu0 %v1066
    %1134 = vmatprep.subr.mxu0 %v1069
    %1135 = vmatpush1.msra.mxu0 %v1068
    %1136 = vmatprep.subr.mxu0 %v1071
    %1137 = vmatpush1.msra.mxu0 %v1070
    %1138 = vmatprep.subr.mxu0 %v1073
    %1139 = vmatpush1.msra.mxu0 %v1072
    %1140 = vmatprep.mubr.f32.mxu0 %v82
    %1141 = vmatmul.mubr.f32.gmra.mrb[0].mxu0 %v81
    %v1142 = vpop.f32.mrb[0].mxu0
    %v1143 = vadd.f32 0.0, %v1142
    %v1144 = vpop.f32.mrb[0].mxu0
    %v1145 = vadd.f32 0.0, %v1144
    %1146 = vmatprep.mubr.f32.mxu0 %v84
    %1147 = vmatmul.mubr.f32.gmra.mrb[0].mxu0 %v83
    %v1148 = vpop.f32.mrb[0].mxu0
    %v1149 = vadd.f32 0.0, %v1148
    %v1150 = vpop.f32.mrb[0].mxu0
    %v1151 = vadd.f32 0.0, %v1150
    %1152 = vdwg.mxu0
    %v1154 = vsel %vm232, %v1074, 0
    %v1157 = vsel %vm232, %v1075, 0
    %1159 = vmatprep.subr.mxu0 %v1145
    %1160 = vmatpush1.msra.mxu0 %v1143
    %1161 = vmatprep.subr.mxu0 %v1151
    %1162 = vmatpush1.msra.mxu0 %v1149
    %1163 = vmatprep.subr.mxu0 0.0
    %1164 = vmatpush1.msra.mxu0 0.0
    %1165 = vmatprep.subr.mxu0 0.0
    %1166 = vmatpush1.msra.mxu0 0.0
    %1167 = vmatprep.subr.mxu0 0.0
    %1168 = vmatpush1.msra.mxu0 0.0
    %1169 = vmatprep.subr.mxu0 0.0
    %1170 = vmatpush1.msra.mxu0 0.0
    %1171 = vmatprep.subr.mxu0 0.0
    %1172 = vmatpush1.msra.mxu0 0.0
    %1173 = vmatprep.subr.mxu0 0.0
    %1174 = vmatpush1.msra.mxu0 0.0
    %1175 = vmatprep.subr.mxu0 0.0
    %1176 = vmatpush1.msra.mxu0 0.0
    %1177 = vmatprep.subr.mxu0 0.0
    %1178 = vmatpush1.msra.mxu0 0.0
    %1179 = vmatprep.subr.mxu0 0.0
    %1180 = vmatpush1.msra.mxu0 0.0
    %1181 = vmatprep.subr.mxu0 0.0
    %1182 = vmatpush1.msra.mxu0 0.0
    %1183 = vmatprep.subr.mxu0 0.0
    %1184 = vmatpush1.msra.mxu0 0.0
    %1185 = vmatprep.subr.mxu0 0.0
    %1186 = vmatpush1.msra.mxu0 0.0
    %1187 = vmatprep.subr.mxu0 0.0
    %1188 = vmatpush1.msra.mxu0 0.0
    %1189 = vmatprep.subr.mxu0 0.0
    %1190 = vmatpush1.msra.mxu0 0.0
    %1191 = vmatprep.subr.mxu0 0.0
    %1192 = vmatpush1.msra.mxu0 0.0
    %1193 = vmatprep.subr.mxu0 0.0
    %1194 = vmatpush1.msra.mxu0 0.0
    %1195 = vmatprep.subr.mxu0 0.0
    %1196 = vmatpush1.msra.mxu0 0.0
    %1197 = vmatprep.subr.mxu0 0.0
    %1198 = vmatpush1.msra.mxu0 0.0
    %1199 = vmatprep.subr.mxu0 0.0
    %1200 = vmatpush1.msra.mxu0 0.0
    %1201 = vmatprep.subr.mxu0 0.0
    %1202 = vmatpush1.msra.mxu0 0.0
    %1203 = vmatprep.subr.mxu0 0.0
    %1204 = vmatpush1.msra.mxu0 0.0
    %1205 = vmatprep.subr.mxu0 0.0
    %1206 = vmatpush1.msra.mxu0 0.0
    %1207 = vmatprep.subr.mxu0 0.0
    %1208 = vmatpush1.msra.mxu0 0.0
    %1209 = vmatprep.subr.mxu0 0.0
    %1210 = vmatpush1.msra.mxu0 0.0
    %1211 = vmatprep.subr.mxu0 0.0
    %1212 = vmatpush1.msra.mxu0 0.0
    %1213 = vmatprep.subr.mxu0 0.0
    %1214 = vmatpush1.msra.mxu0 0.0
    %1215 = vmatprep.subr.mxu0 0.0
    %1216 = vmatpush1.msra.mxu0 0.0
    %1217 = vmatprep.subr.mxu0 0.0
    %1218 = vmatpush1.msra.mxu0 0.0
    %1219 = vmatprep.subr.mxu0 0.0
    %1220 = vmatpush1.msra.mxu0 0.0
    %1221 = vmatprep.subr.mxu0 0.0
    %1222 = vmatpush1.msra.mxu0 0.0
    %1223 = vmatprep.mubr.f32.mxu0 0.0
    %1224 = vmatmul.mubr.f32.gmra.mrb[0].mxu0 %v1154
    %v1225 = vpop.f32.mrb[0].mxu0
    %v1226 = vadd.f32 0.0, %v1225
    %v1227 = vpop.f32.mrb[0].mxu0
    %v1228 = vadd.f32 0.0, %v1227
    %1229 = vmatprep.mubr.f32.mxu0 0.0
    %1230 = vmatmul.mubr.f32.gmra.mrb[0].mxu0 %v1157
    %v1231 = vpop.f32.mrb[0].mxu0
    %v1232 = vadd.f32 0.0, %v1231
    %v1233 = vpop.f32.mrb[0].mxu0
    %v1234 = vadd.f32 0.0, %v1233
    %1235 = vdwg.mxu0
    %v1236 = vadd.f32 %v1006, %v1226
    %v1237 = vadd.f32 %v1007, %v1228
    %v1238 = vadd.f32 %v1008, %v1232
    %v1239 = vadd.f32 %v1009, %v1234
    %v1240 = vld [vmem:[#allocation7 + $0xa00] sm:$0xff]
    %v1241 = vld [vmem:[#allocation7 + $0xa08] sm:$0xff]
    %v1242 = vld [vmem:[#allocation7 + $0xa10] sm:$0xff]
    %v1243 = vld [vmem:[#allocation7 + $0xa18] sm:$0xff]
    %v1244 = vld [vmem:[#allocation7 + $0xa20] sm:$0xff]
    %v1245 = vld [vmem:[#allocation7 + $0xa28] sm:$0xff]
    %v1246 = vld [vmem:[#allocation7 + $0xa30] sm:$0xff]
    %v1247 = vld [vmem:[#allocation7 + $0xa38] sm:$0xff]
    %v1248 = vld [vmem:[#allocation7 + $0xa40] sm:$0xff]
    %v1249 = vld [vmem:[#allocation7 + $0xa48] sm:$0xff]
    %v1250 = vld [vmem:[#allocation7 + $0xa50] sm:$0xff]
    %v1251 = vld [vmem:[#allocation7 + $0xa58] sm:$0xff]
    %v1252 = vld [vmem:[#allocation7 + $0xa60] sm:$0xff]
    %v1253 = vld [vmem:[#allocation7 + $0xa68] sm:$0xff]
    %v1254 = vld [vmem:[#allocation7 + $0xa70] sm:$0xff]
    %v1255 = vld [vmem:[#allocation7 + $0xa78] sm:$0xff]
    %v1256 = vld [vmem:[#allocation7 + $0xa80] sm:$0xff]
    %v1257 = vld [vmem:[#allocation7 + $0xa88] sm:$0xff]
    %v1258 = vld [vmem:[#allocation7 + $0xa90] sm:$0xff]
    %v1259 = vld [vmem:[#allocation7 + $0xa98] sm:$0xff]
    %v1260 = vld [vmem:[#allocation7 + $0xaa0] sm:$0xff]
    %v1261 = vld [vmem:[#allocation7 + $0xaa8] sm:$0xff]
    %v1262 = vld [vmem:[#allocation7 + $0xab0] sm:$0xff]
    %v1263 = vld [vmem:[#allocation7 + $0xab8] sm:$0xff]
    %v1264 = vld [vmem:[#allocation7 + $0xac0] sm:$0xff]
    %v1265 = vld [vmem:[#allocation7 + $0xac8] sm:$0xff]
    %v1266 = vld [vmem:[#allocation7 + $0xad0] sm:$0xff]
    %v1267 = vld [vmem:[#allocation7 + $0xad8] sm:$0xff]
    %v1268 = vld [vmem:[#allocation7 + $0xae0] sm:$0xff]
    %v1269 = vld [vmem:[#allocation7 + $0xae8] sm:$0xff]
    %v1270 = vld [vmem:[#allocation7 + $0xaf0] sm:$0xff]
    %v1271 = vld [vmem:[#allocation7 + $0xaf8] sm:$0xff]
    %v1272 = vld [vmem:[#allocation7 + $0xb00] sm:$0xff]
    %v1273 = vld [vmem:[#allocation7 + $0xb08] sm:$0xff]
    %v1274 = vld [vmem:[#allocation7 + $0xb10] sm:$0xff]
    %v1275 = vld [vmem:[#allocation7 + $0xb18] sm:$0xff]
    %v1276 = vld [vmem:[#allocation7 + $0xb20] sm:$0xff]
    %v1277 = vld [vmem:[#allocation7 + $0xb28] sm:$0xff]
    %v1278 = vld [vmem:[#allocation7 + $0xb30] sm:$0xff]
    %v1279 = vld [vmem:[#allocation7 + $0xb38] sm:$0xff]
    %v1280 = vld [vmem:[#allocation7 + $0xb40] sm:$0xff]
    %v1281 = vld [vmem:[#allocation7 + $0xb48] sm:$0xff]
    %v1282 = vld [vmem:[#allocation7 + $0xb50] sm:$0xff]
    %v1283 = vld [vmem:[#allocation7 + $0xb58] sm:$0xff]
    %v1284 = vld [vmem:[#allocation7 + $0xb60] sm:$0xff]
    %v1285 = vld [vmem:[#allocation7 + $0xb68] sm:$0xff]
    %v1286 = vld [vmem:[#allocation7 + $0xb70] sm:$0xff]
    %v1287 = vld [vmem:[#allocation7 + $0xb78] sm:$0xff]
    %v1288 = vld [vmem:[#allocation7 + $0xb80] sm:$0xff]
    %v1289 = vld [vmem:[#allocation7 + $0xb88] sm:$0xff]
    %v1290 = vld [vmem:[#allocation7 + $0xb90] sm:$0xff]
    %v1291 = vld [vmem:[#allocation7 + $0xb98] sm:$0xff]
    %v1292 = vld [vmem:[#allocation7 + $0xba0] sm:$0xff]
    %v1293 = vld [vmem:[#allocation7 + $0xba8] sm:$0xff]
    %v1294 = vld [vmem:[#allocation7 + $0xbb0] sm:$0xff]
    %v1295 = vld [vmem:[#allocation7 + $0xbb8] sm:$0xff]
    %v1296 = vld [vmem:[#allocation7 + $0xbc0] sm:$0xff]
    %v1297 = vld [vmem:[#allocation7 + $0xbc8] sm:$0xff]
    %v1298 = vld [vmem:[#allocation7 + $0xbd0] sm:$0xff]
    %v1299 = vld [vmem:[#allocation7 + $0xbd8] sm:$0xff]
    %v1300 = vld [vmem:[#allocation7 + $0xbe0] sm:$0xff]
    %v1301 = vld [vmem:[#allocation7 + $0xbe8] sm:$0xff]
    %v1302 = vld [vmem:[#allocation7 + $0xbf0] sm:$0xff]
    %v1303 = vld [vmem:[#allocation7 + $0xbf8] sm:$0xff]
    %v1304 = vld [vmem:[%s5 + $0x80] sm:$0xff]
    %v1305 = vld [vmem:[%s5 + $0x88] sm:$0xff]
    %1306 = vmatprep.subr.mxu0 %v1241
    %1307 = vmatpush1.msra.mxu0 %v1240
    %1308 = vmatprep.subr.mxu0 %v1243
    %1309 = vmatpush1.msra.mxu0 %v1242
    %1310 = vmatprep.subr.mxu0 %v1245
    %1311 = vmatpush1.msra.mxu0 %v1244
    %1312 = vmatprep.subr.mxu0 %v1247
    %1313 = vmatpush1.msra.mxu0 %v1246
    %1314 = vmatprep.subr.mxu0 %v1249
    %1315 = vmatpush1.msra.mxu0 %v1248
    %1316 = vmatprep.subr.mxu0 %v1251
    %1317 = vmatpush1.msra.mxu0 %v1250
    %1318 = vmatprep.subr.mxu0 %v1253
    %1319 = vmatpush1.msra.mxu0 %v1252
    %1320 = vmatprep.subr.mxu0 %v1255
    %1321 = vmatpush1.msra.mxu0 %v1254
    %1322 = vmatprep.subr.mxu0 %v1257
    %1323 = vmatpush1.msra.mxu0 %v1256
    %1324 = vmatprep.subr.mxu0 %v1259
    %1325 = vmatpush1.msra.mxu0 %v1258
    %1326 = vmatprep.subr.mxu0 %v1261
    %1327 = vmatpush1.msra.mxu0 %v1260
    %1328 = vmatprep.subr.mxu0 %v1263
    %1329 = vmatpush1.msra.mxu0 %v1262
    %1330 = vmatprep.subr.mxu0 %v1265
    %1331 = vmatpush1.msra.mxu0 %v1264
    %1332 = vmatprep.subr.mxu0 %v1267
    %1333 = vmatpush1.msra.mxu0 %v1266
    %1334 = vmatprep.subr.mxu0 %v1269
    %1335 = vmatpush1.msra.mxu0 %v1268
    %1336 = vmatprep.subr.mxu0 %v1271
    %1337 = vmatpush1.msra.mxu0 %v1270
    %1338 = vmatprep.subr.mxu0 %v1273
    %1339 = vmatpush1.msra.mxu0 %v1272
    %1340 = vmatprep.subr.mxu0 %v1275
    %1341 = vmatpush1.msra.mxu0 %v1274
    %1342 = vmatprep.subr.mxu0 %v1277
    %1343 = vmatpush1.msra.mxu0 %v1276
    %1344 = vmatprep.subr.mxu0 %v1279
    %1345 = vmatpush1.msra.mxu0 %v1278
    %1346 = vmatprep.subr.mxu0 %v1281
    %1347 = vmatpush1.msra.mxu0 %v1280
    %1348 = vmatprep.subr.mxu0 %v1283
    %1349 = vmatpush1.msra.mxu0 %v1282
    %1350 = vmatprep.subr.mxu0 %v1285
    %1351 = vmatpush1.msra.mxu0 %v1284
    %1352 = vmatprep.subr.mxu0 %v1287
    %1353 = vmatpush1.msra.mxu0 %v1286
    %1354 = vmatprep.subr.mxu0 %v1289
    %1355 = vmatpush1.msra.mxu0 %v1288
    %1356 = vmatprep.subr.mxu0 %v1291
    %1357 = vmatpush1.msra.mxu0 %v1290
    %1358 = vmatprep.subr.mxu0 %v1293
    %1359 = vmatpush1.msra.mxu0 %v1292
    %1360 = vmatprep.subr.mxu0 %v1295
    %1361 = vmatpush1.msra.mxu0 %v1294
    %1362 = vmatprep.subr.mxu0 %v1297
    %1363 = vmatpush1.msra.mxu0 %v1296
    %1364 = vmatprep.subr.mxu0 %v1299
    %1365 = vmatpush1.msra.mxu0 %v1298
    %1366 = vmatprep.subr.mxu0 %v1301
    %1367 = vmatpush1.msra.mxu0 %v1300
    %1368 = vmatprep.subr.mxu0 %v1303
    %1369 = vmatpush1.msra.mxu0 %v1302
    %1370 = vmatprep.mubr.f32.mxu0 %v82
    %1371 = vmatmul.mubr.f32.gmra.mrb[0].mxu0 %v81
    %v1372 = vpop.f32.mrb[0].mxu0
    %v1373 = vadd.f32 0.0, %v1372
    %v1374 = vpop.f32.mrb[0].mxu0
    %v1375 = vadd.f32 0.0, %v1374
    %1376 = vmatprep.mubr.f32.mxu0 %v84
    %1377 = vmatmul.mubr.f32.gmra.mrb[0].mxu0 %v83
    %v1378 = vpop.f32.mrb[0].mxu0
    %v1379 = vadd.f32 0.0, %v1378
    %v1380 = vpop.f32.mrb[0].mxu0
    %v1381 = vadd.f32 0.0, %v1380
    %1382 = vdwg.mxu0
    %v1384 = vsel %vm232, %v1304, 0
    %v1387 = vsel %vm232, %v1305, 0
    %1389 = vmatprep.subr.mxu0 %v1375
    %1390 = vmatpush1.msra.mxu0 %v1373
    %1391 = vmatprep.subr.mxu0 %v1381
    %1392 = vmatpush1.msra.mxu0 %v1379
    %1393 = vmatprep.subr.mxu0 0.0
    %1394 = vmatpush1.msra.mxu0 0.0
    %1395 = vmatprep.subr.mxu0 0.0
    %1396 = vmatpush1.msra.mxu0 0.0
    %1397 = vmatprep.subr.mxu0 0.0
    %1398 = vmatpush1.msra.mxu0 0.0
    %1399 = vmatprep.subr.mxu0 0.0
    %1400 = vmatpush1.msra.mxu0 0.0
    %1401 = vmatprep.subr.mxu0 0.0
    %1402 = vmatpush1.msra.mxu0 0.0
    %1403 = vmatprep.subr.mxu0 0.0
    %1404 = vmatpush1.msra.mxu0 0.0
    %1405 = vmatprep.subr.mxu0 0.0
    %1406 = vmatpush1.msra.mxu0 0.0
    %1407 = vmatprep.subr.mxu0 0.0
    %1408 = vmatpush1.msra.mxu0 0.0
    %1409 = vmatprep.subr.mxu0 0.0
    %1410 = vmatpush1.msra.mxu0 0.0
    %1411 = vmatprep.subr.mxu0 0.0
    %1412 = vmatpush1.msra.mxu0 0.0
    %1413 = vmatprep.subr.mxu0 0.0
    %1414 = vmatpush1.msra.mxu0 0.0
    %1415 = vmatprep.subr.mxu0 0.0
    %1416 = vmatpush1.msra.mxu0 0.0
    %1417 = vmatprep.subr.mxu0 0.0
    %1418 = vmatpush1.msra.mxu0 0.0
    %1419 = vmatprep.subr.mxu0 0.0
    %1420 = vmatpush1.msra.mxu0 0.0
    %1421 = vmatprep.subr.mxu0 0.0
    %1422 = vmatpush1.msra.mxu0 0.0
    %1423 = vmatprep.subr.mxu0 0.0
    %1424 = vmatpush1.msra.mxu0 0.0
    %1425 = vmatprep.subr.mxu0 0.0
    %1426 = vmatpush1.msra.mxu0 0.0
    %1427 = vmatprep.subr.mxu0 0.0
    %1428 = vmatpush1.msra.mxu0 0.0
    %1429 = vmatprep.subr.mxu0 0.0
    %1430 = vmatpush1.msra.mxu0 0.0
    %1431 = vmatprep.subr.mxu0 0.0
    %1432 = vmatpush1.msra.mxu0 0.0
    %1433 = vmatprep.subr.mxu0 0.0
    %1434 = vmatpush1.msra.mxu0 0.0
    %1435 = vmatprep.subr.mxu0 0.0
    %1436 = vmatpush1.msra.mxu0 0.0
    %1437 = vmatprep.subr.mxu0 0.0
    %1438 = vmatpush1.msra.mxu0 0.0
    %1439 = vmatprep.subr.mxu0 0.0
    %1440 = vmatpush1.msra.mxu0 0.0
    %1441 = vmatprep.subr.mxu0 0.0
    %1442 = vmatpush1.msra.mxu0 0.0
    %1443 = vmatprep.subr.mxu0 0.0
    %1444 = vmatpush1.msra.mxu0 0.0
    %1445 = vmatprep.subr.mxu0 0.0
    %1446 = vmatpush1.msra.mxu0 0.0
    %1447 = vmatprep.subr.mxu0 0.0
    %1448 = vmatpush1.msra.mxu0 0.0
    %1449 = vmatprep.subr.mxu0 0.0
    %1450 = vmatpush1.msra.mxu0 0.0
    %1451 = vmatprep.subr.mxu0 0.0
    %1452 = vmatpush1.msra.mxu0 0.0
    %1453 = vmatprep.mubr.f32.mxu0 0.0
    %1454 = vmatmul.mubr.f32.gmra.mrb[0].mxu0 %v1384
    %v1455 = vpop.f32.mrb[0].mxu0
    %v1456 = vadd.f32 0.0, %v1455
    %v1457 = vpop.f32.mrb[0].mxu0
    %v1458 = vadd.f32 0.0, %v1457
    %1459 = vmatprep.mubr.f32.mxu0 0.0
    %1460 = vmatmul.mubr.f32.gmra.mrb[0].mxu0 %v1387
    %v1461 = vpop.f32.mrb[0].mxu0
    %v1462 = vadd.f32 0.0, %v1461
    %v1463 = vpop.f32.mrb[0].mxu0
    %v1464 = vadd.f32 0.0, %v1463
    %1465 = vdwg.mxu0
    %v1466 = vadd.f32 %v1236, %v1456
    %v1467 = vadd.f32 %v1237, %v1458
    %v1468 = vadd.f32 %v1238, %v1462
    %v1469 = vadd.f32 %v1239, %v1464
    %v1470 = vld [vmem:[#allocation7 + $0xc00] sm:$0xff]
    %v1471 = vld [vmem:[#allocation7 + $0xc08] sm:$0xff]
    %v1472 = vld [vmem:[#allocation7 + $0xc10] sm:$0xff]
    %v1473 = vld [vmem:[#allocation7 + $0xc18] sm:$0xff]
    %v1474 = vld [vmem:[#allocation7 + $0xc20] sm:$0xff]
    %v1475 = vld [vmem:[#allocation7 + $0xc28] sm:$0xff]
    %v1476 = vld [vmem:[#allocation7 + $0xc30] sm:$0xff]
    %v1477 = vld [vmem:[#allocation7 + $0xc38] sm:$0xff]
    %v1478 = vld [vmem:[#allocation7 + $0xc40] sm:$0xff]
    %v1479 = vld [vmem:[#allocation7 + $0xc48] sm:$0xff]
    %v1480 = vld [vmem:[#allocation7 + $0xc50] sm:$0xff]
    %v1481 = vld [vmem:[#allocation7 + $0xc58] sm:$0xff]
    %v1482 = vld [vmem:[#allocation7 + $0xc60] sm:$0xff]
    %v1483 = vld [vmem:[#allocation7 + $0xc68] sm:$0xff]
    %v1484 = vld [vmem:[#allocation7 + $0xc70] sm:$0xff]
    %v1485 = vld [vmem:[#allocation7 + $0xc78] sm:$0xff]
    %v1486 = vld [vmem:[#allocation7 + $0xc80] sm:$0xff]
    %v1487 = vld [vmem:[#allocation7 + $0xc88] sm:$0xff]
    %v1488 = vld [vmem:[#allocation7 + $0xc90] sm:$0xff]
    %v1489 = vld [vmem:[#allocation7 + $0xc98] sm:$0xff]
    %v1490 = vld [vmem:[#allocation7 + $0xca0] sm:$0xff]
    %v1491 = vld [vmem:[#allocation7 + $0xca8] sm:$0xff]
    %v1492 = vld [vmem:[#allocation7 + $0xcb0] sm:$0xff]
    %v1493 = vld [vmem:[#allocation7 + $0xcb8] sm:$0xff]
    %v1494 = vld [vmem:[#allocation7 + $0xcc0] sm:$0xff]
    %v1495 = vld [vmem:[#allocation7 + $0xcc8] sm:$0xff]
    %v1496 = vld [vmem:[#allocation7 + $0xcd0] sm:$0xff]
    %v1497 = vld [vmem:[#allocation7 + $0xcd8] sm:$0xff]
    %v1498 = vld [vmem:[#allocation7 + $0xce0] sm:$0xff]
    %v1499 = vld [vmem:[#allocation7 + $0xce8] sm:$0xff]
    %v1500 = vld [vmem:[#allocation7 + $0xcf0] sm:$0xff]
    %v1501 = vld [vmem:[#allocation7 + $0xcf8] sm:$0xff]
    %v1502 = vld [vmem:[#allocation7 + $0xd00] sm:$0xff]
    %v1503 = vld [vmem:[#allocation7 + $0xd08] sm:$0xff]
    %v1504 = vld [vmem:[#allocation7 + $0xd10] sm:$0xff]
    %v1505 = vld [vmem:[#allocation7 + $0xd18] sm:$0xff]
    %v1506 = vld [vmem:[#allocation7 + $0xd20] sm:$0xff]
    %v1507 = vld [vmem:[#allocation7 + $0xd28] sm:$0xff]
    %v1508 = vld [vmem:[#allocation7 + $0xd30] sm:$0xff]
    %v1509 = vld [vmem:[#allocation7 + $0xd38] sm:$0xff]
    %v1510 = vld [vmem:[#allocation7 + $0xd40] sm:$0xff]
    %v1511 = vld [vmem:[#allocation7 + $0xd48] sm:$0xff]
    %v1512 = vld [vmem:[#allocation7 + $0xd50] sm:$0xff]
    %v1513 = vld [vmem:[#allocation7 + $0xd58] sm:$0xff]
    %v1514 = vld [vmem:[#allocation7 + $0xd60] sm:$0xff]
    %v1515 = vld [vmem:[#allocation7 + $0xd68] sm:$0xff]
    %v1516 = vld [vmem:[#allocation7 + $0xd70] sm:$0xff]
    %v1517 = vld [vmem:[#allocation7 + $0xd78] sm:$0xff]
    %v1518 = vld [vmem:[#allocation7 + $0xd80] sm:$0xff]
    %v1519 = vld [vmem:[#allocation7 + $0xd88] sm:$0xff]
    %v1520 = vld [vmem:[#allocation7 + $0xd90] sm:$0xff]
    %v1521 = vld [vmem:[#allocation7 + $0xd98] sm:$0xff]
    %v1522 = vld [vmem:[#allocation7 + $0xda0] sm:$0xff]
    %v1523 = vld [vmem:[#allocation7 + $0xda8] sm:$0xff]
    %v1524 = vld [vmem:[#allocation7 + $0xdb0] sm:$0xff]
    %v1525 = vld [vmem:[#allocation7 + $0xdb8] sm:$0xff]
    %v1526 = vld [vmem:[#allocation7 + $0xdc0] sm:$0xff]
    %v1527 = vld [vmem:[#allocation7 + $0xdc8] sm:$0xff]
    %v1528 = vld [vmem:[#allocation7 + $0xdd0] sm:$0xff]
    %v1529 = vld [vmem:[#allocation7 + $0xdd8] sm:$0xff]
    %v1530 = vld [vmem:[#allocation7 + $0xde0] sm:$0xff]
    %v1531 = vld [vmem:[#allocation7 + $0xde8] sm:$0xff]
    %v1532 = vld [vmem:[#allocation7 + $0xdf0] sm:$0xff]
    %v1533 = vld [vmem:[#allocation7 + $0xdf8] sm:$0xff]
    %v1534 = vld [vmem:[%s5 + $0x90] sm:$0xff]
    %v1535 = vld [vmem:[%s5 + $0x98] sm:$0xff]
    %1536 = vmatprep.subr.mxu0 %v1471
    %1537 = vmatpush1.msra.mxu0 %v1470
    %1538 = vmatprep.subr.mxu0 %v1473
    %1539 = vmatpush1.msra.mxu0 %v1472
    %1540 = vmatprep.subr.mxu0 %v1475
    %1541 = vmatpush1.msra.mxu0 %v1474
    %1542 = vmatprep.subr.mxu0 %v1477
    %1543 = vmatpush1.msra.mxu0 %v1476
    %1544 = vmatprep.subr.mxu0 %v1479
    %1545 = vmatpush1.msra.mxu0 %v1478
    %1546 = vmatprep.subr.mxu0 %v1481
    %1547 = vmatpush1.msra.mxu0 %v1480
    %1548 = vmatprep.subr.mxu0 %v1483
    %1549 = vmatpush1.msra.mxu0 %v1482
    %1550 = vmatprep.subr.mxu0 %v1485
    %1551 = vmatpush1.msra.mxu0 %v1484
    %1552 = vmatprep.subr.mxu0 %v1487
    %1553 = vmatpush1.msra.mxu0 %v1486
    %1554 = vmatprep.subr.mxu0 %v1489
    %1555 = vmatpush1.msra.mxu0 %v1488
    %1556 = vmatprep.subr.mxu0 %v1491
    %1557 = vmatpush1.msra.mxu0 %v1490
    %1558 = vmatprep.subr.mxu0 %v1493
    %1559 = vmatpush1.msra.mxu0 %v1492
    %1560 = vmatprep.subr.mxu0 %v1495
    %1561 = vmatpush1.msra.mxu0 %v1494
    %1562 = vmatprep.subr.mxu0 %v1497
    %1563 = vmatpush1.msra.mxu0 %v1496
    %1564 = vmatprep.subr.mxu0 %v1499
    %1565 = vmatpush1.msra.mxu0 %v1498
    %1566 = vmatprep.subr.mxu0 %v1501
    %1567 = vmatpush1.msra.mxu0 %v1500
    %1568 = vmatprep.subr.mxu0 %v1503
    %1569 = vmatpush1.msra.mxu0 %v1502
    %1570 = vmatprep.subr.mxu0 %v1505
    %1571 = vmatpush1.msra.mxu0 %v1504
    %1572 = vmatprep.subr.mxu0 %v1507
    %1573 = vmatpush1.msra.mxu0 %v1506
    %1574 = vmatprep.subr.mxu0 %v1509
    %1575 = vmatpush1.msra.mxu0 %v1508
    %1576 = vmatprep.subr.mxu0 %v1511
    %1577 = vmatpush1.msra.mxu0 %v1510
    %1578 = vmatprep.subr.mxu0 %v1513
    %1579 = vmatpush1.msra.mxu0 %v1512
    %1580 = vmatprep.subr.mxu0 %v1515
    %1581 = vmatpush1.msra.mxu0 %v1514
    %1582 = vmatprep.subr.mxu0 %v1517
    %1583 = vmatpush1.msra.mxu0 %v1516
    %1584 = vmatprep.subr.mxu0 %v1519
    %1585 = vmatpush1.msra.mxu0 %v1518
    %1586 = vmatprep.subr.mxu0 %v1521
    %1587 = vmatpush1.msra.mxu0 %v1520
    %1588 = vmatprep.subr.mxu0 %v1523
    %1589 = vmatpush1.msra.mxu0 %v1522
    %1590 = vmatprep.subr.mxu0 %v1525
    %1591 = vmatpush1.msra.mxu0 %v1524
    %1592 = vmatprep.subr.mxu0 %v1527
    %1593 = vmatpush1.msra.mxu0 %v1526
    %1594 = vmatprep.subr.mxu0 %v1529
    %1595 = vmatpush1.msra.mxu0 %v1528
    %1596 = vmatprep.subr.mxu0 %v1531
    %1597 = vmatpush1.msra.mxu0 %v1530
    %1598 = vmatprep.subr.mxu0 %v1533
    %1599 = vmatpush1.msra.mxu0 %v1532
    %1600 = vmatprep.mubr.f32.mxu0 %v82
    %1601 = vmatmul.mubr.f32.gmra.mrb[0].mxu0 %v81
    %v1602 = vpop.f32.mrb[0].mxu0
    %v1603 = vadd.f32 0.0, %v1602
    %v1604 = vpop.f32.mrb[0].mxu0
    %v1605 = vadd.f32 0.0, %v1604
    %1606 = vmatprep.mubr.f32.mxu0 %v84
    %1607 = vmatmul.mubr.f32.gmra.mrb[0].mxu0 %v83
    %v1608 = vpop.f32.mrb[0].mxu0
    %v1609 = vadd.f32 0.0, %v1608
    %v1610 = vpop.f32.mrb[0].mxu0
    %v1611 = vadd.f32 0.0, %v1610
    %1612 = vdwg.mxu0
    %v1614 = vsel %vm232, %v1534, 0
    %v1617 = vsel %vm232, %v1535, 0
    %1619 = vmatprep.subr.mxu0 %v1605
    %1620 = vmatpush1.msra.mxu0 %v1603
    %1621 = vmatprep.subr.mxu0 %v1611
    %1622 = vmatpush1.msra.mxu0 %v1609
    %1623 = vmatprep.subr.mxu0 0.0
    %1624 = vmatpush1.msra.mxu0 0.0
    %1625 = vmatprep.subr.mxu0 0.0
    %1626 = vmatpush1.msra.mxu0 0.0
    %1627 = vmatprep.subr.mxu0 0.0
    %1628 = vmatpush1.msra.mxu0 0.0
    %1629 = vmatprep.subr.mxu0 0.0
    %1630 = vmatpush1.msra.mxu0 0.0
    %1631 = vmatprep.subr.mxu0 0.0
    %1632 = vmatpush1.msra.mxu0 0.0
    %1633 = vmatprep.subr.mxu0 0.0
    %1634 = vmatpush1.msra.mxu0 0.0
    %1635 = vmatprep.subr.mxu0 0.0
    %1636 = vmatpush1.msra.mxu0 0.0
    %1637 = vmatprep.subr.mxu0 0.0
    %1638 = vmatpush1.msra.mxu0 0.0
    %1639 = vmatprep.subr.mxu0 0.0
    %1640 = vmatpush1.msra.mxu0 0.0
    %1641 = vmatprep.subr.mxu0 0.0
    %1642 = vmatpush1.msra.mxu0 0.0
    %1643 = vmatprep.subr.mxu0 0.0
    %1644 = vmatpush1.msra.mxu0 0.0
    %1645 = vmatprep.subr.mxu0 0.0
    %1646 = vmatpush1.msra.mxu0 0.0
    %1647 = vmatprep.subr.mxu0 0.0
    %1648 = vmatpush1.msra.mxu0 0.0
    %1649 = vmatprep.subr.mxu0 0.0
    %1650 = vmatpush1.msra.mxu0 0.0
    %1651 = vmatprep.subr.mxu0 0.0
    %1652 = vmatpush1.msra.mxu0 0.0
    %1653 = vmatprep.subr.mxu0 0.0
    %1654 = vmatpush1.msra.mxu0 0.0
    %1655 = vmatprep.subr.mxu0 0.0
    %1656 = vmatpush1.msra.mxu0 0.0
    %1657 = vmatprep.subr.mxu0 0.0
    %1658 = vmatpush1.msra.mxu0 0.0
    %1659 = vmatprep.subr.mxu0 0.0
    %1660 = vmatpush1.msra.mxu0 0.0
    %1661 = vmatprep.subr.mxu0 0.0
    %1662 = vmatpush1.msra.mxu0 0.0
    %1663 = vmatprep.subr.mxu0 0.0
    %1664 = vmatpush1.msra.mxu0 0.0
    %1665 = vmatprep.subr.mxu0 0.0
    %1666 = vmatpush1.msra.mxu0 0.0
    %1667 = vmatprep.subr.mxu0 0.0
    %1668 = vmatpush1.msra.mxu0 0.0
    %1669 = vmatprep.subr.mxu0 0.0
    %1670 = vmatpush1.msra.mxu0 0.0
    %1671 = vmatprep.subr.mxu0 0.0
    %1672 = vmatpush1.msra.mxu0 0.0
    %1673 = vmatprep.subr.mxu0 0.0
    %1674 = vmatpush1.msra.mxu0 0.0
    %1675 = vmatprep.subr.mxu0 0.0
    %1676 = vmatpush1.msra.mxu0 0.0
    %1677 = vmatprep.subr.mxu0 0.0
    %1678 = vmatpush1.msra.mxu0 0.0
    %1679 = vmatprep.subr.mxu0 0.0
    %1680 = vmatpush1.msra.mxu0 0.0
    %1681 = vmatprep.subr.mxu0 0.0
    %1682 = vmatpush1.msra.mxu0 0.0
    %1683 = vmatprep.mubr.f32.mxu0 0.0
    %1684 = vmatmul.mubr.f32.gmra.mrb[0].mxu0 %v1614
    %v1685 = vpop.f32.mrb[0].mxu0
    %v1686 = vadd.f32 0.0, %v1685
    %v1687 = vpop.f32.mrb[0].mxu0
    %v1688 = vadd.f32 0.0, %v1687
    %1689 = vmatprep.mubr.f32.mxu0 0.0
    %1690 = vmatmul.mubr.f32.gmra.mrb[0].mxu0 %v1617
    %v1691 = vpop.f32.mrb[0].mxu0
    %v1692 = vadd.f32 0.0, %v1691
    %v1693 = vpop.f32.mrb[0].mxu0
    %v1694 = vadd.f32 0.0, %v1693
    %1695 = vdwg.mxu0
    %v1696 = vadd.f32 %v1466, %v1686
    %v1697 = vadd.f32 %v1467, %v1688
    %v1698 = vadd.f32 %v1468, %v1692
    %v1699 = vadd.f32 %v1469, %v1694
    %v1700 = vld [vmem:[#allocation7 + $0xe00] sm:$0xff]
    %v1701 = vld [vmem:[#allocation7 + $0xe08] sm:$0xff]
    %v1702 = vld [vmem:[#allocation7 + $0xe10] sm:$0xff]
    %v1703 = vld [vmem:[#allocation7 + $0xe18] sm:$0xff]
    %v1704 = vld [vmem:[#allocation7 + $0xe20] sm:$0xff]
    %v1705 = vld [vmem:[#allocation7 + $0xe28] sm:$0xff]
    %v1706 = vld [vmem:[#allocation7 + $0xe30] sm:$0xff]
    %v1707 = vld [vmem:[#allocation7 + $0xe38] sm:$0xff]
    %v1708 = vld [vmem:[#allocation7 + $0xe40] sm:$0xff]
    %v1709 = vld [vmem:[#allocation7 + $0xe48] sm:$0xff]
    %v1710 = vld [vmem:[#allocation7 + $0xe50] sm:$0xff]
    %v1711 = vld [vmem:[#allocation7 + $0xe58] sm:$0xff]
    %v1712 = vld [vmem:[#allocation7 + $0xe60] sm:$0xff]
    %v1713 = vld [vmem:[#allocation7 + $0xe68] sm:$0xff]
    %v1714 = vld [vmem:[#allocation7 + $0xe70] sm:$0xff]
    %v1715 = vld [vmem:[#allocation7 + $0xe78] sm:$0xff]
    %v1716 = vld [vmem:[#allocation7 + $0xe80] sm:$0xff]
    %v1717 = vld [vmem:[#allocation7 + $0xe88] sm:$0xff]
    %v1718 = vld [vmem:[#allocation7 + $0xe90] sm:$0xff]
    %v1719 = vld [vmem:[#allocation7 + $0xe98] sm:$0xff]
    %v1720 = vld [vmem:[#allocation7 + $0xea0] sm:$0xff]
    %v1721 = vld [vmem:[#allocation7 + $0xea8] sm:$0xff]
    %v1722 = vld [vmem:[#allocation7 + $0xeb0] sm:$0xff]
    %v1723 = vld [vmem:[#allocation7 + $0xeb8] sm:$0xff]
    %v1724 = vld [vmem:[#allocation7 + $0xec0] sm:$0xff]
    %v1725 = vld [vmem:[#allocation7 + $0xec8] sm:$0xff]
    %v1726 = vld [vmem:[#allocation7 + $0xed0] sm:$0xff]
    %v1727 = vld [vmem:[#allocation7 + $0xed8] sm:$0xff]
    %v1728 = vld [vmem:[#allocation7 + $0xee0] sm:$0xff]
    %v1729 = vld [vmem:[#allocation7 + $0xee8] sm:$0xff]
    %v1730 = vld [vmem:[#allocation7 + $0xef0] sm:$0xff]
    %v1731 = vld [vmem:[#allocation7 + $0xef8] sm:$0xff]
    %v1732 = vld [vmem:[#allocation7 + $0xf00] sm:$0xff]
    %v1733 = vld [vmem:[#allocation7 + $0xf08] sm:$0xff]
    %v1734 = vld [vmem:[#allocation7 + $0xf10] sm:$0xff]
    %v1735 = vld [vmem:[#allocation7 + $0xf18] sm:$0xff]
    %v1736 = vld [vmem:[#allocation7 + $0xf20] sm:$0xff]
    %v1737 = vld [vmem:[#allocation7 + $0xf28] sm:$0xff]
    %v1738 = vld [vmem:[#allocation7 + $0xf30] sm:$0xff]
    %v1739 = vld [vmem:[#allocation7 + $0xf38] sm:$0xff]
    %v1740 = vld [vmem:[#allocation7 + $0xf40] sm:$0xff]
    %v1741 = vld [vmem:[#allocation7 + $0xf48] sm:$0xff]
    %v1742 = vld [vmem:[#allocation7 + $0xf50] sm:$0xff]
    %v1743 = vld [vmem:[#allocation7 + $0xf58] sm:$0xff]
    %v1744 = vld [vmem:[#allocation7 + $0xf60] sm:$0xff]
    %v1745 = vld [vmem:[#allocation7 + $0xf68] sm:$0xff]
    %v1746 = vld [vmem:[#allocation7 + $0xf70] sm:$0xff]
    %v1747 = vld [vmem:[#allocation7 + $0xf78] sm:$0xff]
    %v1748 = vld [vmem:[#allocation7 + $0xf80] sm:$0xff]
    %v1749 = vld [vmem:[#allocation7 + $0xf88] sm:$0xff]
    %v1750 = vld [vmem:[#allocation7 + $0xf90] sm:$0xff]
    %v1751 = vld [vmem:[#allocation7 + $0xf98] sm:$0xff]
    %v1752 = vld [vmem:[#allocation7 + $0xfa0] sm:$0xff]
    %v1753 = vld [vmem:[#allocation7 + $0xfa8] sm:$0xff]
    %v1754 = vld [vmem:[#allocation7 + $0xfb0] sm:$0xff]
    %v1755 = vld [vmem:[#allocation7 + $0xfb8] sm:$0xff]
    %v1756 = vld [vmem:[#allocation7 + $0xfc0] sm:$0xff]
    %v1757 = vld [vmem:[#allocation7 + $0xfc8] sm:$0xff]
    %v1758 = vld [vmem:[#allocation7 + $0xfd0] sm:$0xff]
    %v1759 = vld [vmem:[#allocation7 + $0xfd8] sm:$0xff]
    %v1760 = vld [vmem:[#allocation7 + $0xfe0] sm:$0xff]
    %v1761 = vld [vmem:[#allocation7 + $0xfe8] sm:$0xff]
    %v1762 = vld [vmem:[#allocation7 + $0xff0] sm:$0xff]
    %v1763 = vld [vmem:[#allocation7 + $0xff8] sm:$0xff]
    %v1764 = vld [vmem:[%s5 + $0xa0] sm:$0xff]
    %v1765 = vld [vmem:[%s5 + $0xa8] sm:$0xff]
    %1766 = vmatprep.subr.mxu0 %v1701
    %1767 = vmatpush1.msra.mxu0 %v1700
    %1768 = vmatprep.subr.mxu0 %v1703
    %1769 = vmatpush1.msra.mxu0 %v1702
    %1770 = vmatprep.subr.mxu0 %v1705
    %1771 = vmatpush1.msra.mxu0 %v1704
    %1772 = vmatprep.subr.mxu0 %v1707
    %1773 = vmatpush1.msra.mxu0 %v1706
    %1774 = vmatprep.subr.mxu0 %v1709
    %1775 = vmatpush1.msra.mxu0 %v1708
    %1776 = vmatprep.subr.mxu0 %v1711
    %1777 = vmatpush1.msra.mxu0 %v1710
    %1778 = vmatprep.subr.mxu0 %v1713
    %1779 = vmatpush1.msra.mxu0 %v1712
    %1780 = vmatprep.subr.mxu0 %v1715
    %1781 = vmatpush1.msra.mxu0 %v1714
    %1782 = vmatprep.subr.mxu0 %v1717
    %1783 = vmatpush1.msra.mxu0 %v1716
    %1784 = vmatprep.subr.mxu0 %v1719
    %1785 = vmatpush1.msra.mxu0 %v1718
    %1786 = vmatprep.subr.mxu0 %v1721
    %1787 = vmatpush1.msra.mxu0 %v1720
    %1788 = vmatprep.subr.mxu0 %v1723
    %1789 = vmatpush1.msra.mxu0 %v1722
    %1790 = vmatprep.subr.mxu0 %v1725
    %1791 = vmatpush1.msra.mxu0 %v1724
    %1792 = vmatprep.subr.mxu0 %v1727
    %1793 = vmatpush1.msra.mxu0 %v1726
    %1794 = vmatprep.subr.mxu0 %v1729
    %1795 = vmatpush1.msra.mxu0 %v1728
    %1796 = vmatprep.subr.mxu0 %v1731
    %1797 = vmatpush1.msra.mxu0 %v1730
    %1798 = vmatprep.subr.mxu0 %v1733
    %1799 = vmatpush1.msra.mxu0 %v1732
    %1800 = vmatprep.subr.mxu0 %v1735
    %1801 = vmatpush1.msra.mxu0 %v1734
    %1802 = vmatprep.subr.mxu0 %v1737
    %1803 = vmatpush1.msra.mxu0 %v1736
    %1804 = vmatprep.subr.mxu0 %v1739
    %1805 = vmatpush1.msra.mxu0 %v1738
    %1806 = vmatprep.subr.mxu0 %v1741
    %1807 = vmatpush1.msra.mxu0 %v1740
    %1808 = vmatprep.subr.mxu0 %v1743
    %1809 = vmatpush1.msra.mxu0 %v1742
    %1810 = vmatprep.subr.mxu0 %v1745
    %1811 = vmatpush1.msra.mxu0 %v1744
    %1812 = vmatprep.subr.mxu0 %v1747
    %1813 = vmatpush1.msra.mxu0 %v1746
    %1814 = vmatprep.subr.mxu0 %v1749
    %1815 = vmatpush1.msra.mxu0 %v1748
    %1816 = vmatprep.subr.mxu0 %v1751
    %1817 = vmatpush1.msra.mxu0 %v1750
    %1818 = vmatprep.subr.mxu0 %v1753
    %1819 = vmatpush1.msra.mxu0 %v1752
    %1820 = vmatprep.subr.mxu0 %v1755
    %1821 = vmatpush1.msra.mxu0 %v1754
    %1822 = vmatprep.subr.mxu0 %v1757
    %1823 = vmatpush1.msra.mxu0 %v1756
    %1824 = vmatprep.subr.mxu0 %v1759
    %1825 = vmatpush1.msra.mxu0 %v1758
    %1826 = vmatprep.subr.mxu0 %v1761
    %1827 = vmatpush1.msra.mxu0 %v1760
    %1828 = vmatprep.subr.mxu0 %v1763
    %1829 = vmatpush1.msra.mxu0 %v1762
    %1830 = vmatprep.mubr.f32.mxu0 %v82
    %1831 = vmatmul.mubr.f32.gmra.mrb[0].mxu0 %v81
    %v1832 = vpop.f32.mrb[0].mxu0
    %v1833 = vadd.f32 0.0, %v1832
    %v1834 = vpop.f32.mrb[0].mxu0
    %v1835 = vadd.f32 0.0, %v1834
    %1836 = vmatprep.mubr.f32.mxu0 %v84
    %1837 = vmatmul.mubr.f32.gmra.mrb[0].mxu0 %v83
    %v1838 = vpop.f32.mrb[0].mxu0
    %v1839 = vadd.f32 0.0, %v1838
    %v1840 = vpop.f32.mrb[0].mxu0
    %v1841 = vadd.f32 0.0, %v1840
    %1842 = vdwg.mxu0
    %v1844 = vsel %vm232, %v1764, 0
    %v1847 = vsel %vm232, %v1765, 0
    %1849 = vmatprep.subr.mxu0 %v1835
    %1850 = vmatpush1.msra.mxu0 %v1833
    %1851 = vmatprep.subr.mxu0 %v1841
    %1852 = vmatpush1.msra.mxu0 %v1839
    %1853 = vmatprep.subr.mxu0 0.0
    %1854 = vmatpush1.msra.mxu0 0.0
    %1855 = vmatprep.subr.mxu0 0.0
    %1856 = vmatpush1.msra.mxu0 0.0
    %1857 = vmatprep.subr.mxu0 0.0
    %1858 = vmatpush1.msra.mxu0 0.0
    %1859 = vmatprep.subr.mxu0 0.0
    %1860 = vmatpush1.msra.mxu0 0.0
    %1861 = vmatprep.subr.mxu0 0.0
    %1862 = vmatpush1.msra.mxu0 0.0
    %1863 = vmatprep.subr.mxu0 0.0
    %1864 = vmatpush1.msra.mxu0 0.0
    %1865 = vmatprep.subr.mxu0 0.0
    %1866 = vmatpush1.msra.mxu0 0.0
    %1867 = vmatprep.subr.mxu0 0.0
    %1868 = vmatpush1.msra.mxu0 0.0
    %1869 = vmatprep.subr.mxu0 0.0
    %1870 = vmatpush1.msra.mxu0 0.0
    %1871 = vmatprep.subr.mxu0 0.0
    %1872 = vmatpush1.msra.mxu0 0.0
    %1873 = vmatprep.subr.mxu0 0.0
    %1874 = vmatpush1.msra.mxu0 0.0
    %1875 = vmatprep.subr.mxu0 0.0
    %1876 = vmatpush1.msra.mxu0 0.0
    %1877 = vmatprep.subr.mxu0 0.0
    %1878 = vmatpush1.msra.mxu0 0.0
    %1879 = vmatprep.subr.mxu0 0.0
    %1880 = vmatpush1.msra.mxu0 0.0
    %1881 = vmatprep.subr.mxu0 0.0
    %1882 = vmatpush1.msra.mxu0 0.0
    %1883 = vmatprep.subr.mxu0 0.0
    %1884 = vmatpush1.msra.mxu0 0.0
    %1885 = vmatprep.subr.mxu0 0.0
    %1886 = vmatpush1.msra.mxu0 0.0
    %1887 = vmatprep.subr.mxu0 0.0
    %1888 = vmatpush1.msra.mxu0 0.0
    %1889 = vmatprep.subr.mxu0 0.0
    %1890 = vmatpush1.msra.mxu0 0.0
    %1891 = vmatprep.subr.mxu0 0.0
    %1892 = vmatpush1.msra.mxu0 0.0
    %1893 = vmatprep.subr.mxu0 0.0
    %1894 = vmatpush1.msra.mxu0 0.0
    %1895 = vmatprep.subr.mxu0 0.0
    %1896 = vmatpush1.msra.mxu0 0.0
    %1897 = vmatprep.subr.mxu0 0.0
    %1898 = vmatpush1.msra.mxu0 0.0
    %1899 = vmatprep.subr.mxu0 0.0
    %1900 = vmatpush1.msra.mxu0 0.0
    %1901 = vmatprep.subr.mxu0 0.0
    %1902 = vmatpush1.msra.mxu0 0.0
    %1903 = vmatprep.subr.mxu0 0.0
    %1904 = vmatpush1.msra.mxu0 0.0
    %1905 = vmatprep.subr.mxu0 0.0
    %1906 = vmatpush1.msra.mxu0 0.0
    %1907 = vmatprep.subr.mxu0 0.0
    %1908 = vmatpush1.msra.mxu0 0.0
    %1909 = vmatprep.subr.mxu0 0.0
    %1910 = vmatpush1.msra.mxu0 0.0
    %1911 = vmatprep.subr.mxu0 0.0
    %1912 = vmatpush1.msra.mxu0 0.0
    %1913 = vmatprep.mubr.f32.mxu0 0.0
    %1914 = vmatmul.mubr.f32.gmra.mrb[0].mxu0 %v1844
    %v1915 = vpop.f32.mrb[0].mxu0
    %v1916 = vadd.f32 0.0, %v1915
    %v1917 = vpop.f32.mrb[0].mxu0
    %v1918 = vadd.f32 0.0, %v1917
    %1919 = vmatprep.mubr.f32.mxu0 0.0
    %1920 = vmatmul.mubr.f32.gmra.mrb[0].mxu0 %v1847
    %v1921 = vpop.f32.mrb[0].mxu0
    %v1922 = vadd.f32 0.0, %v1921
    %v1923 = vpop.f32.mrb[0].mxu0
    %v1924 = vadd.f32 0.0, %v1923
    %1925 = vdwg.mxu0
    %v1926 = vadd.f32 %v1696, %v1916
    %v1927 = vadd.f32 %v1697, %v1918
    %v1928 = vadd.f32 %v1698, %v1922
    %v1929 = vadd.f32 %v1699, %v1924
    %v1930 = vld [vmem:[#allocation7 + $0x1000] sm:$0xff]
    %v1931 = vld [vmem:[#allocation7 + $0x1008] sm:$0xff]
    %v1932 = vld [vmem:[#allocation7 + $0x1010] sm:$0xff]
    %v1933 = vld [vmem:[#allocation7 + $0x1018] sm:$0xff]
    %v1934 = vld [vmem:[#allocation7 + $0x1020] sm:$0xff]
    %v1935 = vld [vmem:[#allocation7 + $0x1028] sm:$0xff]
    %v1936 = vld [vmem:[#allocation7 + $0x1030] sm:$0xff]
    %v1937 = vld [vmem:[#allocation7 + $0x1038] sm:$0xff]
    %v1938 = vld [vmem:[#allocation7 + $0x1040] sm:$0xff]
    %v1939 = vld [vmem:[#allocation7 + $0x1048] sm:$0xff]
    %v1940 = vld [vmem:[#allocation7 + $0x1050] sm:$0xff]
    %v1941 = vld [vmem:[#allocation7 + $0x1058] sm:$0xff]
    %v1942 = vld [vmem:[#allocation7 + $0x1060] sm:$0xff]
    %v1943 = vld [vmem:[#allocation7 + $0x1068] sm:$0xff]
    %v1944 = vld [vmem:[#allocation7 + $0x1070] sm:$0xff]
    %v1945 = vld [vmem:[#allocation7 + $0x1078] sm:$0xff]
    %v1946 = vld [vmem:[#allocation7 + $0x1080] sm:$0xff]
    %v1947 = vld [vmem:[#allocation7 + $0x1088] sm:$0xff]
    %v1948 = vld [vmem:[#allocation7 + $0x1090] sm:$0xff]
    %v1949 = vld [vmem:[#allocation7 + $0x1098] sm:$0xff]
    %v1950 = vld [vmem:[#allocation7 + $0x10a0] sm:$0xff]
    %v1951 = vld [vmem:[#allocation7 + $0x10a8] sm:$0xff]
    %v1952 = vld [vmem:[#allocation7 + $0x10b0] sm:$0xff]
    %v1953 = vld [vmem:[#allocation7 + $0x10b8] sm:$0xff]
    %v1954 = vld [vmem:[#allocation7 + $0x10c0] sm:$0xff]
    %v1955 = vld [vmem:[#allocation7 + $0x10c8] sm:$0xff]
    %v1956 = vld [vmem:[#allocation7 + $0x10d0] sm:$0xff]
    %v1957 = vld [vmem:[#allocation7 + $0x10d8] sm:$0xff]
    %v1958 = vld [vmem:[#allocation7 + $0x10e0] sm:$0xff]
    %v1959 = vld [vmem:[#allocation7 + $0x10e8] sm:$0xff]
    %v1960 = vld [vmem:[#allocation7 + $0x10f0] sm:$0xff]
    %v1961 = vld [vmem:[#allocation7 + $0x10f8] sm:$0xff]
    %v1962 = vld [vmem:[#allocation7 + $0x1100] sm:$0xff]
    %v1963 = vld [vmem:[#allocation7 + $0x1108] sm:$0xff]
    %v1964 = vld [vmem:[#allocation7 + $0x1110] sm:$0xff]
    %v1965 = vld [vmem:[#allocation7 + $0x1118] sm:$0xff]
    %v1966 = vld [vmem:[#allocation7 + $0x1120] sm:$0xff]
    %v1967 = vld [vmem:[#allocation7 + $0x1128] sm:$0xff]
    %v1968 = vld [vmem:[#allocation7 + $0x1130] sm:$0xff]
    %v1969 = vld [vmem:[#allocation7 + $0x1138] sm:$0xff]
    %v1970 = vld [vmem:[#allocation7 + $0x1140] sm:$0xff]
    %v1971 = vld [vmem:[#allocation7 + $0x1148] sm:$0xff]
    %v1972 = vld [vmem:[#allocation7 + $0x1150] sm:$0xff]
    %v1973 = vld [vmem:[#allocation7 + $0x1158] sm:$0xff]
    %v1974 = vld [vmem:[#allocation7 + $0x1160] sm:$0xff]
    %v1975 = vld [vmem:[#allocation7 + $0x1168] sm:$0xff]
    %v1976 = vld [vmem:[#allocation7 + $0x1170] sm:$0xff]
    %v1977 = vld [vmem:[#allocation7 + $0x1178] sm:$0xff]
    %v1978 = vld [vmem:[#allocation7 + $0x1180] sm:$0xff]
    %v1979 = vld [vmem:[#allocation7 + $0x1188] sm:$0xff]
    %v1980 = vld [vmem:[#allocation7 + $0x1190] sm:$0xff]
    %v1981 = vld [vmem:[#allocation7 + $0x1198] sm:$0xff]
    %v1982 = vld [vmem:[#allocation7 + $0x11a0] sm:$0xff]
    %v1983 = vld [vmem:[#allocation7 + $0x11a8] sm:$0xff]
    %v1984 = vld [vmem:[#allocation7 + $0x11b0] sm:$0xff]
    %v1985 = vld [vmem:[#allocation7 + $0x11b8] sm:$0xff]
    %v1986 = vld [vmem:[#allocation7 + $0x11c0] sm:$0xff]
    %v1987 = vld [vmem:[#allocation7 + $0x11c8] sm:$0xff]
    %v1988 = vld [vmem:[#allocation7 + $0x11d0] sm:$0xff]
    %v1989 = vld [vmem:[#allocation7 + $0x11d8] sm:$0xff]
    %v1990 = vld [vmem:[#allocation7 + $0x11e0] sm:$0xff]
    %v1991 = vld [vmem:[#allocation7 + $0x11e8] sm:$0xff]
    %v1992 = vld [vmem:[#allocation7 + $0x11f0] sm:$0xff]
    %v1993 = vld [vmem:[#allocation7 + $0x11f8] sm:$0xff]
    %v1994 = vld [vmem:[%s5 + $0xb0] sm:$0xff]
    %v1995 = vld [vmem:[%s5 + $0xb8] sm:$0xff]
    %1996 = vmatprep.subr.mxu0 %v1931
    %1997 = vmatpush1.msra.mxu0 %v1930
    %1998 = vmatprep.subr.mxu0 %v1933
    %1999 = vmatpush1.msra.mxu0 %v1932
    %2000 = vmatprep.subr.mxu0 %v1935
    %2001 = vmatpush1.msra.mxu0 %v1934
    %2002 = vmatprep.subr.mxu0 %v1937
    %2003 = vmatpush1.msra.mxu0 %v1936
    %2004 = vmatprep.subr.mxu0 %v1939
    %2005 = vmatpush1.msra.mxu0 %v1938
    %2006 = vmatprep.subr.mxu0 %v1941
    %2007 = vmatpush1.msra.mxu0 %v1940
    %2008 = vmatprep.subr.mxu0 %v1943
    %2009 = vmatpush1.msra.mxu0 %v1942
    %2010 = vmatprep.subr.mxu0 %v1945
    %2011 = vmatpush1.msra.mxu0 %v1944
    %2012 = vmatprep.subr.mxu0 %v1947
    %2013 = vmatpush1.msra.mxu0 %v1946
    %2014 = vmatprep.subr.mxu0 %v1949
    %2015 = vmatpush1.msra.mxu0 %v1948
    %2016 = vmatprep.subr.mxu0 %v1951
    %2017 = vmatpush1.msra.mxu0 %v1950
    %2018 = vmatprep.subr.mxu0 %v1953
    %2019 = vmatpush1.msra.mxu0 %v1952
    %2020 = vmatprep.subr.mxu0 %v1955
    %2021 = vmatpush1.msra.mxu0 %v1954
    %2022 = vmatprep.subr.mxu0 %v1957
    %2023 = vmatpush1.msra.mxu0 %v1956
    %2024 = vmatprep.subr.mxu0 %v1959
    %2025 = vmatpush1.msra.mxu0 %v1958
    %2026 = vmatprep.subr.mxu0 %v1961
    %2027 = vmatpush1.msra.mxu0 %v1960
    %2028 = vmatprep.subr.mxu0 %v1963
    %2029 = vmatpush1.msra.mxu0 %v1962
    %2030 = vmatprep.subr.mxu0 %v1965
    %2031 = vmatpush1.msra.mxu0 %v1964
    %2032 = vmatprep.subr.mxu0 %v1967
    %2033 = vmatpush1.msra.mxu0 %v1966
    %2034 = vmatprep.subr.mxu0 %v1969
    %2035 = vmatpush1.msra.mxu0 %v1968
    %2036 = vmatprep.subr.mxu0 %v1971
    %2037 = vmatpush1.msra.mxu0 %v1970
    %2038 = vmatprep.subr.mxu0 %v1973
    %2039 = vmatpush1.msra.mxu0 %v1972
    %2040 = vmatprep.subr.mxu0 %v1975
    %2041 = vmatpush1.msra.mxu0 %v1974
    %2042 = vmatprep.subr.mxu0 %v1977
    %2043 = vmatpush1.msra.mxu0 %v1976
    %2044 = vmatprep.subr.mxu0 %v1979
    %2045 = vmatpush1.msra.mxu0 %v1978
    %2046 = vmatprep.subr.mxu0 %v1981
    %2047 = vmatpush1.msra.mxu0 %v1980
    %2048 = vmatprep.subr.mxu0 %v1983
    %2049 = vmatpush1.msra.mxu0 %v1982
    %2050 = vmatprep.subr.mxu0 %v1985
    %2051 = vmatpush1.msra.mxu0 %v1984
    %2052 = vmatprep.subr.mxu0 %v1987
    %2053 = vmatpush1.msra.mxu0 %v1986
    %2054 = vmatprep.subr.mxu0 %v1989
    %2055 = vmatpush1.msra.mxu0 %v1988
    %2056 = vmatprep.subr.mxu0 %v1991
    %2057 = vmatpush1.msra.mxu0 %v1990
    %2058 = vmatprep.subr.mxu0 %v1993
    %2059 = vmatpush1.msra.mxu0 %v1992
    %2060 = vmatprep.mubr.f32.mxu0 %v82
    %2061 = vmatmul.mubr.f32.gmra.mrb[0].mxu0 %v81
    %v2062 = vpop.f32.mrb[0].mxu0
    %v2063 = vadd.f32 0.0, %v2062
    %v2064 = vpop.f32.mrb[0].mxu0
    %v2065 = vadd.f32 0.0, %v2064
    %2066 = vmatprep.mubr.f32.mxu0 %v84
    %2067 = vmatmul.mubr.f32.gmra.mrb[0].mxu0 %v83
    %v2068 = vpop.f32.mrb[0].mxu0
    %v2069 = vadd.f32 0.0, %v2068
    %v2070 = vpop.f32.mrb[0].mxu0
    %v2071 = vadd.f32 0.0, %v2070
    %2072 = vdwg.mxu0
    %v2074 = vsel %vm232, %v1994, 0
    %v2077 = vsel %vm232, %v1995, 0
    %2079 = vmatprep.subr.mxu0 %v2065
    %2080 = vmatpush1.msra.mxu0 %v2063
    %2081 = vmatprep.subr.mxu0 %v2071
    %2082 = vmatpush1.msra.mxu0 %v2069
    %2083 = vmatprep.subr.mxu0 0.0
    %2084 = vmatpush1.msra.mxu0 0.0
    %2085 = vmatprep.subr.mxu0 0.0
    %2086 = vmatpush1.msra.mxu0 0.0
    %2087 = vmatprep.subr.mxu0 0.0
    %2088 = vmatpush1.msra.mxu0 0.0
    %2089 = vmatprep.subr.mxu0 0.0
    %2090 = vmatpush1.msra.mxu0 0.0
    %2091 = vmatprep.subr.mxu0 0.0
    %2092 = vmatpush1.msra.mxu0 0.0
    %2093 = vmatprep.subr.mxu0 0.0
    %2094 = vmatpush1.msra.mxu0 0.0
    %2095 = vmatprep.subr.mxu0 0.0
    %2096 = vmatpush1.msra.mxu0 0.0
    %2097 = vmatprep.subr.mxu0 0.0
    %2098 = vmatpush1.msra.mxu0 0.0
    %2099 = vmatprep.subr.mxu0 0.0
    %2100 = vmatpush1.msra.mxu0 0.0
    %2101 = vmatprep.subr.mxu0 0.0
    %2102 = vmatpush1.msra.mxu0 0.0
    %2103 = vmatprep.subr.mxu0 0.0
    %2104 = vmatpush1.msra.mxu0 0.0
    %2105 = vmatprep.subr.mxu0 0.0
    %2106 = vmatpush1.msra.mxu0 0.0
    %2107 = vmatprep.subr.mxu0 0.0
    %2108 = vmatpush1.msra.mxu0 0.0
    %2109 = vmatprep.subr.mxu0 0.0
    %2110 = vmatpush1.msra.mxu0 0.0
    %2111 = vmatprep.subr.mxu0 0.0
    %2112 = vmatpush1.msra.mxu0 0.0
    %2113 = vmatprep.subr.mxu0 0.0
    %2114 = vmatpush1.msra.mxu0 0.0
    %2115 = vmatprep.subr.mxu0 0.0
    %2116 = vmatpush1.msra.mxu0 0.0
    %2117 = vmatprep.subr.mxu0 0.0
    %2118 = vmatpush1.msra.mxu0 0.0
    %2119 = vmatprep.subr.mxu0 0.0
    %2120 = vmatpush1.msra.mxu0 0.0
    %2121 = vmatprep.subr.mxu0 0.0
    %2122 = vmatpush1.msra.mxu0 0.0
    %2123 = vmatprep.subr.mxu0 0.0
    %2124 = vmatpush1.msra.mxu0 0.0
    %2125 = vmatprep.subr.mxu0 0.0
    %2126 = vmatpush1.msra.mxu0 0.0
    %2127 = vmatprep.subr.mxu0 0.0
    %2128 = vmatpush1.msra.mxu0 0.0
    %2129 = vmatprep.subr.mxu0 0.0
    %2130 = vmatpush1.msra.mxu0 0.0
    %2131 = vmatprep.subr.mxu0 0.0
    %2132 = vmatpush1.msra.mxu0 0.0
    %2133 = vmatprep.subr.mxu0 0.0
    %2134 = vmatpush1.msra.mxu0 0.0
    %2135 = vmatprep.subr.mxu0 0.0
    %2136 = vmatpush1.msra.mxu0 0.0
    %2137 = vmatprep.subr.mxu0 0.0
    %2138 = vmatpush1.msra.mxu0 0.0
    %2139 = vmatprep.subr.mxu0 0.0
    %2140 = vmatpush1.msra.mxu0 0.0
    %2141 = vmatprep.subr.mxu0 0.0
    %2142 = vmatpush1.msra.mxu0 0.0
    %2143 = vmatprep.mubr.f32.mxu0 0.0
    %2144 = vmatmul.mubr.f32.gmra.mrb[0].mxu0 %v2074
    %v2145 = vpop.f32.mrb[0].mxu0
    %v2146 = vadd.f32 0.0, %v2145
    %v2147 = vpop.f32.mrb[0].mxu0
    %v2148 = vadd.f32 0.0, %v2147
    %2149 = vmatprep.mubr.f32.mxu0 0.0
    %2150 = vmatmul.mubr.f32.gmra.mrb[0].mxu0 %v2077
    %v2151 = vpop.f32.mrb[0].mxu0
    %v2152 = vadd.f32 0.0, %v2151
    %v2153 = vpop.f32.mrb[0].mxu0
    %v2154 = vadd.f32 0.0, %v2153
    %2155 = vdwg.mxu0
    %v2156 = vadd.f32 %v1926, %v2146
    %v2157 = vadd.f32 %v1927, %v2148
    %v2158 = vadd.f32 %v1928, %v2152
    %v2159 = vadd.f32 %v1929, %v2154
    %v2160 = vmax.f32 %v2156, 0.0
    %v2161 = vmax.f32 %v2157, 0.0
    %v2162 = vmax.f32 %v2158, 0.0
    %v2163 = vmax.f32 %v2159, 0.0
    %v2164 = vld [vmem:[#allocation8 + $0x900] sm:$0xff]
    %v2165 = vld [vmem:[#allocation8 + $0x908] sm:$0xff]
    %v2166 = vld [vmem:[#allocation8] sm:$0xff]
    %v2167 = vld [vmem:[#allocation8 + $0x8] sm:$0xff]
    %v2168 = vld [vmem:[#allocation8 + $0x10] sm:$0xff]
    %v2169 = vld [vmem:[#allocation8 + $0x18] sm:$0xff]
    %v2170 = vld [vmem:[#allocation8 + $0x20] sm:$0xff]
    %v2171 = vld [vmem:[#allocation8 + $0x28] sm:$0xff]
    %v2172 = vld [vmem:[#allocation8 + $0x30] sm:$0xff]
    %v2173 = vld [vmem:[#allocation8 + $0x38] sm:$0xff]
    %v2174 = vld [vmem:[#allocation8 + $0x40] sm:$0xff]
    %v2175 = vld [vmem:[#allocation8 + $0x48] sm:$0xff]
    %v2176 = vld [vmem:[#allocation8 + $0x50] sm:$0xff]
    %v2177 = vld [vmem:[#allocation8 + $0x58] sm:$0xff]
    %v2178 = vld [vmem:[#allocation8 + $0x60] sm:$0xff]
    %v2179 = vld [vmem:[#allocation8 + $0x68] sm:$0xff]
    %v2180 = vld [vmem:[#allocation8 + $0x70] sm:$0xff]
    %v2181 = vld [vmem:[#allocation8 + $0x78] sm:$0xff]
    %v2182 = vld [vmem:[#allocation8 + $0x80] sm:$0xff]
    %v2183 = vld [vmem:[#allocation8 + $0x88] sm:$0xff]
    %v2184 = vld [vmem:[#allocation8 + $0x90] sm:$0xff]
    %v2185 = vld [vmem:[#allocation8 + $0x98] sm:$0xff]
    %v2186 = vld [vmem:[#allocation8 + $0xa0] sm:$0xff]
    %v2187 = vld [vmem:[#allocation8 + $0xa8] sm:$0xff]
    %v2188 = vld [vmem:[#allocation8 + $0xb0] sm:$0xff]
    %v2189 = vld [vmem:[#allocation8 + $0xb8] sm:$0xff]
    %v2190 = vld [vmem:[#allocation8 + $0xc0] sm:$0xff]
    %v2191 = vld [vmem:[#allocation8 + $0xc8] sm:$0xff]
    %v2192 = vld [vmem:[#allocation8 + $0xd0] sm:$0xff]
    %v2193 = vld [vmem:[#allocation8 + $0xd8] sm:$0xff]
    %v2194 = vld [vmem:[#allocation8 + $0xe0] sm:$0xff]
    %v2195 = vld [vmem:[#allocation8 + $0xe8] sm:$0xff]
    %v2196 = vld [vmem:[#allocation8 + $0xf0] sm:$0xff]
    %v2197 = vld [vmem:[#allocation8 + $0xf8] sm:$0xff]
    %v2198 = vld [vmem:[%s5 + $0xc0] sm:$0xff]
    %v2199 = vld [vmem:[%s5 + $0xc8] sm:$0xff]
    %2200 = vmatprep.subr.mxu0 0.0
    %2201 = vmatpush1.msra.mxu0 %v2166
    %2202 = vmatprep.subr.mxu0 0.0
    %2203 = vmatpush1.msra.mxu0 %v2167
    %2204 = vmatprep.subr.mxu0 0.0
    %2205 = vmatpush1.msra.mxu0 %v2168
    %2206 = vmatprep.subr.mxu0 0.0
    %2207 = vmatpush1.msra.mxu0 %v2169
    %2208 = vmatprep.subr.mxu0 0.0
    %2209 = vmatpush1.msra.mxu0 %v2170
    %2210 = vmatprep.subr.mxu0 0.0
    %2211 = vmatpush1.msra.mxu0 %v2171
    %2212 = vmatprep.subr.mxu0 0.0
    %2213 = vmatpush1.msra.mxu0 %v2172
    %2214 = vmatprep.subr.mxu0 0.0
    %2215 = vmatpush1.msra.mxu0 %v2173
    %2216 = vmatprep.subr.mxu0 0.0
    %2217 = vmatpush1.msra.mxu0 %v2174
    %2218 = vmatprep.subr.mxu0 0.0
    %2219 = vmatpush1.msra.mxu0 %v2175
    %2220 = vmatprep.subr.mxu0 0.0
    %2221 = vmatpush1.msra.mxu0 %v2176
    %2222 = vmatprep.subr.mxu0 0.0
    %2223 = vmatpush1.msra.mxu0 %v2177
    %2224 = vmatprep.subr.mxu0 0.0
    %2225 = vmatpush1.msra.mxu0 %v2178
    %2226 = vmatprep.subr.mxu0 0.0
    %2227 = vmatpush1.msra.mxu0 %v2179
    %2228 = vmatprep.subr.mxu0 0.0
    %2229 = vmatpush1.msra.mxu0 %v2180
    %2230 = vmatprep.subr.mxu0 0.0
    %2231 = vmatpush1.msra.mxu0 %v2181
    %2232 = vmatprep.subr.mxu0 0.0
    %2233 = vmatpush1.msra.mxu0 %v2182
    %2234 = vmatprep.subr.mxu0 0.0
    %2235 = vmatpush1.msra.mxu0 %v2183
    %2236 = vmatprep.subr.mxu0 0.0
    %2237 = vmatpush1.msra.mxu0 %v2184
    %2238 = vmatprep.subr.mxu0 0.0
    %2239 = vmatpush1.msra.mxu0 %v2185
    %2240 = vmatprep.subr.mxu0 0.0
    %2241 = vmatpush1.msra.mxu0 %v2186
    %2242 = vmatprep.subr.mxu0 0.0
    %2243 = vmatpush1.msra.mxu0 %v2187
    %2244 = vmatprep.subr.mxu0 0.0
    %2245 = vmatpush1.msra.mxu0 %v2188
    %2246 = vmatprep.subr.mxu0 0.0
    %2247 = vmatpush1.msra.mxu0 %v2189
    %2248 = vmatprep.subr.mxu0 0.0
    %2249 = vmatpush1.msra.mxu0 %v2190
    %2250 = vmatprep.subr.mxu0 0.0
    %2251 = vmatpush1.msra.mxu0 %v2191
    %2252 = vmatprep.subr.mxu0 0.0
    %2253 = vmatpush1.msra.mxu0 %v2192
    %2254 = vmatprep.subr.mxu0 0.0
    %2255 = vmatpush1.msra.mxu0 %v2193
    %2256 = vmatprep.subr.mxu0 0.0
    %2257 = vmatpush1.msra.mxu0 %v2194
    %2258 = vmatprep.subr.mxu0 0.0
    %2259 = vmatpush1.msra.mxu0 %v2195
    %2260 = vmatprep.subr.mxu0 0.0
    %2261 = vmatpush1.msra.mxu0 %v2196
    %2262 = vmatprep.subr.mxu0 0.0
    %2263 = vmatpush1.msra.mxu0 %v2197
    %2264 = vmatprep.mubr.f32.mxu0 %v2161
    %2265 = vmatmul.mubr.f32.gmra.mrb[0].mxu0 %v2160
    %v2266 = vpop.f32.mrb[0].mxu0
    %v2267 = vadd.f32 0.0, %v2266
    %v2268 = vpop.f32.mrb[0].mxu0
    %2269 = vmatprep.mubr.f32.mxu0 %v2163
    %2270 = vmatmul.mubr.f32.gmra.mrb[0].mxu0 %v2162
    %v2271 = vpop.f32.mrb[0].mxu0
    %v2272 = vadd.f32 0.0, %v2271
    %v2273 = vpop.f32.mrb[0].mxu0
    %2274 = vdwg.mxu0
    %v2276 = vsel %vm232, %v2198, 0
    %v2279 = vsel %vm232, %v2199, 0
    %2281 = vmatprep.subr.mxu0 0.0
    %2282 = vmatpush1.msra.mxu0 %v2267
    %2283 = vmatprep.subr.mxu0 0.0
    %2284 = vmatpush1.msra.mxu0 %v2272
    %2285 = vmatprep.subr.mxu0 0.0
    %2286 = vmatpush1.msra.mxu0 0.0
    %2287 = vmatprep.subr.mxu0 0.0
    %2288 = vmatpush1.msra.mxu0 0.0
    %2289 = vmatprep.subr.mxu0 0.0
    %2290 = vmatpush1.msra.mxu0 0.0
    %2291 = vmatprep.subr.mxu0 0.0
    %2292 = vmatpush1.msra.mxu0 0.0
    %2293 = vmatprep.subr.mxu0 0.0
    %2294 = vmatpush1.msra.mxu0 0.0
    %2295 = vmatprep.subr.mxu0 0.0
    %2296 = vmatpush1.msra.mxu0 0.0
    %2297 = vmatprep.subr.mxu0 0.0
    %2298 = vmatpush1.msra.mxu0 0.0
    %2299 = vmatprep.subr.mxu0 0.0
    %2300 = vmatpush1.msra.mxu0 0.0
    %2301 = vmatprep.subr.mxu0 0.0
    %2302 = vmatpush1.msra.mxu0 0.0
    %2303 = vmatprep.subr.mxu0 0.0
    %2304 = vmatpush1.msra.mxu0 0.0
    %2305 = vmatprep.subr.mxu0 0.0
    %2306 = vmatpush1.msra.mxu0 0.0
    %2307 = vmatprep.subr.mxu0 0.0
    %2308 = vmatpush1.msra.mxu0 0.0
    %2309 = vmatprep.subr.mxu0 0.0
    %2310 = vmatpush1.msra.mxu0 0.0
    %2311 = vmatprep.subr.mxu0 0.0
    %2312 = vmatpush1.msra.mxu0 0.0
    %2313 = vmatprep.subr.mxu0 0.0
    %2314 = vmatpush1.msra.mxu0 0.0
    %2315 = vmatprep.subr.mxu0 0.0
    %2316 = vmatpush1.msra.mxu0 0.0
    %2317 = vmatprep.subr.mxu0 0.0
    %2318 = vmatpush1.msra.mxu0 0.0
    %2319 = vmatprep.subr.mxu0 0.0
    %2320 = vmatpush1.msra.mxu0 0.0
    %2321 = vmatprep.subr.mxu0 0.0
    %2322 = vmatpush1.msra.mxu0 0.0
    %2323 = vmatprep.subr.mxu0 0.0
    %2324 = vmatpush1.msra.mxu0 0.0
    %2325 = vmatprep.subr.mxu0 0.0
    %2326 = vmatpush1.msra.mxu0 0.0
    %2327 = vmatprep.subr.mxu0 0.0
    %2328 = vmatpush1.msra.mxu0 0.0
    %2329 = vmatprep.subr.mxu0 0.0
    %2330 = vmatpush1.msra.mxu0 0.0
    %2331 = vmatprep.subr.mxu0 0.0
    %2332 = vmatpush1.msra.mxu0 0.0
    %2333 = vmatprep.subr.mxu0 0.0
    %2334 = vmatpush1.msra.mxu0 0.0
    %2335 = vmatprep.subr.mxu0 0.0
    %2336 = vmatpush1.msra.mxu0 0.0
    %2337 = vmatprep.subr.mxu0 0.0
    %2338 = vmatpush1.msra.mxu0 0.0
    %2339 = vmatprep.subr.mxu0 0.0
    %2340 = vmatpush1.msra.mxu0 0.0
    %2341 = vmatprep.subr.mxu0 0.0
    %2342 = vmatpush1.msra.mxu0 0.0
    %2343 = vmatprep.subr.mxu0 0.0
    %2344 = vmatpush1.msra.mxu0 0.0
    %2345 = vmatprep.mubr.f32.mxu0 0.0
    %2346 = vmatmul.mubr.f32.gmra.mrb[0].mxu0 %v2276
    %v2347 = vpop.f32.mrb[0].mxu0
    %v2348 = vadd.f32 0.0, %v2347
    %v2349 = vpop.f32.mrb[0].mxu0
    %2350 = vmatprep.mubr.f32.mxu0 0.0
    %2351 = vmatmul.mubr.f32.gmra.mrb[0].mxu0 %v2279
    %v2352 = vpop.f32.mrb[0].mxu0
    %v2353 = vadd.f32 0.0, %v2352
    %v2354 = vpop.f32.mrb[0].mxu0
    %2355 = vdwg.mxu0
    %v2356 = vadd.f32 %v2164, %v2348
    %v2357 = vadd.f32 %v2165, %v2353
    %v2358 = vld [vmem:[#allocation8 + $0x100] sm:$0xff]
    %v2359 = vld [vmem:[#allocation8 + $0x108] sm:$0xff]
    %v2360 = vld [vmem:[#allocation8 + $0x110] sm:$0xff]
    %v2361 = vld [vmem:[#allocation8 + $0x118] sm:$0xff]
    %v2362 = vld [vmem:[#allocation8 + $0x120] sm:$0xff]
    %v2363 = vld [vmem:[#allocation8 + $0x128] sm:$0xff]
    %v2364 = vld [vmem:[#allocation8 + $0x130] sm:$0xff]
    %v2365 = vld [vmem:[#allocation8 + $0x138] sm:$0xff]
    %v2366 = vld [vmem:[#allocation8 + $0x140] sm:$0xff]
    %v2367 = vld [vmem:[#allocation8 + $0x148] sm:$0xff]
    %v2368 = vld [vmem:[#allocation8 + $0x150] sm:$0xff]
    %v2369 = vld [vmem:[#allocation8 + $0x158] sm:$0xff]
    %v2370 = vld [vmem:[#allocation8 + $0x160] sm:$0xff]
    %v2371 = vld [vmem:[#allocation8 + $0x168] sm:$0xff]
    %v2372 = vld [vmem:[#allocation8 + $0x170] sm:$0xff]
    %v2373 = vld [vmem:[#allocation8 + $0x178] sm:$0xff]
    %v2374 = vld [vmem:[#allocation8 + $0x180] sm:$0xff]
    %v2375 = vld [vmem:[#allocation8 + $0x188] sm:$0xff]
    %v2376 = vld [vmem:[#allocation8 + $0x190] sm:$0xff]
    %v2377 = vld [vmem:[#allocation8 + $0x198] sm:$0xff]
    %v2378 = vld [vmem:[#allocation8 + $0x1a0] sm:$0xff]
    %v2379 = vld [vmem:[#allocation8 + $0x1a8] sm:$0xff]
    %v2380 = vld [vmem:[#allocation8 + $0x1b0] sm:$0xff]
    %v2381 = vld [vmem:[#allocation8 + $0x1b8] sm:$0xff]
    %v2382 = vld [vmem:[#allocation8 + $0x1c0] sm:$0xff]
    %v2383 = vld [vmem:[#allocation8 + $0x1c8] sm:$0xff]
    %v2384 = vld [vmem:[#allocation8 + $0x1d0] sm:$0xff]
    %v2385 = vld [vmem:[#allocation8 + $0x1d8] sm:$0xff]
    %v2386 = vld [vmem:[#allocation8 + $0x1e0] sm:$0xff]
    %v2387 = vld [vmem:[#allocation8 + $0x1e8] sm:$0xff]
    %v2388 = vld [vmem:[#allocation8 + $0x1f0] sm:$0xff]
    %v2389 = vld [vmem:[#allocation8 + $0x1f8] sm:$0xff]
    %v2390 = vld [vmem:[%s5 + $0xd0] sm:$0xff]
    %v2391 = vld [vmem:[%s5 + $0xd8] sm:$0xff]
    %2392 = vmatprep.subr.mxu0 0.0
    %2393 = vmatpush1.msra.mxu0 %v2358
    %2394 = vmatprep.subr.mxu0 0.0
    %2395 = vmatpush1.msra.mxu0 %v2359
    %2396 = vmatprep.subr.mxu0 0.0
    %2397 = vmatpush1.msra.mxu0 %v2360
    %2398 = vmatprep.subr.mxu0 0.0
    %2399 = vmatpush1.msra.mxu0 %v2361
    %2400 = vmatprep.subr.mxu0 0.0
    %2401 = vmatpush1.msra.mxu0 %v2362
    %2402 = vmatprep.subr.mxu0 0.0
    %2403 = vmatpush1.msra.mxu0 %v2363
    %2404 = vmatprep.subr.mxu0 0.0
    %2405 = vmatpush1.msra.mxu0 %v2364
    %2406 = vmatprep.subr.mxu0 0.0
    %2407 = vmatpush1.msra.mxu0 %v2365
    %2408 = vmatprep.subr.mxu0 0.0
    %2409 = vmatpush1.msra.mxu0 %v2366
    %2410 = vmatprep.subr.mxu0 0.0
    %2411 = vmatpush1.msra.mxu0 %v2367
    %2412 = vmatprep.subr.mxu0 0.0
    %2413 = vmatpush1.msra.mxu0 %v2368
    %2414 = vmatprep.subr.mxu0 0.0
    %2415 = vmatpush1.msra.mxu0 %v2369
    %2416 = vmatprep.subr.mxu0 0.0
    %2417 = vmatpush1.msra.mxu0 %v2370
    %2418 = vmatprep.subr.mxu0 0.0
    %2419 = vmatpush1.msra.mxu0 %v2371
    %2420 = vmatprep.subr.mxu0 0.0
    %2421 = vmatpush1.msra.mxu0 %v2372
    %2422 = vmatprep.subr.mxu0 0.0
    %2423 = vmatpush1.msra.mxu0 %v2373
    %2424 = vmatprep.subr.mxu0 0.0
    %2425 = vmatpush1.msra.mxu0 %v2374
    %2426 = vmatprep.subr.mxu0 0.0
    %2427 = vmatpush1.msra.mxu0 %v2375
    %2428 = vmatprep.subr.mxu0 0.0
    %2429 = vmatpush1.msra.mxu0 %v2376
    %2430 = vmatprep.subr.mxu0 0.0
    %2431 = vmatpush1.msra.mxu0 %v2377
    %2432 = vmatprep.subr.mxu0 0.0
    %2433 = vmatpush1.msra.mxu0 %v2378
    %2434 = vmatprep.subr.mxu0 0.0
    %2435 = vmatpush1.msra.mxu0 %v2379
    %2436 = vmatprep.subr.mxu0 0.0
    %2437 = vmatpush1.msra.mxu0 %v2380
    %2438 = vmatprep.subr.mxu0 0.0
    %2439 = vmatpush1.msra.mxu0 %v2381
    %2440 = vmatprep.subr.mxu0 0.0
    %2441 = vmatpush1.msra.mxu0 %v2382
    %2442 = vmatprep.subr.mxu0 0.0
    %2443 = vmatpush1.msra.mxu0 %v2383
    %2444 = vmatprep.subr.mxu0 0.0
    %2445 = vmatpush1.msra.mxu0 %v2384
    %2446 = vmatprep.subr.mxu0 0.0
    %2447 = vmatpush1.msra.mxu0 %v2385
    %2448 = vmatprep.subr.mxu0 0.0
    %2449 = vmatpush1.msra.mxu0 %v2386
    %2450 = vmatprep.subr.mxu0 0.0
    %2451 = vmatpush1.msra.mxu0 %v2387
    %2452 = vmatprep.subr.mxu0 0.0
    %2453 = vmatpush1.msra.mxu0 %v2388
    %2454 = vmatprep.subr.mxu0 0.0
    %2455 = vmatpush1.msra.mxu0 %v2389
    %2456 = vmatprep.mubr.f32.mxu0 %v2161
    %2457 = vmatmul.mubr.f32.gmra.mrb[0].mxu0 %v2160
    %v2458 = vpop.f32.mrb[0].mxu0
    %v2459 = vadd.f32 0.0, %v2458
    %v2460 = vpop.f32.mrb[0].mxu0
    %2461 = vmatprep.mubr.f32.mxu0 %v2163
    %2462 = vmatmul.mubr.f32.gmra.mrb[0].mxu0 %v2162
    %v2463 = vpop.f32.mrb[0].mxu0
    %v2464 = vadd.f32 0.0, %v2463
    %v2465 = vpop.f32.mrb[0].mxu0
    %2466 = vdwg.mxu0
    %v2468 = vsel %vm232, %v2390, 0
    %v2471 = vsel %vm232, %v2391, 0
    %2473 = vmatprep.subr.mxu0 0.0
    %2474 = vmatpush1.msra.mxu0 %v2459
    %2475 = vmatprep.subr.mxu0 0.0
    %2476 = vmatpush1.msra.mxu0 %v2464
    %2477 = vmatprep.subr.mxu0 0.0
    %2478 = vmatpush1.msra.mxu0 0.0
    %2479 = vmatprep.subr.mxu0 0.0
    %2480 = vmatpush1.msra.mxu0 0.0
    %2481 = vmatprep.subr.mxu0 0.0
    %2482 = vmatpush1.msra.mxu0 0.0
    %2483 = vmatprep.subr.mxu0 0.0
    %2484 = vmatpush1.msra.mxu0 0.0
    %2485 = vmatprep.subr.mxu0 0.0
    %2486 = vmatpush1.msra.mxu0 0.0
    %2487 = vmatprep.subr.mxu0 0.0
    %2488 = vmatpush1.msra.mxu0 0.0
    %2489 = vmatprep.subr.mxu0 0.0
    %2490 = vmatpush1.msra.mxu0 0.0
    %2491 = vmatprep.subr.mxu0 0.0
    %2492 = vmatpush1.msra.mxu0 0.0
    %2493 = vmatprep.subr.mxu0 0.0
    %2494 = vmatpush1.msra.mxu0 0.0
    %2495 = vmatprep.subr.mxu0 0.0
    %2496 = vmatpush1.msra.mxu0 0.0
    %2497 = vmatprep.subr.mxu0 0.0
    %2498 = vmatpush1.msra.mxu0 0.0
    %2499 = vmatprep.subr.mxu0 0.0
    %2500 = vmatpush1.msra.mxu0 0.0
    %2501 = vmatprep.subr.mxu0 0.0
    %2502 = vmatpush1.msra.mxu0 0.0
    %2503 = vmatprep.subr.mxu0 0.0
    %2504 = vmatpush1.msra.mxu0 0.0
    %2505 = vmatprep.subr.mxu0 0.0
    %2506 = vmatpush1.msra.mxu0 0.0
    %2507 = vmatprep.subr.mxu0 0.0
    %2508 = vmatpush1.msra.mxu0 0.0
    %2509 = vmatprep.subr.mxu0 0.0
    %2510 = vmatpush1.msra.mxu0 0.0
    %2511 = vmatprep.subr.mxu0 0.0
    %2512 = vmatpush1.msra.mxu0 0.0
    %2513 = vmatprep.subr.mxu0 0.0
    %2514 = vmatpush1.msra.mxu0 0.0
    %2515 = vmatprep.subr.mxu0 0.0
    %2516 = vmatpush1.msra.mxu0 0.0
    %2517 = vmatprep.subr.mxu0 0.0
    %2518 = vmatpush1.msra.mxu0 0.0
    %2519 = vmatprep.subr.mxu0 0.0
    %2520 = vmatpush1.msra.mxu0 0.0
    %2521 = vmatprep.subr.mxu0 0.0
    %2522 = vmatpush1.msra.mxu0 0.0
    %2523 = vmatprep.subr.mxu0 0.0
    %2524 = vmatpush1.msra.mxu0 0.0
    %2525 = vmatprep.subr.mxu0 0.0
    %2526 = vmatpush1.msra.mxu0 0.0
    %2527 = vmatprep.subr.mxu0 0.0
    %2528 = vmatpush1.msra.mxu0 0.0
    %2529 = vmatprep.subr.mxu0 0.0
    %2530 = vmatpush1.msra.mxu0 0.0
    %2531 = vmatprep.subr.mxu0 0.0
    %2532 = vmatpush1.msra.mxu0 0.0
    %2533 = vmatprep.subr.mxu0 0.0
    %2534 = vmatpush1.msra.mxu0 0.0
    %2535 = vmatprep.subr.mxu0 0.0
    %2536 = vmatpush1.msra.mxu0 0.0
    %2537 = vmatprep.mubr.f32.mxu0 0.0
    %2538 = vmatmul.mubr.f32.gmra.mrb[0].mxu0 %v2468
    %v2539 = vpop.f32.mrb[0].mxu0
    %v2540 = vadd.f32 0.0, %v2539
    %v2541 = vpop.f32.mrb[0].mxu0
    %2542 = vmatprep.mubr.f32.mxu0 0.0
    %2543 = vmatmul.mubr.f32.gmra.mrb[0].mxu0 %v2471
    %v2544 = vpop.f32.mrb[0].mxu0
    %v2545 = vadd.f32 0.0, %v2544
    %v2546 = vpop.f32.mrb[0].mxu0
    %2547 = vdwg.mxu0
    %v2548 = vadd.f32 %v2356, %v2540
    %v2549 = vadd.f32 %v2357, %v2545
    %v2550 = vld [vmem:[#allocation8 + $0x200] sm:$0xff]
    %v2551 = vld [vmem:[#allocation8 + $0x208] sm:$0xff]
    %v2552 = vld [vmem:[#allocation8 + $0x210] sm:$0xff]
    %v2553 = vld [vmem:[#allocation8 + $0x218] sm:$0xff]
    %v2554 = vld [vmem:[#allocation8 + $0x220] sm:$0xff]
    %v2555 = vld [vmem:[#allocation8 + $0x228] sm:$0xff]
    %v2556 = vld [vmem:[#allocation8 + $0x230] sm:$0xff]
    %v2557 = vld [vmem:[#allocation8 + $0x238] sm:$0xff]
    %v2558 = vld [vmem:[#allocation8 + $0x240] sm:$0xff]
    %v2559 = vld [vmem:[#allocation8 + $0x248] sm:$0xff]
    %v2560 = vld [vmem:[#allocation8 + $0x250] sm:$0xff]
    %v2561 = vld [vmem:[#allocation8 + $0x258] sm:$0xff]
    %v2562 = vld [vmem:[#allocation8 + $0x260] sm:$0xff]
    %v2563 = vld [vmem:[#allocation8 + $0x268] sm:$0xff]
    %v2564 = vld [vmem:[#allocation8 + $0x270] sm:$0xff]
    %v2565 = vld [vmem:[#allocation8 + $0x278] sm:$0xff]
    %v2566 = vld [vmem:[#allocation8 + $0x280] sm:$0xff]
    %v2567 = vld [vmem:[#allocation8 + $0x288] sm:$0xff]
    %v2568 = vld [vmem:[#allocation8 + $0x290] sm:$0xff]
    %v2569 = vld [vmem:[#allocation8 + $0x298] sm:$0xff]
    %v2570 = vld [vmem:[#allocation8 + $0x2a0] sm:$0xff]
    %v2571 = vld [vmem:[#allocation8 + $0x2a8] sm:$0xff]
    %v2572 = vld [vmem:[#allocation8 + $0x2b0] sm:$0xff]
    %v2573 = vld [vmem:[#allocation8 + $0x2b8] sm:$0xff]
    %v2574 = vld [vmem:[#allocation8 + $0x2c0] sm:$0xff]
    %v2575 = vld [vmem:[#allocation8 + $0x2c8] sm:$0xff]
    %v2576 = vld [vmem:[#allocation8 + $0x2d0] sm:$0xff]
    %v2577 = vld [vmem:[#allocation8 + $0x2d8] sm:$0xff]
    %v2578 = vld [vmem:[#allocation8 + $0x2e0] sm:$0xff]
    %v2579 = vld [vmem:[#allocation8 + $0x2e8] sm:$0xff]
    %v2580 = vld [vmem:[#allocation8 + $0x2f0] sm:$0xff]
    %v2581 = vld [vmem:[#allocation8 + $0x2f8] sm:$0xff]
    %v2582 = vld [vmem:[%s5 + $0xe0] sm:$0xff]
    %v2583 = vld [vmem:[%s5 + $0xe8] sm:$0xff]
    %2584 = vmatprep.subr.mxu0 0.0
    %2585 = vmatpush1.msra.mxu0 %v2550
    %2586 = vmatprep.subr.mxu0 0.0
    %2587 = vmatpush1.msra.mxu0 %v2551
    %2588 = vmatprep.subr.mxu0 0.0
    %2589 = vmatpush1.msra.mxu0 %v2552
    %2590 = vmatprep.subr.mxu0 0.0
    %2591 = vmatpush1.msra.mxu0 %v2553
    %2592 = vmatprep.subr.mxu0 0.0
    %2593 = vmatpush1.msra.mxu0 %v2554
    %2594 = vmatprep.subr.mxu0 0.0
    %2595 = vmatpush1.msra.mxu0 %v2555
    %2596 = vmatprep.subr.mxu0 0.0
    %2597 = vmatpush1.msra.mxu0 %v2556
    %2598 = vmatprep.subr.mxu0 0.0
    %2599 = vmatpush1.msra.mxu0 %v2557
    %2600 = vmatprep.subr.mxu0 0.0
    %2601 = vmatpush1.msra.mxu0 %v2558
    %2602 = vmatprep.subr.mxu0 0.0
    %2603 = vmatpush1.msra.mxu0 %v2559
    %2604 = vmatprep.subr.mxu0 0.0
    %2605 = vmatpush1.msra.mxu0 %v2560
    %2606 = vmatprep.subr.mxu0 0.0
    %2607 = vmatpush1.msra.mxu0 %v2561
    %2608 = vmatprep.subr.mxu0 0.0
    %2609 = vmatpush1.msra.mxu0 %v2562
    %2610 = vmatprep.subr.mxu0 0.0
    %2611 = vmatpush1.msra.mxu0 %v2563
    %2612 = vmatprep.subr.mxu0 0.0
    %2613 = vmatpush1.msra.mxu0 %v2564
    %2614 = vmatprep.subr.mxu0 0.0
    %2615 = vmatpush1.msra.mxu0 %v2565
    %2616 = vmatprep.subr.mxu0 0.0
    %2617 = vmatpush1.msra.mxu0 %v2566
    %2618 = vmatprep.subr.mxu0 0.0
    %2619 = vmatpush1.msra.mxu0 %v2567
    %2620 = vmatprep.subr.mxu0 0.0
    %2621 = vmatpush1.msra.mxu0 %v2568
    %2622 = vmatprep.subr.mxu0 0.0
    %2623 = vmatpush1.msra.mxu0 %v2569
    %2624 = vmatprep.subr.mxu0 0.0
    %2625 = vmatpush1.msra.mxu0 %v2570
    %2626 = vmatprep.subr.mxu0 0.0
    %2627 = vmatpush1.msra.mxu0 %v2571
    %2628 = vmatprep.subr.mxu0 0.0
    %2629 = vmatpush1.msra.mxu0 %v2572
    %2630 = vmatprep.subr.mxu0 0.0
    %2631 = vmatpush1.msra.mxu0 %v2573
    %2632 = vmatprep.subr.mxu0 0.0
    %2633 = vmatpush1.msra.mxu0 %v2574
    %2634 = vmatprep.subr.mxu0 0.0
    %2635 = vmatpush1.msra.mxu0 %v2575
    %2636 = vmatprep.subr.mxu0 0.0
    %2637 = vmatpush1.msra.mxu0 %v2576
    %2638 = vmatprep.subr.mxu0 0.0
    %2639 = vmatpush1.msra.mxu0 %v2577
    %2640 = vmatprep.subr.mxu0 0.0
    %2641 = vmatpush1.msra.mxu0 %v2578
    %2642 = vmatprep.subr.mxu0 0.0
    %2643 = vmatpush1.msra.mxu0 %v2579
    %2644 = vmatprep.subr.mxu0 0.0
    %2645 = vmatpush1.msra.mxu0 %v2580
    %2646 = vmatprep.subr.mxu0 0.0
    %2647 = vmatpush1.msra.mxu0 %v2581
    %2648 = vmatprep.mubr.f32.mxu0 %v2161
    %2649 = vmatmul.mubr.f32.gmra.mrb[0].mxu0 %v2160
    %v2650 = vpop.f32.mrb[0].mxu0
    %v2651 = vadd.f32 0.0, %v2650
    %v2652 = vpop.f32.mrb[0].mxu0
    %2653 = vmatprep.mubr.f32.mxu0 %v2163
    %2654 = vmatmul.mubr.f32.gmra.mrb[0].mxu0 %v2162
    %v2655 = vpop.f32.mrb[0].mxu0
    %v2656 = vadd.f32 0.0, %v2655
    %v2657 = vpop.f32.mrb[0].mxu0
    %2658 = vdwg.mxu0
    %v2660 = vsel %vm232, %v2582, 0
    %v2663 = vsel %vm232, %v2583, 0
    %2665 = vmatprep.subr.mxu0 0.0
    %2666 = vmatpush1.msra.mxu0 %v2651
    %2667 = vmatprep.subr.mxu0 0.0
    %2668 = vmatpush1.msra.mxu0 %v2656
    %2669 = vmatprep.subr.mxu0 0.0
    %2670 = vmatpush1.msra.mxu0 0.0
    %2671 = vmatprep.subr.mxu0 0.0
    %2672 = vmatpush1.msra.mxu0 0.0
    %2673 = vmatprep.subr.mxu0 0.0
    %2674 = vmatpush1.msra.mxu0 0.0
    %2675 = vmatprep.subr.mxu0 0.0
    %2676 = vmatpush1.msra.mxu0 0.0
    %2677 = vmatprep.subr.mxu0 0.0
    %2678 = vmatpush1.msra.mxu0 0.0
    %2679 = vmatprep.subr.mxu0 0.0
    %2680 = vmatpush1.msra.mxu0 0.0
    %2681 = vmatprep.subr.mxu0 0.0
    %2682 = vmatpush1.msra.mxu0 0.0
    %2683 = vmatprep.subr.mxu0 0.0
    %2684 = vmatpush1.msra.mxu0 0.0
    %2685 = vmatprep.subr.mxu0 0.0
    %2686 = vmatpush1.msra.mxu0 0.0
    %2687 = vmatprep.subr.mxu0 0.0
    %2688 = vmatpush1.msra.mxu0 0.0
    %2689 = vmatprep.subr.mxu0 0.0
    %2690 = vmatpush1.msra.mxu0 0.0
    %2691 = vmatprep.subr.mxu0 0.0
    %2692 = vmatpush1.msra.mxu0 0.0
    %2693 = vmatprep.subr.mxu0 0.0
    %2694 = vmatpush1.msra.mxu0 0.0
    %2695 = vmatprep.subr.mxu0 0.0
    %2696 = vmatpush1.msra.mxu0 0.0
    %2697 = vmatprep.subr.mxu0 0.0
    %2698 = vmatpush1.msra.mxu0 0.0
    %2699 = vmatprep.subr.mxu0 0.0
    %2700 = vmatpush1.msra.mxu0 0.0
    %2701 = vmatprep.subr.mxu0 0.0
    %2702 = vmatpush1.msra.mxu0 0.0
    %2703 = vmatprep.subr.mxu0 0.0
    %2704 = vmatpush1.msra.mxu0 0.0
    %2705 = vmatprep.subr.mxu0 0.0
    %2706 = vmatpush1.msra.mxu0 0.0
    %2707 = vmatprep.subr.mxu0 0.0
    %2708 = vmatpush1.msra.mxu0 0.0
    %2709 = vmatprep.subr.mxu0 0.0
    %2710 = vmatpush1.msra.mxu0 0.0
    %2711 = vmatprep.subr.mxu0 0.0
    %2712 = vmatpush1.msra.mxu0 0.0
    %2713 = vmatprep.subr.mxu0 0.0
    %2714 = vmatpush1.msra.mxu0 0.0
    %2715 = vmatprep.subr.mxu0 0.0
    %2716 = vmatpush1.msra.mxu0 0.0
    %2717 = vmatprep.subr.mxu0 0.0
    %2718 = vmatpush1.msra.mxu0 0.0
    %2719 = vmatprep.subr.mxu0 0.0
    %2720 = vmatpush1.msra.mxu0 0.0
    %2721 = vmatprep.subr.mxu0 0.0
    %2722 = vmatpush1.msra.mxu0 0.0
    %2723 = vmatprep.subr.mxu0 0.0
    %2724 = vmatpush1.msra.mxu0 0.0
    %2725 = vmatprep.subr.mxu0 0.0
    %2726 = vmatpush1.msra.mxu0 0.0
    %2727 = vmatprep.subr.mxu0 0.0
    %2728 = vmatpush1.msra.mxu0 0.0
    %2729 = vmatprep.mubr.f32.mxu0 0.0
    %2730 = vmatmul.mubr.f32.gmra.mrb[0].mxu0 %v2660
    %v2731 = vpop.f32.mrb[0].mxu0
    %v2732 = vadd.f32 0.0, %v2731
    %v2733 = vpop.f32.mrb[0].mxu0
    %2734 = vmatprep.mubr.f32.mxu0 0.0
    %2735 = vmatmul.mubr.f32.gmra.mrb[0].mxu0 %v2663
    %v2736 = vpop.f32.mrb[0].mxu0
    %v2737 = vadd.f32 0.0, %v2736
    %v2738 = vpop.f32.mrb[0].mxu0
    %2739 = vdwg.mxu0
    %v2740 = vadd.f32 %v2548, %v2732
    %v2741 = vadd.f32 %v2549, %v2737
    %v2742 = vld [vmem:[#allocation8 + $0x300] sm:$0xff]
    %v2743 = vld [vmem:[#allocation8 + $0x308] sm:$0xff]
    %v2744 = vld [vmem:[#allocation8 + $0x310] sm:$0xff]
    %v2745 = vld [vmem:[#allocation8 + $0x318] sm:$0xff]
    %v2746 = vld [vmem:[#allocation8 + $0x320] sm:$0xff]
    %v2747 = vld [vmem:[#allocation8 + $0x328] sm:$0xff]
    %v2748 = vld [vmem:[#allocation8 + $0x330] sm:$0xff]
    %v2749 = vld [vmem:[#allocation8 + $0x338] sm:$0xff]
    %v2750 = vld [vmem:[#allocation8 + $0x340] sm:$0xff]
    %v2751 = vld [vmem:[#allocation8 + $0x348] sm:$0xff]
    %v2752 = vld [vmem:[#allocation8 + $0x350] sm:$0xff]
    %v2753 = vld [vmem:[#allocation8 + $0x358] sm:$0xff]
    %v2754 = vld [vmem:[#allocation8 + $0x360] sm:$0xff]
    %v2755 = vld [vmem:[#allocation8 + $0x368] sm:$0xff]
    %v2756 = vld [vmem:[#allocation8 + $0x370] sm:$0xff]
    %v2757 = vld [vmem:[#allocation8 + $0x378] sm:$0xff]
    %v2758 = vld [vmem:[#allocation8 + $0x380] sm:$0xff]
    %v2759 = vld [vmem:[#allocation8 + $0x388] sm:$0xff]
    %v2760 = vld [vmem:[#allocation8 + $0x390] sm:$0xff]
    %v2761 = vld [vmem:[#allocation8 + $0x398] sm:$0xff]
    %v2762 = vld [vmem:[#allocation8 + $0x3a0] sm:$0xff]
    %v2763 = vld [vmem:[#allocation8 + $0x3a8] sm:$0xff]
    %v2764 = vld [vmem:[#allocation8 + $0x3b0] sm:$0xff]
    %v2765 = vld [vmem:[#allocation8 + $0x3b8] sm:$0xff]
    %v2766 = vld [vmem:[#allocation8 + $0x3c0] sm:$0xff]
    %v2767 = vld [vmem:[#allocation8 + $0x3c8] sm:$0xff]
    %v2768 = vld [vmem:[#allocation8 + $0x3d0] sm:$0xff]
    %v2769 = vld [vmem:[#allocation8 + $0x3d8] sm:$0xff]
    %v2770 = vld [vmem:[#allocation8 + $0x3e0] sm:$0xff]
    %v2771 = vld [vmem:[#allocation8 + $0x3e8] sm:$0xff]
    %v2772 = vld [vmem:[#allocation8 + $0x3f0] sm:$0xff]
    %v2773 = vld [vmem:[#allocation8 + $0x3f8] sm:$0xff]
    %v2774 = vld [vmem:[%s5 + $0xf0] sm:$0xff]
    %v2775 = vld [vmem:[%s5 + $0xf8] sm:$0xff]
    %2776 = vmatprep.subr.mxu0 0.0
    %2777 = vmatpush1.msra.mxu0 %v2742
    %2778 = vmatprep.subr.mxu0 0.0
    %2779 = vmatpush1.msra.mxu0 %v2743
    %2780 = vmatprep.subr.mxu0 0.0
    %2781 = vmatpush1.msra.mxu0 %v2744
    %2782 = vmatprep.subr.mxu0 0.0
    %2783 = vmatpush1.msra.mxu0 %v2745
    %2784 = vmatprep.subr.mxu0 0.0
    %2785 = vmatpush1.msra.mxu0 %v2746
    %2786 = vmatprep.subr.mxu0 0.0
    %2787 = vmatpush1.msra.mxu0 %v2747
    %2788 = vmatprep.subr.mxu0 0.0
    %2789 = vmatpush1.msra.mxu0 %v2748
    %2790 = vmatprep.subr.mxu0 0.0
    %2791 = vmatpush1.msra.mxu0 %v2749
    %2792 = vmatprep.subr.mxu0 0.0
    %2793 = vmatpush1.msra.mxu0 %v2750
    %2794 = vmatprep.subr.mxu0 0.0
    %2795 = vmatpush1.msra.mxu0 %v2751
    %2796 = vmatprep.subr.mxu0 0.0
    %2797 = vmatpush1.msra.mxu0 %v2752
    %2798 = vmatprep.subr.mxu0 0.0
    %2799 = vmatpush1.msra.mxu0 %v2753
    %2800 = vmatprep.subr.mxu0 0.0
    %2801 = vmatpush1.msra.mxu0 %v2754
    %2802 = vmatprep.subr.mxu0 0.0
    %2803 = vmatpush1.msra.mxu0 %v2755
    %2804 = vmatprep.subr.mxu0 0.0
    %2805 = vmatpush1.msra.mxu0 %v2756
    %2806 = vmatprep.subr.mxu0 0.0
    %2807 = vmatpush1.msra.mxu0 %v2757
    %2808 = vmatprep.subr.mxu0 0.0
    %2809 = vmatpush1.msra.mxu0 %v2758
    %2810 = vmatprep.subr.mxu0 0.0
    %2811 = vmatpush1.msra.mxu0 %v2759
    %2812 = vmatprep.subr.mxu0 0.0
    %2813 = vmatpush1.msra.mxu0 %v2760
    %2814 = vmatprep.subr.mxu0 0.0
    %2815 = vmatpush1.msra.mxu0 %v2761
    %2816 = vmatprep.subr.mxu0 0.0
    %2817 = vmatpush1.msra.mxu0 %v2762
    %2818 = vmatprep.subr.mxu0 0.0
    %2819 = vmatpush1.msra.mxu0 %v2763
    %2820 = vmatprep.subr.mxu0 0.0
    %2821 = vmatpush1.msra.mxu0 %v2764
    %2822 = vmatprep.subr.mxu0 0.0
    %2823 = vmatpush1.msra.mxu0 %v2765
    %2824 = vmatprep.subr.mxu0 0.0
    %2825 = vmatpush1.msra.mxu0 %v2766
    %2826 = vmatprep.subr.mxu0 0.0
    %2827 = vmatpush1.msra.mxu0 %v2767
    %2828 = vmatprep.subr.mxu0 0.0
    %2829 = vmatpush1.msra.mxu0 %v2768
    %2830 = vmatprep.subr.mxu0 0.0
    %2831 = vmatpush1.msra.mxu0 %v2769
    %2832 = vmatprep.subr.mxu0 0.0
    %2833 = vmatpush1.msra.mxu0 %v2770
    %2834 = vmatprep.subr.mxu0 0.0
    %2835 = vmatpush1.msra.mxu0 %v2771
    %2836 = vmatprep.subr.mxu0 0.0
    %2837 = vmatpush1.msra.mxu0 %v2772
    %2838 = vmatprep.subr.mxu0 0.0
    %2839 = vmatpush1.msra.mxu0 %v2773
    %2840 = vmatprep.mubr.f32.mxu0 %v2161
    %2841 = vmatmul.mubr.f32.gmra.mrb[0].mxu0 %v2160
    %v2842 = vpop.f32.mrb[0].mxu0
    %v2843 = vadd.f32 0.0, %v2842
    %v2844 = vpop.f32.mrb[0].mxu0
    %2845 = vmatprep.mubr.f32.mxu0 %v2163
    %2846 = vmatmul.mubr.f32.gmra.mrb[0].mxu0 %v2162
    %v2847 = vpop.f32.mrb[0].mxu0
    %v2848 = vadd.f32 0.0, %v2847
    %v2849 = vpop.f32.mrb[0].mxu0
    %2850 = vdwg.mxu0
    %v2852 = vsel %vm232, %v2774, 0
    %v2855 = vsel %vm232, %v2775, 0
    %2857 = vmatprep.subr.mxu0 0.0
    %2858 = vmatpush1.msra.mxu0 %v2843
    %2859 = vmatprep.subr.mxu0 0.0
    %2860 = vmatpush1.msra.mxu0 %v2848
    %2861 = vmatprep.subr.mxu0 0.0
    %2862 = vmatpush1.msra.mxu0 0.0
    %2863 = vmatprep.subr.mxu0 0.0
    %2864 = vmatpush1.msra.mxu0 0.0
    %2865 = vmatprep.subr.mxu0 0.0
    %2866 = vmatpush1.msra.mxu0 0.0
    %2867 = vmatprep.subr.mxu0 0.0
    %2868 = vmatpush1.msra.mxu0 0.0
    %2869 = vmatprep.subr.mxu0 0.0
    %2870 = vmatpush1.msra.mxu0 0.0
    %2871 = vmatprep.subr.mxu0 0.0
    %2872 = vmatpush1.msra.mxu0 0.0
    %2873 = vmatprep.subr.mxu0 0.0
    %2874 = vmatpush1.msra.mxu0 0.0
    %2875 = vmatprep.subr.mxu0 0.0
    %2876 = vmatpush1.msra.mxu0 0.0
    %2877 = vmatprep.subr.mxu0 0.0
    %2878 = vmatpush1.msra.mxu0 0.0
    %2879 = vmatprep.subr.mxu0 0.0
    %2880 = vmatpush1.msra.mxu0 0.0
    %2881 = vmatprep.subr.mxu0 0.0
    %2882 = vmatpush1.msra.mxu0 0.0
    %2883 = vmatprep.subr.mxu0 0.0
    %2884 = vmatpush1.msra.mxu0 0.0
    %2885 = vmatprep.subr.mxu0 0.0
    %2886 = vmatpush1.msra.mxu0 0.0
    %2887 = vmatprep.subr.mxu0 0.0
    %2888 = vmatpush1.msra.mxu0 0.0
    %2889 = vmatprep.subr.mxu0 0.0
    %2890 = vmatpush1.msra.mxu0 0.0
    %2891 = vmatprep.subr.mxu0 0.0
    %2892 = vmatpush1.msra.mxu0 0.0
    %2893 = vmatprep.subr.mxu0 0.0
    %2894 = vmatpush1.msra.mxu0 0.0
    %2895 = vmatprep.subr.mxu0 0.0
    %2896 = vmatpush1.msra.mxu0 0.0
    %2897 = vmatprep.subr.mxu0 0.0
    %2898 = vmatpush1.msra.mxu0 0.0
    %2899 = vmatprep.subr.mxu0 0.0
    %2900 = vmatpush1.msra.mxu0 0.0
    %2901 = vmatprep.subr.mxu0 0.0
    %2902 = vmatpush1.msra.mxu0 0.0
    %2903 = vmatprep.subr.mxu0 0.0
    %2904 = vmatpush1.msra.mxu0 0.0
    %2905 = vmatprep.subr.mxu0 0.0
    %2906 = vmatpush1.msra.mxu0 0.0
    %2907 = vmatprep.subr.mxu0 0.0
    %2908 = vmatpush1.msra.mxu0 0.0
    %2909 = vmatprep.subr.mxu0 0.0
    %2910 = vmatpush1.msra.mxu0 0.0
    %2911 = vmatprep.subr.mxu0 0.0
    %2912 = vmatpush1.msra.mxu0 0.0
    %2913 = vmatprep.subr.mxu0 0.0
    %2914 = vmatpush1.msra.mxu0 0.0
    %2915 = vmatprep.subr.mxu0 0.0
    %2916 = vmatpush1.msra.mxu0 0.0
    %2917 = vmatprep.subr.mxu0 0.0
    %2918 = vmatpush1.msra.mxu0 0.0
    %2919 = vmatprep.subr.mxu0 0.0
    %2920 = vmatpush1.msra.mxu0 0.0
    %2921 = vmatprep.mubr.f32.mxu0 0.0
    %2922 = vmatmul.mubr.f32.gmra.mrb[0].mxu0 %v2852
    %v2923 = vpop.f32.mrb[0].mxu0
    %v2924 = vadd.f32 0.0, %v2923
    %v2925 = vpop.f32.mrb[0].mxu0
    %2926 = vmatprep.mubr.f32.mxu0 0.0
    %2927 = vmatmul.mubr.f32.gmra.mrb[0].mxu0 %v2855
    %v2928 = vpop.f32.mrb[0].mxu0
    %v2929 = vadd.f32 0.0, %v2928
    %v2930 = vpop.f32.mrb[0].mxu0
    %2931 = vdwg.mxu0
    %v2932 = vadd.f32 %v2740, %v2924
    %v2933 = vadd.f32 %v2741, %v2929
    %v2934 = vld [vmem:[#allocation8 + $0x400] sm:$0xff]
    %v2935 = vld [vmem:[#allocation8 + $0x408] sm:$0xff]
    %v2936 = vld [vmem:[#allocation8 + $0x410] sm:$0xff]
    %v2937 = vld [vmem:[#allocation8 + $0x418] sm:$0xff]
    %v2938 = vld [vmem:[#allocation8 + $0x420] sm:$0xff]
    %v2939 = vld [vmem:[#allocation8 + $0x428] sm:$0xff]
    %v2940 = vld [vmem:[#allocation8 + $0x430] sm:$0xff]
    %v2941 = vld [vmem:[#allocation8 + $0x438] sm:$0xff]
    %v2942 = vld [vmem:[#allocation8 + $0x440] sm:$0xff]
    %v2943 = vld [vmem:[#allocation8 + $0x448] sm:$0xff]
    %v2944 = vld [vmem:[#allocation8 + $0x450] sm:$0xff]
    %v2945 = vld [vmem:[#allocation8 + $0x458] sm:$0xff]
    %v2946 = vld [vmem:[#allocation8 + $0x460] sm:$0xff]
    %v2947 = vld [vmem:[#allocation8 + $0x468] sm:$0xff]
    %v2948 = vld [vmem:[#allocation8 + $0x470] sm:$0xff]
    %v2949 = vld [vmem:[#allocation8 + $0x478] sm:$0xff]
    %v2950 = vld [vmem:[#allocation8 + $0x480] sm:$0xff]
    %v2951 = vld [vmem:[#allocation8 + $0x488] sm:$0xff]
    %v2952 = vld [vmem:[#allocation8 + $0x490] sm:$0xff]
    %v2953 = vld [vmem:[#allocation8 + $0x498] sm:$0xff]
    %v2954 = vld [vmem:[#allocation8 + $0x4a0] sm:$0xff]
    %v2955 = vld [vmem:[#allocation8 + $0x4a8] sm:$0xff]
    %v2956 = vld [vmem:[#allocation8 + $0x4b0] sm:$0xff]
    %v2957 = vld [vmem:[#allocation8 + $0x4b8] sm:$0xff]
    %v2958 = vld [vmem:[#allocation8 + $0x4c0] sm:$0xff]
    %v2959 = vld [vmem:[#allocation8 + $0x4c8] sm:$0xff]
    %v2960 = vld [vmem:[#allocation8 + $0x4d0] sm:$0xff]
    %v2961 = vld [vmem:[#allocation8 + $0x4d8] sm:$0xff]
    %v2962 = vld [vmem:[#allocation8 + $0x4e0] sm:$0xff]
    %v2963 = vld [vmem:[#allocation8 + $0x4e8] sm:$0xff]
    %v2964 = vld [vmem:[#allocation8 + $0x4f0] sm:$0xff]
    %v2965 = vld [vmem:[#allocation8 + $0x4f8] sm:$0xff]
    %v2966 = vld [vmem:[%s5 + $0x100] sm:$0xff]
    %v2967 = vld [vmem:[%s5 + $0x108] sm:$0xff]
    %2968 = vmatprep.subr.mxu0 0.0
    %2969 = vmatpush1.msra.mxu0 %v2934
    %2970 = vmatprep.subr.mxu0 0.0
    %2971 = vmatpush1.msra.mxu0 %v2935
    %2972 = vmatprep.subr.mxu0 0.0
    %2973 = vmatpush1.msra.mxu0 %v2936
    %2974 = vmatprep.subr.mxu0 0.0
    %2975 = vmatpush1.msra.mxu0 %v2937
    %2976 = vmatprep.subr.mxu0 0.0
    %2977 = vmatpush1.msra.mxu0 %v2938
    %2978 = vmatprep.subr.mxu0 0.0
    %2979 = vmatpush1.msra.mxu0 %v2939
    %2980 = vmatprep.subr.mxu0 0.0
    %2981 = vmatpush1.msra.mxu0 %v2940
    %2982 = vmatprep.subr.mxu0 0.0
    %2983 = vmatpush1.msra.mxu0 %v2941
    %2984 = vmatprep.subr.mxu0 0.0
    %2985 = vmatpush1.msra.mxu0 %v2942
    %2986 = vmatprep.subr.mxu0 0.0
    %2987 = vmatpush1.msra.mxu0 %v2943
    %2988 = vmatprep.subr.mxu0 0.0
    %2989 = vmatpush1.msra.mxu0 %v2944
    %2990 = vmatprep.subr.mxu0 0.0
    %2991 = vmatpush1.msra.mxu0 %v2945
    %2992 = vmatprep.subr.mxu0 0.0
    %2993 = vmatpush1.msra.mxu0 %v2946
    %2994 = vmatprep.subr.mxu0 0.0
    %2995 = vmatpush1.msra.mxu0 %v2947
    %2996 = vmatprep.subr.mxu0 0.0
    %2997 = vmatpush1.msra.mxu0 %v2948
    %2998 = vmatprep.subr.mxu0 0.0
    %2999 = vmatpush1.msra.mxu0 %v2949
    %3000 = vmatprep.subr.mxu0 0.0
    %3001 = vmatpush1.msra.mxu0 %v2950
    %3002 = vmatprep.subr.mxu0 0.0
    %3003 = vmatpush1.msra.mxu0 %v2951
    %3004 = vmatprep.subr.mxu0 0.0
    %3005 = vmatpush1.msra.mxu0 %v2952
    %3006 = vmatprep.subr.mxu0 0.0
    %3007 = vmatpush1.msra.mxu0 %v2953
    %3008 = vmatprep.subr.mxu0 0.0
    %3009 = vmatpush1.msra.mxu0 %v2954
    %3010 = vmatprep.subr.mxu0 0.0
    %3011 = vmatpush1.msra.mxu0 %v2955
    %3012 = vmatprep.subr.mxu0 0.0
    %3013 = vmatpush1.msra.mxu0 %v2956
    %3014 = vmatprep.subr.mxu0 0.0
    %3015 = vmatpush1.msra.mxu0 %v2957
    %3016 = vmatprep.subr.mxu0 0.0
    %3017 = vmatpush1.msra.mxu0 %v2958
    %3018 = vmatprep.subr.mxu0 0.0
    %3019 = vmatpush1.msra.mxu0 %v2959
    %3020 = vmatprep.subr.mxu0 0.0
    %3021 = vmatpush1.msra.mxu0 %v2960
    %3022 = vmatprep.subr.mxu0 0.0
    %3023 = vmatpush1.msra.mxu0 %v2961
    %3024 = vmatprep.subr.mxu0 0.0
    %3025 = vmatpush1.msra.mxu0 %v2962
    %3026 = vmatprep.subr.mxu0 0.0
    %3027 = vmatpush1.msra.mxu0 %v2963
    %3028 = vmatprep.subr.mxu0 0.0
    %3029 = vmatpush1.msra.mxu0 %v2964
    %3030 = vmatprep.subr.mxu0 0.0
    %3031 = vmatpush1.msra.mxu0 %v2965
    %3032 = vmatprep.mubr.f32.mxu0 %v2161
    %3033 = vmatmul.mubr.f32.gmra.mrb[0].mxu0 %v2160
    %v3034 = vpop.f32.mrb[0].mxu0
    %v3035 = vadd.f32 0.0, %v3034
    %v3036 = vpop.f32.mrb[0].mxu0
    %3037 = vmatprep.mubr.f32.mxu0 %v2163
    %3038 = vmatmul.mubr.f32.gmra.mrb[0].mxu0 %v2162
    %v3039 = vpop.f32.mrb[0].mxu0
    %v3040 = vadd.f32 0.0, %v3039
    %v3041 = vpop.f32.mrb[0].mxu0
    %3042 = vdwg.mxu0
    %v3044 = vsel %vm232, %v2966, 0
    %v3047 = vsel %vm232, %v2967, 0
    %3049 = vmatprep.subr.mxu0 0.0
    %3050 = vmatpush1.msra.mxu0 %v3035
    %3051 = vmatprep.subr.mxu0 0.0
    %3052 = vmatpush1.msra.mxu0 %v3040
    %3053 = vmatprep.subr.mxu0 0.0
    %3054 = vmatpush1.msra.mxu0 0.0
    %3055 = vmatprep.subr.mxu0 0.0
    %3056 = vmatpush1.msra.mxu0 0.0
    %3057 = vmatprep.subr.mxu0 0.0
    %3058 = vmatpush1.msra.mxu0 0.0
    %3059 = vmatprep.subr.mxu0 0.0
    %3060 = vmatpush1.msra.mxu0 0.0
    %3061 = vmatprep.subr.mxu0 0.0
    %3062 = vmatpush1.msra.mxu0 0.0
    %3063 = vmatprep.subr.mxu0 0.0
    %3064 = vmatpush1.msra.mxu0 0.0
    %3065 = vmatprep.subr.mxu0 0.0
    %3066 = vmatpush1.msra.mxu0 0.0
    %3067 = vmatprep.subr.mxu0 0.0
    %3068 = vmatpush1.msra.mxu0 0.0
    %3069 = vmatprep.subr.mxu0 0.0
    %3070 = vmatpush1.msra.mxu0 0.0
    %3071 = vmatprep.subr.mxu0 0.0
    %3072 = vmatpush1.msra.mxu0 0.0
    %3073 = vmatprep.subr.mxu0 0.0
    %3074 = vmatpush1.msra.mxu0 0.0
    %3075 = vmatprep.subr.mxu0 0.0
    %3076 = vmatpush1.msra.mxu0 0.0
    %3077 = vmatprep.subr.mxu0 0.0
    %3078 = vmatpush1.msra.mxu0 0.0
    %3079 = vmatprep.subr.mxu0 0.0
    %3080 = vmatpush1.msra.mxu0 0.0
    %3081 = vmatprep.subr.mxu0 0.0
    %3082 = vmatpush1.msra.mxu0 0.0
    %3083 = vmatprep.subr.mxu0 0.0
    %3084 = vmatpush1.msra.mxu0 0.0
    %3085 = vmatprep.subr.mxu0 0.0
    %3086 = vmatpush1.msra.mxu0 0.0
    %3087 = vmatprep.subr.mxu0 0.0
    %3088 = vmatpush1.msra.mxu0 0.0
    %3089 = vmatprep.subr.mxu0 0.0
    %3090 = vmatpush1.msra.mxu0 0.0
    %3091 = vmatprep.subr.mxu0 0.0
    %3092 = vmatpush1.msra.mxu0 0.0
    %3093 = vmatprep.subr.mxu0 0.0
    %3094 = vmatpush1.msra.mxu0 0.0
    %3095 = vmatprep.subr.mxu0 0.0
    %3096 = vmatpush1.msra.mxu0 0.0
    %3097 = vmatprep.subr.mxu0 0.0
    %3098 = vmatpush1.msra.mxu0 0.0
    %3099 = vmatprep.subr.mxu0 0.0
    %3100 = vmatpush1.msra.mxu0 0.0
    %3101 = vmatprep.subr.mxu0 0.0
    %3102 = vmatpush1.msra.mxu0 0.0
    %3103 = vmatprep.subr.mxu0 0.0
    %3104 = vmatpush1.msra.mxu0 0.0
    %3105 = vmatprep.subr.mxu0 0.0
    %3106 = vmatpush1.msra.mxu0 0.0
    %3107 = vmatprep.subr.mxu0 0.0
    %3108 = vmatpush1.msra.mxu0 0.0
    %3109 = vmatprep.subr.mxu0 0.0
    %3110 = vmatpush1.msra.mxu0 0.0
    %3111 = vmatprep.subr.mxu0 0.0
    %3112 = vmatpush1.msra.mxu0 0.0
    %3113 = vmatprep.mubr.f32.mxu0 0.0
    %3114 = vmatmul.mubr.f32.gmra.mrb[0].mxu0 %v3044
    %v3115 = vpop.f32.mrb[0].mxu0
    %v3116 = vadd.f32 0.0, %v3115
    %v3117 = vpop.f32.mrb[0].mxu0
    %3118 = vmatprep.mubr.f32.mxu0 0.0
    %3119 = vmatmul.mubr.f32.gmra.mrb[0].mxu0 %v3047
    %v3120 = vpop.f32.mrb[0].mxu0
    %v3121 = vadd.f32 0.0, %v3120
    %v3122 = vpop.f32.mrb[0].mxu0
    %3123 = vdwg.mxu0
    %v3124 = vadd.f32 %v2932, %v3116
    %v3125 = vadd.f32 %v2933, %v3121
    %v3126 = vld [vmem:[#allocation8 + $0x500] sm:$0xff]
    %v3127 = vld [vmem:[#allocation8 + $0x508] sm:$0xff]
    %v3128 = vld [vmem:[#allocation8 + $0x510] sm:$0xff]
    %v3129 = vld [vmem:[#allocation8 + $0x518] sm:$0xff]
    %v3130 = vld [vmem:[#allocation8 + $0x520] sm:$0xff]
    %v3131 = vld [vmem:[#allocation8 + $0x528] sm:$0xff]
    %v3132 = vld [vmem:[#allocation8 + $0x530] sm:$0xff]
    %v3133 = vld [vmem:[#allocation8 + $0x538] sm:$0xff]
    %v3134 = vld [vmem:[#allocation8 + $0x540] sm:$0xff]
    %v3135 = vld [vmem:[#allocation8 + $0x548] sm:$0xff]
    %v3136 = vld [vmem:[#allocation8 + $0x550] sm:$0xff]
    %v3137 = vld [vmem:[#allocation8 + $0x558] sm:$0xff]
    %v3138 = vld [vmem:[#allocation8 + $0x560] sm:$0xff]
    %v3139 = vld [vmem:[#allocation8 + $0x568] sm:$0xff]
    %v3140 = vld [vmem:[#allocation8 + $0x570] sm:$0xff]
    %v3141 = vld [vmem:[#allocation8 + $0x578] sm:$0xff]
    %v3142 = vld [vmem:[#allocation8 + $0x580] sm:$0xff]
    %v3143 = vld [vmem:[#allocation8 + $0x588] sm:$0xff]
    %v3144 = vld [vmem:[#allocation8 + $0x590] sm:$0xff]
    %v3145 = vld [vmem:[#allocation8 + $0x598] sm:$0xff]
    %v3146 = vld [vmem:[#allocation8 + $0x5a0] sm:$0xff]
    %v3147 = vld [vmem:[#allocation8 + $0x5a8] sm:$0xff]
    %v3148 = vld [vmem:[#allocation8 + $0x5b0] sm:$0xff]
    %v3149 = vld [vmem:[#allocation8 + $0x5b8] sm:$0xff]
    %v3150 = vld [vmem:[#allocation8 + $0x5c0] sm:$0xff]
    %v3151 = vld [vmem:[#allocation8 + $0x5c8] sm:$0xff]
    %v3152 = vld [vmem:[#allocation8 + $0x5d0] sm:$0xff]
    %v3153 = vld [vmem:[#allocation8 + $0x5d8] sm:$0xff]
    %v3154 = vld [vmem:[#allocation8 + $0x5e0] sm:$0xff]
    %v3155 = vld [vmem:[#allocation8 + $0x5e8] sm:$0xff]
    %v3156 = vld [vmem:[#allocation8 + $0x5f0] sm:$0xff]
    %v3157 = vld [vmem:[#allocation8 + $0x5f8] sm:$0xff]
    %v3158 = vld [vmem:[%s5 + $0x110] sm:$0xff]
    %v3159 = vld [vmem:[%s5 + $0x118] sm:$0xff]
    %3160 = vmatprep.subr.mxu0 0.0
    %3161 = vmatpush1.msra.mxu0 %v3126
    %3162 = vmatprep.subr.mxu0 0.0
    %3163 = vmatpush1.msra.mxu0 %v3127
    %3164 = vmatprep.subr.mxu0 0.0
    %3165 = vmatpush1.msra.mxu0 %v3128
    %3166 = vmatprep.subr.mxu0 0.0
    %3167 = vmatpush1.msra.mxu0 %v3129
    %3168 = vmatprep.subr.mxu0 0.0
    %3169 = vmatpush1.msra.mxu0 %v3130
    %3170 = vmatprep.subr.mxu0 0.0
    %3171 = vmatpush1.msra.mxu0 %v3131
    %3172 = vmatprep.subr.mxu0 0.0
    %3173 = vmatpush1.msra.mxu0 %v3132
    %3174 = vmatprep.subr.mxu0 0.0
    %3175 = vmatpush1.msra.mxu0 %v3133
    %3176 = vmatprep.subr.mxu0 0.0
    %3177 = vmatpush1.msra.mxu0 %v3134
    %3178 = vmatprep.subr.mxu0 0.0
    %3179 = vmatpush1.msra.mxu0 %v3135
    %3180 = vmatprep.subr.mxu0 0.0
    %3181 = vmatpush1.msra.mxu0 %v3136
    %3182 = vmatprep.subr.mxu0 0.0
    %3183 = vmatpush1.msra.mxu0 %v3137
    %3184 = vmatprep.subr.mxu0 0.0
    %3185 = vmatpush1.msra.mxu0 %v3138
    %3186 = vmatprep.subr.mxu0 0.0
    %3187 = vmatpush1.msra.mxu0 %v3139
    %3188 = vmatprep.subr.mxu0 0.0
    %3189 = vmatpush1.msra.mxu0 %v3140
    %3190 = vmatprep.subr.mxu0 0.0
    %3191 = vmatpush1.msra.mxu0 %v3141
    %3192 = vmatprep.subr.mxu0 0.0
    %3193 = vmatpush1.msra.mxu0 %v3142
    %3194 = vmatprep.subr.mxu0 0.0
    %3195 = vmatpush1.msra.mxu0 %v3143
    %3196 = vmatprep.subr.mxu0 0.0
    %3197 = vmatpush1.msra.mxu0 %v3144
    %3198 = vmatprep.subr.mxu0 0.0
    %3199 = vmatpush1.msra.mxu0 %v3145
    %3200 = vmatprep.subr.mxu0 0.0
    %3201 = vmatpush1.msra.mxu0 %v3146
    %3202 = vmatprep.subr.mxu0 0.0
    %3203 = vmatpush1.msra.mxu0 %v3147
    %3204 = vmatprep.subr.mxu0 0.0
    %3205 = vmatpush1.msra.mxu0 %v3148
    %3206 = vmatprep.subr.mxu0 0.0
    %3207 = vmatpush1.msra.mxu0 %v3149
    %3208 = vmatprep.subr.mxu0 0.0
    %3209 = vmatpush1.msra.mxu0 %v3150
    %3210 = vmatprep.subr.mxu0 0.0
    %3211 = vmatpush1.msra.mxu0 %v3151
    %3212 = vmatprep.subr.mxu0 0.0
    %3213 = vmatpush1.msra.mxu0 %v3152
    %3214 = vmatprep.subr.mxu0 0.0
    %3215 = vmatpush1.msra.mxu0 %v3153
    %3216 = vmatprep.subr.mxu0 0.0
    %3217 = vmatpush1.msra.mxu0 %v3154
    %3218 = vmatprep.subr.mxu0 0.0
    %3219 = vmatpush1.msra.mxu0 %v3155
    %3220 = vmatprep.subr.mxu0 0.0
    %3221 = vmatpush1.msra.mxu0 %v3156
    %3222 = vmatprep.subr.mxu0 0.0
    %3223 = vmatpush1.msra.mxu0 %v3157
    %3224 = vmatprep.mubr.f32.mxu0 %v2161
    %3225 = vmatmul.mubr.f32.gmra.mrb[0].mxu0 %v2160
    %v3226 = vpop.f32.mrb[0].mxu0
    %v3227 = vadd.f32 0.0, %v3226
    %v3228 = vpop.f32.mrb[0].mxu0
    %3229 = vmatprep.mubr.f32.mxu0 %v2163
    %3230 = vmatmul.mubr.f32.gmra.mrb[0].mxu0 %v2162
    %v3231 = vpop.f32.mrb[0].mxu0
    %v3232 = vadd.f32 0.0, %v3231
    %v3233 = vpop.f32.mrb[0].mxu0
    %3234 = vdwg.mxu0
    %v3236 = vsel %vm232, %v3158, 0
    %v3239 = vsel %vm232, %v3159, 0
    %3241 = vmatprep.subr.mxu0 0.0
    %3242 = vmatpush1.msra.mxu0 %v3227
    %3243 = vmatprep.subr.mxu0 0.0
    %3244 = vmatpush1.msra.mxu0 %v3232
    %3245 = vmatprep.subr.mxu0 0.0
    %3246 = vmatpush1.msra.mxu0 0.0
    %3247 = vmatprep.subr.mxu0 0.0
    %3248 = vmatpush1.msra.mxu0 0.0
    %3249 = vmatprep.subr.mxu0 0.0
    %3250 = vmatpush1.msra.mxu0 0.0
    %3251 = vmatprep.subr.mxu0 0.0
    %3252 = vmatpush1.msra.mxu0 0.0
    %3253 = vmatprep.subr.mxu0 0.0
    %3254 = vmatpush1.msra.mxu0 0.0
    %3255 = vmatprep.subr.mxu0 0.0
    %3256 = vmatpush1.msra.mxu0 0.0
    %3257 = vmatprep.subr.mxu0 0.0
    %3258 = vmatpush1.msra.mxu0 0.0
    %3259 = vmatprep.subr.mxu0 0.0
    %3260 = vmatpush1.msra.mxu0 0.0
    %3261 = vmatprep.subr.mxu0 0.0
    %3262 = vmatpush1.msra.mxu0 0.0
    %3263 = vmatprep.subr.mxu0 0.0
    %3264 = vmatpush1.msra.mxu0 0.0
    %3265 = vmatprep.subr.mxu0 0.0
    %3266 = vmatpush1.msra.mxu0 0.0
    %3267 = vmatprep.subr.mxu0 0.0
    %3268 = vmatpush1.msra.mxu0 0.0
    %3269 = vmatprep.subr.mxu0 0.0
    %3270 = vmatpush1.msra.mxu0 0.0
    %3271 = vmatprep.subr.mxu0 0.0
    %3272 = vmatpush1.msra.mxu0 0.0
    %3273 = vmatprep.subr.mxu0 0.0
    %3274 = vmatpush1.msra.mxu0 0.0
    %3275 = vmatprep.subr.mxu0 0.0
    %3276 = vmatpush1.msra.mxu0 0.0
    %3277 = vmatprep.subr.mxu0 0.0
    %3278 = vmatpush1.msra.mxu0 0.0
    %3279 = vmatprep.subr.mxu0 0.0
    %3280 = vmatpush1.msra.mxu0 0.0
    %3281 = vmatprep.subr.mxu0 0.0
    %3282 = vmatpush1.msra.mxu0 0.0
    %3283 = vmatprep.subr.mxu0 0.0
    %3284 = vmatpush1.msra.mxu0 0.0
    %3285 = vmatprep.subr.mxu0 0.0
    %3286 = vmatpush1.msra.mxu0 0.0
    %3287 = vmatprep.subr.mxu0 0.0
    %3288 = vmatpush1.msra.mxu0 0.0
    %3289 = vmatprep.subr.mxu0 0.0
    %3290 = vmatpush1.msra.mxu0 0.0
    %3291 = vmatprep.subr.mxu0 0.0
    %3292 = vmatpush1.msra.mxu0 0.0
    %3293 = vmatprep.subr.mxu0 0.0
    %3294 = vmatpush1.msra.mxu0 0.0
    %3295 = vmatprep.subr.mxu0 0.0
    %3296 = vmatpush1.msra.mxu0 0.0
    %3297 = vmatprep.subr.mxu0 0.0
    %3298 = vmatpush1.msra.mxu0 0.0
    %3299 = vmatprep.subr.mxu0 0.0
    %3300 = vmatpush1.msra.mxu0 0.0
    %3301 = vmatprep.subr.mxu0 0.0
    %3302 = vmatpush1.msra.mxu0 0.0
    %3303 = vmatprep.subr.mxu0 0.0
    %3304 = vmatpush1.msra.mxu0 0.0
    %3305 = vmatprep.mubr.f32.mxu0 0.0
    %3306 = vmatmul.mubr.f32.gmra.mrb[0].mxu0 %v3236
    %v3307 = vpop.f32.mrb[0].mxu0
    %v3308 = vadd.f32 0.0, %v3307
    %v3309 = vpop.f32.mrb[0].mxu0
    %3310 = vmatprep.mubr.f32.mxu0 0.0
    %3311 = vmatmul.mubr.f32.gmra.mrb[0].mxu0 %v3239
    %v3312 = vpop.f32.mrb[0].mxu0
    %v3313 = vadd.f32 0.0, %v3312
    %v3314 = vpop.f32.mrb[0].mxu0
    %3315 = vdwg.mxu0
    %v3316 = vadd.f32 %v3124, %v3308
    %v3317 = vadd.f32 %v3125, %v3313
    %v3318 = vld [vmem:[#allocation8 + $0x600] sm:$0xff]
    %v3319 = vld [vmem:[#allocation8 + $0x608] sm:$0xff]
    %v3320 = vld [vmem:[#allocation8 + $0x610] sm:$0xff]
    %v3321 = vld [vmem:[#allocation8 + $0x618] sm:$0xff]
    %v3322 = vld [vmem:[#allocation8 + $0x620] sm:$0xff]
    %v3323 = vld [vmem:[#allocation8 + $0x628] sm:$0xff]
    %v3324 = vld [vmem:[#allocation8 + $0x630] sm:$0xff]
    %v3325 = vld [vmem:[#allocation8 + $0x638] sm:$0xff]
    %v3326 = vld [vmem:[#allocation8 + $0x640] sm:$0xff]
    %v3327 = vld [vmem:[#allocation8 + $0x648] sm:$0xff]
    %v3328 = vld [vmem:[#allocation8 + $0x650] sm:$0xff]
    %v3329 = vld [vmem:[#allocation8 + $0x658] sm:$0xff]
    %v3330 = vld [vmem:[#allocation8 + $0x660] sm:$0xff]
    %v3331 = vld [vmem:[#allocation8 + $0x668] sm:$0xff]
    %v3332 = vld [vmem:[#allocation8 + $0x670] sm:$0xff]
    %v3333 = vld [vmem:[#allocation8 + $0x678] sm:$0xff]
    %v3334 = vld [vmem:[#allocation8 + $0x680] sm:$0xff]
    %v3335 = vld [vmem:[#allocation8 + $0x688] sm:$0xff]
    %v3336 = vld [vmem:[#allocation8 + $0x690] sm:$0xff]
    %v3337 = vld [vmem:[#allocation8 + $0x698] sm:$0xff]
    %v3338 = vld [vmem:[#allocation8 + $0x6a0] sm:$0xff]
    %v3339 = vld [vmem:[#allocation8 + $0x6a8] sm:$0xff]
    %v3340 = vld [vmem:[#allocation8 + $0x6b0] sm:$0xff]
    %v3341 = vld [vmem:[#allocation8 + $0x6b8] sm:$0xff]
    %v3342 = vld [vmem:[#allocation8 + $0x6c0] sm:$0xff]
    %v3343 = vld [vmem:[#allocation8 + $0x6c8] sm:$0xff]
    %v3344 = vld [vmem:[#allocation8 + $0x6d0] sm:$0xff]
    %v3345 = vld [vmem:[#allocation8 + $0x6d8] sm:$0xff]
    %v3346 = vld [vmem:[#allocation8 + $0x6e0] sm:$0xff]
    %v3347 = vld [vmem:[#allocation8 + $0x6e8] sm:$0xff]
    %v3348 = vld [vmem:[#allocation8 + $0x6f0] sm:$0xff]
    %v3349 = vld [vmem:[#allocation8 + $0x6f8] sm:$0xff]
    %v3350 = vld [vmem:[%s5 + $0x120] sm:$0xff]
    %v3351 = vld [vmem:[%s5 + $0x128] sm:$0xff]
    %3352 = vmatprep.subr.mxu0 0.0
    %3353 = vmatpush1.msra.mxu0 %v3318
    %3354 = vmatprep.subr.mxu0 0.0
    %3355 = vmatpush1.msra.mxu0 %v3319
    %3356 = vmatprep.subr.mxu0 0.0
    %3357 = vmatpush1.msra.mxu0 %v3320
    %3358 = vmatprep.subr.mxu0 0.0
    %3359 = vmatpush1.msra.mxu0 %v3321
    %3360 = vmatprep.subr.mxu0 0.0
    %3361 = vmatpush1.msra.mxu0 %v3322
    %3362 = vmatprep.subr.mxu0 0.0
    %3363 = vmatpush1.msra.mxu0 %v3323
    %3364 = vmatprep.subr.mxu0 0.0
    %3365 = vmatpush1.msra.mxu0 %v3324
    %3366 = vmatprep.subr.mxu0 0.0
    %3367 = vmatpush1.msra.mxu0 %v3325
    %3368 = vmatprep.subr.mxu0 0.0
    %3369 = vmatpush1.msra.mxu0 %v3326
    %3370 = vmatprep.subr.mxu0 0.0
    %3371 = vmatpush1.msra.mxu0 %v3327
    %3372 = vmatprep.subr.mxu0 0.0
    %3373 = vmatpush1.msra.mxu0 %v3328
    %3374 = vmatprep.subr.mxu0 0.0
    %3375 = vmatpush1.msra.mxu0 %v3329
    %3376 = vmatprep.subr.mxu0 0.0
    %3377 = vmatpush1.msra.mxu0 %v3330
    %3378 = vmatprep.subr.mxu0 0.0
    %3379 = vmatpush1.msra.mxu0 %v3331
    %3380 = vmatprep.subr.mxu0 0.0
    %3381 = vmatpush1.msra.mxu0 %v3332
    %3382 = vmatprep.subr.mxu0 0.0
    %3383 = vmatpush1.msra.mxu0 %v3333
    %3384 = vmatprep.subr.mxu0 0.0
    %3385 = vmatpush1.msra.mxu0 %v3334
    %3386 = vmatprep.subr.mxu0 0.0
    %3387 = vmatpush1.msra.mxu0 %v3335
    %3388 = vmatprep.subr.mxu0 0.0
    %3389 = vmatpush1.msra.mxu0 %v3336
    %3390 = vmatprep.subr.mxu0 0.0
    %3391 = vmatpush1.msra.mxu0 %v3337
    %3392 = vmatprep.subr.mxu0 0.0
    %3393 = vmatpush1.msra.mxu0 %v3338
    %3394 = vmatprep.subr.mxu0 0.0
    %3395 = vmatpush1.msra.mxu0 %v3339
    %3396 = vmatprep.subr.mxu0 0.0
    %3397 = vmatpush1.msra.mxu0 %v3340
    %3398 = vmatprep.subr.mxu0 0.0
    %3399 = vmatpush1.msra.mxu0 %v3341
    %3400 = vmatprep.subr.mxu0 0.0
    %3401 = vmatpush1.msra.mxu0 %v3342
    %3402 = vmatprep.subr.mxu0 0.0
    %3403 = vmatpush1.msra.mxu0 %v3343
    %3404 = vmatprep.subr.mxu0 0.0
    %3405 = vmatpush1.msra.mxu0 %v3344
    %3406 = vmatprep.subr.mxu0 0.0
    %3407 = vmatpush1.msra.mxu0 %v3345
    %3408 = vmatprep.subr.mxu0 0.0
    %3409 = vmatpush1.msra.mxu0 %v3346
    %3410 = vmatprep.subr.mxu0 0.0
    %3411 = vmatpush1.msra.mxu0 %v3347
    %3412 = vmatprep.subr.mxu0 0.0
    %3413 = vmatpush1.msra.mxu0 %v3348
    %3414 = vmatprep.subr.mxu0 0.0
    %3415 = vmatpush1.msra.mxu0 %v3349
    %3416 = vmatprep.mubr.f32.mxu0 %v2161
    %3417 = vmatmul.mubr.f32.gmra.mrb[0].mxu0 %v2160
    %v3418 = vpop.f32.mrb[0].mxu0
    %v3419 = vadd.f32 0.0, %v3418
    %v3420 = vpop.f32.mrb[0].mxu0
    %3421 = vmatprep.mubr.f32.mxu0 %v2163
    %3422 = vmatmul.mubr.f32.gmra.mrb[0].mxu0 %v2162
    %v3423 = vpop.f32.mrb[0].mxu0
    %v3424 = vadd.f32 0.0, %v3423
    %v3425 = vpop.f32.mrb[0].mxu0
    %3426 = vdwg.mxu0
    %v3428 = vsel %vm232, %v3350, 0
    %v3431 = vsel %vm232, %v3351, 0
    %3433 = vmatprep.subr.mxu0 0.0
    %3434 = vmatpush1.msra.mxu0 %v3419
    %3435 = vmatprep.subr.mxu0 0.0
    %3436 = vmatpush1.msra.mxu0 %v3424
    %3437 = vmatprep.subr.mxu0 0.0
    %3438 = vmatpush1.msra.mxu0 0.0
    %3439 = vmatprep.subr.mxu0 0.0
    %3440 = vmatpush1.msra.mxu0 0.0
    %3441 = vmatprep.subr.mxu0 0.0
    %3442 = vmatpush1.msra.mxu0 0.0
    %3443 = vmatprep.subr.mxu0 0.0
    %3444 = vmatpush1.msra.mxu0 0.0
    %3445 = vmatprep.subr.mxu0 0.0
    %3446 = vmatpush1.msra.mxu0 0.0
    %3447 = vmatprep.subr.mxu0 0.0
    %3448 = vmatpush1.msra.mxu0 0.0
    %3449 = vmatprep.subr.mxu0 0.0
    %3450 = vmatpush1.msra.mxu0 0.0
    %3451 = vmatprep.subr.mxu0 0.0
    %3452 = vmatpush1.msra.mxu0 0.0
    %3453 = vmatprep.subr.mxu0 0.0
    %3454 = vmatpush1.msra.mxu0 0.0
    %3455 = vmatprep.subr.mxu0 0.0
    %3456 = vmatpush1.msra.mxu0 0.0
    %3457 = vmatprep.subr.mxu0 0.0
    %3458 = vmatpush1.msra.mxu0 0.0
    %3459 = vmatprep.subr.mxu0 0.0
    %3460 = vmatpush1.msra.mxu0 0.0
    %3461 = vmatprep.subr.mxu0 0.0
    %3462 = vmatpush1.msra.mxu0 0.0
    %3463 = vmatprep.subr.mxu0 0.0
    %3464 = vmatpush1.msra.mxu0 0.0
    %3465 = vmatprep.subr.mxu0 0.0
    %3466 = vmatpush1.msra.mxu0 0.0
    %3467 = vmatprep.subr.mxu0 0.0
    %3468 = vmatpush1.msra.mxu0 0.0
    %3469 = vmatprep.subr.mxu0 0.0
    %3470 = vmatpush1.msra.mxu0 0.0
    %3471 = vmatprep.subr.mxu0 0.0
    %3472 = vmatpush1.msra.mxu0 0.0
    %3473 = vmatprep.subr.mxu0 0.0
    %3474 = vmatpush1.msra.mxu0 0.0
    %3475 = vmatprep.subr.mxu0 0.0
    %3476 = vmatpush1.msra.mxu0 0.0
    %3477 = vmatprep.subr.mxu0 0.0
    %3478 = vmatpush1.msra.mxu0 0.0
    %3479 = vmatprep.subr.mxu0 0.0
    %3480 = vmatpush1.msra.mxu0 0.0
    %3481 = vmatprep.subr.mxu0 0.0
    %3482 = vmatpush1.msra.mxu0 0.0
    %3483 = vmatprep.subr.mxu0 0.0
    %3484 = vmatpush1.msra.mxu0 0.0
    %3485 = vmatprep.subr.mxu0 0.0
    %3486 = vmatpush1.msra.mxu0 0.0
    %3487 = vmatprep.subr.mxu0 0.0
    %3488 = vmatpush1.msra.mxu0 0.0
    %3489 = vmatprep.subr.mxu0 0.0
    %3490 = vmatpush1.msra.mxu0 0.0
    %3491 = vmatprep.subr.mxu0 0.0
    %3492 = vmatpush1.msra.mxu0 0.0
    %3493 = vmatprep.subr.mxu0 0.0
    %3494 = vmatpush1.msra.mxu0 0.0
    %3495 = vmatprep.subr.mxu0 0.0
    %3496 = vmatpush1.msra.mxu0 0.0
    %3497 = vmatprep.mubr.f32.mxu0 0.0
    %3498 = vmatmul.mubr.f32.gmra.mrb[0].mxu0 %v3428
    %v3499 = vpop.f32.mrb[0].mxu0
    %v3500 = vadd.f32 0.0, %v3499
    %v3501 = vpop.f32.mrb[0].mxu0
    %3502 = vmatprep.mubr.f32.mxu0 0.0
    %3503 = vmatmul.mubr.f32.gmra.mrb[0].mxu0 %v3431
    %v3504 = vpop.f32.mrb[0].mxu0
    %v3505 = vadd.f32 0.0, %v3504
    %v3506 = vpop.f32.mrb[0].mxu0
    %3507 = vdwg.mxu0
    %v3508 = vadd.f32 %v3316, %v3500
    %v3509 = vadd.f32 %v3317, %v3505
    %v3510 = vld [vmem:[#allocation8 + $0x700] sm:$0xff]
    %v3511 = vld [vmem:[#allocation8 + $0x708] sm:$0xff]
    %v3512 = vld [vmem:[#allocation8 + $0x710] sm:$0xff]
    %v3513 = vld [vmem:[#allocation8 + $0x718] sm:$0xff]
    %v3514 = vld [vmem:[#allocation8 + $0x720] sm:$0xff]
    %v3515 = vld [vmem:[#allocation8 + $0x728] sm:$0xff]
    %v3516 = vld [vmem:[#allocation8 + $0x730] sm:$0xff]
    %v3517 = vld [vmem:[#allocation8 + $0x738] sm:$0xff]
    %v3518 = vld [vmem:[#allocation8 + $0x740] sm:$0xff]
    %v3519 = vld [vmem:[#allocation8 + $0x748] sm:$0xff]
    %v3520 = vld [vmem:[#allocation8 + $0x750] sm:$0xff]
    %v3521 = vld [vmem:[#allocation8 + $0x758] sm:$0xff]
    %v3522 = vld [vmem:[#allocation8 + $0x760] sm:$0xff]
    %v3523 = vld [vmem:[#allocation8 + $0x768] sm:$0xff]
    %v3524 = vld [vmem:[#allocation8 + $0x770] sm:$0xff]
    %v3525 = vld [vmem:[#allocation8 + $0x778] sm:$0xff]
    %v3526 = vld [vmem:[#allocation8 + $0x780] sm:$0xff]
    %v3527 = vld [vmem:[#allocation8 + $0x788] sm:$0xff]
    %v3528 = vld [vmem:[#allocation8 + $0x790] sm:$0xff]
    %v3529 = vld [vmem:[#allocation8 + $0x798] sm:$0xff]
    %v3530 = vld [vmem:[#allocation8 + $0x7a0] sm:$0xff]
    %v3531 = vld [vmem:[#allocation8 + $0x7a8] sm:$0xff]
    %v3532 = vld [vmem:[#allocation8 + $0x7b0] sm:$0xff]
    %v3533 = vld [vmem:[#allocation8 + $0x7b8] sm:$0xff]
    %v3534 = vld [vmem:[#allocation8 + $0x7c0] sm:$0xff]
    %v3535 = vld [vmem:[#allocation8 + $0x7c8] sm:$0xff]
    %v3536 = vld [vmem:[#allocation8 + $0x7d0] sm:$0xff]
    %v3537 = vld [vmem:[#allocation8 + $0x7d8] sm:$0xff]
    %v3538 = vld [vmem:[#allocation8 + $0x7e0] sm:$0xff]
    %v3539 = vld [vmem:[#allocation8 + $0x7e8] sm:$0xff]
    %v3540 = vld [vmem:[#allocation8 + $0x7f0] sm:$0xff]
    %v3541 = vld [vmem:[#allocation8 + $0x7f8] sm:$0xff]
    %v3542 = vld [vmem:[%s5 + $0x130] sm:$0xff]
    %v3543 = vld [vmem:[%s5 + $0x138] sm:$0xff]
    %3544 = vmatprep.subr.mxu0 0.0
    %3545 = vmatpush1.msra.mxu0 %v3510
    %3546 = vmatprep.subr.mxu0 0.0
    %3547 = vmatpush1.msra.mxu0 %v3511
    %3548 = vmatprep.subr.mxu0 0.0
    %3549 = vmatpush1.msra.mxu0 %v3512
    %3550 = vmatprep.subr.mxu0 0.0
    %3551 = vmatpush1.msra.mxu0 %v3513
    %3552 = vmatprep.subr.mxu0 0.0
    %3553 = vmatpush1.msra.mxu0 %v3514
    %3554 = vmatprep.subr.mxu0 0.0
    %3555 = vmatpush1.msra.mxu0 %v3515
    %3556 = vmatprep.subr.mxu0 0.0
    %3557 = vmatpush1.msra.mxu0 %v3516
    %3558 = vmatprep.subr.mxu0 0.0
    %3559 = vmatpush1.msra.mxu0 %v3517
    %3560 = vmatprep.subr.mxu0 0.0
    %3561 = vmatpush1.msra.mxu0 %v3518
    %3562 = vmatprep.subr.mxu0 0.0
    %3563 = vmatpush1.msra.mxu0 %v3519
    %3564 = vmatprep.subr.mxu0 0.0
    %3565 = vmatpush1.msra.mxu0 %v3520
    %3566 = vmatprep.subr.mxu0 0.0
    %3567 = vmatpush1.msra.mxu0 %v3521
    %3568 = vmatprep.subr.mxu0 0.0
    %3569 = vmatpush1.msra.mxu0 %v3522
    %3570 = vmatprep.subr.mxu0 0.0
    %3571 = vmatpush1.msra.mxu0 %v3523
    %3572 = vmatprep.subr.mxu0 0.0
    %3573 = vmatpush1.msra.mxu0 %v3524
    %3574 = vmatprep.subr.mxu0 0.0
    %3575 = vmatpush1.msra.mxu0 %v3525
    %3576 = vmatprep.subr.mxu0 0.0
    %3577 = vmatpush1.msra.mxu0 %v3526
    %3578 = vmatprep.subr.mxu0 0.0
    %3579 = vmatpush1.msra.mxu0 %v3527
    %3580 = vmatprep.subr.mxu0 0.0
    %3581 = vmatpush1.msra.mxu0 %v3528
    %3582 = vmatprep.subr.mxu0 0.0
    %3583 = vmatpush1.msra.mxu0 %v3529
    %3584 = vmatprep.subr.mxu0 0.0
    %3585 = vmatpush1.msra.mxu0 %v3530
    %3586 = vmatprep.subr.mxu0 0.0
    %3587 = vmatpush1.msra.mxu0 %v3531
    %3588 = vmatprep.subr.mxu0 0.0
    %3589 = vmatpush1.msra.mxu0 %v3532
    %3590 = vmatprep.subr.mxu0 0.0
    %3591 = vmatpush1.msra.mxu0 %v3533
    %3592 = vmatprep.subr.mxu0 0.0
    %3593 = vmatpush1.msra.mxu0 %v3534
    %3594 = vmatprep.subr.mxu0 0.0
    %3595 = vmatpush1.msra.mxu0 %v3535
    %3596 = vmatprep.subr.mxu0 0.0
    %3597 = vmatpush1.msra.mxu0 %v3536
    %3598 = vmatprep.subr.mxu0 0.0
    %3599 = vmatpush1.msra.mxu0 %v3537
    %3600 = vmatprep.subr.mxu0 0.0
    %3601 = vmatpush1.msra.mxu0 %v3538
    %3602 = vmatprep.subr.mxu0 0.0
    %3603 = vmatpush1.msra.mxu0 %v3539
    %3604 = vmatprep.subr.mxu0 0.0
    %3605 = vmatpush1.msra.mxu0 %v3540
    %3606 = vmatprep.subr.mxu0 0.0
    %3607 = vmatpush1.msra.mxu0 %v3541
    %3608 = vmatprep.mubr.f32.mxu0 %v2161
    %3609 = vmatmul.mubr.f32.gmra.mrb[0].mxu0 %v2160
    %v3610 = vpop.f32.mrb[0].mxu0
    %v3611 = vadd.f32 0.0, %v3610
    %v3612 = vpop.f32.mrb[0].mxu0
    %3613 = vmatprep.mubr.f32.mxu0 %v2163
    %3614 = vmatmul.mubr.f32.gmra.mrb[0].mxu0 %v2162
    %v3615 = vpop.f32.mrb[0].mxu0
    %v3616 = vadd.f32 0.0, %v3615
    %v3617 = vpop.f32.mrb[0].mxu0
    %3618 = vdwg.mxu0
    %v3620 = vsel %vm232, %v3542, 0
    %v3623 = vsel %vm232, %v3543, 0
    %3625 = vmatprep.subr.mxu0 0.0
    %3626 = vmatpush1.msra.mxu0 %v3611
    %3627 = vmatprep.subr.mxu0 0.0
    %3628 = vmatpush1.msra.mxu0 %v3616
    %3629 = vmatprep.subr.mxu0 0.0
    %3630 = vmatpush1.msra.mxu0 0.0
    %3631 = vmatprep.subr.mxu0 0.0
    %3632 = vmatpush1.msra.mxu0 0.0
    %3633 = vmatprep.subr.mxu0 0.0
    %3634 = vmatpush1.msra.mxu0 0.0
    %3635 = vmatprep.subr.mxu0 0.0
    %3636 = vmatpush1.msra.mxu0 0.0
    %3637 = vmatprep.subr.mxu0 0.0
    %3638 = vmatpush1.msra.mxu0 0.0
    %3639 = vmatprep.subr.mxu0 0.0
    %3640 = vmatpush1.msra.mxu0 0.0
    %3641 = vmatprep.subr.mxu0 0.0
    %3642 = vmatpush1.msra.mxu0 0.0
    %3643 = vmatprep.subr.mxu0 0.0
    %3644 = vmatpush1.msra.mxu0 0.0
    %3645 = vmatprep.subr.mxu0 0.0
    %3646 = vmatpush1.msra.mxu0 0.0
    %3647 = vmatprep.subr.mxu0 0.0
    %3648 = vmatpush1.msra.mxu0 0.0
    %3649 = vmatprep.subr.mxu0 0.0
    %3650 = vmatpush1.msra.mxu0 0.0
    %3651 = vmatprep.subr.mxu0 0.0
    %3652 = vmatpush1.msra.mxu0 0.0
    %3653 = vmatprep.subr.mxu0 0.0
    %3654 = vmatpush1.msra.mxu0 0.0
    %3655 = vmatprep.subr.mxu0 0.0
    %3656 = vmatpush1.msra.mxu0 0.0
    %3657 = vmatprep.subr.mxu0 0.0
    %3658 = vmatpush1.msra.mxu0 0.0
    %3659 = vmatprep.subr.mxu0 0.0
    %3660 = vmatpush1.msra.mxu0 0.0
    %3661 = vmatprep.subr.mxu0 0.0
    %3662 = vmatpush1.msra.mxu0 0.0
    %3663 = vmatprep.subr.mxu0 0.0
    %3664 = vmatpush1.msra.mxu0 0.0
    %3665 = vmatprep.subr.mxu0 0.0
    %3666 = vmatpush1.msra.mxu0 0.0
    %3667 = vmatprep.subr.mxu0 0.0
    %3668 = vmatpush1.msra.mxu0 0.0
    %3669 = vmatprep.subr.mxu0 0.0
    %3670 = vmatpush1.msra.mxu0 0.0
    %3671 = vmatprep.subr.mxu0 0.0
    %3672 = vmatpush1.msra.mxu0 0.0
    %3673 = vmatprep.subr.mxu0 0.0
    %3674 = vmatpush1.msra.mxu0 0.0
    %3675 = vmatprep.subr.mxu0 0.0
    %3676 = vmatpush1.msra.mxu0 0.0
    %3677 = vmatprep.subr.mxu0 0.0
    %3678 = vmatpush1.msra.mxu0 0.0
    %3679 = vmatprep.subr.mxu0 0.0
    %3680 = vmatpush1.msra.mxu0 0.0
    %3681 = vmatprep.subr.mxu0 0.0
    %3682 = vmatpush1.msra.mxu0 0.0
    %3683 = vmatprep.subr.mxu0 0.0
    %3684 = vmatpush1.msra.mxu0 0.0
    %3685 = vmatprep.subr.mxu0 0.0
    %3686 = vmatpush1.msra.mxu0 0.0
    %3687 = vmatprep.subr.mxu0 0.0
    %3688 = vmatpush1.msra.mxu0 0.0
    %3689 = vmatprep.mubr.f32.mxu0 0.0
    %3690 = vmatmul.mubr.f32.gmra.mrb[0].mxu0 %v3620
    %v3691 = vpop.f32.mrb[0].mxu0
    %v3692 = vadd.f32 0.0, %v3691
    %v3693 = vpop.f32.mrb[0].mxu0
    %3694 = vmatprep.mubr.f32.mxu0 0.0
    %3695 = vmatmul.mubr.f32.gmra.mrb[0].mxu0 %v3623
    %v3696 = vpop.f32.mrb[0].mxu0
    %v3697 = vadd.f32 0.0, %v3696
    %v3698 = vpop.f32.mrb[0].mxu0
    %3699 = vdwg.mxu0
    %v3700 = vadd.f32 %v3508, %v3692
    %v3701 = vadd.f32 %v3509, %v3697
    %v3702 = vld [vmem:[#allocation8 + $0x800] sm:$0xff]
    %v3703 = vld [vmem:[#allocation8 + $0x808] sm:$0xff]
    %v3704 = vld [vmem:[#allocation8 + $0x810] sm:$0xff]
    %v3705 = vld [vmem:[#allocation8 + $0x818] sm:$0xff]
    %v3706 = vld [vmem:[#allocation8 + $0x820] sm:$0xff]
    %v3707 = vld [vmem:[#allocation8 + $0x828] sm:$0xff]
    %v3708 = vld [vmem:[#allocation8 + $0x830] sm:$0xff]
    %v3709 = vld [vmem:[#allocation8 + $0x838] sm:$0xff]
    %v3710 = vld [vmem:[#allocation8 + $0x840] sm:$0xff]
    %v3711 = vld [vmem:[#allocation8 + $0x848] sm:$0xff]
    %v3712 = vld [vmem:[#allocation8 + $0x850] sm:$0xff]
    %v3713 = vld [vmem:[#allocation8 + $0x858] sm:$0xff]
    %v3714 = vld [vmem:[#allocation8 + $0x860] sm:$0xff]
    %v3715 = vld [vmem:[#allocation8 + $0x868] sm:$0xff]
    %v3716 = vld [vmem:[#allocation8 + $0x870] sm:$0xff]
    %v3717 = vld [vmem:[#allocation8 + $0x878] sm:$0xff]
    %v3718 = vld [vmem:[#allocation8 + $0x880] sm:$0xff]
    %v3719 = vld [vmem:[#allocation8 + $0x888] sm:$0xff]
    %v3720 = vld [vmem:[#allocation8 + $0x890] sm:$0xff]
    %v3721 = vld [vmem:[#allocation8 + $0x898] sm:$0xff]
    %v3722 = vld [vmem:[#allocation8 + $0x8a0] sm:$0xff]
    %v3723 = vld [vmem:[#allocation8 + $0x8a8] sm:$0xff]
    %v3724 = vld [vmem:[#allocation8 + $0x8b0] sm:$0xff]
    %v3725 = vld [vmem:[#allocation8 + $0x8b8] sm:$0xff]
    %v3726 = vld [vmem:[#allocation8 + $0x8c0] sm:$0xff]
    %v3727 = vld [vmem:[#allocation8 + $0x8c8] sm:$0xff]
    %v3728 = vld [vmem:[#allocation8 + $0x8d0] sm:$0xff]
    %v3729 = vld [vmem:[#allocation8 + $0x8d8] sm:$0xff]
    %v3730 = vld [vmem:[#allocation8 + $0x8e0] sm:$0xff]
    %v3731 = vld [vmem:[#allocation8 + $0x8e8] sm:$0xff]
    %v3732 = vld [vmem:[#allocation8 + $0x8f0] sm:$0xff]
    %v3733 = vld [vmem:[#allocation8 + $0x8f8] sm:$0xff]
    %v3734 = vld [vmem:[%s5 + $0x140] sm:$0xff]
    %v3735 = vld [vmem:[%s5 + $0x148] sm:$0xff]
    %3736 = vmatprep.subr.mxu0 0.0
    %3737 = vmatpush1.msra.mxu0 %v3702
    %3738 = vmatprep.subr.mxu0 0.0
    %3739 = vmatpush1.msra.mxu0 %v3703
    %3740 = vmatprep.subr.mxu0 0.0
    %3741 = vmatpush1.msra.mxu0 %v3704
    %3742 = vmatprep.subr.mxu0 0.0
    %3743 = vmatpush1.msra.mxu0 %v3705
    %3744 = vmatprep.subr.mxu0 0.0
    %3745 = vmatpush1.msra.mxu0 %v3706
    %3746 = vmatprep.subr.mxu0 0.0
    %3747 = vmatpush1.msra.mxu0 %v3707
    %3748 = vmatprep.subr.mxu0 0.0
    %3749 = vmatpush1.msra.mxu0 %v3708
    %3750 = vmatprep.subr.mxu0 0.0
    %3751 = vmatpush1.msra.mxu0 %v3709
    %3752 = vmatprep.subr.mxu0 0.0
    %3753 = vmatpush1.msra.mxu0 %v3710
    %3754 = vmatprep.subr.mxu0 0.0
    %3755 = vmatpush1.msra.mxu0 %v3711
    %3756 = vmatprep.subr.mxu0 0.0
    %3757 = vmatpush1.msra.mxu0 %v3712
    %3758 = vmatprep.subr.mxu0 0.0
    %3759 = vmatpush1.msra.mxu0 %v3713
    %3760 = vmatprep.subr.mxu0 0.0
    %3761 = vmatpush1.msra.mxu0 %v3714
    %3762 = vmatprep.subr.mxu0 0.0
    %3763 = vmatpush1.msra.mxu0 %v3715
    %3764 = vmatprep.subr.mxu0 0.0
    %3765 = vmatpush1.msra.mxu0 %v3716
    %3766 = vmatprep.subr.mxu0 0.0
    %3767 = vmatpush1.msra.mxu0 %v3717
    %3768 = vmatprep.subr.mxu0 0.0
    %3769 = vmatpush1.msra.mxu0 %v3718
    %3770 = vmatprep.subr.mxu0 0.0
    %3771 = vmatpush1.msra.mxu0 %v3719
    %3772 = vmatprep.subr.mxu0 0.0
    %3773 = vmatpush1.msra.mxu0 %v3720
    %3774 = vmatprep.subr.mxu0 0.0
    %3775 = vmatpush1.msra.mxu0 %v3721
    %3776 = vmatprep.subr.mxu0 0.0
    %3777 = vmatpush1.msra.mxu0 %v3722
    %3778 = vmatprep.subr.mxu0 0.0
    %3779 = vmatpush1.msra.mxu0 %v3723
    %3780 = vmatprep.subr.mxu0 0.0
    %3781 = vmatpush1.msra.mxu0 %v3724
    %3782 = vmatprep.subr.mxu0 0.0
    %3783 = vmatpush1.msra.mxu0 %v3725
    %3784 = vmatprep.subr.mxu0 0.0
    %3785 = vmatpush1.msra.mxu0 %v3726
    %3786 = vmatprep.subr.mxu0 0.0
    %3787 = vmatpush1.msra.mxu0 %v3727
    %3788 = vmatprep.subr.mxu0 0.0
    %3789 = vmatpush1.msra.mxu0 %v3728
    %3790 = vmatprep.subr.mxu0 0.0
    %3791 = vmatpush1.msra.mxu0 %v3729
    %3792 = vmatprep.subr.mxu0 0.0
    %3793 = vmatpush1.msra.mxu0 %v3730
    %3794 = vmatprep.subr.mxu0 0.0
    %3795 = vmatpush1.msra.mxu0 %v3731
    %3796 = vmatprep.subr.mxu0 0.0
    %3797 = vmatpush1.msra.mxu0 %v3732
    %3798 = vmatprep.subr.mxu0 0.0
    %3799 = vmatpush1.msra.mxu0 %v3733
    %3800 = vmatprep.mubr.f32.mxu0 %v2161
    %3801 = vmatmul.mubr.f32.gmra.mrb[0].mxu0 %v2160
    %v3802 = vpop.f32.mrb[0].mxu0
    %v3803 = vadd.f32 0.0, %v3802
    %v3804 = vpop.f32.mrb[0].mxu0
    %3805 = vmatprep.mubr.f32.mxu0 %v2163
    %3806 = vmatmul.mubr.f32.gmra.mrb[0].mxu0 %v2162
    %v3807 = vpop.f32.mrb[0].mxu0
    %v3808 = vadd.f32 0.0, %v3807
    %v3809 = vpop.f32.mrb[0].mxu0
    %3810 = vdwg.mxu0
    %v3812 = vsel %vm232, %v3734, 0
    %v3815 = vsel %vm232, %v3735, 0
    %3817 = vmatprep.subr.mxu0 0.0
    %3818 = vmatpush1.msra.mxu0 %v3803
    %3819 = vmatprep.subr.mxu0 0.0
    %3820 = vmatpush1.msra.mxu0 %v3808
    %3821 = vmatprep.subr.mxu0 0.0
    %3822 = vmatpush1.msra.mxu0 0.0
    %3823 = vmatprep.subr.mxu0 0.0
    %3824 = vmatpush1.msra.mxu0 0.0
    %3825 = vmatprep.subr.mxu0 0.0
    %3826 = vmatpush1.msra.mxu0 0.0
    %3827 = vmatprep.subr.mxu0 0.0
    %3828 = vmatpush1.msra.mxu0 0.0
    %3829 = vmatprep.subr.mxu0 0.0
    %3830 = vmatpush1.msra.mxu0 0.0
    %3831 = vmatprep.subr.mxu0 0.0
    %3832 = vmatpush1.msra.mxu0 0.0
    %3833 = vmatprep.subr.mxu0 0.0
    %3834 = vmatpush1.msra.mxu0 0.0
    %3835 = vmatprep.subr.mxu0 0.0
    %3836 = vmatpush1.msra.mxu0 0.0
    %3837 = vmatprep.subr.mxu0 0.0
    %3838 = vmatpush1.msra.mxu0 0.0
    %3839 = vmatprep.subr.mxu0 0.0
    %3840 = vmatpush1.msra.mxu0 0.0
    %3841 = vmatprep.subr.mxu0 0.0
    %3842 = vmatpush1.msra.mxu0 0.0
    %3843 = vmatprep.subr.mxu0 0.0
    %3844 = vmatpush1.msra.mxu0 0.0
    %3845 = vmatprep.subr.mxu0 0.0
    %3846 = vmatpush1.msra.mxu0 0.0
    %3847 = vmatprep.subr.mxu0 0.0
    %3848 = vmatpush1.msra.mxu0 0.0
    %3849 = vmatprep.subr.mxu0 0.0
    %3850 = vmatpush1.msra.mxu0 0.0
    %3851 = vmatprep.subr.mxu0 0.0
    %3852 = vmatpush1.msra.mxu0 0.0
    %3853 = vmatprep.subr.mxu0 0.0
    %3854 = vmatpush1.msra.mxu0 0.0
    %3855 = vmatprep.subr.mxu0 0.0
    %3856 = vmatpush1.msra.mxu0 0.0
    %3857 = vmatprep.subr.mxu0 0.0
    %3858 = vmatpush1.msra.mxu0 0.0
    %3859 = vmatprep.subr.mxu0 0.0
    %3860 = vmatpush1.msra.mxu0 0.0
    %3861 = vmatprep.subr.mxu0 0.0
    %3862 = vmatpush1.msra.mxu0 0.0
    %3863 = vmatprep.subr.mxu0 0.0
    %3864 = vmatpush1.msra.mxu0 0.0
    %3865 = vmatprep.subr.mxu0 0.0
    %3866 = vmatpush1.msra.mxu0 0.0
    %3867 = vmatprep.subr.mxu0 0.0
    %3868 = vmatpush1.msra.mxu0 0.0
    %3869 = vmatprep.subr.mxu0 0.0
    %3870 = vmatpush1.msra.mxu0 0.0
    %3871 = vmatprep.subr.mxu0 0.0
    %3872 = vmatpush1.msra.mxu0 0.0
    %3873 = vmatprep.subr.mxu0 0.0
    %3874 = vmatpush1.msra.mxu0 0.0
    %3875 = vmatprep.subr.mxu0 0.0
    %3876 = vmatpush1.msra.mxu0 0.0
    %3877 = vmatprep.subr.mxu0 0.0
    %3878 = vmatpush1.msra.mxu0 0.0
    %3879 = vmatprep.subr.mxu0 0.0
    %3880 = vmatpush1.msra.mxu0 0.0
    %3881 = vmatprep.mubr.f32.mxu0 0.0
    %3882 = vmatmul.mubr.f32.gmra.mrb[0].mxu0 %v3812
    %v3883 = vpop.f32.mrb[0].mxu0
    %v3884 = vadd.f32 0.0, %v3883
    %v3885 = vpop.f32.mrb[0].mxu0
    %3886 = vmatprep.mubr.f32.mxu0 0.0
    %3887 = vmatmul.mubr.f32.gmra.mrb[0].mxu0 %v3815
    %v3888 = vpop.f32.mrb[0].mxu0
    %v3889 = vadd.f32 0.0, %v3888
    %v3890 = vpop.f32.mrb[0].mxu0
    %3891 = vdwg.mxu0
    %v3892 = vadd.f32 %v3700, %v3884
    %v3893 = vadd.f32 %v3701, %v3889
    %v3894 = vmax.f32 %v3892, 0.0
    %v3895 = vmax.f32 %v3893, 0.0
    %v3896 = vld [vmem:[%s6] sm:$0xff]
    %v3897 = vld [vmem:[%s6 + $0x8] sm:$0xff]
    %v3898 = vld [vmem:[%s6 + $0x10] sm:$0xff]
    %v3899 = vld [vmem:[%s6 + $0x18] sm:$0xff]
    %v3900 = vld [vmem:[%s6 + $0x20] sm:$0xff]
    %v3901 = vld [vmem:[%s6 + $0x28] sm:$0xff]
    %v3902 = vld [vmem:[%s6 + $0x30] sm:$0xff]
    %v3903 = vld [vmem:[%s6 + $0x38] sm:$0xff]
    %v3904 = vld [vmem:[%s6 + $0x40] sm:$0xff]
    %v3905 = vld [vmem:[%s6 + $0x48] sm:$0xff]
    %v3906 = vld [vmem:[%s6 + $0x50] sm:$0xff]
    %v3907 = vld [vmem:[%s6 + $0x58] sm:$0xff]
    %v3908 = vld [vmem:[%s6 + $0x60] sm:$0xff]
    %v3909 = vld [vmem:[%s6 + $0x68] sm:$0xff]
    %v3910 = vld [vmem:[%s6 + $0x70] sm:$0xff]
    %v3911 = vld [vmem:[%s6 + $0x78] sm:$0xff]
    %v3912 = vld [vmem:[%s6 + $0x80] sm:$0xff]
    %v3913 = vld [vmem:[%s6 + $0x88] sm:$0xff]
    %v3914 = vld [vmem:[%s6 + $0x90] sm:$0xff]
    %v3915 = vld [vmem:[%s6 + $0x98] sm:$0xff]
    %v3916 = vld [vmem:[%s6 + $0xa0] sm:$0xff]
    %v3917 = vld [vmem:[%s6 + $0xa8] sm:$0xff]
    %v3918 = vld [vmem:[%s6 + $0xb0] sm:$0xff]
    %v3919 = vld [vmem:[%s6 + $0xb8] sm:$0xff]
    %v3920 = vld [vmem:[%s6 + $0xc0] sm:$0xff]
    %v3921 = vld [vmem:[%s6 + $0xc8] sm:$0xff]
    %v3922 = vld [vmem:[%s6 + $0xd0] sm:$0xff]
    %v3923 = vld [vmem:[%s6 + $0xd8] sm:$0xff]
    %v3924 = vld [vmem:[%s6 + $0xe0] sm:$0xff]
    %v3925 = vld [vmem:[%s6 + $0xe8] sm:$0xff]
    %v3926 = vld [vmem:[%s6 + $0xf0] sm:$0xff]
    %v3927 = vld [vmem:[%s6 + $0xf8] sm:$0xff]
    %v3928 = vld [vmem:[%s6 + $0x100] sm:$0xff]
    %v3929 = vld [vmem:[%s6 + $0x108] sm:$0xff]
    %v3930 = vld [vmem:[%s6 + $0x110] sm:$0xff]
    %v3931 = vld [vmem:[%s6 + $0x118] sm:$0xff]
    %v3932 = vld [vmem:[%s6 + $0x120] sm:$0xff]
    %v3933 = vld [vmem:[%s6 + $0x128] sm:$0xff]
    %v3934 = vld [vmem:[%s6 + $0x130] sm:$0xff]
    %v3935 = vld [vmem:[%s6 + $0x138] sm:$0xff]
    %v3936 = vld [vmem:[%s6 + $0x140] sm:$0xff]
    %v3937 = vld [vmem:[%s6 + $0x148] sm:$0xff]
    %v3938 = vld [vmem:[%s6 + $0x150] sm:$0xff]
    %v3939 = vld [vmem:[%s6 + $0x158] sm:$0xff]
    %v3940 = vld [vmem:[%s6 + $0x160] sm:$0xff]
    %v3941 = vld [vmem:[%s6 + $0x168] sm:$0xff]
    %v3942 = vld [vmem:[%s6 + $0x170] sm:$0xff]
    %v3943 = vld [vmem:[%s6 + $0x178] sm:$0xff]
    %v3944 = vld [vmem:[%s6 + $0x180] sm:$0xff]
    %v3945 = vld [vmem:[%s6 + $0x188] sm:$0xff]
    %v3946 = vld [vmem:[%s6 + $0x190] sm:$0xff]
    %v3947 = vld [vmem:[%s6 + $0x198] sm:$0xff]
    %v3948 = vld [vmem:[%s6 + $0x1a0] sm:$0xff]
    %v3949 = vld [vmem:[%s6 + $0x1a8] sm:$0xff]
    %v3950 = vld [vmem:[%s6 + $0x1b0] sm:$0xff]
    %v3951 = vld [vmem:[%s6 + $0x1b8] sm:$0xff]
    %v3952 = vld [vmem:[%s6 + $0x1c0] sm:$0xff]
    %v3953 = vld [vmem:[%s6 + $0x1c8] sm:$0xff]
    %v3954 = vld [vmem:[%s6 + $0x1d0] sm:$0xff]
    %v3955 = vld [vmem:[%s6 + $0x1d8] sm:$0xff]
    %v3956 = vld [vmem:[%s6 + $0x1e0] sm:$0xff]
    %v3957 = vld [vmem:[%s6 + $0x1e8] sm:$0xff]
    %v3958 = vld [vmem:[%s6 + $0x1f0] sm:$0xff]
    %v3959 = vld [vmem:[%s6 + $0x1f8] sm:$0xff]
    %3960 = vmatprep.subr.mxu0 %v3897
    %3961 = vmatpush1.msra.mxu0 %v3896
    %3962 = vmatprep.subr.mxu0 %v3901
    %3963 = vmatpush1.msra.mxu0 %v3900
    %3964 = vmatprep.subr.mxu0 %v3905
    %3965 = vmatpush1.msra.mxu0 %v3904
    %3966 = vmatprep.subr.mxu0 %v3909
    %3967 = vmatpush1.msra.mxu0 %v3908
    %3968 = vmatprep.subr.mxu0 %v3913
    %3969 = vmatpush1.msra.mxu0 %v3912
    %3970 = vmatprep.subr.mxu0 %v3917
    %3971 = vmatpush1.msra.mxu0 %v3916
    %3972 = vmatprep.subr.mxu0 %v3921
    %3973 = vmatpush1.msra.mxu0 %v3920
    %3974 = vmatprep.subr.mxu0 %v3925
    %3975 = vmatpush1.msra.mxu0 %v3924
    %3976 = vmatprep.subr.mxu0 %v3929
    %3977 = vmatpush1.msra.mxu0 %v3928
    %3978 = vmatprep.subr.mxu0 %v3933
    %3979 = vmatpush1.msra.mxu0 %v3932
    %3980 = vmatprep.subr.mxu0 %v3937
    %3981 = vmatpush1.msra.mxu0 %v3936
    %3982 = vmatprep.subr.mxu0 %v3941
    %3983 = vmatpush1.msra.mxu0 %v3940
    %3984 = vmatprep.subr.mxu0 %v3945
    %3985 = vmatpush1.msra.mxu0 %v3944
    %3986 = vmatprep.subr.mxu0 %v3949
    %3987 = vmatpush1.msra.mxu0 %v3948
    %3988 = vmatprep.subr.mxu0 %v3953
    %3989 = vmatpush1.msra.mxu0 %v3952
    %3990 = vmatprep.subr.mxu0 %v3957
    %3991 = vmatpush1.msra.mxu0 %v3956
    %3992 = vmatprep.subr.mxu0 0.0
    %3993 = vmatpush1.msra.mxu0 0.0
    %3994 = vmatprep.subr.mxu0 0.0
    %3995 = vmatpush1.msra.mxu0 0.0
    %3996 = vmatprep.subr.mxu0 0.0
    %3997 = vmatpush1.msra.mxu0 0.0
    %3998 = vmatprep.subr.mxu0 0.0
    %3999 = vmatpush1.msra.mxu0 0.0
    %4000 = vmatprep.subr.mxu0 0.0
    %4001 = vmatpush1.msra.mxu0 0.0
    %4002 = vmatprep.subr.mxu0 0.0
    %4003 = vmatpush1.msra.mxu0 0.0
    %4004 = vmatprep.subr.mxu0 0.0
    %4005 = vmatpush1.msra.mxu0 0.0
    %4006 = vmatprep.subr.mxu0 0.0
    %4007 = vmatpush1.msra.mxu0 0.0
    %4008 = vmatprep.subr.mxu0 0.0
    %4009 = vmatpush1.msra.mxu0 0.0
    %4010 = vmatprep.subr.mxu0 0.0
    %4011 = vmatpush1.msra.mxu0 0.0
    %4012 = vmatprep.subr.mxu0 0.0
    %4013 = vmatpush1.msra.mxu0 0.0
    %4014 = vmatprep.subr.mxu0 0.0
    %4015 = vmatpush1.msra.mxu0 0.0
    %4016 = vmatprep.subr.mxu0 0.0
    %4017 = vmatpush1.msra.mxu0 0.0
    %4018 = vmatprep.subr.mxu0 0.0
    %4019 = vmatpush1.msra.mxu0 0.0
    %4020 = vmatprep.subr.mxu0 0.0
    %4021 = vmatpush1.msra.mxu0 0.0
    %4022 = vmatprep.subr.mxu0 0.0
    %4023 = vmatpush1.msra.mxu0 0.0
    %4024 = vmatprep.mubr.f32.mxu0 0.0
    %4025 = vmatmul.mubr.f32.gmra.mrb[0].mxu0 %v3894
    %v4026 = vpop.f32.mrb[0].mxu0
    %v4027 = vadd.f32 0.0, %v4026
    %v4028 = vpop.f32.mrb[0].mxu0
    %v4029 = vadd.f32 0.0, %v4028
    %4030 = vmatprep.mubr.f32.mxu0 0.0
    %4031 = vmatmul.mubr.f32.gmra.mrb[0].mxu0 %v3895
    %v4032 = vpop.f32.mrb[0].mxu0
    %v4033 = vadd.f32 0.0, %v4032
    %v4034 = vpop.f32.mrb[0].mxu0
    %v4035 = vadd.f32 0.0, %v4034
    %4036 = vdwg.mxu0
    %4037 = vmatprep.subr.mxu0 %v3899
    %4038 = vmatpush1.msra.mxu0 %v3898
    %4039 = vmatprep.subr.mxu0 %v3903
    %4040 = vmatpush1.msra.mxu0 %v3902
    %4041 = vmatprep.subr.mxu0 %v3907
    %4042 = vmatpush1.msra.mxu0 %v3906
    %4043 = vmatprep.subr.mxu0 %v3911
    %4044 = vmatpush1.msra.mxu0 %v3910
    %4045 = vmatprep.subr.mxu0 %v3915
    %4046 = vmatpush1.msra.mxu0 %v3914
    %4047 = vmatprep.subr.mxu0 %v3919
    %4048 = vmatpush1.msra.mxu0 %v3918
    %4049 = vmatprep.subr.mxu0 %v3923
    %4050 = vmatpush1.msra.mxu0 %v3922
    %4051 = vmatprep.subr.mxu0 %v3927
    %4052 = vmatpush1.msra.mxu0 %v3926
    %4053 = vmatprep.subr.mxu0 %v3931
    %4054 = vmatpush1.msra.mxu0 %v3930
    %4055 = vmatprep.subr.mxu0 %v3935
    %4056 = vmatpush1.msra.mxu0 %v3934
    %4057 = vmatprep.subr.mxu0 %v3939
    %4058 = vmatpush1.msra.mxu0 %v3938
    %4059 = vmatprep.subr.mxu0 %v3943
    %4060 = vmatpush1.msra.mxu0 %v3942
    %4061 = vmatprep.subr.mxu0 %v3947
    %4062 = vmatpush1.msra.mxu0 %v3946
    %4063 = vmatprep.subr.mxu0 %v3951
    %4064 = vmatpush1.msra.mxu0 %v3950
    %4065 = vmatprep.subr.mxu0 %v3955
    %4066 = vmatpush1.msra.mxu0 %v3954
    %4067 = vmatprep.subr.mxu0 %v3959
    %4068 = vmatpush1.msra.mxu0 %v3958
    %4069 = vmatprep.subr.mxu0 0.0
    %4070 = vmatpush1.msra.mxu0 0.0
    %4071 = vmatprep.subr.mxu0 0.0
    %4072 = vmatpush1.msra.mxu0 0.0
    %4073 = vmatprep.subr.mxu0 0.0
    %4074 = vmatpush1.msra.mxu0 0.0
    %4075 = vmatprep.subr.mxu0 0.0
    %4076 = vmatpush1.msra.mxu0 0.0
    %4077 = vmatprep.subr.mxu0 0.0
    %4078 = vmatpush1.msra.mxu0 0.0
    %4079 = vmatprep.subr.mxu0 0.0
    %4080 = vmatpush1.msra.mxu0 0.0
    %4081 = vmatprep.subr.mxu0 0.0
    %4082 = vmatpush1.msra.mxu0 0.0
    %4083 = vmatprep.subr.mxu0 0.0
    %4084 = vmatpush1.msra.mxu0 0.0
    %4085 = vmatprep.subr.mxu0 0.0
    %4086 = vmatpush1.msra.mxu0 0.0
    %4087 = vmatprep.subr.mxu0 0.0
    %4088 = vmatpush1.msra.mxu0 0.0
    %4089 = vmatprep.subr.mxu0 0.0
    %4090 = vmatpush1.msra.mxu0 0.0
    %4091 = vmatprep.subr.mxu0 0.0
    %4092 = vmatpush1.msra.mxu0 0.0
    %4093 = vmatprep.subr.mxu0 0.0
    %4094 = vmatpush1.msra.mxu0 0.0
    %4095 = vmatprep.subr.mxu0 0.0
    %4096 = vmatpush1.msra.mxu0 0.0
    %4097 = vmatprep.subr.mxu0 0.0
    %4098 = vmatpush1.msra.mxu0 0.0
    %4099 = vmatprep.subr.mxu0 0.0
    %4100 = vmatpush1.msra.mxu0 0.0
    %4101 = vmatprep.mubr.f32.mxu0 0.0
    %4102 = vmatmul.mubr.f32.gmra.mrb[0].mxu0 %v3894
    %v4103 = vpop.f32.mrb[0].mxu0
    %v4104 = vadd.f32 0.0, %v4103
    %v4105 = vpop.f32.mrb[0].mxu0
    %v4106 = vadd.f32 0.0, %v4105
    %4107 = vmatprep.mubr.f32.mxu0 0.0
    %4108 = vmatmul.mubr.f32.gmra.mrb[0].mxu0 %v3895
    %v4109 = vpop.f32.mrb[0].mxu0
    %v4110 = vadd.f32 0.0, %v4109
    %v4111 = vpop.f32.mrb[0].mxu0
    %v4112 = vadd.f32 0.0, %v4111
    %4113 = vdwg.mxu0
    %v4114 = vld [vmem:[%s5] sm:$0xff]
    %v4115 = vld [vmem:[%s5 + $0x8] sm:$0xff]
    %v4116 = vld [vmem:[%s5 + $0x150] sm:$0xff]
    %v4117 = vld [vmem:[%s5 + $0x158] sm:$0xff]
    %v4119 = vsel %vm232, %v4116, 0
    %v4122 = vsel %vm232, %v4117, 0
    %4124 = vmatprep.subr.mxu0 0.0
    %4125 = vmatpush1.msra.mxu0 %v4027
    %4126 = vmatprep.subr.mxu0 0.0
    %4127 = vmatpush1.msra.mxu0 %v4033
    %4128 = vmatprep.subr.mxu0 0.0
    %4129 = vmatpush1.msra.mxu0 0.0
    %4130 = vmatprep.subr.mxu0 0.0
    %4131 = vmatpush1.msra.mxu0 0.0
    %4132 = vmatprep.subr.mxu0 0.0
    %4133 = vmatpush1.msra.mxu0 0.0
    %4134 = vmatprep.subr.mxu0 0.0
    %4135 = vmatpush1.msra.mxu0 0.0
    %4136 = vmatprep.subr.mxu0 0.0
    %4137 = vmatpush1.msra.mxu0 0.0
    %4138 = vmatprep.subr.mxu0 0.0
    %4139 = vmatpush1.msra.mxu0 0.0
    %4140 = vmatprep.subr.mxu0 0.0
    %4141 = vmatpush1.msra.mxu0 0.0
    %4142 = vmatprep.subr.mxu0 0.0
    %4143 = vmatpush1.msra.mxu0 0.0
    %4144 = vmatprep.subr.mxu0 0.0
    %4145 = vmatpush1.msra.mxu0 0.0
    %4146 = vmatprep.subr.mxu0 0.0
    %4147 = vmatpush1.msra.mxu0 0.0
    %4148 = vmatprep.subr.mxu0 0.0
    %4149 = vmatpush1.msra.mxu0 0.0
    %4150 = vmatprep.subr.mxu0 0.0
    %4151 = vmatpush1.msra.mxu0 0.0
    %4152 = vmatprep.subr.mxu0 0.0
    %4153 = vmatpush1.msra.mxu0 0.0
    %4154 = vmatprep.subr.mxu0 0.0
    %4155 = vmatpush1.msra.mxu0 0.0
    %4156 = vmatprep.subr.mxu0 0.0
    %4157 = vmatpush1.msra.mxu0 0.0
    %4158 = vmatprep.subr.mxu0 0.0
    %4159 = vmatpush1.msra.mxu0 0.0
    %4160 = vmatprep.subr.mxu0 0.0
    %4161 = vmatpush1.msra.mxu0 0.0
    %4162 = vmatprep.subr.mxu0 0.0
    %4163 = vmatpush1.msra.mxu0 0.0
    %4164 = vmatprep.subr.mxu0 0.0
    %4165 = vmatpush1.msra.mxu0 0.0
    %4166 = vmatprep.subr.mxu0 0.0
    %4167 = vmatpush1.msra.mxu0 0.0
    %4168 = vmatprep.subr.mxu0 0.0
    %4169 = vmatpush1.msra.mxu0 0.0
    %4170 = vmatprep.subr.mxu0 0.0
    %4171 = vmatpush1.msra.mxu0 0.0
    %4172 = vmatprep.subr.mxu0 0.0
    %4173 = vmatpush1.msra.mxu0 0.0
    %4174 = vmatprep.subr.mxu0 0.0
    %4175 = vmatpush1.msra.mxu0 0.0
    %4176 = vmatprep.subr.mxu0 0.0
    %4177 = vmatpush1.msra.mxu0 0.0
    %4178 = vmatprep.subr.mxu0 0.0
    %4179 = vmatpush1.msra.mxu0 0.0
    %4180 = vmatprep.subr.mxu0 0.0
    %4181 = vmatpush1.msra.mxu0 0.0
    %4182 = vmatprep.subr.mxu0 0.0
    %4183 = vmatpush1.msra.mxu0 0.0
    %4184 = vmatprep.subr.mxu0 0.0
    %4185 = vmatpush1.msra.mxu0 0.0
    %4186 = vmatprep.subr.mxu0 0.0
    %4187 = vmatpush1.msra.mxu0 0.0
    %4188 = vmatprep.mubr.f32.mxu0 0.0
    %4189 = vmatmul.mubr.f32.gmra.mrb[0].mxu0 %v4119
    %v4190 = vpop.f32.mrb[0].mxu0
    %v4191 = vadd.f32 0.0, %v4190
    %v4192 = vpop.f32.mrb[0].mxu0
    %4193 = vmatprep.mubr.f32.mxu0 0.0
    %4194 = vmatmul.mubr.f32.gmra.mrb[0].mxu0 %v4122
    %v4195 = vpop.f32.mrb[0].mxu0
    %v4196 = vadd.f32 0.0, %v4195
    %v4197 = vpop.f32.mrb[0].mxu0
    %4198 = vdwg.mxu0
    %v4199 = vadd.f32 %v4114, %v4191
    %v4200 = vadd.f32 %v4115, %v4196
    %v4201 = vld [vmem:[%s5 + $0x160] sm:$0xff]
    %v4202 = vld [vmem:[%s5 + $0x168] sm:$0xff]
    %4205 = vrot.lane.b32.xlu0 %v4027, 112
    %v4206 = vpop.permute.xlu0 %4205
    %4207 = vrot.lane.b32.xlu0 %v4033, 112
    %v4208 = vpop.permute.xlu0 %4207
    %v4212 = vsel %vm232, %v4201, 0
    %v4215 = vsel %vm232, %v4202, 0
    %4217 = vmatprep.subr.mxu0 0.0
    %4218 = vmatpush1.msra.mxu0 %v4206
    %4219 = vmatprep.subr.mxu0 0.0
    %4220 = vmatpush1.msra.mxu0 %v4208
    %4221 = vmatprep.subr.mxu0 0.0
    %4222 = vmatpush1.msra.mxu0 0.0
    %4223 = vmatprep.subr.mxu0 0.0
    %4224 = vmatpush1.msra.mxu0 0.0
    %4225 = vmatprep.subr.mxu0 0.0
    %4226 = vmatpush1.msra.mxu0 0.0
    %4227 = vmatprep.subr.mxu0 0.0
    %4228 = vmatpush1.msra.mxu0 0.0
    %4229 = vmatprep.subr.mxu0 0.0
    %4230 = vmatpush1.msra.mxu0 0.0
    %4231 = vmatprep.subr.mxu0 0.0
    %4232 = vmatpush1.msra.mxu0 0.0
    %4233 = vmatprep.subr.mxu0 0.0
    %4234 = vmatpush1.msra.mxu0 0.0
    %4235 = vmatprep.subr.mxu0 0.0
    %4236 = vmatpush1.msra.mxu0 0.0
    %4237 = vmatprep.subr.mxu0 0.0
    %4238 = vmatpush1.msra.mxu0 0.0
    %4239 = vmatprep.subr.mxu0 0.0
    %4240 = vmatpush1.msra.mxu0 0.0
    %4241 = vmatprep.subr.mxu0 0.0
    %4242 = vmatpush1.msra.mxu0 0.0
    %4243 = vmatprep.subr.mxu0 0.0
    %4244 = vmatpush1.msra.mxu0 0.0
    %4245 = vmatprep.subr.mxu0 0.0
    %4246 = vmatpush1.msra.mxu0 0.0
    %4247 = vmatprep.subr.mxu0 0.0
    %4248 = vmatpush1.msra.mxu0 0.0
    %4249 = vmatprep.subr.mxu0 0.0
    %4250 = vmatpush1.msra.mxu0 0.0
    %4251 = vmatprep.subr.mxu0 0.0
    %4252 = vmatpush1.msra.mxu0 0.0
    %4253 = vmatprep.subr.mxu0 0.0
    %4254 = vmatpush1.msra.mxu0 0.0
    %4255 = vmatprep.subr.mxu0 0.0
    %4256 = vmatpush1.msra.mxu0 0.0
    %4257 = vmatprep.subr.mxu0 0.0
    %4258 = vmatpush1.msra.mxu0 0.0
    %4259 = vmatprep.subr.mxu0 0.0
    %4260 = vmatpush1.msra.mxu0 0.0
    %4261 = vmatprep.subr.mxu0 0.0
    %4262 = vmatpush1.msra.mxu0 0.0
    %4263 = vmatprep.subr.mxu0 0.0
    %4264 = vmatpush1.msra.mxu0 0.0
    %4265 = vmatprep.subr.mxu0 0.0
    %4266 = vmatpush1.msra.mxu0 0.0
    %4267 = vmatprep.subr.mxu0 0.0
    %4268 = vmatpush1.msra.mxu0 0.0
    %4269 = vmatprep.subr.mxu0 0.0
    %4270 = vmatpush1.msra.mxu0 0.0
    %4271 = vmatprep.subr.mxu0 0.0
    %4272 = vmatpush1.msra.mxu0 0.0
    %4273 = vmatprep.subr.mxu0 0.0
    %4274 = vmatpush1.msra.mxu0 0.0
    %4275 = vmatprep.subr.mxu0 0.0
    %4276 = vmatpush1.msra.mxu0 0.0
    %4277 = vmatprep.subr.mxu0 0.0
    %4278 = vmatpush1.msra.mxu0 0.0
    %4279 = vmatprep.subr.mxu0 0.0
    %4280 = vmatpush1.msra.mxu0 0.0
    %4281 = vmatprep.mubr.f32.mxu0 0.0
    %4282 = vmatmul.mubr.f32.gmra.mrb[0].mxu0 %v4212
    %v4283 = vpop.f32.mrb[0].mxu0
    %v4284 = vadd.f32 0.0, %v4283
    %v4285 = vpop.f32.mrb[0].mxu0
    %4286 = vmatprep.mubr.f32.mxu0 0.0
    %4287 = vmatmul.mubr.f32.gmra.mrb[0].mxu0 %v4215
    %v4288 = vpop.f32.mrb[0].mxu0
    %v4289 = vadd.f32 0.0, %v4288
    %v4290 = vpop.f32.mrb[0].mxu0
    %4291 = vdwg.mxu0
    %v4292 = vadd.f32 %v4199, %v4284
    %v4293 = vadd.f32 %v4200, %v4289
    %v4294 = vld [vmem:[%s5 + $0x170] sm:$0xff]
    %v4295 = vld [vmem:[%s5 + $0x178] sm:$0xff]
    %4296 = vrot.lane.b32.xlu0 %v4027, 96
    %v4297 = vpop.permute.xlu0 %4296
    %4298 = vrot.lane.b32.xlu0 %v4033, 96
    %v4299 = vpop.permute.xlu0 %4298
    %v4303 = vsel %vm232, %v4294, 0
    %v4306 = vsel %vm232, %v4295, 0
    %4308 = vmatprep.subr.mxu0 0.0
    %4309 = vmatpush1.msra.mxu0 %v4297
    %4310 = vmatprep.subr.mxu0 0.0
    %4311 = vmatpush1.msra.mxu0 %v4299
    %4312 = vmatprep.subr.mxu0 0.0
    %4313 = vmatpush1.msra.mxu0 0.0
    %4314 = vmatprep.subr.mxu0 0.0
    %4315 = vmatpush1.msra.mxu0 0.0
    %4316 = vmatprep.subr.mxu0 0.0
    %4317 = vmatpush1.msra.mxu0 0.0
    %4318 = vmatprep.subr.mxu0 0.0
    %4319 = vmatpush1.msra.mxu0 0.0
    %4320 = vmatprep.subr.mxu0 0.0
    %4321 = vmatpush1.msra.mxu0 0.0
    %4322 = vmatprep.subr.mxu0 0.0
    %4323 = vmatpush1.msra.mxu0 0.0
    %4324 = vmatprep.subr.mxu0 0.0
    %4325 = vmatpush1.msra.mxu0 0.0
    %4326 = vmatprep.subr.mxu0 0.0
    %4327 = vmatpush1.msra.mxu0 0.0
    %4328 = vmatprep.subr.mxu0 0.0
    %4329 = vmatpush1.msra.mxu0 0.0
    %4330 = vmatprep.subr.mxu0 0.0
    %4331 = vmatpush1.msra.mxu0 0.0
    %4332 = vmatprep.subr.mxu0 0.0
    %4333 = vmatpush1.msra.mxu0 0.0
    %4334 = vmatprep.subr.mxu0 0.0
    %4335 = vmatpush1.msra.mxu0 0.0
    %4336 = vmatprep.subr.mxu0 0.0
    %4337 = vmatpush1.msra.mxu0 0.0
    %4338 = vmatprep.subr.mxu0 0.0
    %4339 = vmatpush1.msra.mxu0 0.0
    %4340 = vmatprep.subr.mxu0 0.0
    %4341 = vmatpush1.msra.mxu0 0.0
    %4342 = vmatprep.subr.mxu0 0.0
    %4343 = vmatpush1.msra.mxu0 0.0
    %4344 = vmatprep.subr.mxu0 0.0
    %4345 = vmatpush1.msra.mxu0 0.0
    %4346 = vmatprep.subr.mxu0 0.0
    %4347 = vmatpush1.msra.mxu0 0.0
    %4348 = vmatprep.subr.mxu0 0.0
    %4349 = vmatpush1.msra.mxu0 0.0
    %4350 = vmatprep.subr.mxu0 0.0
    %4351 = vmatpush1.msra.mxu0 0.0
    %4352 = vmatprep.subr.mxu0 0.0
    %4353 = vmatpush1.msra.mxu0 0.0
    %4354 = vmatprep.subr.mxu0 0.0
    %4355 = vmatpush1.msra.mxu0 0.0
    %4356 = vmatprep.subr.mxu0 0.0
    %4357 = vmatpush1.msra.mxu0 0.0
    %4358 = vmatprep.subr.mxu0 0.0
    %4359 = vmatpush1.msra.mxu0 0.0
    %4360 = vmatprep.subr.mxu0 0.0
    %4361 = vmatpush1.msra.mxu0 0.0
    %4362 = vmatprep.subr.mxu0 0.0
    %4363 = vmatpush1.msra.mxu0 0.0
    %4364 = vmatprep.subr.mxu0 0.0
    %4365 = vmatpush1.msra.mxu0 0.0
    %4366 = vmatprep.subr.mxu0 0.0
    %4367 = vmatpush1.msra.mxu0 0.0
    %4368 = vmatprep.subr.mxu0 0.0
    %4369 = vmatpush1.msra.mxu0 0.0
    %4370 = vmatprep.subr.mxu0 0.0
    %4371 = vmatpush1.msra.mxu0 0.0
    %4372 = vmatprep.mubr.f32.mxu0 0.0
    %4373 = vmatmul.mubr.f32.gmra.mrb[0].mxu0 %v4303
    %v4374 = vpop.f32.mrb[0].mxu0
    %v4375 = vadd.f32 0.0, %v4374
    %v4376 = vpop.f32.mrb[0].mxu0
    %4377 = vmatprep.mubr.f32.mxu0 0.0
    %4378 = vmatmul.mubr.f32.gmra.mrb[0].mxu0 %v4306
    %v4379 = vpop.f32.mrb[0].mxu0
    %v4380 = vadd.f32 0.0, %v4379
    %v4381 = vpop.f32.mrb[0].mxu0
    %4382 = vdwg.mxu0
    %v4383 = vadd.f32 %v4292, %v4375
    %v4384 = vadd.f32 %v4293, %v4380
    %v4385 = vld [vmem:[%s5 + $0x180] sm:$0xff]
    %v4386 = vld [vmem:[%s5 + $0x188] sm:$0xff]
    %4387 = vrot.lane.b32.xlu0 %v4027, 80
    %v4388 = vpop.permute.xlu0 %4387
    %4389 = vrot.lane.b32.xlu0 %v4033, 80
    %v4390 = vpop.permute.xlu0 %4389
    %v4394 = vsel %vm232, %v4385, 0
    %v4397 = vsel %vm232, %v4386, 0
    %4399 = vmatprep.subr.mxu0 0.0
    %4400 = vmatpush1.msra.mxu0 %v4388
    %4401 = vmatprep.subr.mxu0 0.0
    %4402 = vmatpush1.msra.mxu0 %v4390
    %4403 = vmatprep.subr.mxu0 0.0
    %4404 = vmatpush1.msra.mxu0 0.0
    %4405 = vmatprep.subr.mxu0 0.0
    %4406 = vmatpush1.msra.mxu0 0.0
    %4407 = vmatprep.subr.mxu0 0.0
    %4408 = vmatpush1.msra.mxu0 0.0
    %4409 = vmatprep.subr.mxu0 0.0
    %4410 = vmatpush1.msra.mxu0 0.0
    %4411 = vmatprep.subr.mxu0 0.0
    %4412 = vmatpush1.msra.mxu0 0.0
    %4413 = vmatprep.subr.mxu0 0.0
    %4414 = vmatpush1.msra.mxu0 0.0
    %4415 = vmatprep.subr.mxu0 0.0
    %4416 = vmatpush1.msra.mxu0 0.0
    %4417 = vmatprep.subr.mxu0 0.0
    %4418 = vmatpush1.msra.mxu0 0.0
    %4419 = vmatprep.subr.mxu0 0.0
    %4420 = vmatpush1.msra.mxu0 0.0
    %4421 = vmatprep.subr.mxu0 0.0
    %4422 = vmatpush1.msra.mxu0 0.0
    %4423 = vmatprep.subr.mxu0 0.0
    %4424 = vmatpush1.msra.mxu0 0.0
    %4425 = vmatprep.subr.mxu0 0.0
    %4426 = vmatpush1.msra.mxu0 0.0
    %4427 = vmatprep.subr.mxu0 0.0
    %4428 = vmatpush1.msra.mxu0 0.0
    %4429 = vmatprep.subr.mxu0 0.0
    %4430 = vmatpush1.msra.mxu0 0.0
    %4431 = vmatprep.subr.mxu0 0.0
    %4432 = vmatpush1.msra.mxu0 0.0
    %4433 = vmatprep.subr.mxu0 0.0
    %4434 = vmatpush1.msra.mxu0 0.0
    %4435 = vmatprep.subr.mxu0 0.0
    %4436 = vmatpush1.msra.mxu0 0.0
    %4437 = vmatprep.subr.mxu0 0.0
    %4438 = vmatpush1.msra.mxu0 0.0
    %4439 = vmatprep.subr.mxu0 0.0
    %4440 = vmatpush1.msra.mxu0 0.0
    %4441 = vmatprep.subr.mxu0 0.0
    %4442 = vmatpush1.msra.mxu0 0.0
    %4443 = vmatprep.subr.mxu0 0.0
    %4444 = vmatpush1.msra.mxu0 0.0
    %4445 = vmatprep.subr.mxu0 0.0
    %4446 = vmatpush1.msra.mxu0 0.0
    %4447 = vmatprep.subr.mxu0 0.0
    %4448 = vmatpush1.msra.mxu0 0.0
    %4449 = vmatprep.subr.mxu0 0.0
    %4450 = vmatpush1.msra.mxu0 0.0
    %4451 = vmatprep.subr.mxu0 0.0
    %4452 = vmatpush1.msra.mxu0 0.0
    %4453 = vmatprep.subr.mxu0 0.0
    %4454 = vmatpush1.msra.mxu0 0.0
    %4455 = vmatprep.subr.mxu0 0.0
    %4456 = vmatpush1.msra.mxu0 0.0
    %4457 = vmatprep.subr.mxu0 0.0
    %4458 = vmatpush1.msra.mxu0 0.0
    %4459 = vmatprep.subr.mxu0 0.0
    %4460 = vmatpush1.msra.mxu0 0.0
    %4461 = vmatprep.subr.mxu0 0.0
    %4462 = vmatpush1.msra.mxu0 0.0
    %4463 = vmatprep.mubr.f32.mxu0 0.0
    %4464 = vmatmul.mubr.f32.gmra.mrb[0].mxu0 %v4394
    %v4465 = vpop.f32.mrb[0].mxu0
    %v4466 = vadd.f32 0.0, %v4465
    %v4467 = vpop.f32.mrb[0].mxu0
    %4468 = vmatprep.mubr.f32.mxu0 0.0
    %4469 = vmatmul.mubr.f32.gmra.mrb[0].mxu0 %v4397
    %v4470 = vpop.f32.mrb[0].mxu0
    %v4471 = vadd.f32 0.0, %v4470
    %v4472 = vpop.f32.mrb[0].mxu0
    %4473 = vdwg.mxu0
    %v4474 = vadd.f32 %v4383, %v4466
    %v4475 = vadd.f32 %v4384, %v4471
    %v4476 = vld [vmem:[%s5 + $0x190] sm:$0xff]
    %v4477 = vld [vmem:[%s5 + $0x198] sm:$0xff]
    %4478 = vrot.lane.b32.xlu0 %v4027, 64
    %v4479 = vpop.permute.xlu0 %4478
    %4480 = vrot.lane.b32.xlu0 %v4033, 64
    %v4481 = vpop.permute.xlu0 %4480
    %v4485 = vsel %vm232, %v4476, 0
    %v4488 = vsel %vm232, %v4477, 0
    %4490 = vmatprep.subr.mxu0 0.0
    %4491 = vmatpush1.msra.mxu0 %v4479
    %4492 = vmatprep.subr.mxu0 0.0
    %4493 = vmatpush1.msra.mxu0 %v4481
    %4494 = vmatprep.subr.mxu0 0.0
    %4495 = vmatpush1.msra.mxu0 0.0
    %4496 = vmatprep.subr.mxu0 0.0
    %4497 = vmatpush1.msra.mxu0 0.0
    %4498 = vmatprep.subr.mxu0 0.0
    %4499 = vmatpush1.msra.mxu0 0.0
    %4500 = vmatprep.subr.mxu0 0.0
    %4501 = vmatpush1.msra.mxu0 0.0
    %4502 = vmatprep.subr.mxu0 0.0
    %4503 = vmatpush1.msra.mxu0 0.0
    %4504 = vmatprep.subr.mxu0 0.0
    %4505 = vmatpush1.msra.mxu0 0.0
    %4506 = vmatprep.subr.mxu0 0.0
    %4507 = vmatpush1.msra.mxu0 0.0
    %4508 = vmatprep.subr.mxu0 0.0
    %4509 = vmatpush1.msra.mxu0 0.0
    %4510 = vmatprep.subr.mxu0 0.0
    %4511 = vmatpush1.msra.mxu0 0.0
    %4512 = vmatprep.subr.mxu0 0.0
    %4513 = vmatpush1.msra.mxu0 0.0
    %4514 = vmatprep.subr.mxu0 0.0
    %4515 = vmatpush1.msra.mxu0 0.0
    %4516 = vmatprep.subr.mxu0 0.0
    %4517 = vmatpush1.msra.mxu0 0.0
    %4518 = vmatprep.subr.mxu0 0.0
    %4519 = vmatpush1.msra.mxu0 0.0
    %4520 = vmatprep.subr.mxu0 0.0
    %4521 = vmatpush1.msra.mxu0 0.0
    %4522 = vmatprep.subr.mxu0 0.0
    %4523 = vmatpush1.msra.mxu0 0.0
    %4524 = vmatprep.subr.mxu0 0.0
    %4525 = vmatpush1.msra.mxu0 0.0
    %4526 = vmatprep.subr.mxu0 0.0
    %4527 = vmatpush1.msra.mxu0 0.0
    %4528 = vmatprep.subr.mxu0 0.0
    %4529 = vmatpush1.msra.mxu0 0.0
    %4530 = vmatprep.subr.mxu0 0.0
    %4531 = vmatpush1.msra.mxu0 0.0
    %4532 = vmatprep.subr.mxu0 0.0
    %4533 = vmatpush1.msra.mxu0 0.0
    %4534 = vmatprep.subr.mxu0 0.0
    %4535 = vmatpush1.msra.mxu0 0.0
    %4536 = vmatprep.subr.mxu0 0.0
    %4537 = vmatpush1.msra.mxu0 0.0
    %4538 = vmatprep.subr.mxu0 0.0
    %4539 = vmatpush1.msra.mxu0 0.0
    %4540 = vmatprep.subr.mxu0 0.0
    %4541 = vmatpush1.msra.mxu0 0.0
    %4542 = vmatprep.subr.mxu0 0.0
    %4543 = vmatpush1.msra.mxu0 0.0
    %4544 = vmatprep.subr.mxu0 0.0
    %4545 = vmatpush1.msra.mxu0 0.0
    %4546 = vmatprep.subr.mxu0 0.0
    %4547 = vmatpush1.msra.mxu0 0.0
    %4548 = vmatprep.subr.mxu0 0.0
    %4549 = vmatpush1.msra.mxu0 0.0
    %4550 = vmatprep.subr.mxu0 0.0
    %4551 = vmatpush1.msra.mxu0 0.0
    %4552 = vmatprep.subr.mxu0 0.0
    %4553 = vmatpush1.msra.mxu0 0.0
    %4554 = vmatprep.mubr.f32.mxu0 0.0
    %4555 = vmatmul.mubr.f32.gmra.mrb[0].mxu0 %v4485
    %v4556 = vpop.f32.mrb[0].mxu0
    %v4557 = vadd.f32 0.0, %v4556
    %v4558 = vpop.f32.mrb[0].mxu0
    %4559 = vmatprep.mubr.f32.mxu0 0.0
    %4560 = vmatmul.mubr.f32.gmra.mrb[0].mxu0 %v4488
    %v4561 = vpop.f32.mrb[0].mxu0
    %v4562 = vadd.f32 0.0, %v4561
    %v4563 = vpop.f32.mrb[0].mxu0
    %4564 = vdwg.mxu0
    %v4565 = vadd.f32 %v4474, %v4557
    %v4566 = vadd.f32 %v4475, %v4562
    %v4567 = vld [vmem:[%s5 + $0x1a0] sm:$0xff]
    %v4568 = vld [vmem:[%s5 + $0x1a8] sm:$0xff]
    %4569 = vrot.lane.b32.xlu0 %v4027, 48
    %v4570 = vpop.permute.xlu0 %4569
    %4571 = vrot.lane.b32.xlu0 %v4033, 48
    %v4572 = vpop.permute.xlu0 %4571
    %v4576 = vsel %vm232, %v4567, 0
    %v4579 = vsel %vm232, %v4568, 0
    %4581 = vmatprep.subr.mxu0 0.0
    %4582 = vmatpush1.msra.mxu0 %v4570
    %4583 = vmatprep.subr.mxu0 0.0
    %4584 = vmatpush1.msra.mxu0 %v4572
    %4585 = vmatprep.subr.mxu0 0.0
    %4586 = vmatpush1.msra.mxu0 0.0
    %4587 = vmatprep.subr.mxu0 0.0
    %4588 = vmatpush1.msra.mxu0 0.0
    %4589 = vmatprep.subr.mxu0 0.0
    %4590 = vmatpush1.msra.mxu0 0.0
    %4591 = vmatprep.subr.mxu0 0.0
    %4592 = vmatpush1.msra.mxu0 0.0
    %4593 = vmatprep.subr.mxu0 0.0
    %4594 = vmatpush1.msra.mxu0 0.0
    %4595 = vmatprep.subr.mxu0 0.0
    %4596 = vmatpush1.msra.mxu0 0.0
    %4597 = vmatprep.subr.mxu0 0.0
    %4598 = vmatpush1.msra.mxu0 0.0
    %4599 = vmatprep.subr.mxu0 0.0
    %4600 = vmatpush1.msra.mxu0 0.0
    %4601 = vmatprep.subr.mxu0 0.0
    %4602 = vmatpush1.msra.mxu0 0.0
    %4603 = vmatprep.subr.mxu0 0.0
    %4604 = vmatpush1.msra.mxu0 0.0
    %4605 = vmatprep.subr.mxu0 0.0
    %4606 = vmatpush1.msra.mxu0 0.0
    %4607 = vmatprep.subr.mxu0 0.0
    %4608 = vmatpush1.msra.mxu0 0.0
    %4609 = vmatprep.subr.mxu0 0.0
    %4610 = vmatpush1.msra.mxu0 0.0
    %4611 = vmatprep.subr.mxu0 0.0
    %4612 = vmatpush1.msra.mxu0 0.0
    %4613 = vmatprep.subr.mxu0 0.0
    %4614 = vmatpush1.msra.mxu0 0.0
    %4615 = vmatprep.subr.mxu0 0.0
    %4616 = vmatpush1.msra.mxu0 0.0
    %4617 = vmatprep.subr.mxu0 0.0
    %4618 = vmatpush1.msra.mxu0 0.0
    %4619 = vmatprep.subr.mxu0 0.0
    %4620 = vmatpush1.msra.mxu0 0.0
    %4621 = vmatprep.subr.mxu0 0.0
    %4622 = vmatpush1.msra.mxu0 0.0
    %4623 = vmatprep.subr.mxu0 0.0
    %4624 = vmatpush1.msra.mxu0 0.0
    %4625 = vmatprep.subr.mxu0 0.0
    %4626 = vmatpush1.msra.mxu0 0.0
    %4627 = vmatprep.subr.mxu0 0.0
    %4628 = vmatpush1.msra.mxu0 0.0
    %4629 = vmatprep.subr.mxu0 0.0
    %4630 = vmatpush1.msra.mxu0 0.0
    %4631 = vmatprep.subr.mxu0 0.0
    %4632 = vmatpush1.msra.mxu0 0.0
    %4633 = vmatprep.subr.mxu0 0.0
    %4634 = vmatpush1.msra.mxu0 0.0
    %4635 = vmatprep.subr.mxu0 0.0
    %4636 = vmatpush1.msra.mxu0 0.0
    %4637 = vmatprep.subr.mxu0 0.0
    %4638 = vmatpush1.msra.mxu0 0.0
    %4639 = vmatprep.subr.mxu0 0.0
    %4640 = vmatpush1.msra.mxu0 0.0
    %4641 = vmatprep.subr.mxu0 0.0
    %4642 = vmatpush1.msra.mxu0 0.0
    %4643 = vmatprep.subr.mxu0 0.0
    %4644 = vmatpush1.msra.mxu0 0.0
    %4645 = vmatprep.mubr.f32.mxu0 0.0
    %4646 = vmatmul.mubr.f32.gmra.mrb[0].mxu0 %v4576
    %v4647 = vpop.f32.mrb[0].mxu0
    %v4648 = vadd.f32 0.0, %v4647
    %v4649 = vpop.f32.mrb[0].mxu0
    %4650 = vmatprep.mubr.f32.mxu0 0.0
    %4651 = vmatmul.mubr.f32.gmra.mrb[0].mxu0 %v4579
    %v4652 = vpop.f32.mrb[0].mxu0
    %v4653 = vadd.f32 0.0, %v4652
    %v4654 = vpop.f32.mrb[0].mxu0
    %4655 = vdwg.mxu0
    %v4656 = vadd.f32 %v4565, %v4648
    %v4657 = vadd.f32 %v4566, %v4653
    %v4658 = vld [vmem:[%s5 + $0x1b0] sm:$0xff]
    %v4659 = vld [vmem:[%s5 + $0x1b8] sm:$0xff]
    %4660 = vrot.lane.b32.xlu0 %v4027, 32
    %v4661 = vpop.permute.xlu0 %4660
    %4662 = vrot.lane.b32.xlu0 %v4033, 32
    %v4663 = vpop.permute.xlu0 %4662
    %v4667 = vsel %vm232, %v4658, 0
    %v4670 = vsel %vm232, %v4659, 0
    %4672 = vmatprep.subr.mxu0 0.0
    %4673 = vmatpush1.msra.mxu0 %v4661
    %4674 = vmatprep.subr.mxu0 0.0
    %4675 = vmatpush1.msra.mxu0 %v4663
    %4676 = vmatprep.subr.mxu0 0.0
    %4677 = vmatpush1.msra.mxu0 0.0
    %4678 = vmatprep.subr.mxu0 0.0
    %4679 = vmatpush1.msra.mxu0 0.0
    %4680 = vmatprep.subr.mxu0 0.0
    %4681 = vmatpush1.msra.mxu0 0.0
    %4682 = vmatprep.subr.mxu0 0.0
    %4683 = vmatpush1.msra.mxu0 0.0
    %4684 = vmatprep.subr.mxu0 0.0
    %4685 = vmatpush1.msra.mxu0 0.0
    %4686 = vmatprep.subr.mxu0 0.0
    %4687 = vmatpush1.msra.mxu0 0.0
    %4688 = vmatprep.subr.mxu0 0.0
    %4689 = vmatpush1.msra.mxu0 0.0
    %4690 = vmatprep.subr.mxu0 0.0
    %4691 = vmatpush1.msra.mxu0 0.0
    %4692 = vmatprep.subr.mxu0 0.0
    %4693 = vmatpush1.msra.mxu0 0.0
    %4694 = vmatprep.subr.mxu0 0.0
    %4695 = vmatpush1.msra.mxu0 0.0
    %4696 = vmatprep.subr.mxu0 0.0
    %4697 = vmatpush1.msra.mxu0 0.0
    %4698 = vmatprep.subr.mxu0 0.0
    %4699 = vmatpush1.msra.mxu0 0.0
    %4700 = vmatprep.subr.mxu0 0.0
    %4701 = vmatpush1.msra.mxu0 0.0
    %4702 = vmatprep.subr.mxu0 0.0
    %4703 = vmatpush1.msra.mxu0 0.0
    %4704 = vmatprep.subr.mxu0 0.0
    %4705 = vmatpush1.msra.mxu0 0.0
    %4706 = vmatprep.subr.mxu0 0.0
    %4707 = vmatpush1.msra.mxu0 0.0
    %4708 = vmatprep.subr.mxu0 0.0
    %4709 = vmatpush1.msra.mxu0 0.0
    %4710 = vmatprep.subr.mxu0 0.0
    %4711 = vmatpush1.msra.mxu0 0.0
    %4712 = vmatprep.subr.mxu0 0.0
    %4713 = vmatpush1.msra.mxu0 0.0
    %4714 = vmatprep.subr.mxu0 0.0
    %4715 = vmatpush1.msra.mxu0 0.0
    %4716 = vmatprep.subr.mxu0 0.0
    %4717 = vmatpush1.msra.mxu0 0.0
    %4718 = vmatprep.subr.mxu0 0.0
    %4719 = vmatpush1.msra.mxu0 0.0
    %4720 = vmatprep.subr.mxu0 0.0
    %4721 = vmatpush1.msra.mxu0 0.0
    %4722 = vmatprep.subr.mxu0 0.0
    %4723 = vmatpush1.msra.mxu0 0.0
    %4724 = vmatprep.subr.mxu0 0.0
    %4725 = vmatpush1.msra.mxu0 0.0
    %4726 = vmatprep.subr.mxu0 0.0
    %4727 = vmatpush1.msra.mxu0 0.0
    %4728 = vmatprep.subr.mxu0 0.0
    %4729 = vmatpush1.msra.mxu0 0.0
    %4730 = vmatprep.subr.mxu0 0.0
    %4731 = vmatpush1.msra.mxu0 0.0
    %4732 = vmatprep.subr.mxu0 0.0
    %4733 = vmatpush1.msra.mxu0 0.0
    %4734 = vmatprep.subr.mxu0 0.0
    %4735 = vmatpush1.msra.mxu0 0.0
    %4736 = vmatprep.mubr.f32.mxu0 0.0
    %4737 = vmatmul.mubr.f32.gmra.mrb[0].mxu0 %v4667
    %v4738 = vpop.f32.mrb[0].mxu0
    %v4739 = vadd.f32 0.0, %v4738
    %v4740 = vpop.f32.mrb[0].mxu0
    %4741 = vmatprep.mubr.f32.mxu0 0.0
    %4742 = vmatmul.mubr.f32.gmra.mrb[0].mxu0 %v4670
    %v4743 = vpop.f32.mrb[0].mxu0
    %v4744 = vadd.f32 0.0, %v4743
    %v4745 = vpop.f32.mrb[0].mxu0
    %4746 = vdwg.mxu0
    %v4747 = vadd.f32 %v4656, %v4739
    %v4748 = vadd.f32 %v4657, %v4744
    %v4749 = vld [vmem:[%s5 + $0x1c0] sm:$0xff]
    %v4750 = vld [vmem:[%s5 + $0x1c8] sm:$0xff]
    %4751 = vrot.lane.b32.xlu0 %v4027, 16
    %v4752 = vpop.permute.xlu0 %4751
    %4753 = vrot.lane.b32.xlu0 %v4033, 16
    %v4754 = vpop.permute.xlu0 %4753
    %v4758 = vsel %vm232, %v4749, 0
    %v4761 = vsel %vm232, %v4750, 0
    %4763 = vmatprep.subr.mxu0 0.0
    %4764 = vmatpush1.msra.mxu0 %v4752
    %4765 = vmatprep.subr.mxu0 0.0
    %4766 = vmatpush1.msra.mxu0 %v4754
    %4767 = vmatprep.subr.mxu0 0.0
    %4768 = vmatpush1.msra.mxu0 0.0
    %4769 = vmatprep.subr.mxu0 0.0
    %4770 = vmatpush1.msra.mxu0 0.0
    %4771 = vmatprep.subr.mxu0 0.0
    %4772 = vmatpush1.msra.mxu0 0.0
    %4773 = vmatprep.subr.mxu0 0.0
    %4774 = vmatpush1.msra.mxu0 0.0
    %4775 = vmatprep.subr.mxu0 0.0
    %4776 = vmatpush1.msra.mxu0 0.0
    %4777 = vmatprep.subr.mxu0 0.0
    %4778 = vmatpush1.msra.mxu0 0.0
    %4779 = vmatprep.subr.mxu0 0.0
    %4780 = vmatpush1.msra.mxu0 0.0
    %4781 = vmatprep.subr.mxu0 0.0
    %4782 = vmatpush1.msra.mxu0 0.0
    %4783 = vmatprep.subr.mxu0 0.0
    %4784 = vmatpush1.msra.mxu0 0.0
    %4785 = vmatprep.subr.mxu0 0.0
    %4786 = vmatpush1.msra.mxu0 0.0
    %4787 = vmatprep.subr.mxu0 0.0
    %4788 = vmatpush1.msra.mxu0 0.0
    %4789 = vmatprep.subr.mxu0 0.0
    %4790 = vmatpush1.msra.mxu0 0.0
    %4791 = vmatprep.subr.mxu0 0.0
    %4792 = vmatpush1.msra.mxu0 0.0
    %4793 = vmatprep.subr.mxu0 0.0
    %4794 = vmatpush1.msra.mxu0 0.0
    %4795 = vmatprep.subr.mxu0 0.0
    %4796 = vmatpush1.msra.mxu0 0.0
    %4797 = vmatprep.subr.mxu0 0.0
    %4798 = vmatpush1.msra.mxu0 0.0
    %4799 = vmatprep.subr.mxu0 0.0
    %4800 = vmatpush1.msra.mxu0 0.0
    %4801 = vmatprep.subr.mxu0 0.0
    %4802 = vmatpush1.msra.mxu0 0.0
    %4803 = vmatprep.subr.mxu0 0.0
    %4804 = vmatpush1.msra.mxu0 0.0
    %4805 = vmatprep.subr.mxu0 0.0
    %4806 = vmatpush1.msra.mxu0 0.0
    %4807 = vmatprep.subr.mxu0 0.0
    %4808 = vmatpush1.msra.mxu0 0.0
    %4809 = vmatprep.subr.mxu0 0.0
    %4810 = vmatpush1.msra.mxu0 0.0
    %4811 = vmatprep.subr.mxu0 0.0
    %4812 = vmatpush1.msra.mxu0 0.0
    %4813 = vmatprep.subr.mxu0 0.0
    %4814 = vmatpush1.msra.mxu0 0.0
    %4815 = vmatprep.subr.mxu0 0.0
    %4816 = vmatpush1.msra.mxu0 0.0
    %4817 = vmatprep.subr.mxu0 0.0
    %4818 = vmatpush1.msra.mxu0 0.0
    %4819 = vmatprep.subr.mxu0 0.0
    %4820 = vmatpush1.msra.mxu0 0.0
    %4821 = vmatprep.subr.mxu0 0.0
    %4822 = vmatpush1.msra.mxu0 0.0
    %4823 = vmatprep.subr.mxu0 0.0
    %4824 = vmatpush1.msra.mxu0 0.0
    %4825 = vmatprep.subr.mxu0 0.0
    %4826 = vmatpush1.msra.mxu0 0.0
    %4827 = vmatprep.mubr.f32.mxu0 0.0
    %4828 = vmatmul.mubr.f32.gmra.mrb[0].mxu0 %v4758
    %v4829 = vpop.f32.mrb[0].mxu0
    %v4830 = vadd.f32 0.0, %v4829
    %v4831 = vpop.f32.mrb[0].mxu0
    %4832 = vmatprep.mubr.f32.mxu0 0.0
    %4833 = vmatmul.mubr.f32.gmra.mrb[0].mxu0 %v4761
    %v4834 = vpop.f32.mrb[0].mxu0
    %v4835 = vadd.f32 0.0, %v4834
    %v4836 = vpop.f32.mrb[0].mxu0
    %4837 = vdwg.mxu0
    %v4838 = vadd.f32 %v4747, %v4830
    %v4839 = vadd.f32 %v4748, %v4835
    %v4840 = vld [vmem:[%s5 + $0x1d0] sm:$0xff]
    %v4841 = vld [vmem:[%s5 + $0x1d8] sm:$0xff]
    %v4843 = vsel %vm232, %v4840, 0
    %v4846 = vsel %vm232, %v4841, 0
    %4848 = vmatprep.subr.mxu0 0.0
    %4849 = vmatpush1.msra.mxu0 %v4029
    %4850 = vmatprep.subr.mxu0 0.0
    %4851 = vmatpush1.msra.mxu0 %v4035
    %4852 = vmatprep.subr.mxu0 0.0
    %4853 = vmatpush1.msra.mxu0 0.0
    %4854 = vmatprep.subr.mxu0 0.0
    %4855 = vmatpush1.msra.mxu0 0.0
    %4856 = vmatprep.subr.mxu0 0.0
    %4857 = vmatpush1.msra.mxu0 0.0
    %4858 = vmatprep.subr.mxu0 0.0
    %4859 = vmatpush1.msra.mxu0 0.0
    %4860 = vmatprep.subr.mxu0 0.0
    %4861 = vmatpush1.msra.mxu0 0.0
    %4862 = vmatprep.subr.mxu0 0.0
    %4863 = vmatpush1.msra.mxu0 0.0
    %4864 = vmatprep.subr.mxu0 0.0
    %4865 = vmatpush1.msra.mxu0 0.0
    %4866 = vmatprep.subr.mxu0 0.0
    %4867 = vmatpush1.msra.mxu0 0.0
    %4868 = vmatprep.subr.mxu0 0.0
    %4869 = vmatpush1.msra.mxu0 0.0
    %4870 = vmatprep.subr.mxu0 0.0
    %4871 = vmatpush1.msra.mxu0 0.0
    %4872 = vmatprep.subr.mxu0 0.0
    %4873 = vmatpush1.msra.mxu0 0.0
    %4874 = vmatprep.subr.mxu0 0.0
    %4875 = vmatpush1.msra.mxu0 0.0
    %4876 = vmatprep.subr.mxu0 0.0
    %4877 = vmatpush1.msra.mxu0 0.0
    %4878 = vmatprep.subr.mxu0 0.0
    %4879 = vmatpush1.msra.mxu0 0.0
    %4880 = vmatprep.subr.mxu0 0.0
    %4881 = vmatpush1.msra.mxu0 0.0
    %4882 = vmatprep.subr.mxu0 0.0
    %4883 = vmatpush1.msra.mxu0 0.0
    %4884 = vmatprep.subr.mxu0 0.0
    %4885 = vmatpush1.msra.mxu0 0.0
    %4886 = vmatprep.subr.mxu0 0.0
    %4887 = vmatpush1.msra.mxu0 0.0
    %4888 = vmatprep.subr.mxu0 0.0
    %4889 = vmatpush1.msra.mxu0 0.0
    %4890 = vmatprep.subr.mxu0 0.0
    %4891 = vmatpush1.msra.mxu0 0.0
    %4892 = vmatprep.subr.mxu0 0.0
    %4893 = vmatpush1.msra.mxu0 0.0
    %4894 = vmatprep.subr.mxu0 0.0
    %4895 = vmatpush1.msra.mxu0 0.0
    %4896 = vmatprep.subr.mxu0 0.0
    %4897 = vmatpush1.msra.mxu0 0.0
    %4898 = vmatprep.subr.mxu0 0.0
    %4899 = vmatpush1.msra.mxu0 0.0
    %4900 = vmatprep.subr.mxu0 0.0
    %4901 = vmatpush1.msra.mxu0 0.0
    %4902 = vmatprep.subr.mxu0 0.0
    %4903 = vmatpush1.msra.mxu0 0.0
    %4904 = vmatprep.subr.mxu0 0.0
    %4905 = vmatpush1.msra.mxu0 0.0
    %4906 = vmatprep.subr.mxu0 0.0
    %4907 = vmatpush1.msra.mxu0 0.0
    %4908 = vmatprep.subr.mxu0 0.0
    %4909 = vmatpush1.msra.mxu0 0.0
    %4910 = vmatprep.subr.mxu0 0.0
    %4911 = vmatpush1.msra.mxu0 0.0
    %4912 = vmatprep.mubr.f32.mxu0 0.0
    %4913 = vmatmul.mubr.f32.gmra.mrb[0].mxu0 %v4843
    %v4914 = vpop.f32.mrb[0].mxu0
    %v4915 = vadd.f32 0.0, %v4914
    %v4916 = vpop.f32.mrb[0].mxu0
    %4917 = vmatprep.mubr.f32.mxu0 0.0
    %4918 = vmatmul.mubr.f32.gmra.mrb[0].mxu0 %v4846
    %v4919 = vpop.f32.mrb[0].mxu0
    %v4920 = vadd.f32 0.0, %v4919
    %v4921 = vpop.f32.mrb[0].mxu0
    %4922 = vdwg.mxu0
    %v4923 = vadd.f32 %v4838, %v4915
    %v4924 = vadd.f32 %v4839, %v4920
    %v4925 = vld [vmem:[%s5 + $0x1e0] sm:$0xff]
    %v4926 = vld [vmem:[%s5 + $0x1e8] sm:$0xff]
    %4929 = vrot.lane.b32.xlu0 %v4029, 112
    %v4930 = vpop.permute.xlu0 %4929
    %4931 = vrot.lane.b32.xlu0 %v4035, 112
    %v4932 = vpop.permute.xlu0 %4931
    %v4936 = vsel %vm232, %v4925, 0
    %v4939 = vsel %vm232, %v4926, 0
    %4941 = vmatprep.subr.mxu0 0.0
    %4942 = vmatpush1.msra.mxu0 %v4930
    %4943 = vmatprep.subr.mxu0 0.0
    %4944 = vmatpush1.msra.mxu0 %v4932
    %4945 = vmatprep.subr.mxu0 0.0
    %4946 = vmatpush1.msra.mxu0 0.0
    %4947 = vmatprep.subr.mxu0 0.0
    %4948 = vmatpush1.msra.mxu0 0.0
    %4949 = vmatprep.subr.mxu0 0.0
    %4950 = vmatpush1.msra.mxu0 0.0
    %4951 = vmatprep.subr.mxu0 0.0
    %4952 = vmatpush1.msra.mxu0 0.0
    %4953 = vmatprep.subr.mxu0 0.0
    %4954 = vmatpush1.msra.mxu0 0.0
    %4955 = vmatprep.subr.mxu0 0.0
    %4956 = vmatpush1.msra.mxu0 0.0
    %4957 = vmatprep.subr.mxu0 0.0
    %4958 = vmatpush1.msra.mxu0 0.0
    %4959 = vmatprep.subr.mxu0 0.0
    %4960 = vmatpush1.msra.mxu0 0.0
    %4961 = vmatprep.subr.mxu0 0.0
    %4962 = vmatpush1.msra.mxu0 0.0
    %4963 = vmatprep.subr.mxu0 0.0
    %4964 = vmatpush1.msra.mxu0 0.0
    %4965 = vmatprep.subr.mxu0 0.0
    %4966 = vmatpush1.msra.mxu0 0.0
    %4967 = vmatprep.subr.mxu0 0.0
    %4968 = vmatpush1.msra.mxu0 0.0
    %4969 = vmatprep.subr.mxu0 0.0
    %4970 = vmatpush1.msra.mxu0 0.0
    %4971 = vmatprep.subr.mxu0 0.0
    %4972 = vmatpush1.msra.mxu0 0.0
    %4973 = vmatprep.subr.mxu0 0.0
    %4974 = vmatpush1.msra.mxu0 0.0
    %4975 = vmatprep.subr.mxu0 0.0
    %4976 = vmatpush1.msra.mxu0 0.0
    %4977 = vmatprep.subr.mxu0 0.0
    %4978 = vmatpush1.msra.mxu0 0.0
    %4979 = vmatprep.subr.mxu0 0.0
    %4980 = vmatpush1.msra.mxu0 0.0
    %4981 = vmatprep.subr.mxu0 0.0
    %4982 = vmatpush1.msra.mxu0 0.0
    %4983 = vmatprep.subr.mxu0 0.0
    %4984 = vmatpush1.msra.mxu0 0.0
    %4985 = vmatprep.subr.mxu0 0.0
    %4986 = vmatpush1.msra.mxu0 0.0
    %4987 = vmatprep.subr.mxu0 0.0
    %4988 = vmatpush1.msra.mxu0 0.0
    %4989 = vmatprep.subr.mxu0 0.0
    %4990 = vmatpush1.msra.mxu0 0.0
    %4991 = vmatprep.subr.mxu0 0.0
    %4992 = vmatpush1.msra.mxu0 0.0
    %4993 = vmatprep.subr.mxu0 0.0
    %4994 = vmatpush1.msra.mxu0 0.0
    %4995 = vmatprep.subr.mxu0 0.0
    %4996 = vmatpush1.msra.mxu0 0.0
    %4997 = vmatprep.subr.mxu0 0.0
    %4998 = vmatpush1.msra.mxu0 0.0
    %4999 = vmatprep.subr.mxu0 0.0
    %5000 = vmatpush1.msra.mxu0 0.0
    %5001 = vmatprep.subr.mxu0 0.0
    %5002 = vmatpush1.msra.mxu0 0.0
    %5003 = vmatprep.subr.mxu0 0.0
    %5004 = vmatpush1.msra.mxu0 0.0
    %5005 = vmatprep.mubr.f32.mxu0 0.0
    %5006 = vmatmul.mubr.f32.gmra.mrb[0].mxu0 %v4936
    %v5007 = vpop.f32.mrb[0].mxu0
    %v5008 = vadd.f32 0.0, %v5007
    %v5009 = vpop.f32.mrb[0].mxu0
    %5010 = vmatprep.mubr.f32.mxu0 0.0
    %5011 = vmatmul.mubr.f32.gmra.mrb[0].mxu0 %v4939
    %v5012 = vpop.f32.mrb[0].mxu0
    %v5013 = vadd.f32 0.0, %v5012
    %v5014 = vpop.f32.mrb[0].mxu0
    %5015 = vdwg.mxu0
    %v5016 = vadd.f32 %v4923, %v5008
    %v5017 = vadd.f32 %v4924, %v5013
    %v5018 = vld [vmem:[%s5 + $0x1f0] sm:$0xff]
    %v5019 = vld [vmem:[%s5 + $0x1f8] sm:$0xff]
    %5020 = vrot.lane.b32.xlu0 %v4029, 96
    %v5021 = vpop.permute.xlu0 %5020
    %5022 = vrot.lane.b32.xlu0 %v4035, 96
    %v5023 = vpop.permute.xlu0 %5022
    %v5027 = vsel %vm232, %v5018, 0
    %v5030 = vsel %vm232, %v5019, 0
    %5032 = vmatprep.subr.mxu0 0.0
    %5033 = vmatpush1.msra.mxu0 %v5021
    %5034 = vmatprep.subr.mxu0 0.0
    %5035 = vmatpush1.msra.mxu0 %v5023
    %5036 = vmatprep.subr.mxu0 0.0
    %5037 = vmatpush1.msra.mxu0 0.0
    %5038 = vmatprep.subr.mxu0 0.0
    %5039 = vmatpush1.msra.mxu0 0.0
    %5040 = vmatprep.subr.mxu0 0.0
    %5041 = vmatpush1.msra.mxu0 0.0
    %5042 = vmatprep.subr.mxu0 0.0
    %5043 = vmatpush1.msra.mxu0 0.0
    %5044 = vmatprep.subr.mxu0 0.0
    %5045 = vmatpush1.msra.mxu0 0.0
    %5046 = vmatprep.subr.mxu0 0.0
    %5047 = vmatpush1.msra.mxu0 0.0
    %5048 = vmatprep.subr.mxu0 0.0
    %5049 = vmatpush1.msra.mxu0 0.0
    %5050 = vmatprep.subr.mxu0 0.0
    %5051 = vmatpush1.msra.mxu0 0.0
    %5052 = vmatprep.subr.mxu0 0.0
    %5053 = vmatpush1.msra.mxu0 0.0
    %5054 = vmatprep.subr.mxu0 0.0
    %5055 = vmatpush1.msra.mxu0 0.0
    %5056 = vmatprep.subr.mxu0 0.0
    %5057 = vmatpush1.msra.mxu0 0.0
    %5058 = vmatprep.subr.mxu0 0.0
    %5059 = vmatpush1.msra.mxu0 0.0
    %5060 = vmatprep.subr.mxu0 0.0
    %5061 = vmatpush1.msra.mxu0 0.0
    %5062 = vmatprep.subr.mxu0 0.0
    %5063 = vmatpush1.msra.mxu0 0.0
    %5064 = vmatprep.subr.mxu0 0.0
    %5065 = vmatpush1.msra.mxu0 0.0
    %5066 = vmatprep.subr.mxu0 0.0
    %5067 = vmatpush1.msra.mxu0 0.0
    %5068 = vmatprep.subr.mxu0 0.0
    %5069 = vmatpush1.msra.mxu0 0.0
    %5070 = vmatprep.subr.mxu0 0.0
    %5071 = vmatpush1.msra.mxu0 0.0
    %5072 = vmatprep.subr.mxu0 0.0
    %5073 = vmatpush1.msra.mxu0 0.0
    %5074 = vmatprep.subr.mxu0 0.0
    %5075 = vmatpush1.msra.mxu0 0.0
    %5076 = vmatprep.subr.mxu0 0.0
    %5077 = vmatpush1.msra.mxu0 0.0
    %5078 = vmatprep.subr.mxu0 0.0
    %5079 = vmatpush1.msra.mxu0 0.0
    %5080 = vmatprep.subr.mxu0 0.0
    %5081 = vmatpush1.msra.mxu0 0.0
    %5082 = vmatprep.subr.mxu0 0.0
    %5083 = vmatpush1.msra.mxu0 0.0
    %5084 = vmatprep.subr.mxu0 0.0
    %5085 = vmatpush1.msra.mxu0 0.0
    %5086 = vmatprep.subr.mxu0 0.0
    %5087 = vmatpush1.msra.mxu0 0.0
    %5088 = vmatprep.subr.mxu0 0.0
    %5089 = vmatpush1.msra.mxu0 0.0
    %5090 = vmatprep.subr.mxu0 0.0
    %5091 = vmatpush1.msra.mxu0 0.0
    %5092 = vmatprep.subr.mxu0 0.0
    %5093 = vmatpush1.msra.mxu0 0.0
    %5094 = vmatprep.subr.mxu0 0.0
    %5095 = vmatpush1.msra.mxu0 0.0
    %5096 = vmatprep.mubr.f32.mxu0 0.0
    %5097 = vmatmul.mubr.f32.gmra.mrb[0].mxu0 %v5027
    %v5098 = vpop.f32.mrb[0].mxu0
    %v5099 = vadd.f32 0.0, %v5098
    %v5100 = vpop.f32.mrb[0].mxu0
    %5101 = vmatprep.mubr.f32.mxu0 0.0
    %5102 = vmatmul.mubr.f32.gmra.mrb[0].mxu0 %v5030
    %v5103 = vpop.f32.mrb[0].mxu0
    %v5104 = vadd.f32 0.0, %v5103
    %v5105 = vpop.f32.mrb[0].mxu0
    %5106 = vdwg.mxu0
    %v5107 = vadd.f32 %v5016, %v5099
    %v5108 = vadd.f32 %v5017, %v5104
    %v5109 = vld [vmem:[%s5 + $0x200] sm:$0xff]
    %v5110 = vld [vmem:[%s5 + $0x208] sm:$0xff]
    %5111 = vrot.lane.b32.xlu0 %v4029, 80
    %v5112 = vpop.permute.xlu0 %5111
    %5113 = vrot.lane.b32.xlu0 %v4035, 80
    %v5114 = vpop.permute.xlu0 %5113
    %v5118 = vsel %vm232, %v5109, 0
    %v5121 = vsel %vm232, %v5110, 0
    %5123 = vmatprep.subr.mxu0 0.0
    %5124 = vmatpush1.msra.mxu0 %v5112
    %5125 = vmatprep.subr.mxu0 0.0
    %5126 = vmatpush1.msra.mxu0 %v5114
    %5127 = vmatprep.subr.mxu0 0.0
    %5128 = vmatpush1.msra.mxu0 0.0
    %5129 = vmatprep.subr.mxu0 0.0
    %5130 = vmatpush1.msra.mxu0 0.0
    %5131 = vmatprep.subr.mxu0 0.0
    %5132 = vmatpush1.msra.mxu0 0.0
    %5133 = vmatprep.subr.mxu0 0.0
    %5134 = vmatpush1.msra.mxu0 0.0
    %5135 = vmatprep.subr.mxu0 0.0
    %5136 = vmatpush1.msra.mxu0 0.0
    %5137 = vmatprep.subr.mxu0 0.0
    %5138 = vmatpush1.msra.mxu0 0.0
    %5139 = vmatprep.subr.mxu0 0.0
    %5140 = vmatpush1.msra.mxu0 0.0
    %5141 = vmatprep.subr.mxu0 0.0
    %5142 = vmatpush1.msra.mxu0 0.0
    %5143 = vmatprep.subr.mxu0 0.0
    %5144 = vmatpush1.msra.mxu0 0.0
    %5145 = vmatprep.subr.mxu0 0.0
    %5146 = vmatpush1.msra.mxu0 0.0
    %5147 = vmatprep.subr.mxu0 0.0
    %5148 = vmatpush1.msra.mxu0 0.0
    %5149 = vmatprep.subr.mxu0 0.0
    %5150 = vmatpush1.msra.mxu0 0.0
    %5151 = vmatprep.subr.mxu0 0.0
    %5152 = vmatpush1.msra.mxu0 0.0
    %5153 = vmatprep.subr.mxu0 0.0
    %5154 = vmatpush1.msra.mxu0 0.0
    %5155 = vmatprep.subr.mxu0 0.0
    %5156 = vmatpush1.msra.mxu0 0.0
    %5157 = vmatprep.subr.mxu0 0.0
    %5158 = vmatpush1.msra.mxu0 0.0
    %5159 = vmatprep.subr.mxu0 0.0
    %5160 = vmatpush1.msra.mxu0 0.0
    %5161 = vmatprep.subr.mxu0 0.0
    %5162 = vmatpush1.msra.mxu0 0.0
    %5163 = vmatprep.subr.mxu0 0.0
    %5164 = vmatpush1.msra.mxu0 0.0
    %5165 = vmatprep.subr.mxu0 0.0
    %5166 = vmatpush1.msra.mxu0 0.0
    %5167 = vmatprep.subr.mxu0 0.0
    %5168 = vmatpush1.msra.mxu0 0.0
    %5169 = vmatprep.subr.mxu0 0.0
    %5170 = vmatpush1.msra.mxu0 0.0
    %5171 = vmatprep.subr.mxu0 0.0
    %5172 = vmatpush1.msra.mxu0 0.0
    %5173 = vmatprep.subr.mxu0 0.0
    %5174 = vmatpush1.msra.mxu0 0.0
    %5175 = vmatprep.subr.mxu0 0.0
    %5176 = vmatpush1.msra.mxu0 0.0
    %5177 = vmatprep.subr.mxu0 0.0
    %5178 = vmatpush1.msra.mxu0 0.0
    %5179 = vmatprep.subr.mxu0 0.0
    %5180 = vmatpush1.msra.mxu0 0.0
    %5181 = vmatprep.subr.mxu0 0.0
    %5182 = vmatpush1.msra.mxu0 0.0
    %5183 = vmatprep.subr.mxu0 0.0
    %5184 = vmatpush1.msra.mxu0 0.0
    %5185 = vmatprep.subr.mxu0 0.0
    %5186 = vmatpush1.msra.mxu0 0.0
    %5187 = vmatprep.mubr.f32.mxu0 0.0
    %5188 = vmatmul.mubr.f32.gmra.mrb[0].mxu0 %v5118
    %v5189 = vpop.f32.mrb[0].mxu0
    %v5190 = vadd.f32 0.0, %v5189
    %v5191 = vpop.f32.mrb[0].mxu0
    %5192 = vmatprep.mubr.f32.mxu0 0.0
    %5193 = vmatmul.mubr.f32.gmra.mrb[0].mxu0 %v5121
    %v5194 = vpop.f32.mrb[0].mxu0
    %v5195 = vadd.f32 0.0, %v5194
    %v5196 = vpop.f32.mrb[0].mxu0
    %5197 = vdwg.mxu0
    %v5198 = vadd.f32 %v5107, %v5190
    %v5199 = vadd.f32 %v5108, %v5195
    %v5200 = vld [vmem:[%s5 + $0x210] sm:$0xff]
    %v5201 = vld [vmem:[%s5 + $0x218] sm:$0xff]
    %5202 = vrot.lane.b32.xlu0 %v4029, 64
    %v5203 = vpop.permute.xlu0 %5202
    %5204 = vrot.lane.b32.xlu0 %v4035, 64
    %v5205 = vpop.permute.xlu0 %5204
    %v5209 = vsel %vm232, %v5200, 0
    %v5212 = vsel %vm232, %v5201, 0
    %5214 = vmatprep.subr.mxu0 0.0
    %5215 = vmatpush1.msra.mxu0 %v5203
    %5216 = vmatprep.subr.mxu0 0.0
    %5217 = vmatpush1.msra.mxu0 %v5205
    %5218 = vmatprep.subr.mxu0 0.0
    %5219 = vmatpush1.msra.mxu0 0.0
    %5220 = vmatprep.subr.mxu0 0.0
    %5221 = vmatpush1.msra.mxu0 0.0
    %5222 = vmatprep.subr.mxu0 0.0
    %5223 = vmatpush1.msra.mxu0 0.0
    %5224 = vmatprep.subr.mxu0 0.0
    %5225 = vmatpush1.msra.mxu0 0.0
    %5226 = vmatprep.subr.mxu0 0.0
    %5227 = vmatpush1.msra.mxu0 0.0
    %5228 = vmatprep.subr.mxu0 0.0
    %5229 = vmatpush1.msra.mxu0 0.0
    %5230 = vmatprep.subr.mxu0 0.0
    %5231 = vmatpush1.msra.mxu0 0.0
    %5232 = vmatprep.subr.mxu0 0.0
    %5233 = vmatpush1.msra.mxu0 0.0
    %5234 = vmatprep.subr.mxu0 0.0
    %5235 = vmatpush1.msra.mxu0 0.0
    %5236 = vmatprep.subr.mxu0 0.0
    %5237 = vmatpush1.msra.mxu0 0.0
    %5238 = vmatprep.subr.mxu0 0.0
    %5239 = vmatpush1.msra.mxu0 0.0
    %5240 = vmatprep.subr.mxu0 0.0
    %5241 = vmatpush1.msra.mxu0 0.0
    %5242 = vmatprep.subr.mxu0 0.0
    %5243 = vmatpush1.msra.mxu0 0.0
    %5244 = vmatprep.subr.mxu0 0.0
    %5245 = vmatpush1.msra.mxu0 0.0
    %5246 = vmatprep.subr.mxu0 0.0
    %5247 = vmatpush1.msra.mxu0 0.0
    %5248 = vmatprep.subr.mxu0 0.0
    %5249 = vmatpush1.msra.mxu0 0.0
    %5250 = vmatprep.subr.mxu0 0.0
    %5251 = vmatpush1.msra.mxu0 0.0
    %5252 = vmatprep.subr.mxu0 0.0
    %5253 = vmatpush1.msra.mxu0 0.0
    %5254 = vmatprep.subr.mxu0 0.0
    %5255 = vmatpush1.msra.mxu0 0.0
    %5256 = vmatprep.subr.mxu0 0.0
    %5257 = vmatpush1.msra.mxu0 0.0
    %5258 = vmatprep.subr.mxu0 0.0
    %5259 = vmatpush1.msra.mxu0 0.0
    %5260 = vmatprep.subr.mxu0 0.0
    %5261 = vmatpush1.msra.mxu0 0.0
    %5262 = vmatprep.subr.mxu0 0.0
    %5263 = vmatpush1.msra.mxu0 0.0
    %5264 = vmatprep.subr.mxu0 0.0
    %5265 = vmatpush1.msra.mxu0 0.0
    %5266 = vmatprep.subr.mxu0 0.0
    %5267 = vmatpush1.msra.mxu0 0.0
    %5268 = vmatprep.subr.mxu0 0.0
    %5269 = vmatpush1.msra.mxu0 0.0
    %5270 = vmatprep.subr.mxu0 0.0
    %5271 = vmatpush1.msra.mxu0 0.0
    %5272 = vmatprep.subr.mxu0 0.0
    %5273 = vmatpush1.msra.mxu0 0.0
    %5274 = vmatprep.subr.mxu0 0.0
    %5275 = vmatpush1.msra.mxu0 0.0
    %5276 = vmatprep.subr.mxu0 0.0
    %5277 = vmatpush1.msra.mxu0 0.0
    %5278 = vmatprep.mubr.f32.mxu0 0.0
    %5279 = vmatmul.mubr.f32.gmra.mrb[0].mxu0 %v5209
    %v5280 = vpop.f32.mrb[0].mxu0
    %v5281 = vadd.f32 0.0, %v5280
    %v5282 = vpop.f32.mrb[0].mxu0
    %5283 = vmatprep.mubr.f32.mxu0 0.0
    %5284 = vmatmul.mubr.f32.gmra.mrb[0].mxu0 %v5212
    %v5285 = vpop.f32.mrb[0].mxu0
    %v5286 = vadd.f32 0.0, %v5285
    %v5287 = vpop.f32.mrb[0].mxu0
    %5288 = vdwg.mxu0
    %v5289 = vadd.f32 %v5198, %v5281
    %v5290 = vadd.f32 %v5199, %v5286
    %v5291 = vld [vmem:[%s5 + $0x220] sm:$0xff]
    %v5292 = vld [vmem:[%s5 + $0x228] sm:$0xff]
    %5293 = vrot.lane.b32.xlu0 %v4029, 48
    %v5294 = vpop.permute.xlu0 %5293
    %5295 = vrot.lane.b32.xlu0 %v4035, 48
    %v5296 = vpop.permute.xlu0 %5295
    %v5300 = vsel %vm232, %v5291, 0
    %v5303 = vsel %vm232, %v5292, 0
    %5305 = vmatprep.subr.mxu0 0.0
    %5306 = vmatpush1.msra.mxu0 %v5294
    %5307 = vmatprep.subr.mxu0 0.0
    %5308 = vmatpush1.msra.mxu0 %v5296
    %5309 = vmatprep.subr.mxu0 0.0
    %5310 = vmatpush1.msra.mxu0 0.0
    %5311 = vmatprep.subr.mxu0 0.0
    %5312 = vmatpush1.msra.mxu0 0.0
    %5313 = vmatprep.subr.mxu0 0.0
    %5314 = vmatpush1.msra.mxu0 0.0
    %5315 = vmatprep.subr.mxu0 0.0
    %5316 = vmatpush1.msra.mxu0 0.0
    %5317 = vmatprep.subr.mxu0 0.0
    %5318 = vmatpush1.msra.mxu0 0.0
    %5319 = vmatprep.subr.mxu0 0.0
    %5320 = vmatpush1.msra.mxu0 0.0
    %5321 = vmatprep.subr.mxu0 0.0
    %5322 = vmatpush1.msra.mxu0 0.0
    %5323 = vmatprep.subr.mxu0 0.0
    %5324 = vmatpush1.msra.mxu0 0.0
    %5325 = vmatprep.subr.mxu0 0.0
    %5326 = vmatpush1.msra.mxu0 0.0
    %5327 = vmatprep.subr.mxu0 0.0
    %5328 = vmatpush1.msra.mxu0 0.0
    %5329 = vmatprep.subr.mxu0 0.0
    %5330 = vmatpush1.msra.mxu0 0.0
    %5331 = vmatprep.subr.mxu0 0.0
    %5332 = vmatpush1.msra.mxu0 0.0
    %5333 = vmatprep.subr.mxu0 0.0
    %5334 = vmatpush1.msra.mxu0 0.0
    %5335 = vmatprep.subr.mxu0 0.0
    %5336 = vmatpush1.msra.mxu0 0.0
    %5337 = vmatprep.subr.mxu0 0.0
    %5338 = vmatpush1.msra.mxu0 0.0
    %5339 = vmatprep.subr.mxu0 0.0
    %5340 = vmatpush1.msra.mxu0 0.0
    %5341 = vmatprep.subr.mxu0 0.0
    %5342 = vmatpush1.msra.mxu0 0.0
    %5343 = vmatprep.subr.mxu0 0.0
    %5344 = vmatpush1.msra.mxu0 0.0
    %5345 = vmatprep.subr.mxu0 0.0
    %5346 = vmatpush1.msra.mxu0 0.0
    %5347 = vmatprep.subr.mxu0 0.0
    %5348 = vmatpush1.msra.mxu0 0.0
    %5349 = vmatprep.subr.mxu0 0.0
    %5350 = vmatpush1.msra.mxu0 0.0
    %5351 = vmatprep.subr.mxu0 0.0
    %5352 = vmatpush1.msra.mxu0 0.0
    %5353 = vmatprep.subr.mxu0 0.0
    %5354 = vmatpush1.msra.mxu0 0.0
    %5355 = vmatprep.subr.mxu0 0.0
    %5356 = vmatpush1.msra.mxu0 0.0
    %5357 = vmatprep.subr.mxu0 0.0
    %5358 = vmatpush1.msra.mxu0 0.0
    %5359 = vmatprep.subr.mxu0 0.0
    %5360 = vmatpush1.msra.mxu0 0.0
    %5361 = vmatprep.subr.mxu0 0.0
    %5362 = vmatpush1.msra.mxu0 0.0
    %5363 = vmatprep.subr.mxu0 0.0
    %5364 = vmatpush1.msra.mxu0 0.0
    %5365 = vmatprep.subr.mxu0 0.0
    %5366 = vmatpush1.msra.mxu0 0.0
    %5367 = vmatprep.subr.mxu0 0.0
    %5368 = vmatpush1.msra.mxu0 0.0
    %5369 = vmatprep.mubr.f32.mxu0 0.0
    %5370 = vmatmul.mubr.f32.gmra.mrb[0].mxu0 %v5300
    %v5371 = vpop.f32.mrb[0].mxu0
    %v5372 = vadd.f32 0.0, %v5371
    %v5373 = vpop.f32.mrb[0].mxu0
    %5374 = vmatprep.mubr.f32.mxu0 0.0
    %5375 = vmatmul.mubr.f32.gmra.mrb[0].mxu0 %v5303
    %v5376 = vpop.f32.mrb[0].mxu0
    %v5377 = vadd.f32 0.0, %v5376
    %v5378 = vpop.f32.mrb[0].mxu0
    %5379 = vdwg.mxu0
    %v5380 = vadd.f32 %v5289, %v5372
    %v5381 = vadd.f32 %v5290, %v5377
    %v5382 = vld [vmem:[%s5 + $0x230] sm:$0xff]
    %v5383 = vld [vmem:[%s5 + $0x238] sm:$0xff]
    %5384 = vrot.lane.b32.xlu0 %v4029, 32
    %v5385 = vpop.permute.xlu0 %5384
    %5386 = vrot.lane.b32.xlu0 %v4035, 32
    %v5387 = vpop.permute.xlu0 %5386
    %v5391 = vsel %vm232, %v5382, 0
    %v5394 = vsel %vm232, %v5383, 0
    %5396 = vmatprep.subr.mxu0 0.0
    %5397 = vmatpush1.msra.mxu0 %v5385
    %5398 = vmatprep.subr.mxu0 0.0
    %5399 = vmatpush1.msra.mxu0 %v5387
    %5400 = vmatprep.subr.mxu0 0.0
    %5401 = vmatpush1.msra.mxu0 0.0
    %5402 = vmatprep.subr.mxu0 0.0
    %5403 = vmatpush1.msra.mxu0 0.0
    %5404 = vmatprep.subr.mxu0 0.0
    %5405 = vmatpush1.msra.mxu0 0.0
    %5406 = vmatprep.subr.mxu0 0.0
    %5407 = vmatpush1.msra.mxu0 0.0
    %5408 = vmatprep.subr.mxu0 0.0
    %5409 = vmatpush1.msra.mxu0 0.0
    %5410 = vmatprep.subr.mxu0 0.0
    %5411 = vmatpush1.msra.mxu0 0.0
    %5412 = vmatprep.subr.mxu0 0.0
    %5413 = vmatpush1.msra.mxu0 0.0
    %5414 = vmatprep.subr.mxu0 0.0
    %5415 = vmatpush1.msra.mxu0 0.0
    %5416 = vmatprep.subr.mxu0 0.0
    %5417 = vmatpush1.msra.mxu0 0.0
    %5418 = vmatprep.subr.mxu0 0.0
    %5419 = vmatpush1.msra.mxu0 0.0
    %5420 = vmatprep.subr.mxu0 0.0
    %5421 = vmatpush1.msra.mxu0 0.0
    %5422 = vmatprep.subr.mxu0 0.0
    %5423 = vmatpush1.msra.mxu0 0.0
    %5424 = vmatprep.subr.mxu0 0.0
    %5425 = vmatpush1.msra.mxu0 0.0
    %5426 = vmatprep.subr.mxu0 0.0
    %5427 = vmatpush1.msra.mxu0 0.0
    %5428 = vmatprep.subr.mxu0 0.0
    %5429 = vmatpush1.msra.mxu0 0.0
    %5430 = vmatprep.subr.mxu0 0.0
    %5431 = vmatpush1.msra.mxu0 0.0
    %5432 = vmatprep.subr.mxu0 0.0
    %5433 = vmatpush1.msra.mxu0 0.0
    %5434 = vmatprep.subr.mxu0 0.0
    %5435 = vmatpush1.msra.mxu0 0.0
    %5436 = vmatprep.subr.mxu0 0.0
    %5437 = vmatpush1.msra.mxu0 0.0
    %5438 = vmatprep.subr.mxu0 0.0
    %5439 = vmatpush1.msra.mxu0 0.0
    %5440 = vmatprep.subr.mxu0 0.0
    %5441 = vmatpush1.msra.mxu0 0.0
    %5442 = vmatprep.subr.mxu0 0.0
    %5443 = vmatpush1.msra.mxu0 0.0
    %5444 = vmatprep.subr.mxu0 0.0
    %5445 = vmatpush1.msra.mxu0 0.0
    %5446 = vmatprep.subr.mxu0 0.0
    %5447 = vmatpush1.msra.mxu0 0.0
    %5448 = vmatprep.subr.mxu0 0.0
    %5449 = vmatpush1.msra.mxu0 0.0
    %5450 = vmatprep.subr.mxu0 0.0
    %5451 = vmatpush1.msra.mxu0 0.0
    %5452 = vmatprep.subr.mxu0 0.0
    %5453 = vmatpush1.msra.mxu0 0.0
    %5454 = vmatprep.subr.mxu0 0.0
    %5455 = vmatpush1.msra.mxu0 0.0
    %5456 = vmatprep.subr.mxu0 0.0
    %5457 = vmatpush1.msra.mxu0 0.0
    %5458 = vmatprep.subr.mxu0 0.0
    %5459 = vmatpush1.msra.mxu0 0.0
    %5460 = vmatprep.mubr.f32.mxu0 0.0
    %5461 = vmatmul.mubr.f32.gmra.mrb[0].mxu0 %v5391
    %v5462 = vpop.f32.mrb[0].mxu0
    %v5463 = vadd.f32 0.0, %v5462
    %v5464 = vpop.f32.mrb[0].mxu0
    %5465 = vmatprep.mubr.f32.mxu0 0.0
    %5466 = vmatmul.mubr.f32.gmra.mrb[0].mxu0 %v5394
    %v5467 = vpop.f32.mrb[0].mxu0
    %v5468 = vadd.f32 0.0, %v5467
    %v5469 = vpop.f32.mrb[0].mxu0
    %5470 = vdwg.mxu0
    %v5471 = vadd.f32 %v5380, %v5463
    %v5472 = vadd.f32 %v5381, %v5468
    %v5473 = vld [vmem:[%s5 + $0x240] sm:$0xff]
    %v5474 = vld [vmem:[%s5 + $0x248] sm:$0xff]
    %5475 = vrot.lane.b32.xlu0 %v4029, 16
    %v5476 = vpop.permute.xlu0 %5475
    %5477 = vrot.lane.b32.xlu0 %v4035, 16
    %v5478 = vpop.permute.xlu0 %5477
    %v5482 = vsel %vm232, %v5473, 0
    %v5485 = vsel %vm232, %v5474, 0
    %5487 = vmatprep.subr.mxu0 0.0
    %5488 = vmatpush1.msra.mxu0 %v5476
    %5489 = vmatprep.subr.mxu0 0.0
    %5490 = vmatpush1.msra.mxu0 %v5478
    %5491 = vmatprep.subr.mxu0 0.0
    %5492 = vmatpush1.msra.mxu0 0.0
    %5493 = vmatprep.subr.mxu0 0.0
    %5494 = vmatpush1.msra.mxu0 0.0
    %5495 = vmatprep.subr.mxu0 0.0
    %5496 = vmatpush1.msra.mxu0 0.0
    %5497 = vmatprep.subr.mxu0 0.0
    %5498 = vmatpush1.msra.mxu0 0.0
    %5499 = vmatprep.subr.mxu0 0.0
    %5500 = vmatpush1.msra.mxu0 0.0
    %5501 = vmatprep.subr.mxu0 0.0
    %5502 = vmatpush1.msra.mxu0 0.0
    %5503 = vmatprep.subr.mxu0 0.0
    %5504 = vmatpush1.msra.mxu0 0.0
    %5505 = vmatprep.subr.mxu0 0.0
    %5506 = vmatpush1.msra.mxu0 0.0
    %5507 = vmatprep.subr.mxu0 0.0
    %5508 = vmatpush1.msra.mxu0 0.0
    %5509 = vmatprep.subr.mxu0 0.0
    %5510 = vmatpush1.msra.mxu0 0.0
    %5511 = vmatprep.subr.mxu0 0.0
    %5512 = vmatpush1.msra.mxu0 0.0
    %5513 = vmatprep.subr.mxu0 0.0
    %5514 = vmatpush1.msra.mxu0 0.0
    %5515 = vmatprep.subr.mxu0 0.0
    %5516 = vmatpush1.msra.mxu0 0.0
    %5517 = vmatprep.subr.mxu0 0.0
    %5518 = vmatpush1.msra.mxu0 0.0
    %5519 = vmatprep.subr.mxu0 0.0
    %5520 = vmatpush1.msra.mxu0 0.0
    %5521 = vmatprep.subr.mxu0 0.0
    %5522 = vmatpush1.msra.mxu0 0.0
    %5523 = vmatprep.subr.mxu0 0.0
    %5524 = vmatpush1.msra.mxu0 0.0
    %5525 = vmatprep.subr.mxu0 0.0
    %5526 = vmatpush1.msra.mxu0 0.0
    %5527 = vmatprep.subr.mxu0 0.0
    %5528 = vmatpush1.msra.mxu0 0.0
    %5529 = vmatprep.subr.mxu0 0.0
    %5530 = vmatpush1.msra.mxu0 0.0
    %5531 = vmatprep.subr.mxu0 0.0
    %5532 = vmatpush1.msra.mxu0 0.0
    %5533 = vmatprep.subr.mxu0 0.0
    %5534 = vmatpush1.msra.mxu0 0.0
    %5535 = vmatprep.subr.mxu0 0.0
    %5536 = vmatpush1.msra.mxu0 0.0
    %5537 = vmatprep.subr.mxu0 0.0
    %5538 = vmatpush1.msra.mxu0 0.0
    %5539 = vmatprep.subr.mxu0 0.0
    %5540 = vmatpush1.msra.mxu0 0.0
    %5541 = vmatprep.subr.mxu0 0.0
    %5542 = vmatpush1.msra.mxu0 0.0
    %5543 = vmatprep.subr.mxu0 0.0
    %5544 = vmatpush1.msra.mxu0 0.0
    %5545 = vmatprep.subr.mxu0 0.0
    %5546 = vmatpush1.msra.mxu0 0.0
    %5547 = vmatprep.subr.mxu0 0.0
    %5548 = vmatpush1.msra.mxu0 0.0
    %5549 = vmatprep.subr.mxu0 0.0
    %5550 = vmatpush1.msra.mxu0 0.0
    %5551 = vmatprep.mubr.f32.mxu0 0.0
    %5552 = vmatmul.mubr.f32.gmra.mrb[0].mxu0 %v5482
    %v5553 = vpop.f32.mrb[0].mxu0
    %v5554 = vadd.f32 0.0, %v5553
    %v5555 = vpop.f32.mrb[0].mxu0
    %5556 = vmatprep.mubr.f32.mxu0 0.0
    %5557 = vmatmul.mubr.f32.gmra.mrb[0].mxu0 %v5485
    %v5558 = vpop.f32.mrb[0].mxu0
    %v5559 = vadd.f32 0.0, %v5558
    %v5560 = vpop.f32.mrb[0].mxu0
    %5561 = vdwg.mxu0
    %v5562 = vadd.f32 %v5471, %v5554
    %v5563 = vadd.f32 %v5472, %v5559
    %v5564 = vld [vmem:[%s5 + $0x250] sm:$0xff]
    %v5565 = vld [vmem:[%s5 + $0x258] sm:$0xff]
    %v5567 = vsel %vm232, %v5564, 0
    %v5570 = vsel %vm232, %v5565, 0
    %5572 = vmatprep.subr.mxu0 0.0
    %5573 = vmatpush1.msra.mxu0 %v4104
    %5574 = vmatprep.subr.mxu0 0.0
    %5575 = vmatpush1.msra.mxu0 %v4110
    %5576 = vmatprep.subr.mxu0 0.0
    %5577 = vmatpush1.msra.mxu0 0.0
    %5578 = vmatprep.subr.mxu0 0.0
    %5579 = vmatpush1.msra.mxu0 0.0
    %5580 = vmatprep.subr.mxu0 0.0
    %5581 = vmatpush1.msra.mxu0 0.0
    %5582 = vmatprep.subr.mxu0 0.0
    %5583 = vmatpush1.msra.mxu0 0.0
    %5584 = vmatprep.subr.mxu0 0.0
    %5585 = vmatpush1.msra.mxu0 0.0
    %5586 = vmatprep.subr.mxu0 0.0
    %5587 = vmatpush1.msra.mxu0 0.0
    %5588 = vmatprep.subr.mxu0 0.0
    %5589 = vmatpush1.msra.mxu0 0.0
    %5590 = vmatprep.subr.mxu0 0.0
    %5591 = vmatpush1.msra.mxu0 0.0
    %5592 = vmatprep.subr.mxu0 0.0
    %5593 = vmatpush1.msra.mxu0 0.0
    %5594 = vmatprep.subr.mxu0 0.0
    %5595 = vmatpush1.msra.mxu0 0.0
    %5596 = vmatprep.subr.mxu0 0.0
    %5597 = vmatpush1.msra.mxu0 0.0
    %5598 = vmatprep.subr.mxu0 0.0
    %5599 = vmatpush1.msra.mxu0 0.0
    %5600 = vmatprep.subr.mxu0 0.0
    %5601 = vmatpush1.msra.mxu0 0.0
    %5602 = vmatprep.subr.mxu0 0.0
    %5603 = vmatpush1.msra.mxu0 0.0
    %5604 = vmatprep.subr.mxu0 0.0
    %5605 = vmatpush1.msra.mxu0 0.0
    %5606 = vmatprep.subr.mxu0 0.0
    %5607 = vmatpush1.msra.mxu0 0.0
    %5608 = vmatprep.subr.mxu0 0.0
    %5609 = vmatpush1.msra.mxu0 0.0
    %5610 = vmatprep.subr.mxu0 0.0
    %5611 = vmatpush1.msra.mxu0 0.0
    %5612 = vmatprep.subr.mxu0 0.0
    %5613 = vmatpush1.msra.mxu0 0.0
    %5614 = vmatprep.subr.mxu0 0.0
    %5615 = vmatpush1.msra.mxu0 0.0
    %5616 = vmatprep.subr.mxu0 0.0
    %5617 = vmatpush1.msra.mxu0 0.0
    %5618 = vmatprep.subr.mxu0 0.0
    %5619 = vmatpush1.msra.mxu0 0.0
    %5620 = vmatprep.subr.mxu0 0.0
    %5621 = vmatpush1.msra.mxu0 0.0
    %5622 = vmatprep.subr.mxu0 0.0
    %5623 = vmatpush1.msra.mxu0 0.0
    %5624 = vmatprep.subr.mxu0 0.0
    %5625 = vmatpush1.msra.mxu0 0.0
    %5626 = vmatprep.subr.mxu0 0.0
    %5627 = vmatpush1.msra.mxu0 0.0
    %5628 = vmatprep.subr.mxu0 0.0
    %5629 = vmatpush1.msra.mxu0 0.0
    %5630 = vmatprep.subr.mxu0 0.0
    %5631 = vmatpush1.msra.mxu0 0.0
    %5632 = vmatprep.subr.mxu0 0.0
    %5633 = vmatpush1.msra.mxu0 0.0
    %5634 = vmatprep.subr.mxu0 0.0
    %5635 = vmatpush1.msra.mxu0 0.0
    %5636 = vmatprep.mubr.f32.mxu0 0.0
    %5637 = vmatmul.mubr.f32.gmra.mrb[0].mxu0 %v5567
    %v5638 = vpop.f32.mrb[0].mxu0
    %v5639 = vadd.f32 0.0, %v5638
    %v5640 = vpop.f32.mrb[0].mxu0
    %5641 = vmatprep.mubr.f32.mxu0 0.0
    %5642 = vmatmul.mubr.f32.gmra.mrb[0].mxu0 %v5570
    %v5643 = vpop.f32.mrb[0].mxu0
    %v5644 = vadd.f32 0.0, %v5643
    %v5645 = vpop.f32.mrb[0].mxu0
    %5646 = vdwg.mxu0
    %v5647 = vadd.f32 %v5562, %v5639
    %v5648 = vadd.f32 %v5563, %v5644
    %v5649 = vld [vmem:[%s5 + $0x260] sm:$0xff]
    %v5650 = vld [vmem:[%s5 + $0x268] sm:$0xff]
    %5653 = vrot.lane.b32.xlu0 %v4104, 112
    %v5654 = vpop.permute.xlu0 %5653
    %5655 = vrot.lane.b32.xlu0 %v4110, 112
    %v5656 = vpop.permute.xlu0 %5655
    %v5660 = vsel %vm232, %v5649, 0
    %v5663 = vsel %vm232, %v5650, 0
    %5665 = vmatprep.subr.mxu0 0.0
    %5666 = vmatpush1.msra.mxu0 %v5654
    %5667 = vmatprep.subr.mxu0 0.0
    %5668 = vmatpush1.msra.mxu0 %v5656
    %5669 = vmatprep.subr.mxu0 0.0
    %5670 = vmatpush1.msra.mxu0 0.0
    %5671 = vmatprep.subr.mxu0 0.0
    %5672 = vmatpush1.msra.mxu0 0.0
    %5673 = vmatprep.subr.mxu0 0.0
    %5674 = vmatpush1.msra.mxu0 0.0
    %5675 = vmatprep.subr.mxu0 0.0
    %5676 = vmatpush1.msra.mxu0 0.0
    %5677 = vmatprep.subr.mxu0 0.0
    %5678 = vmatpush1.msra.mxu0 0.0
    %5679 = vmatprep.subr.mxu0 0.0
    %5680 = vmatpush1.msra.mxu0 0.0
    %5681 = vmatprep.subr.mxu0 0.0
    %5682 = vmatpush1.msra.mxu0 0.0
    %5683 = vmatprep.subr.mxu0 0.0
    %5684 = vmatpush1.msra.mxu0 0.0
    %5685 = vmatprep.subr.mxu0 0.0
    %5686 = vmatpush1.msra.mxu0 0.0
    %5687 = vmatprep.subr.mxu0 0.0
    %5688 = vmatpush1.msra.mxu0 0.0
    %5689 = vmatprep.subr.mxu0 0.0
    %5690 = vmatpush1.msra.mxu0 0.0
    %5691 = vmatprep.subr.mxu0 0.0
    %5692 = vmatpush1.msra.mxu0 0.0
    %5693 = vmatprep.subr.mxu0 0.0
    %5694 = vmatpush1.msra.mxu0 0.0
    %5695 = vmatprep.subr.mxu0 0.0
    %5696 = vmatpush1.msra.mxu0 0.0
    %5697 = vmatprep.subr.mxu0 0.0
    %5698 = vmatpush1.msra.mxu0 0.0
    %5699 = vmatprep.subr.mxu0 0.0
    %5700 = vmatpush1.msra.mxu0 0.0
    %5701 = vmatprep.subr.mxu0 0.0
    %5702 = vmatpush1.msra.mxu0 0.0
    %5703 = vmatprep.subr.mxu0 0.0
    %5704 = vmatpush1.msra.mxu0 0.0
    %5705 = vmatprep.subr.mxu0 0.0
    %5706 = vmatpush1.msra.mxu0 0.0
    %5707 = vmatprep.subr.mxu0 0.0
    %5708 = vmatpush1.msra.mxu0 0.0
    %5709 = vmatprep.subr.mxu0 0.0
    %5710 = vmatpush1.msra.mxu0 0.0
    %5711 = vmatprep.subr.mxu0 0.0
    %5712 = vmatpush1.msra.mxu0 0.0
    %5713 = vmatprep.subr.mxu0 0.0
    %5714 = vmatpush1.msra.mxu0 0.0
    %5715 = vmatprep.subr.mxu0 0.0
    %5716 = vmatpush1.msra.mxu0 0.0
    %5717 = vmatprep.subr.mxu0 0.0
    %5718 = vmatpush1.msra.mxu0 0.0
    %5719 = vmatprep.subr.mxu0 0.0
    %5720 = vmatpush1.msra.mxu0 0.0
    %5721 = vmatprep.subr.mxu0 0.0
    %5722 = vmatpush1.msra.mxu0 0.0
    %5723 = vmatprep.subr.mxu0 0.0
    %5724 = vmatpush1.msra.mxu0 0.0
    %5725 = vmatprep.subr.mxu0 0.0
    %5726 = vmatpush1.msra.mxu0 0.0
    %5727 = vmatprep.subr.mxu0 0.0
    %5728 = vmatpush1.msra.mxu0 0.0
    %5729 = vmatprep.mubr.f32.mxu0 0.0
    %5730 = vmatmul.mubr.f32.gmra.mrb[0].mxu0 %v5660
    %v5731 = vpop.f32.mrb[0].mxu0
    %v5732 = vadd.f32 0.0, %v5731
    %v5733 = vpop.f32.mrb[0].mxu0
    %5734 = vmatprep.mubr.f32.mxu0 0.0
    %5735 = vmatmul.mubr.f32.gmra.mrb[0].mxu0 %v5663
    %v5736 = vpop.f32.mrb[0].mxu0
    %v5737 = vadd.f32 0.0, %v5736
    %v5738 = vpop.f32.mrb[0].mxu0
    %5739 = vdwg.mxu0
    %v5740 = vadd.f32 %v5647, %v5732
    %v5741 = vadd.f32 %v5648, %v5737
    %v5742 = vld [vmem:[%s5 + $0x270] sm:$0xff]
    %v5743 = vld [vmem:[%s5 + $0x278] sm:$0xff]
    %5744 = vrot.lane.b32.xlu0 %v4104, 96
    %v5745 = vpop.permute.xlu0 %5744
    %5746 = vrot.lane.b32.xlu0 %v4110, 96
    %v5747 = vpop.permute.xlu0 %5746
    %v5751 = vsel %vm232, %v5742, 0
    %v5754 = vsel %vm232, %v5743, 0
    %5756 = vmatprep.subr.mxu0 0.0
    %5757 = vmatpush1.msra.mxu0 %v5745
    %5758 = vmatprep.subr.mxu0 0.0
    %5759 = vmatpush1.msra.mxu0 %v5747
    %5760 = vmatprep.subr.mxu0 0.0
    %5761 = vmatpush1.msra.mxu0 0.0
    %5762 = vmatprep.subr.mxu0 0.0
    %5763 = vmatpush1.msra.mxu0 0.0
    %5764 = vmatprep.subr.mxu0 0.0
    %5765 = vmatpush1.msra.mxu0 0.0
    %5766 = vmatprep.subr.mxu0 0.0
    %5767 = vmatpush1.msra.mxu0 0.0
    %5768 = vmatprep.subr.mxu0 0.0
    %5769 = vmatpush1.msra.mxu0 0.0
    %5770 = vmatprep.subr.mxu0 0.0
    %5771 = vmatpush1.msra.mxu0 0.0
    %5772 = vmatprep.subr.mxu0 0.0
    %5773 = vmatpush1.msra.mxu0 0.0
    %5774 = vmatprep.subr.mxu0 0.0
    %5775 = vmatpush1.msra.mxu0 0.0
    %5776 = vmatprep.subr.mxu0 0.0
    %5777 = vmatpush1.msra.mxu0 0.0
    %5778 = vmatprep.subr.mxu0 0.0
    %5779 = vmatpush1.msra.mxu0 0.0
    %5780 = vmatprep.subr.mxu0 0.0
    %5781 = vmatpush1.msra.mxu0 0.0
    %5782 = vmatprep.subr.mxu0 0.0
    %5783 = vmatpush1.msra.mxu0 0.0
    %5784 = vmatprep.subr.mxu0 0.0
    %5785 = vmatpush1.msra.mxu0 0.0
    %5786 = vmatprep.subr.mxu0 0.0
    %5787 = vmatpush1.msra.mxu0 0.0
    %5788 = vmatprep.subr.mxu0 0.0
    %5789 = vmatpush1.msra.mxu0 0.0
    %5790 = vmatprep.subr.mxu0 0.0
    %5791 = vmatpush1.msra.mxu0 0.0
    %5792 = vmatprep.subr.mxu0 0.0
    %5793 = vmatpush1.msra.mxu0 0.0
    %5794 = vmatprep.subr.mxu0 0.0
    %5795 = vmatpush1.msra.mxu0 0.0
    %5796 = vmatprep.subr.mxu0 0.0
    %5797 = vmatpush1.msra.mxu0 0.0
    %5798 = vmatprep.subr.mxu0 0.0
    %5799 = vmatpush1.msra.mxu0 0.0
    %5800 = vmatprep.subr.mxu0 0.0
    %5801 = vmatpush1.msra.mxu0 0.0
    %5802 = vmatprep.subr.mxu0 0.0
    %5803 = vmatpush1.msra.mxu0 0.0
    %5804 = vmatprep.subr.mxu0 0.0
    %5805 = vmatpush1.msra.mxu0 0.0
    %5806 = vmatprep.subr.mxu0 0.0
    %5807 = vmatpush1.msra.mxu0 0.0
    %5808 = vmatprep.subr.mxu0 0.0
    %5809 = vmatpush1.msra.mxu0 0.0
    %5810 = vmatprep.subr.mxu0 0.0
    %5811 = vmatpush1.msra.mxu0 0.0
    %5812 = vmatprep.subr.mxu0 0.0
    %5813 = vmatpush1.msra.mxu0 0.0
    %5814 = vmatprep.subr.mxu0 0.0
    %5815 = vmatpush1.msra.mxu0 0.0
    %5816 = vmatprep.subr.mxu0 0.0
    %5817 = vmatpush1.msra.mxu0 0.0
    %5818 = vmatprep.subr.mxu0 0.0
    %5819 = vmatpush1.msra.mxu0 0.0
    %5820 = vmatprep.mubr.f32.mxu0 0.0
    %5821 = vmatmul.mubr.f32.gmra.mrb[0].mxu0 %v5751
    %v5822 = vpop.f32.mrb[0].mxu0
    %v5823 = vadd.f32 0.0, %v5822
    %v5824 = vpop.f32.mrb[0].mxu0
    %5825 = vmatprep.mubr.f32.mxu0 0.0
    %5826 = vmatmul.mubr.f32.gmra.mrb[0].mxu0 %v5754
    %v5827 = vpop.f32.mrb[0].mxu0
    %v5828 = vadd.f32 0.0, %v5827
    %v5829 = vpop.f32.mrb[0].mxu0
    %5830 = vdwg.mxu0
    %v5831 = vadd.f32 %v5740, %v5823
    %v5832 = vadd.f32 %v5741, %v5828
    %v5833 = vld [vmem:[%s5 + $0x280] sm:$0xff]
    %v5834 = vld [vmem:[%s5 + $0x288] sm:$0xff]
    %5835 = vrot.lane.b32.xlu0 %v4104, 80
    %v5836 = vpop.permute.xlu0 %5835
    %5837 = vrot.lane.b32.xlu0 %v4110, 80
    %v5838 = vpop.permute.xlu0 %5837
    %v5842 = vsel %vm232, %v5833, 0
    %v5845 = vsel %vm232, %v5834, 0
    %5847 = vmatprep.subr.mxu0 0.0
    %5848 = vmatpush1.msra.mxu0 %v5836
    %5849 = vmatprep.subr.mxu0 0.0
    %5850 = vmatpush1.msra.mxu0 %v5838
    %5851 = vmatprep.subr.mxu0 0.0
    %5852 = vmatpush1.msra.mxu0 0.0
    %5853 = vmatprep.subr.mxu0 0.0
    %5854 = vmatpush1.msra.mxu0 0.0
    %5855 = vmatprep.subr.mxu0 0.0
    %5856 = vmatpush1.msra.mxu0 0.0
    %5857 = vmatprep.subr.mxu0 0.0
    %5858 = vmatpush1.msra.mxu0 0.0
    %5859 = vmatprep.subr.mxu0 0.0
    %5860 = vmatpush1.msra.mxu0 0.0
    %5861 = vmatprep.subr.mxu0 0.0
    %5862 = vmatpush1.msra.mxu0 0.0
    %5863 = vmatprep.subr.mxu0 0.0
    %5864 = vmatpush1.msra.mxu0 0.0
    %5865 = vmatprep.subr.mxu0 0.0
    %5866 = vmatpush1.msra.mxu0 0.0
    %5867 = vmatprep.subr.mxu0 0.0
    %5868 = vmatpush1.msra.mxu0 0.0
    %5869 = vmatprep.subr.mxu0 0.0
    %5870 = vmatpush1.msra.mxu0 0.0
    %5871 = vmatprep.subr.mxu0 0.0
    %5872 = vmatpush1.msra.mxu0 0.0
    %5873 = vmatprep.subr.mxu0 0.0
    %5874 = vmatpush1.msra.mxu0 0.0
    %5875 = vmatprep.subr.mxu0 0.0
    %5876 = vmatpush1.msra.mxu0 0.0
    %5877 = vmatprep.subr.mxu0 0.0
    %5878 = vmatpush1.msra.mxu0 0.0
    %5879 = vmatprep.subr.mxu0 0.0
    %5880 = vmatpush1.msra.mxu0 0.0
    %5881 = vmatprep.subr.mxu0 0.0
    %5882 = vmatpush1.msra.mxu0 0.0
    %5883 = vmatprep.subr.mxu0 0.0
    %5884 = vmatpush1.msra.mxu0 0.0
    %5885 = vmatprep.subr.mxu0 0.0
    %5886 = vmatpush1.msra.mxu0 0.0
    %5887 = vmatprep.subr.mxu0 0.0
    %5888 = vmatpush1.msra.mxu0 0.0
    %5889 = vmatprep.subr.mxu0 0.0
    %5890 = vmatpush1.msra.mxu0 0.0
    %5891 = vmatprep.subr.mxu0 0.0
    %5892 = vmatpush1.msra.mxu0 0.0
    %5893 = vmatprep.subr.mxu0 0.0
    %5894 = vmatpush1.msra.mxu0 0.0
    %5895 = vmatprep.subr.mxu0 0.0
    %5896 = vmatpush1.msra.mxu0 0.0
    %5897 = vmatprep.subr.mxu0 0.0
    %5898 = vmatpush1.msra.mxu0 0.0
    %5899 = vmatprep.subr.mxu0 0.0
    %5900 = vmatpush1.msra.mxu0 0.0
    %5901 = vmatprep.subr.mxu0 0.0
    %5902 = vmatpush1.msra.mxu0 0.0
    %5903 = vmatprep.subr.mxu0 0.0
    %5904 = vmatpush1.msra.mxu0 0.0
    %5905 = vmatprep.subr.mxu0 0.0
    %5906 = vmatpush1.msra.mxu0 0.0
    %5907 = vmatprep.subr.mxu0 0.0
    %5908 = vmatpush1.msra.mxu0 0.0
    %5909 = vmatprep.subr.mxu0 0.0
    %5910 = vmatpush1.msra.mxu0 0.0
    %5911 = vmatprep.mubr.f32.mxu0 0.0
    %5912 = vmatmul.mubr.f32.gmra.mrb[0].mxu0 %v5842
    %v5913 = vpop.f32.mrb[0].mxu0
    %v5914 = vadd.f32 0.0, %v5913
    %v5915 = vpop.f32.mrb[0].mxu0
    %5916 = vmatprep.mubr.f32.mxu0 0.0
    %5917 = vmatmul.mubr.f32.gmra.mrb[0].mxu0 %v5845
    %v5918 = vpop.f32.mrb[0].mxu0
    %v5919 = vadd.f32 0.0, %v5918
    %v5920 = vpop.f32.mrb[0].mxu0
    %5921 = vdwg.mxu0
    %v5922 = vadd.f32 %v5831, %v5914
    %v5923 = vadd.f32 %v5832, %v5919
    %v5924 = vld [vmem:[%s5 + $0x290] sm:$0xff]
    %v5925 = vld [vmem:[%s5 + $0x298] sm:$0xff]
    %5926 = vrot.lane.b32.xlu0 %v4104, 64
    %v5927 = vpop.permute.xlu0 %5926
    %5928 = vrot.lane.b32.xlu0 %v4110, 64
    %v5929 = vpop.permute.xlu0 %5928
    %v5933 = vsel %vm232, %v5924, 0
    %v5936 = vsel %vm232, %v5925, 0
    %5938 = vmatprep.subr.mxu0 0.0
    %5939 = vmatpush1.msra.mxu0 %v5927
    %5940 = vmatprep.subr.mxu0 0.0
    %5941 = vmatpush1.msra.mxu0 %v5929
    %5942 = vmatprep.subr.mxu0 0.0
    %5943 = vmatpush1.msra.mxu0 0.0
    %5944 = vmatprep.subr.mxu0 0.0
    %5945 = vmatpush1.msra.mxu0 0.0
    %5946 = vmatprep.subr.mxu0 0.0
    %5947 = vmatpush1.msra.mxu0 0.0
    %5948 = vmatprep.subr.mxu0 0.0
    %5949 = vmatpush1.msra.mxu0 0.0
    %5950 = vmatprep.subr.mxu0 0.0
    %5951 = vmatpush1.msra.mxu0 0.0
    %5952 = vmatprep.subr.mxu0 0.0
    %5953 = vmatpush1.msra.mxu0 0.0
    %5954 = vmatprep.subr.mxu0 0.0
    %5955 = vmatpush1.msra.mxu0 0.0
    %5956 = vmatprep.subr.mxu0 0.0
    %5957 = vmatpush1.msra.mxu0 0.0
    %5958 = vmatprep.subr.mxu0 0.0
    %5959 = vmatpush1.msra.mxu0 0.0
    %5960 = vmatprep.subr.mxu0 0.0
    %5961 = vmatpush1.msra.mxu0 0.0
    %5962 = vmatprep.subr.mxu0 0.0
    %5963 = vmatpush1.msra.mxu0 0.0
    %5964 = vmatprep.subr.mxu0 0.0
    %5965 = vmatpush1.msra.mxu0 0.0
    %5966 = vmatprep.subr.mxu0 0.0
    %5967 = vmatpush1.msra.mxu0 0.0
    %5968 = vmatprep.subr.mxu0 0.0
    %5969 = vmatpush1.msra.mxu0 0.0
    %5970 = vmatprep.subr.mxu0 0.0
    %5971 = vmatpush1.msra.mxu0 0.0
    %5972 = vmatprep.subr.mxu0 0.0
    %5973 = vmatpush1.msra.mxu0 0.0
    %5974 = vmatprep.subr.mxu0 0.0
    %5975 = vmatpush1.msra.mxu0 0.0
    %5976 = vmatprep.subr.mxu0 0.0
    %5977 = vmatpush1.msra.mxu0 0.0
    %5978 = vmatprep.subr.mxu0 0.0
    %5979 = vmatpush1.msra.mxu0 0.0
    %5980 = vmatprep.subr.mxu0 0.0
    %5981 = vmatpush1.msra.mxu0 0.0
    %5982 = vmatprep.subr.mxu0 0.0
    %5983 = vmatpush1.msra.mxu0 0.0
    %5984 = vmatprep.subr.mxu0 0.0
    %5985 = vmatpush1.msra.mxu0 0.0
    %5986 = vmatprep.subr.mxu0 0.0
    %5987 = vmatpush1.msra.mxu0 0.0
    %5988 = vmatprep.subr.mxu0 0.0
    %5989 = vmatpush1.msra.mxu0 0.0
    %5990 = vmatprep.subr.mxu0 0.0
    %5991 = vmatpush1.msra.mxu0 0.0
    %5992 = vmatprep.subr.mxu0 0.0
    %5993 = vmatpush1.msra.mxu0 0.0
    %5994 = vmatprep.subr.mxu0 0.0
    %5995 = vmatpush1.msra.mxu0 0.0
    %5996 = vmatprep.subr.mxu0 0.0
    %5997 = vmatpush1.msra.mxu0 0.0
    %5998 = vmatprep.subr.mxu0 0.0
    %5999 = vmatpush1.msra.mxu0 0.0
    %6000 = vmatprep.subr.mxu0 0.0
    %6001 = vmatpush1.msra.mxu0 0.0
    %6002 = vmatprep.mubr.f32.mxu0 0.0
    %6003 = vmatmul.mubr.f32.gmra.mrb[0].mxu0 %v5933
    %v6004 = vpop.f32.mrb[0].mxu0
    %v6005 = vadd.f32 0.0, %v6004
    %v6006 = vpop.f32.mrb[0].mxu0
    %6007 = vmatprep.mubr.f32.mxu0 0.0
    %6008 = vmatmul.mubr.f32.gmra.mrb[0].mxu0 %v5936
    %v6009 = vpop.f32.mrb[0].mxu0
    %v6010 = vadd.f32 0.0, %v6009
    %v6011 = vpop.f32.mrb[0].mxu0
    %6012 = vdwg.mxu0
    %v6013 = vadd.f32 %v5922, %v6005
    %v6014 = vadd.f32 %v5923, %v6010
    %v6015 = vld [vmem:[%s5 + $0x2a0] sm:$0xff]
    %v6016 = vld [vmem:[%s5 + $0x2a8] sm:$0xff]
    %6017 = vrot.lane.b32.xlu0 %v4104, 48
    %v6018 = vpop.permute.xlu0 %6017
    %6019 = vrot.lane.b32.xlu0 %v4110, 48
    %v6020 = vpop.permute.xlu0 %6019
    %v6024 = vsel %vm232, %v6015, 0
    %v6027 = vsel %vm232, %v6016, 0
    %6029 = vmatprep.subr.mxu0 0.0
    %6030 = vmatpush1.msra.mxu0 %v6018
    %6031 = vmatprep.subr.mxu0 0.0
    %6032 = vmatpush1.msra.mxu0 %v6020
    %6033 = vmatprep.subr.mxu0 0.0
    %6034 = vmatpush1.msra.mxu0 0.0
    %6035 = vmatprep.subr.mxu0 0.0
    %6036 = vmatpush1.msra.mxu0 0.0
    %6037 = vmatprep.subr.mxu0 0.0
    %6038 = vmatpush1.msra.mxu0 0.0
    %6039 = vmatprep.subr.mxu0 0.0
    %6040 = vmatpush1.msra.mxu0 0.0
    %6041 = vmatprep.subr.mxu0 0.0
    %6042 = vmatpush1.msra.mxu0 0.0
    %6043 = vmatprep.subr.mxu0 0.0
    %6044 = vmatpush1.msra.mxu0 0.0
    %6045 = vmatprep.subr.mxu0 0.0
    %6046 = vmatpush1.msra.mxu0 0.0
    %6047 = vmatprep.subr.mxu0 0.0
    %6048 = vmatpush1.msra.mxu0 0.0
    %6049 = vmatprep.subr.mxu0 0.0
    %6050 = vmatpush1.msra.mxu0 0.0
    %6051 = vmatprep.subr.mxu0 0.0
    %6052 = vmatpush1.msra.mxu0 0.0
    %6053 = vmatprep.subr.mxu0 0.0
    %6054 = vmatpush1.msra.mxu0 0.0
    %6055 = vmatprep.subr.mxu0 0.0
    %6056 = vmatpush1.msra.mxu0 0.0
    %6057 = vmatprep.subr.mxu0 0.0
    %6058 = vmatpush1.msra.mxu0 0.0
    %6059 = vmatprep.subr.mxu0 0.0
    %6060 = vmatpush1.msra.mxu0 0.0
    %6061 = vmatprep.subr.mxu0 0.0
    %6062 = vmatpush1.msra.mxu0 0.0
    %6063 = vmatprep.subr.mxu0 0.0
    %6064 = vmatpush1.msra.mxu0 0.0
    %6065 = vmatprep.subr.mxu0 0.0
    %6066 = vmatpush1.msra.mxu0 0.0
    %6067 = vmatprep.subr.mxu0 0.0
    %6068 = vmatpush1.msra.mxu0 0.0
    %6069 = vmatprep.subr.mxu0 0.0
    %6070 = vmatpush1.msra.mxu0 0.0
    %6071 = vmatprep.subr.mxu0 0.0
    %6072 = vmatpush1.msra.mxu0 0.0
    %6073 = vmatprep.subr.mxu0 0.0
    %6074 = vmatpush1.msra.mxu0 0.0
    %6075 = vmatprep.subr.mxu0 0.0
    %6076 = vmatpush1.msra.mxu0 0.0
    %6077 = vmatprep.subr.mxu0 0.0
    %6078 = vmatpush1.msra.mxu0 0.0
    %6079 = vmatprep.subr.mxu0 0.0
    %6080 = vmatpush1.msra.mxu0 0.0
    %6081 = vmatprep.subr.mxu0 0.0
    %6082 = vmatpush1.msra.mxu0 0.0
    %6083 = vmatprep.subr.mxu0 0.0
    %6084 = vmatpush1.msra.mxu0 0.0
    %6085 = vmatprep.subr.mxu0 0.0
    %6086 = vmatpush1.msra.mxu0 0.0
    %6087 = vmatprep.subr.mxu0 0.0
    %6088 = vmatpush1.msra.mxu0 0.0
    %6089 = vmatprep.subr.mxu0 0.0
    %6090 = vmatpush1.msra.mxu0 0.0
    %6091 = vmatprep.subr.mxu0 0.0
    %6092 = vmatpush1.msra.mxu0 0.0
    %6093 = vmatprep.mubr.f32.mxu0 0.0
    %6094 = vmatmul.mubr.f32.gmra.mrb[0].mxu0 %v6024
    %v6095 = vpop.f32.mrb[0].mxu0
    %v6096 = vadd.f32 0.0, %v6095
    %v6097 = vpop.f32.mrb[0].mxu0
    %6098 = vmatprep.mubr.f32.mxu0 0.0
    %6099 = vmatmul.mubr.f32.gmra.mrb[0].mxu0 %v6027
    %v6100 = vpop.f32.mrb[0].mxu0
    %v6101 = vadd.f32 0.0, %v6100
    %v6102 = vpop.f32.mrb[0].mxu0
    %6103 = vdwg.mxu0
    %v6104 = vadd.f32 %v6013, %v6096
    %v6105 = vadd.f32 %v6014, %v6101
    %v6106 = vld [vmem:[%s5 + $0x2b0] sm:$0xff]
    %v6107 = vld [vmem:[%s5 + $0x2b8] sm:$0xff]
    %6108 = vrot.lane.b32.xlu0 %v4104, 32
    %v6109 = vpop.permute.xlu0 %6108
    %6110 = vrot.lane.b32.xlu0 %v4110, 32
    %v6111 = vpop.permute.xlu0 %6110
    %v6115 = vsel %vm232, %v6106, 0
    %v6118 = vsel %vm232, %v6107, 0
    %6120 = vmatprep.subr.mxu0 0.0
    %6121 = vmatpush1.msra.mxu0 %v6109
    %6122 = vmatprep.subr.mxu0 0.0
    %6123 = vmatpush1.msra.mxu0 %v6111
    %6124 = vmatprep.subr.mxu0 0.0
    %6125 = vmatpush1.msra.mxu0 0.0
    %6126 = vmatprep.subr.mxu0 0.0
    %6127 = vmatpush1.msra.mxu0 0.0
    %6128 = vmatprep.subr.mxu0 0.0
    %6129 = vmatpush1.msra.mxu0 0.0
    %6130 = vmatprep.subr.mxu0 0.0
    %6131 = vmatpush1.msra.mxu0 0.0
    %6132 = vmatprep.subr.mxu0 0.0
    %6133 = vmatpush1.msra.mxu0 0.0
    %6134 = vmatprep.subr.mxu0 0.0
    %6135 = vmatpush1.msra.mxu0 0.0
    %6136 = vmatprep.subr.mxu0 0.0
    %6137 = vmatpush1.msra.mxu0 0.0
    %6138 = vmatprep.subr.mxu0 0.0
    %6139 = vmatpush1.msra.mxu0 0.0
    %6140 = vmatprep.subr.mxu0 0.0
    %6141 = vmatpush1.msra.mxu0 0.0
    %6142 = vmatprep.subr.mxu0 0.0
    %6143 = vmatpush1.msra.mxu0 0.0
    %6144 = vmatprep.subr.mxu0 0.0
    %6145 = vmatpush1.msra.mxu0 0.0
    %6146 = vmatprep.subr.mxu0 0.0
    %6147 = vmatpush1.msra.mxu0 0.0
    %6148 = vmatprep.subr.mxu0 0.0
    %6149 = vmatpush1.msra.mxu0 0.0
    %6150 = vmatprep.subr.mxu0 0.0
    %6151 = vmatpush1.msra.mxu0 0.0
    %6152 = vmatprep.subr.mxu0 0.0
    %6153 = vmatpush1.msra.mxu0 0.0
    %6154 = vmatprep.subr.mxu0 0.0
    %6155 = vmatpush1.msra.mxu0 0.0
    %6156 = vmatprep.subr.mxu0 0.0
    %6157 = vmatpush1.msra.mxu0 0.0
    %6158 = vmatprep.subr.mxu0 0.0
    %6159 = vmatpush1.msra.mxu0 0.0
    %6160 = vmatprep.subr.mxu0 0.0
    %6161 = vmatpush1.msra.mxu0 0.0
    %6162 = vmatprep.subr.mxu0 0.0
    %6163 = vmatpush1.msra.mxu0 0.0
    %6164 = vmatprep.subr.mxu0 0.0
    %6165 = vmatpush1.msra.mxu0 0.0
    %6166 = vmatprep.subr.mxu0 0.0
    %6167 = vmatpush1.msra.mxu0 0.0
    %6168 = vmatprep.subr.mxu0 0.0
    %6169 = vmatpush1.msra.mxu0 0.0
    %6170 = vmatprep.subr.mxu0 0.0
    %6171 = vmatpush1.msra.mxu0 0.0
    %6172 = vmatprep.subr.mxu0 0.0
    %6173 = vmatpush1.msra.mxu0 0.0
    %6174 = vmatprep.subr.mxu0 0.0
    %6175 = vmatpush1.msra.mxu0 0.0
    %6176 = vmatprep.subr.mxu0 0.0
    %6177 = vmatpush1.msra.mxu0 0.0
    %6178 = vmatprep.subr.mxu0 0.0
    %6179 = vmatpush1.msra.mxu0 0.0
    %6180 = vmatprep.subr.mxu0 0.0
    %6181 = vmatpush1.msra.mxu0 0.0
    %6182 = vmatprep.subr.mxu0 0.0
    %6183 = vmatpush1.msra.mxu0 0.0
    %6184 = vmatprep.mubr.f32.mxu0 0.0
    %6185 = vmatmul.mubr.f32.gmra.mrb[0].mxu0 %v6115
    %v6186 = vpop.f32.mrb[0].mxu0
    %v6187 = vadd.f32 0.0, %v6186
    %v6188 = vpop.f32.mrb[0].mxu0
    %6189 = vmatprep.mubr.f32.mxu0 0.0
    %6190 = vmatmul.mubr.f32.gmra.mrb[0].mxu0 %v6118
    %v6191 = vpop.f32.mrb[0].mxu0
    %v6192 = vadd.f32 0.0, %v6191
    %v6193 = vpop.f32.mrb[0].mxu0
    %6194 = vdwg.mxu0
    %v6195 = vadd.f32 %v6104, %v6187
    %v6196 = vadd.f32 %v6105, %v6192
    %v6197 = vld [vmem:[%s5 + $0x2c0] sm:$0xff]
    %v6198 = vld [vmem:[%s5 + $0x2c8] sm:$0xff]
    %6199 = vrot.lane.b32.xlu0 %v4104, 16
    %v6200 = vpop.permute.xlu0 %6199
    %6201 = vrot.lane.b32.xlu0 %v4110, 16
    %v6202 = vpop.permute.xlu0 %6201
    %v6206 = vsel %vm232, %v6197, 0
    %v6209 = vsel %vm232, %v6198, 0
    %6211 = vmatprep.subr.mxu0 0.0
    %6212 = vmatpush1.msra.mxu0 %v6200
    %6213 = vmatprep.subr.mxu0 0.0
    %6214 = vmatpush1.msra.mxu0 %v6202
    %6215 = vmatprep.subr.mxu0 0.0
    %6216 = vmatpush1.msra.mxu0 0.0
    %6217 = vmatprep.subr.mxu0 0.0
    %6218 = vmatpush1.msra.mxu0 0.0
    %6219 = vmatprep.subr.mxu0 0.0
    %6220 = vmatpush1.msra.mxu0 0.0
    %6221 = vmatprep.subr.mxu0 0.0
    %6222 = vmatpush1.msra.mxu0 0.0
    %6223 = vmatprep.subr.mxu0 0.0
    %6224 = vmatpush1.msra.mxu0 0.0
    %6225 = vmatprep.subr.mxu0 0.0
    %6226 = vmatpush1.msra.mxu0 0.0
    %6227 = vmatprep.subr.mxu0 0.0
    %6228 = vmatpush1.msra.mxu0 0.0
    %6229 = vmatprep.subr.mxu0 0.0
    %6230 = vmatpush1.msra.mxu0 0.0
    %6231 = vmatprep.subr.mxu0 0.0
    %6232 = vmatpush1.msra.mxu0 0.0
    %6233 = vmatprep.subr.mxu0 0.0
    %6234 = vmatpush1.msra.mxu0 0.0
    %6235 = vmatprep.subr.mxu0 0.0
    %6236 = vmatpush1.msra.mxu0 0.0
    %6237 = vmatprep.subr.mxu0 0.0
    %6238 = vmatpush1.msra.mxu0 0.0
    %6239 = vmatprep.subr.mxu0 0.0
    %6240 = vmatpush1.msra.mxu0 0.0
    %6241 = vmatprep.subr.mxu0 0.0
    %6242 = vmatpush1.msra.mxu0 0.0
    %6243 = vmatprep.subr.mxu0 0.0
    %6244 = vmatpush1.msra.mxu0 0.0
    %6245 = vmatprep.subr.mxu0 0.0
    %6246 = vmatpush1.msra.mxu0 0.0
    %6247 = vmatprep.subr.mxu0 0.0
    %6248 = vmatpush1.msra.mxu0 0.0
    %6249 = vmatprep.subr.mxu0 0.0
    %6250 = vmatpush1.msra.mxu0 0.0
    %6251 = vmatprep.subr.mxu0 0.0
    %6252 = vmatpush1.msra.mxu0 0.0
    %6253 = vmatprep.subr.mxu0 0.0
    %6254 = vmatpush1.msra.mxu0 0.0
    %6255 = vmatprep.subr.mxu0 0.0
    %6256 = vmatpush1.msra.mxu0 0.0
    %6257 = vmatprep.subr.mxu0 0.0
    %6258 = vmatpush1.msra.mxu0 0.0
    %6259 = vmatprep.subr.mxu0 0.0
    %6260 = vmatpush1.msra.mxu0 0.0
    %6261 = vmatprep.subr.mxu0 0.0
    %6262 = vmatpush1.msra.mxu0 0.0
    %6263 = vmatprep.subr.mxu0 0.0
    %6264 = vmatpush1.msra.mxu0 0.0
    %6265 = vmatprep.subr.mxu0 0.0
    %6266 = vmatpush1.msra.mxu0 0.0
    %6267 = vmatprep.subr.mxu0 0.0
    %6268 = vmatpush1.msra.mxu0 0.0
    %6269 = vmatprep.subr.mxu0 0.0
    %6270 = vmatpush1.msra.mxu0 0.0
    %6271 = vmatprep.subr.mxu0 0.0
    %6272 = vmatpush1.msra.mxu0 0.0
    %6273 = vmatprep.subr.mxu0 0.0
    %6274 = vmatpush1.msra.mxu0 0.0
    %6275 = vmatprep.mubr.f32.mxu0 0.0
    %6276 = vmatmul.mubr.f32.gmra.mrb[0].mxu0 %v6206
    %v6277 = vpop.f32.mrb[0].mxu0
    %v6278 = vadd.f32 0.0, %v6277
    %v6279 = vpop.f32.mrb[0].mxu0
    %6280 = vmatprep.mubr.f32.mxu0 0.0
    %6281 = vmatmul.mubr.f32.gmra.mrb[0].mxu0 %v6209
    %v6282 = vpop.f32.mrb[0].mxu0
    %v6283 = vadd.f32 0.0, %v6282
    %v6284 = vpop.f32.mrb[0].mxu0
    %6285 = vdwg.mxu0
    %v6286 = vadd.f32 %v6195, %v6278
    %v6287 = vadd.f32 %v6196, %v6283
    %v6288 = vld [vmem:[%s5 + $0x2d0] sm:$0xff]
    %v6289 = vld [vmem:[%s5 + $0x2d8] sm:$0xff]
    %v6291 = vsel %vm232, %v6288, 0
    %v6294 = vsel %vm232, %v6289, 0
    %6296 = vmatprep.subr.mxu0 0.0
    %6297 = vmatpush1.msra.mxu0 %v4106
    %6298 = vmatprep.subr.mxu0 0.0
    %6299 = vmatpush1.msra.mxu0 %v4112
    %6300 = vmatprep.subr.mxu0 0.0
    %6301 = vmatpush1.msra.mxu0 0.0
    %6302 = vmatprep.subr.mxu0 0.0
    %6303 = vmatpush1.msra.mxu0 0.0
    %6304 = vmatprep.subr.mxu0 0.0
    %6305 = vmatpush1.msra.mxu0 0.0
    %6306 = vmatprep.subr.mxu0 0.0
    %6307 = vmatpush1.msra.mxu0 0.0
    %6308 = vmatprep.subr.mxu0 0.0
    %6309 = vmatpush1.msra.mxu0 0.0
    %6310 = vmatprep.subr.mxu0 0.0
    %6311 = vmatpush1.msra.mxu0 0.0
    %6312 = vmatprep.subr.mxu0 0.0
    %6313 = vmatpush1.msra.mxu0 0.0
    %6314 = vmatprep.subr.mxu0 0.0
    %6315 = vmatpush1.msra.mxu0 0.0
    %6316 = vmatprep.subr.mxu0 0.0
    %6317 = vmatpush1.msra.mxu0 0.0
    %6318 = vmatprep.subr.mxu0 0.0
    %6319 = vmatpush1.msra.mxu0 0.0
    %6320 = vmatprep.subr.mxu0 0.0
    %6321 = vmatpush1.msra.mxu0 0.0
    %6322 = vmatprep.subr.mxu0 0.0
    %6323 = vmatpush1.msra.mxu0 0.0
    %6324 = vmatprep.subr.mxu0 0.0
    %6325 = vmatpush1.msra.mxu0 0.0
    %6326 = vmatprep.subr.mxu0 0.0
    %6327 = vmatpush1.msra.mxu0 0.0
    %6328 = vmatprep.subr.mxu0 0.0
    %6329 = vmatpush1.msra.mxu0 0.0
    %6330 = vmatprep.subr.mxu0 0.0
    %6331 = vmatpush1.msra.mxu0 0.0
    %6332 = vmatprep.subr.mxu0 0.0
    %6333 = vmatpush1.msra.mxu0 0.0
    %6334 = vmatprep.subr.mxu0 0.0
    %6335 = vmatpush1.msra.mxu0 0.0
    %6336 = vmatprep.subr.mxu0 0.0
    %6337 = vmatpush1.msra.mxu0 0.0
    %6338 = vmatprep.subr.mxu0 0.0
    %6339 = vmatpush1.msra.mxu0 0.0
    %6340 = vmatprep.subr.mxu0 0.0
    %6341 = vmatpush1.msra.mxu0 0.0
    %6342 = vmatprep.subr.mxu0 0.0
    %6343 = vmatpush1.msra.mxu0 0.0
    %6344 = vmatprep.subr.mxu0 0.0
    %6345 = vmatpush1.msra.mxu0 0.0
    %6346 = vmatprep.subr.mxu0 0.0
    %6347 = vmatpush1.msra.mxu0 0.0
    %6348 = vmatprep.subr.mxu0 0.0
    %6349 = vmatpush1.msra.mxu0 0.0
    %6350 = vmatprep.subr.mxu0 0.0
    %6351 = vmatpush1.msra.mxu0 0.0
    %6352 = vmatprep.subr.mxu0 0.0
    %6353 = vmatpush1.msra.mxu0 0.0
    %6354 = vmatprep.subr.mxu0 0.0
    %6355 = vmatpush1.msra.mxu0 0.0
    %6356 = vmatprep.subr.mxu0 0.0
    %6357 = vmatpush1.msra.mxu0 0.0
    %6358 = vmatprep.subr.mxu0 0.0
    %6359 = vmatpush1.msra.mxu0 0.0
    %6360 = vmatprep.mubr.f32.mxu0 0.0
    %6361 = vmatmul.mubr.f32.gmra.mrb[0].mxu0 %v6291
    %v6362 = vpop.f32.mrb[0].mxu0
    %v6363 = vadd.f32 0.0, %v6362
    %v6364 = vpop.f32.mrb[0].mxu0
    %6365 = vmatprep.mubr.f32.mxu0 0.0
    %6366 = vmatmul.mubr.f32.gmra.mrb[0].mxu0 %v6294
    %v6367 = vpop.f32.mrb[0].mxu0
    %v6368 = vadd.f32 0.0, %v6367
    %v6369 = vpop.f32.mrb[0].mxu0
    %6370 = vdwg.mxu0
    %v6371 = vadd.f32 %v6286, %v6363
    %v6372 = vadd.f32 %v6287, %v6368
    %v6373 = vld [vmem:[#allocation8 + $0x910] sm:$0xff]
    %v6374 = vld [vmem:[#allocation8 + $0x918] sm:$0xff]
    %v6375 = vld [vmem:[#allocation8 + $0x920] sm:$0xff]
    %v6376 = vld [vmem:[#allocation8 + $0x928] sm:$0xff]
    %v6377 = vld [vmem:[#allocation8 + $0x930] sm:$0xff]
    %v6378 = vld [vmem:[#allocation8 + $0x938] sm:$0xff]
    %v6379 = vld [vmem:[#allocation8 + $0x940] sm:$0x1]
    %v6380 = vld [vmem:[#allocation5] sm:$0xff]
    %v6381 = vlaneseq
    %v6382 = vshrl.u32 %v6381, 7
    %v6383 = vsub.s32 0, %v6382
    %v6384 = vrot.slane %v6379, %v6383
    %v6386 = vsel %vm232, %v6380, 0
    %6388 = vmatprep.subr.mxu0 0.0
    %6389 = vmatpush1.msra.mxu0 %v6373
    %6390 = vmatprep.subr.mxu0 0.0
    %6391 = vmatpush1.msra.mxu0 %v6374
    %6392 = vmatprep.subr.mxu0 0.0
    %6393 = vmatpush1.msra.mxu0 0.0
    %6394 = vmatprep.subr.mxu0 0.0
    %6395 = vmatpush1.msra.mxu0 0.0
    %6396 = vmatprep.subr.mxu0 0.0
    %6397 = vmatpush1.msra.mxu0 0.0
    %6398 = vmatprep.subr.mxu0 0.0
    %6399 = vmatpush1.msra.mxu0 0.0
    %6400 = vmatprep.subr.mxu0 0.0
    %6401 = vmatpush1.msra.mxu0 0.0
    %6402 = vmatprep.subr.mxu0 0.0
    %6403 = vmatpush1.msra.mxu0 0.0
    %6404 = vmatprep.subr.mxu0 0.0
    %6405 = vmatpush1.msra.mxu0 0.0
    %6406 = vmatprep.subr.mxu0 0.0
    %6407 = vmatpush1.msra.mxu0 0.0
    %6408 = vmatprep.subr.mxu0 0.0
    %6409 = vmatpush1.msra.mxu0 0.0
    %6410 = vmatprep.subr.mxu0 0.0
    %6411 = vmatpush1.msra.mxu0 0.0
    %6412 = vmatprep.subr.mxu0 0.0
    %6413 = vmatpush1.msra.mxu0 0.0
    %6414 = vmatprep.subr.mxu0 0.0
    %6415 = vmatpush1.msra.mxu0 0.0
    %6416 = vmatprep.subr.mxu0 0.0
    %6417 = vmatpush1.msra.mxu0 0.0
    %6418 = vmatprep.subr.mxu0 0.0
    %6419 = vmatpush1.msra.mxu0 0.0
    %6420 = vmatprep.subr.mxu0 0.0
    %6421 = vmatpush1.msra.mxu0 0.0
    %6422 = vmatprep.subr.mxu0 0.0
    %6423 = vmatpush1.msra.mxu0 0.0
    %6424 = vmatprep.subr.mxu0 0.0
    %6425 = vmatpush1.msra.mxu0 0.0
    %6426 = vmatprep.subr.mxu0 0.0
    %6427 = vmatpush1.msra.mxu0 0.0
    %6428 = vmatprep.subr.mxu0 0.0
    %6429 = vmatpush1.msra.mxu0 0.0
    %6430 = vmatprep.subr.mxu0 0.0
    %6431 = vmatpush1.msra.mxu0 0.0
    %6432 = vmatprep.subr.mxu0 0.0
    %6433 = vmatpush1.msra.mxu0 0.0
    %6434 = vmatprep.subr.mxu0 0.0
    %6435 = vmatpush1.msra.mxu0 0.0
    %6436 = vmatprep.subr.mxu0 0.0
    %6437 = vmatpush1.msra.mxu0 0.0
    %6438 = vmatprep.subr.mxu0 0.0
    %6439 = vmatpush1.msra.mxu0 0.0
    %6440 = vmatprep.subr.mxu0 0.0
    %6441 = vmatpush1.msra.mxu0 0.0
    %6442 = vmatprep.subr.mxu0 0.0
    %6443 = vmatpush1.msra.mxu0 0.0
    %6444 = vmatprep.subr.mxu0 0.0
    %6445 = vmatpush1.msra.mxu0 0.0
    %6446 = vmatprep.subr.mxu0 0.0
    %6447 = vmatpush1.msra.mxu0 0.0
    %6448 = vmatprep.subr.mxu0 0.0
    %6449 = vmatpush1.msra.mxu0 0.0
    %6450 = vmatprep.subr.mxu0 0.0
    %6451 = vmatpush1.msra.mxu0 0.0
    %6452 = vmatprep.mubr.f32.mxu0 0.0
    %6453 = vmatmul.mubr.f32.gmra.mrb[0].mxu0 %v6386
    %v6454 = vpop.f32.mrb[0].mxu0
    %v6455 = vadd.f32 %v6384, %v6454
    %v6456 = vpop.f32.mrb[0].mxu0
    %6457 = vdwg.mxu0
    %vm6458 = vcmask 261120
    %v6460 = vsel %vm6458, 0.0, 0
    %6462 = vmatprep.subr.mxu0 0.0
    %6463 = vmatpush1.msra.mxu0 %v6375
    %6464 = vmatprep.subr.mxu0 0.0
    %6465 = vmatpush1.msra.mxu0 %v6376
    %6466 = vmatprep.subr.mxu0 0.0
    %6467 = vmatpush1.msra.mxu0 %v6377
    %6468 = vmatprep.subr.mxu0 0.0
    %6469 = vmatpush1.msra.mxu0 %v6378
    %6470 = vmatprep.subr.mxu0 0.0
    %6471 = vmatpush1.msra.mxu0 0.0
    %6472 = vmatprep.subr.mxu0 0.0
    %6473 = vmatpush1.msra.mxu0 0.0
    %6474 = vmatprep.subr.mxu0 0.0
    %6475 = vmatpush1.msra.mxu0 0.0
    %6476 = vmatprep.subr.mxu0 0.0
    %6477 = vmatpush1.msra.mxu0 0.0
    %6478 = vmatprep.subr.mxu0 0.0
    %6479 = vmatpush1.msra.mxu0 0.0
    %6480 = vmatprep.subr.mxu0 0.0
    %6481 = vmatpush1.msra.mxu0 0.0
    %6482 = vmatprep.subr.mxu0 0.0
    %6483 = vmatpush1.msra.mxu0 0.0
    %6484 = vmatprep.subr.mxu0 0.0
    %6485 = vmatpush1.msra.mxu0 0.0
    %6486 = vmatprep.subr.mxu0 0.0
    %6487 = vmatpush1.msra.mxu0 0.0
    %6488 = vmatprep.subr.mxu0 0.0
    %6489 = vmatpush1.msra.mxu0 0.0
    %6490 = vmatprep.subr.mxu0 0.0
    %6491 = vmatpush1.msra.mxu0 0.0
    %6492 = vmatprep.subr.mxu0 0.0
    %6493 = vmatpush1.msra.mxu0 0.0
    %6494 = vmatprep.subr.mxu0 0.0
    %6495 = vmatpush1.msra.mxu0 0.0
    %6496 = vmatprep.subr.mxu0 0.0
    %6497 = vmatpush1.msra.mxu0 0.0
    %6498 = vmatprep.subr.mxu0 0.0
    %6499 = vmatpush1.msra.mxu0 0.0
    %6500 = vmatprep.subr.mxu0 0.0
    %6501 = vmatpush1.msra.mxu0 0.0
    %6502 = vmatprep.subr.mxu0 0.0
    %6503 = vmatpush1.msra.mxu0 0.0
    %6504 = vmatprep.subr.mxu0 0.0
    %6505 = vmatpush1.msra.mxu0 0.0
    %6506 = vmatprep.subr.mxu0 0.0
    %6507 = vmatpush1.msra.mxu0 0.0
    %6508 = vmatprep.subr.mxu0 0.0
    %6509 = vmatpush1.msra.mxu0 0.0
    %6510 = vmatprep.subr.mxu0 0.0
    %6511 = vmatpush1.msra.mxu0 0.0
    %6512 = vmatprep.subr.mxu0 0.0
    %6513 = vmatpush1.msra.mxu0 0.0
    %6514 = vmatprep.subr.mxu0 0.0
    %6515 = vmatpush1.msra.mxu0 0.0
    %6516 = vmatprep.subr.mxu0 0.0
    %6517 = vmatpush1.msra.mxu0 0.0
    %6518 = vmatprep.subr.mxu0 0.0
    %6519 = vmatpush1.msra.mxu0 0.0
    %6520 = vmatprep.subr.mxu0 0.0
    %6521 = vmatpush1.msra.mxu0 0.0
    %6522 = vmatprep.subr.mxu0 0.0
    %6523 = vmatpush1.msra.mxu0 0.0
    %6524 = vmatprep.subr.mxu0 0.0
    %6525 = vmatpush1.msra.mxu0 0.0
    %6526 = vmatprep.mubr.f32.mxu0 0.0
    %6527 = vmatmul.mubr.f32.gmra.mrb[0].mxu0 %v6460
    %v6528 = vpop.f32.mrb[0].mxu0
    %v6529 = vadd.f32 0.0, %v6528
    %v6530 = vpop.f32.mrb[0].mxu0
    %6531 = vdwg.mxu0
    %v6532 = vadd.f32 %v6455, %v6529
    %v6533 = vxor.u32 %v6532, 2147483648
    %v6534 = vmul.f32 %v6533, 1.442695
    %v6535 = vpow.pop %v6534
    %v6536 = vadd.f32 %v6535, 1.0
    %v6537 = vrcp.pop %v6536
    %v6538 = vmul.f32 1.0, %v6537
    %v6539 = vtanh.pop %v6532
    %v6540 = vmul.f32 %v6538, 0.0
    %6542 = vrot.lane.b32.xlu0 %v6539, 64
    %v6543 = vpop.permute.xlu0 %6542
    %v6545 = vmul.f32 %v6538, %v6543
    %6547 = vrot.lane.b32.xlu0 %v6545, 32
    %v6548 = vpop.permute.xlu0 %6547
    %v6550 = vadd.f32 %v6540, %v6548
    %v6551 = vtanh.pop %v6550
    %6553 = vrot.lane.b32.xlu0 %v6551, 64
    %v6554 = vpop.permute.xlu0 %6553
    %v6556 = vmul.f32 %v6538, %v6554
    %6558 = vrot.lane.b32.xlu0 %v6556, 32
    %v6559 = vpop.permute.xlu0 %6558
    %v6560 = vsel %vm6458, %v6559, 0
    %6562 = vmatprep.subr.mxu0 0.0
    %6563 = vmatpush1.msra.mxu0 %v6375
    %6564 = vmatprep.subr.mxu0 0.0
    %6565 = vmatpush1.msra.mxu0 %v6376
    %6566 = vmatprep.subr.mxu0 0.0
    %6567 = vmatpush1.msra.mxu0 %v6377
    %6568 = vmatprep.subr.mxu0 0.0
    %6569 = vmatpush1.msra.mxu0 %v6378
    %6570 = vmatprep.subr.mxu0 0.0
    %6571 = vmatpush1.msra.mxu0 0.0
    %6572 = vmatprep.subr.mxu0 0.0
    %6573 = vmatpush1.msra.mxu0 0.0
    %6574 = vmatprep.subr.mxu0 0.0
    %6575 = vmatpush1.msra.mxu0 0.0
    %6576 = vmatprep.subr.mxu0 0.0
    %6577 = vmatpush1.msra.mxu0 0.0
    %6578 = vmatprep.subr.mxu0 0.0
    %6579 = vmatpush1.msra.mxu0 0.0
    %6580 = vmatprep.subr.mxu0 0.0
    %6581 = vmatpush1.msra.mxu0 0.0
    %6582 = vmatprep.subr.mxu0 0.0
    %6583 = vmatpush1.msra.mxu0 0.0
    %6584 = vmatprep.subr.mxu0 0.0
    %6585 = vmatpush1.msra.mxu0 0.0
    %6586 = vmatprep.subr.mxu0 0.0
    %6587 = vmatpush1.msra.mxu0 0.0
    %6588 = vmatprep.subr.mxu0 0.0
    %6589 = vmatpush1.msra.mxu0 0.0
    %6590 = vmatprep.subr.mxu0 0.0
    %6591 = vmatpush1.msra.mxu0 0.0
    %6592 = vmatprep.subr.mxu0 0.0
    %6593 = vmatpush1.msra.mxu0 0.0
    %6594 = vmatprep.subr.mxu0 0.0
    %6595 = vmatpush1.msra.mxu0 0.0
    %6596 = vmatprep.subr.mxu0 0.0
    %6597 = vmatpush1.msra.mxu0 0.0
    %6598 = vmatprep.subr.mxu0 0.0
    %6599 = vmatpush1.msra.mxu0 0.0
    %6600 = vmatprep.subr.mxu0 0.0
    %6601 = vmatpush1.msra.mxu0 0.0
    %6602 = vmatprep.subr.mxu0 0.0
    %6603 = vmatpush1.msra.mxu0 0.0
    %6604 = vmatprep.subr.mxu0 0.0
    %6605 = vmatpush1.msra.mxu0 0.0
    %6606 = vmatprep.subr.mxu0 0.0
    %6607 = vmatpush1.msra.mxu0 0.0
    %6608 = vmatprep.subr.mxu0 0.0
    %6609 = vmatpush1.msra.mxu0 0.0
    %6610 = vmatprep.subr.mxu0 0.0
    %6611 = vmatpush1.msra.mxu0 0.0
    %6612 = vmatprep.subr.mxu0 0.0
    %6613 = vmatpush1.msra.mxu0 0.0
    %6614 = vmatprep.subr.mxu0 0.0
    %6615 = vmatpush1.msra.mxu0 0.0
    %6616 = vmatprep.subr.mxu0 0.0
    %6617 = vmatpush1.msra.mxu0 0.0
    %6618 = vmatprep.subr.mxu0 0.0
    %6619 = vmatpush1.msra.mxu0 0.0
    %6620 = vmatprep.subr.mxu0 0.0
    %6621 = vmatpush1.msra.mxu0 0.0
    %6622 = vmatprep.subr.mxu0 0.0
    %6623 = vmatpush1.msra.mxu0 0.0
    %6624 = vmatprep.subr.mxu0 0.0
    %6625 = vmatpush1.msra.mxu0 0.0
    %6626 = vmatprep.mubr.f32.mxu0 0.0
    %6627 = vmatmul.mubr.f32.gmra.mrb[0].mxu0 %v6560
    %v6628 = vpop.f32.mrb[0].mxu0
    %v6629 = vadd.f32 0.0, %v6628
    %v6630 = vpop.f32.mrb[0].mxu0
    %6631 = vdwg.mxu0
    %v6633 = vrot.slane %v6629, 7
    %v6635 = vadd.f32 %v6455, %v6633
    %v6636 = vxor.u32 %v6635, 2147483648
    %v6637 = vmul.f32 %v6636, 1.442695
    %v6638 = vpow.pop %v6637
    %v6639 = vadd.f32 %v6638, 1.0
    %v6640 = vrcp.pop %v6639
    %v6641 = vmul.f32 1.0, %v6640
    %v6642 = vtanh.pop %v6635
    %v6644 = vrot.slane %v6550, 7
    %v6646 = vmul.f32 %v6641, %v6644
    %6648 = vrot.lane.b32.xlu0 %v6642, 64
    %v6649 = vpop.permute.xlu0 %6648
    %v6651 = vmul.f32 %v6641, %v6649
    %6653 = vrot.lane.b32.xlu0 %v6651, 32
    %v6654 = vpop.permute.xlu0 %6653
    %v6656 = vadd.f32 %v6646, %v6654
    %v6657 = vtanh.pop %v6656
    %6659 = vrot.lane.b32.xlu0 %v6657, 64
    %v6660 = vpop.permute.xlu0 %6659
    %v6662 = vmul.f32 %v6641, %v6660
    %v6664 = vrot.slane %v6662, 1
    %6665 = vrot.lane.b32.xlu0 %v6664, 32
    %v6666 = vpop.permute.xlu0 %6665
    %v6667 = vsel %vm6458, %v6666, 0
    %6669 = vmatprep.subr.mxu0 0.0
    %6670 = vmatpush1.msra.mxu0 %v6375
    %6671 = vmatprep.subr.mxu0 0.0
    %6672 = vmatpush1.msra.mxu0 %v6376
    %6673 = vmatprep.subr.mxu0 0.0
    %6674 = vmatpush1.msra.mxu0 %v6377
    %6675 = vmatprep.subr.mxu0 0.0
    %6676 = vmatpush1.msra.mxu0 %v6378
    %6677 = vmatprep.subr.mxu0 0.0
    %6678 = vmatpush1.msra.mxu0 0.0
    %6679 = vmatprep.subr.mxu0 0.0
    %6680 = vmatpush1.msra.mxu0 0.0
    %6681 = vmatprep.subr.mxu0 0.0
    %6682 = vmatpush1.msra.mxu0 0.0
    %6683 = vmatprep.subr.mxu0 0.0
    %6684 = vmatpush1.msra.mxu0 0.0
    %6685 = vmatprep.subr.mxu0 0.0
    %6686 = vmatpush1.msra.mxu0 0.0
    %6687 = vmatprep.subr.mxu0 0.0
    %6688 = vmatpush1.msra.mxu0 0.0
    %6689 = vmatprep.subr.mxu0 0.0
    %6690 = vmatpush1.msra.mxu0 0.0
    %6691 = vmatprep.subr.mxu0 0.0
    %6692 = vmatpush1.msra.mxu0 0.0
    %6693 = vmatprep.subr.mxu0 0.0
    %6694 = vmatpush1.msra.mxu0 0.0
    %6695 = vmatprep.subr.mxu0 0.0
    %6696 = vmatpush1.msra.mxu0 0.0
    %6697 = vmatprep.subr.mxu0 0.0
    %6698 = vmatpush1.msra.mxu0 0.0
    %6699 = vmatprep.subr.mxu0 0.0
    %6700 = vmatpush1.msra.mxu0 0.0
    %6701 = vmatprep.subr.mxu0 0.0
    %6702 = vmatpush1.msra.mxu0 0.0
    %6703 = vmatprep.subr.mxu0 0.0
    %6704 = vmatpush1.msra.mxu0 0.0
    %6705 = vmatprep.subr.mxu0 0.0
    %6706 = vmatpush1.msra.mxu0 0.0
    %6707 = vmatprep.subr.mxu0 0.0
    %6708 = vmatpush1.msra.mxu0 0.0
    %6709 = vmatprep.subr.mxu0 0.0
    %6710 = vmatpush1.msra.mxu0 0.0
    %6711 = vmatprep.subr.mxu0 0.0
    %6712 = vmatpush1.msra.mxu0 0.0
    %6713 = vmatprep.subr.mxu0 0.0
    %6714 = vmatpush1.msra.mxu0 0.0
    %6715 = vmatprep.subr.mxu0 0.0
    %6716 = vmatpush1.msra.mxu0 0.0
    %6717 = vmatprep.subr.mxu0 0.0
    %6718 = vmatpush1.msra.mxu0 0.0
    %6719 = vmatprep.subr.mxu0 0.0
    %6720 = vmatpush1.msra.mxu0 0.0
    %6721 = vmatprep.subr.mxu0 0.0
    %6722 = vmatpush1.msra.mxu0 0.0
    %6723 = vmatprep.subr.mxu0 0.0
    %6724 = vmatpush1.msra.mxu0 0.0
    %6725 = vmatprep.subr.mxu0 0.0
    %6726 = vmatpush1.msra.mxu0 0.0
    %6727 = vmatprep.subr.mxu0 0.0
    %6728 = vmatpush1.msra.mxu0 0.0
    %6729 = vmatprep.subr.mxu0 0.0
    %6730 = vmatpush1.msra.mxu0 0.0
    %6731 = vmatprep.subr.mxu0 0.0
    %6732 = vmatpush1.msra.mxu0 0.0
    %6733 = vmatprep.mubr.f32.mxu0 0.0
    %6734 = vmatmul.mubr.f32.gmra.mrb[0].mxu0 %v6667
    %v6735 = vpop.f32.mrb[0].mxu0
    %v6736 = vadd.f32 0.0, %v6735
    %v6737 = vpop.f32.mrb[0].mxu0
    %6738 = vdwg.mxu0
    %v6740 = vrot.slane %v6736, 6
    %v6742 = vadd.f32 %v6455, %v6740
    %v6743 = vxor.u32 %v6742, 2147483648
    %v6744 = vmul.f32 %v6743, 1.442695
    %v6745 = vpow.pop %v6744
    %v6746 = vadd.f32 %v6745, 1.0
    %v6747 = vrcp.pop %v6746
    %v6748 = vmul.f32 1.0, %v6747
    %v6749 = vtanh.pop %v6742
    %v6751 = vrot.slane %v6656, 7
    %v6753 = vmul.f32 %v6748, %v6751
    %6755 = vrot.lane.b32.xlu0 %v6749, 64
    %v6756 = vpop.permute.xlu0 %6755
    %v6758 = vmul.f32 %v6748, %v6756
    %6760 = vrot.lane.b32.xlu0 %v6758, 32
    %v6761 = vpop.permute.xlu0 %6760
    %v6763 = vadd.f32 %v6753, %v6761
    %v6764 = vtanh.pop %v6763
    %6766 = vrot.lane.b32.xlu0 %v6764, 64
    %v6767 = vpop.permute.xlu0 %6766
    %v6769 = vmul.f32 %v6748, %v6767
    %v6771 = vrot.slane %v6769, 2
    %6772 = vrot.lane.b32.xlu0 %v6771, 32
    %v6773 = vpop.permute.xlu0 %6772
    %v6774 = vsel %vm6458, %v6773, 0
    %6776 = vmatprep.subr.mxu0 0.0
    %6777 = vmatpush1.msra.mxu0 %v6375
    %6778 = vmatprep.subr.mxu0 0.0
    %6779 = vmatpush1.msra.mxu0 %v6376
    %6780 = vmatprep.subr.mxu0 0.0
    %6781 = vmatpush1.msra.mxu0 %v6377
    %6782 = vmatprep.subr.mxu0 0.0
    %6783 = vmatpush1.msra.mxu0 %v6378
    %6784 = vmatprep.subr.mxu0 0.0
    %6785 = vmatpush1.msra.mxu0 0.0
    %6786 = vmatprep.subr.mxu0 0.0
    %6787 = vmatpush1.msra.mxu0 0.0
    %6788 = vmatprep.subr.mxu0 0.0
    %6789 = vmatpush1.msra.mxu0 0.0
    %6790 = vmatprep.subr.mxu0 0.0
    %6791 = vmatpush1.msra.mxu0 0.0
    %6792 = vmatprep.subr.mxu0 0.0
    %6793 = vmatpush1.msra.mxu0 0.0
    %6794 = vmatprep.subr.mxu0 0.0
    %6795 = vmatpush1.msra.mxu0 0.0
    %6796 = vmatprep.subr.mxu0 0.0
    %6797 = vmatpush1.msra.mxu0 0.0
    %6798 = vmatprep.subr.mxu0 0.0
    %6799 = vmatpush1.msra.mxu0 0.0
    %6800 = vmatprep.subr.mxu0 0.0
    %6801 = vmatpush1.msra.mxu0 0.0
    %6802 = vmatprep.subr.mxu0 0.0
    %6803 = vmatpush1.msra.mxu0 0.0
    %6804 = vmatprep.subr.mxu0 0.0
    %6805 = vmatpush1.msra.mxu0 0.0
    %6806 = vmatprep.subr.mxu0 0.0
    %6807 = vmatpush1.msra.mxu0 0.0
    %6808 = vmatprep.subr.mxu0 0.0
    %6809 = vmatpush1.msra.mxu0 0.0
    %6810 = vmatprep.subr.mxu0 0.0
    %6811 = vmatpush1.msra.mxu0 0.0
    %6812 = vmatprep.subr.mxu0 0.0
    %6813 = vmatpush1.msra.mxu0 0.0
    %6814 = vmatprep.subr.mxu0 0.0
    %6815 = vmatpush1.msra.mxu0 0.0
    %6816 = vmatprep.subr.mxu0 0.0
    %6817 = vmatpush1.msra.mxu0 0.0
    %6818 = vmatprep.subr.mxu0 0.0
    %6819 = vmatpush1.msra.mxu0 0.0
    %6820 = vmatprep.subr.mxu0 0.0
    %6821 = vmatpush1.msra.mxu0 0.0
    %6822 = vmatprep.subr.mxu0 0.0
    %6823 = vmatpush1.msra.mxu0 0.0
    %6824 = vmatprep.subr.mxu0 0.0
    %6825 = vmatpush1.msra.mxu0 0.0
    %6826 = vmatprep.subr.mxu0 0.0
    %6827 = vmatpush1.msra.mxu0 0.0
    %6828 = vmatprep.subr.mxu0 0.0
    %6829 = vmatpush1.msra.mxu0 0.0
    %6830 = vmatprep.subr.mxu0 0.0
    %6831 = vmatpush1.msra.mxu0 0.0
    %6832 = vmatprep.subr.mxu0 0.0
    %6833 = vmatpush1.msra.mxu0 0.0
    %6834 = vmatprep.subr.mxu0 0.0
    %6835 = vmatpush1.msra.mxu0 0.0
    %6836 = vmatprep.subr.mxu0 0.0
    %6837 = vmatpush1.msra.mxu0 0.0
    %6838 = vmatprep.subr.mxu0 0.0
    %6839 = vmatpush1.msra.mxu0 0.0
    %6840 = vmatprep.mubr.f32.mxu0 0.0
    %6841 = vmatmul.mubr.f32.gmra.mrb[0].mxu0 %v6774
    %v6842 = vpop.f32.mrb[0].mxu0
    %v6843 = vadd.f32 0.0, %v6842
    %v6844 = vpop.f32.mrb[0].mxu0
    %6845 = vdwg.mxu0
    %v6847 = vrot.slane %v6843, 5
    %v6849 = vadd.f32 %v6455, %v6847
    %v6850 = vxor.u32 %v6849, 2147483648
    %v6851 = vmul.f32 %v6850, 1.442695
    %v6852 = vpow.pop %v6851
    %v6853 = vadd.f32 %v6852, 1.0
    %v6854 = vrcp.pop %v6853
    %v6855 = vmul.f32 1.0, %v6854
    %v6856 = vtanh.pop %v6849
    %v6858 = vrot.slane %v6763, 7
    %v6860 = vmul.f32 %v6855, %v6858
    %6862 = vrot.lane.b32.xlu0 %v6856, 64
    %v6863 = vpop.permute.xlu0 %6862
    %v6865 = vmul.f32 %v6855, %v6863
    %6867 = vrot.lane.b32.xlu0 %v6865, 32
    %v6868 = vpop.permute.xlu0 %6867
    %v6870 = vadd.f32 %v6860, %v6868
    %v6871 = vtanh.pop %v6870
    %6873 = vrot.lane.b32.xlu0 %v6871, 64
    %v6874 = vpop.permute.xlu0 %6873
    %v6876 = vmul.f32 %v6855, %v6874
    %v6878 = vrot.slane %v6876, 3
    %6879 = vrot.lane.b32.xlu0 %v6878, 32
    %v6880 = vpop.permute.xlu0 %6879
    %v6881 = vsel %vm6458, %v6880, 0
    %6883 = vmatprep.subr.mxu0 0.0
    %6884 = vmatpush1.msra.mxu0 %v6375
    %6885 = vmatprep.subr.mxu0 0.0
    %6886 = vmatpush1.msra.mxu0 %v6376
    %6887 = vmatprep.subr.mxu0 0.0
    %6888 = vmatpush1.msra.mxu0 %v6377
    %6889 = vmatprep.subr.mxu0 0.0
    %6890 = vmatpush1.msra.mxu0 %v6378
    %6891 = vmatprep.subr.mxu0 0.0
    %6892 = vmatpush1.msra.mxu0 0.0
    %6893 = vmatprep.subr.mxu0 0.0
    %6894 = vmatpush1.msra.mxu0 0.0
    %6895 = vmatprep.subr.mxu0 0.0
    %6896 = vmatpush1.msra.mxu0 0.0
    %6897 = vmatprep.subr.mxu0 0.0
    %6898 = vmatpush1.msra.mxu0 0.0
    %6899 = vmatprep.subr.mxu0 0.0
    %6900 = vmatpush1.msra.mxu0 0.0
    %6901 = vmatprep.subr.mxu0 0.0
    %6902 = vmatpush1.msra.mxu0 0.0
    %6903 = vmatprep.subr.mxu0 0.0
    %6904 = vmatpush1.msra.mxu0 0.0
    %6905 = vmatprep.subr.mxu0 0.0
    %6906 = vmatpush1.msra.mxu0 0.0
    %6907 = vmatprep.subr.mxu0 0.0
    %6908 = vmatpush1.msra.mxu0 0.0
    %6909 = vmatprep.subr.mxu0 0.0
    %6910 = vmatpush1.msra.mxu0 0.0
    %6911 = vmatprep.subr.mxu0 0.0
    %6912 = vmatpush1.msra.mxu0 0.0
    %6913 = vmatprep.subr.mxu0 0.0
    %6914 = vmatpush1.msra.mxu0 0.0
    %6915 = vmatprep.subr.mxu0 0.0
    %6916 = vmatpush1.msra.mxu0 0.0
    %6917 = vmatprep.subr.mxu0 0.0
    %6918 = vmatpush1.msra.mxu0 0.0
    %6919 = vmatprep.subr.mxu0 0.0
    %6920 = vmatpush1.msra.mxu0 0.0
    %6921 = vmatprep.subr.mxu0 0.0
    %6922 = vmatpush1.msra.mxu0 0.0
    %6923 = vmatprep.subr.mxu0 0.0
    %6924 = vmatpush1.msra.mxu0 0.0
    %6925 = vmatprep.subr.mxu0 0.0
    %6926 = vmatpush1.msra.mxu0 0.0
    %6927 = vmatprep.subr.mxu0 0.0
    %6928 = vmatpush1.msra.mxu0 0.0
    %6929 = vmatprep.subr.mxu0 0.0
    %6930 = vmatpush1.msra.mxu0 0.0
    %6931 = vmatprep.subr.mxu0 0.0
    %6932 = vmatpush1.msra.mxu0 0.0
    %6933 = vmatprep.subr.mxu0 0.0
    %6934 = vmatpush1.msra.mxu0 0.0
    %6935 = vmatprep.subr.mxu0 0.0
    %6936 = vmatpush1.msra.mxu0 0.0
    %6937 = vmatprep.subr.mxu0 0.0
    %6938 = vmatpush1.msra.mxu0 0.0
    %6939 = vmatprep.subr.mxu0 0.0
    %6940 = vmatpush1.msra.mxu0 0.0
    %6941 = vmatprep.subr.mxu0 0.0
    %6942 = vmatpush1.msra.mxu0 0.0
    %6943 = vmatprep.subr.mxu0 0.0
    %6944 = vmatpush1.msra.mxu0 0.0
    %6945 = vmatprep.subr.mxu0 0.0
    %6946 = vmatpush1.msra.mxu0 0.0
    %6947 = vmatprep.mubr.f32.mxu0 0.0
    %6948 = vmatmul.mubr.f32.gmra.mrb[0].mxu0 %v6881
    %v6949 = vpop.f32.mrb[0].mxu0
    %v6950 = vadd.f32 0.0, %v6949
    %v6951 = vpop.f32.mrb[0].mxu0
    %6952 = vdwg.mxu0
    %v6954 = vrot.slane %v6950, 4
    %v6956 = vadd.f32 %v6455, %v6954
    %v6957 = vxor.u32 %v6956, 2147483648
    %v6958 = vmul.f32 %v6957, 1.442695
    %v6959 = vpow.pop %v6958
    %v6960 = vadd.f32 %v6959, 1.0
    %v6961 = vrcp.pop %v6960
    %v6962 = vmul.f32 1.0, %v6961
    %v6963 = vtanh.pop %v6956
    %v6965 = vrot.slane %v6870, 7
    %v6967 = vmul.f32 %v6962, %v6965
    %6969 = vrot.lane.b32.xlu0 %v6963, 64
    %v6970 = vpop.permute.xlu0 %6969
    %v6972 = vmul.f32 %v6962, %v6970
    %6974 = vrot.lane.b32.xlu0 %v6972, 32
    %v6975 = vpop.permute.xlu0 %6974
    %v6977 = vadd.f32 %v6967, %v6975
    %v6978 = vtanh.pop %v6977
    %6980 = vrot.lane.b32.xlu0 %v6978, 64
    %v6981 = vpop.permute.xlu0 %6980
    %v6983 = vmul.f32 %v6962, %v6981
    %v6985 = vrot.slane %v6983, 4
    %6986 = vrot.lane.b32.xlu0 %v6985, 32
    %v6987 = vpop.permute.xlu0 %6986
    %v6988 = vsel %vm6458, %v6987, 0
    %6990 = vmatprep.subr.mxu0 0.0
    %6991 = vmatpush1.msra.mxu0 %v6375
    %6992 = vmatprep.subr.mxu0 0.0
    %6993 = vmatpush1.msra.mxu0 %v6376
    %6994 = vmatprep.subr.mxu0 0.0
    %6995 = vmatpush1.msra.mxu0 %v6377
    %6996 = vmatprep.subr.mxu0 0.0
    %6997 = vmatpush1.msra.mxu0 %v6378
    %6998 = vmatprep.subr.mxu0 0.0
    %6999 = vmatpush1.msra.mxu0 0.0
    %7000 = vmatprep.subr.mxu0 0.0
    %7001 = vmatpush1.msra.mxu0 0.0
    %7002 = vmatprep.subr.mxu0 0.0
    %7003 = vmatpush1.msra.mxu0 0.0
    %7004 = vmatprep.subr.mxu0 0.0
    %7005 = vmatpush1.msra.mxu0 0.0
    %7006 = vmatprep.subr.mxu0 0.0
    %7007 = vmatpush1.msra.mxu0 0.0
    %7008 = vmatprep.subr.mxu0 0.0
    %7009 = vmatpush1.msra.mxu0 0.0
    %7010 = vmatprep.subr.mxu0 0.0
    %7011 = vmatpush1.msra.mxu0 0.0
    %7012 = vmatprep.subr.mxu0 0.0
    %7013 = vmatpush1.msra.mxu0 0.0
    %7014 = vmatprep.subr.mxu0 0.0
    %7015 = vmatpush1.msra.mxu0 0.0
    %7016 = vmatprep.subr.mxu0 0.0
    %7017 = vmatpush1.msra.mxu0 0.0
    %7018 = vmatprep.subr.mxu0 0.0
    %7019 = vmatpush1.msra.mxu0 0.0
    %7020 = vmatprep.subr.mxu0 0.0
    %7021 = vmatpush1.msra.mxu0 0.0
    %7022 = vmatprep.subr.mxu0 0.0
    %7023 = vmatpush1.msra.mxu0 0.0
    %7024 = vmatprep.subr.mxu0 0.0
    %7025 = vmatpush1.msra.mxu0 0.0
    %7026 = vmatprep.subr.mxu0 0.0
    %7027 = vmatpush1.msra.mxu0 0.0
    %7028 = vmatprep.subr.mxu0 0.0
    %7029 = vmatpush1.msra.mxu0 0.0
    %7030 = vmatprep.subr.mxu0 0.0
    %7031 = vmatpush1.msra.mxu0 0.0
    %7032 = vmatprep.subr.mxu0 0.0
    %7033 = vmatpush1.msra.mxu0 0.0
    %7034 = vmatprep.subr.mxu0 0.0
    %7035 = vmatpush1.msra.mxu0 0.0
    %7036 = vmatprep.subr.mxu0 0.0
    %7037 = vmatpush1.msra.mxu0 0.0
    %7038 = vmatprep.subr.mxu0 0.0
    %7039 = vmatpush1.msra.mxu0 0.0
    %7040 = vmatprep.subr.mxu0 0.0
    %7041 = vmatpush1.msra.mxu0 0.0
    %7042 = vmatprep.subr.mxu0 0.0
    %7043 = vmatpush1.msra.mxu0 0.0
    %7044 = vmatprep.subr.mxu0 0.0
    %7045 = vmatpush1.msra.mxu0 0.0
    %7046 = vmatprep.subr.mxu0 0.0
    %7047 = vmatpush1.msra.mxu0 0.0
    %7048 = vmatprep.subr.mxu0 0.0
    %7049 = vmatpush1.msra.mxu0 0.0
    %7050 = vmatprep.subr.mxu0 0.0
    %7051 = vmatpush1.msra.mxu0 0.0
    %7052 = vmatprep.subr.mxu0 0.0
    %7053 = vmatpush1.msra.mxu0 0.0
    %7054 = vmatprep.mubr.f32.mxu0 0.0
    %7055 = vmatmul.mubr.f32.gmra.mrb[0].mxu0 %v6988
    %v7056 = vpop.f32.mrb[0].mxu0
    %v7057 = vadd.f32 0.0, %v7056
    %v7058 = vpop.f32.mrb[0].mxu0
    %7059 = vdwg.mxu0
    %v7061 = vrot.slane %v7057, 3
    %v7063 = vadd.f32 %v6455, %v7061
    %v7064 = vxor.u32 %v7063, 2147483648
    %v7065 = vmul.f32 %v7064, 1.442695
    %v7066 = vpow.pop %v7065
    %v7067 = vadd.f32 %v7066, 1.0
    %v7068 = vrcp.pop %v7067
    %v7069 = vmul.f32 1.0, %v7068
    %v7070 = vtanh.pop %v7063
    %v7072 = vrot.slane %v6977, 7
    %v7074 = vmul.f32 %v7069, %v7072
    %7076 = vrot.lane.b32.xlu0 %v7070, 64
    %v7077 = vpop.permute.xlu0 %7076
    %v7079 = vmul.f32 %v7069, %v7077
    %7081 = vrot.lane.b32.xlu0 %v7079, 32
    %v7082 = vpop.permute.xlu0 %7081
    %v7084 = vadd.f32 %v7074, %v7082
    %v7085 = vtanh.pop %v7084
    %7087 = vrot.lane.b32.xlu0 %v7085, 64
    %v7088 = vpop.permute.xlu0 %7087
    %v7090 = vmul.f32 %v7069, %v7088
    %v7092 = vrot.slane %v7090, 5
    %7093 = vrot.lane.b32.xlu0 %v7092, 32
    %v7094 = vpop.permute.xlu0 %7093
    %v7095 = vsel %vm6458, %v7094, 0
    %7097 = vmatprep.subr.mxu0 0.0
    %7098 = vmatpush1.msra.mxu0 %v6375
    %7099 = vmatprep.subr.mxu0 0.0
    %7100 = vmatpush1.msra.mxu0 %v6376
    %7101 = vmatprep.subr.mxu0 0.0
    %7102 = vmatpush1.msra.mxu0 %v6377
    %7103 = vmatprep.subr.mxu0 0.0
    %7104 = vmatpush1.msra.mxu0 %v6378
    %7105 = vmatprep.subr.mxu0 0.0
    %7106 = vmatpush1.msra.mxu0 0.0
    %7107 = vmatprep.subr.mxu0 0.0
    %7108 = vmatpush1.msra.mxu0 0.0
    %7109 = vmatprep.subr.mxu0 0.0
    %7110 = vmatpush1.msra.mxu0 0.0
    %7111 = vmatprep.subr.mxu0 0.0
    %7112 = vmatpush1.msra.mxu0 0.0
    %7113 = vmatprep.subr.mxu0 0.0
    %7114 = vmatpush1.msra.mxu0 0.0
    %7115 = vmatprep.subr.mxu0 0.0
    %7116 = vmatpush1.msra.mxu0 0.0
    %7117 = vmatprep.subr.mxu0 0.0
    %7118 = vmatpush1.msra.mxu0 0.0
    %7119 = vmatprep.subr.mxu0 0.0
    %7120 = vmatpush1.msra.mxu0 0.0
    %7121 = vmatprep.subr.mxu0 0.0
    %7122 = vmatpush1.msra.mxu0 0.0
    %7123 = vmatprep.subr.mxu0 0.0
    %7124 = vmatpush1.msra.mxu0 0.0
    %7125 = vmatprep.subr.mxu0 0.0
    %7126 = vmatpush1.msra.mxu0 0.0
    %7127 = vmatprep.subr.mxu0 0.0
    %7128 = vmatpush1.msra.mxu0 0.0
    %7129 = vmatprep.subr.mxu0 0.0
    %7130 = vmatpush1.msra.mxu0 0.0
    %7131 = vmatprep.subr.mxu0 0.0
    %7132 = vmatpush1.msra.mxu0 0.0
    %7133 = vmatprep.subr.mxu0 0.0
    %7134 = vmatpush1.msra.mxu0 0.0
    %7135 = vmatprep.subr.mxu0 0.0
    %7136 = vmatpush1.msra.mxu0 0.0
    %7137 = vmatprep.subr.mxu0 0.0
    %7138 = vmatpush1.msra.mxu0 0.0
    %7139 = vmatprep.subr.mxu0 0.0
    %7140 = vmatpush1.msra.mxu0 0.0
    %7141 = vmatprep.subr.mxu0 0.0
    %7142 = vmatpush1.msra.mxu0 0.0
    %7143 = vmatprep.subr.mxu0 0.0
    %7144 = vmatpush1.msra.mxu0 0.0
    %7145 = vmatprep.subr.mxu0 0.0
    %7146 = vmatpush1.msra.mxu0 0.0
    %7147 = vmatprep.subr.mxu0 0.0
    %7148 = vmatpush1.msra.mxu0 0.0
    %7149 = vmatprep.subr.mxu0 0.0
    %7150 = vmatpush1.msra.mxu0 0.0
    %7151 = vmatprep.subr.mxu0 0.0
    %7152 = vmatpush1.msra.mxu0 0.0
    %7153 = vmatprep.subr.mxu0 0.0
    %7154 = vmatpush1.msra.mxu0 0.0
    %7155 = vmatprep.subr.mxu0 0.0
    %7156 = vmatpush1.msra.mxu0 0.0
    %7157 = vmatprep.subr.mxu0 0.0
    %7158 = vmatpush1.msra.mxu0 0.0
    %7159 = vmatprep.subr.mxu0 0.0
    %7160 = vmatpush1.msra.mxu0 0.0
    %7161 = vmatprep.mubr.f32.mxu0 0.0
    %7162 = vmatmul.mubr.f32.gmra.mrb[0].mxu0 %v7095
    %v7163 = vpop.f32.mrb[0].mxu0
    %v7164 = vadd.f32 0.0, %v7163
    %v7165 = vpop.f32.mrb[0].mxu0
    %7166 = vdwg.mxu0
    %v7168 = vrot.slane %v7164, 2
    %v7170 = vadd.f32 %v6455, %v7168
    %v7171 = vxor.u32 %v7170, 2147483648
    %v7172 = vmul.f32 %v7171, 1.442695
    %v7173 = vpow.pop %v7172
    %v7174 = vadd.f32 %v7173, 1.0
    %v7175 = vrcp.pop %v7174
    %v7176 = vmul.f32 1.0, %v7175
    %v7177 = vtanh.pop %v7170
    %v7179 = vrot.slane %v7084, 7
    %v7181 = vmul.f32 %v7176, %v7179
    %7183 = vrot.lane.b32.xlu0 %v7177, 64
    %v7184 = vpop.permute.xlu0 %7183
    %v7186 = vmul.f32 %v7176, %v7184
    %7188 = vrot.lane.b32.xlu0 %v7186, 32
    %v7189 = vpop.permute.xlu0 %7188
    %v7191 = vadd.f32 %v7181, %v7189
    %v7192 = vtanh.pop %v7191
    %7194 = vrot.lane.b32.xlu0 %v7192, 64
    %v7195 = vpop.permute.xlu0 %7194
    %v7197 = vmul.f32 %v7176, %v7195
    %v7199 = vrot.slane %v7197, 6
    %7200 = vrot.lane.b32.xlu0 %v7199, 32
    %v7201 = vpop.permute.xlu0 %7200
    %v7202 = vsel %vm6458, %v7201, 0
    %7204 = vmatprep.subr.mxu0 0.0
    %7205 = vmatpush1.msra.mxu0 %v6375
    %7206 = vmatprep.subr.mxu0 0.0
    %7207 = vmatpush1.msra.mxu0 %v6376
    %7208 = vmatprep.subr.mxu0 0.0
    %7209 = vmatpush1.msra.mxu0 %v6377
    %7210 = vmatprep.subr.mxu0 0.0
    %7211 = vmatpush1.msra.mxu0 %v6378
    %7212 = vmatprep.subr.mxu0 0.0
    %7213 = vmatpush1.msra.mxu0 0.0
    %7214 = vmatprep.subr.mxu0 0.0
    %7215 = vmatpush1.msra.mxu0 0.0
    %7216 = vmatprep.subr.mxu0 0.0
    %7217 = vmatpush1.msra.mxu0 0.0
    %7218 = vmatprep.subr.mxu0 0.0
    %7219 = vmatpush1.msra.mxu0 0.0
    %7220 = vmatprep.subr.mxu0 0.0
    %7221 = vmatpush1.msra.mxu0 0.0
    %7222 = vmatprep.subr.mxu0 0.0
    %7223 = vmatpush1.msra.mxu0 0.0
    %7224 = vmatprep.subr.mxu0 0.0
    %7225 = vmatpush1.msra.mxu0 0.0
    %7226 = vmatprep.subr.mxu0 0.0
    %7227 = vmatpush1.msra.mxu0 0.0
    %7228 = vmatprep.subr.mxu0 0.0
    %7229 = vmatpush1.msra.mxu0 0.0
    %7230 = vmatprep.subr.mxu0 0.0
    %7231 = vmatpush1.msra.mxu0 0.0
    %7232 = vmatprep.subr.mxu0 0.0
    %7233 = vmatpush1.msra.mxu0 0.0
    %7234 = vmatprep.subr.mxu0 0.0
    %7235 = vmatpush1.msra.mxu0 0.0
    %7236 = vmatprep.subr.mxu0 0.0
    %7237 = vmatpush1.msra.mxu0 0.0
    %7238 = vmatprep.subr.mxu0 0.0
    %7239 = vmatpush1.msra.mxu0 0.0
    %7240 = vmatprep.subr.mxu0 0.0
    %7241 = vmatpush1.msra.mxu0 0.0
    %7242 = vmatprep.subr.mxu0 0.0
    %7243 = vmatpush1.msra.mxu0 0.0
    %7244 = vmatprep.subr.mxu0 0.0
    %7245 = vmatpush1.msra.mxu0 0.0
    %7246 = vmatprep.subr.mxu0 0.0
    %7247 = vmatpush1.msra.mxu0 0.0
    %7248 = vmatprep.subr.mxu0 0.0
    %7249 = vmatpush1.msra.mxu0 0.0
    %7250 = vmatprep.subr.mxu0 0.0
    %7251 = vmatpush1.msra.mxu0 0.0
    %7252 = vmatprep.subr.mxu0 0.0
    %7253 = vmatpush1.msra.mxu0 0.0
    %7254 = vmatprep.subr.mxu0 0.0
    %7255 = vmatpush1.msra.mxu0 0.0
    %7256 = vmatprep.subr.mxu0 0.0
    %7257 = vmatpush1.msra.mxu0 0.0
    %7258 = vmatprep.subr.mxu0 0.0
    %7259 = vmatpush1.msra.mxu0 0.0
    %7260 = vmatprep.subr.mxu0 0.0
    %7261 = vmatpush1.msra.mxu0 0.0
    %7262 = vmatprep.subr.mxu0 0.0
    %7263 = vmatpush1.msra.mxu0 0.0
    %7264 = vmatprep.subr.mxu0 0.0
    %7265 = vmatpush1.msra.mxu0 0.0
    %7266 = vmatprep.subr.mxu0 0.0
    %7267 = vmatpush1.msra.mxu0 0.0
    %7268 = vmatprep.mubr.f32.mxu0 0.0
    %7269 = vmatmul.mubr.f32.gmra.mrb[0].mxu0 %v7202
    %v7270 = vpop.f32.mrb[0].mxu0
    %v7271 = vadd.f32 0.0, %v7270
    %v7272 = vpop.f32.mrb[0].mxu0
    %7273 = vdwg.mxu0
    %v7275 = vrot.slane %v7271, 1
    %v7277 = vadd.f32 %v6455, %v7275
    %v7278 = vxor.u32 %v7277, 2147483648
    %v7279 = vmul.f32 %v7278, 1.442695
    %v7280 = vpow.pop %v7279
    %v7281 = vadd.f32 %v7280, 1.0
    %v7282 = vrcp.pop %v7281
    %v7283 = vmul.f32 1.0, %v7282
    %v7284 = vtanh.pop %v7277
    %v7286 = vrot.slane %v7191, 7
    %v7288 = vmul.f32 %v7283, %v7286
    %7290 = vrot.lane.b32.xlu0 %v7284, 64
    %v7291 = vpop.permute.xlu0 %7290
    %v7293 = vmul.f32 %v7283, %v7291
    %7295 = vrot.lane.b32.xlu0 %v7293, 32
    %v7296 = vpop.permute.xlu0 %7295
    %v7298 = vadd.f32 %v7288, %v7296
    %v7299 = vtanh.pop %v7298
    %7301 = vrot.lane.b32.xlu0 %v7299, 64
    %v7302 = vpop.permute.xlu0 %7301
    %v7304 = vmul.f32 %v7283, %v7302
    %v7305 = vld [vmem:[#allocation2] sm:$0x1]
    %vm7306 = vcmask 253952
    %v7307 = vsel %vm7306, %v7305, 0.0
    %7308 = vadd.xlane.f32.xlu0 %v7307
    %v7309 = vpop.xlane.xlu0 %7308
    %v7310 = vrot.slane %v7309, 4
    %v7311 = vadd.f32 %v7309, %v7310
    %v7312 = vrot.slane %v7311, 2
    %v7313 = vadd.f32 %v7311, %v7312
    %v7314 = vrot.slane %v7313, 1
    %v7315 = vadd.f32 %v7313, %v7314
    %s7316 = vtos %v7315
    %v7318 = vrot.slane %v7304, 7
    %7319 = vrot.lane.b32.xlu0 %v7318, 32
    %v7320 = vpop.permute.xlu0 %7319
    %v7322 = vsel %vm7306, %v7320, 0.0
    %7323 = vadd.xlane.f32.xlu0 %v7322
    %v7324 = vpop.xlane.xlu0 %7323
    %v7325 = vrot.slane %v7324, 4
    %v7326 = vadd.f32 %v7324, %v7325
    %v7327 = vrot.slane %v7326, 2
    %v7328 = vadd.f32 %v7326, %v7327
    %v7329 = vrot.slane %v7328, 1
    %v7330 = vadd.f32 %v7328, %v7329
    %s7331 = vtos %v7330
    %s7332 = sadd.f32 %s7316, %s7331
    %v7333 = vsel %vm232, %v6371, 0.0
    %v7334 = vsel %vm232, %v6372, 0.0
    %v7335 = vadd.f32 %v7333, %v7334
    %7336 = vadd.xlane.f32.xlu0 %v7335
    %v7337 = vpop.xlane.xlu0 %7336
    %v7338 = vrot.slane %v7337, 4
    %v7339 = vadd.f32 %v7337, %v7338
    %v7340 = vrot.slane %v7339, 2
    %v7341 = vadd.f32 %v7339, %v7340
    %v7342 = vrot.slane %v7341, 1
    %v7343 = vadd.f32 %v7341, %v7342
    %s7344 = vtos %v7343
    %s7345 = sadd.f32 %s7332, %s7344
    %s7346 = smul.f32 %s7345, 0.003125
    %v7347 = vstv %s7346
    %v7348 = vsub.f32 %v7305, %v7347
    %v7349 = vsub.f32 %v7304, %v7347
    %v7350 = vsub.f32 %v6371, %v7347
    %v7351 = vsub.f32 %v6372, %v7347
    %v7352 = vmul.f32 %v7348, %v7348
    %v7353 = vsel %vm7306, %v7352, 0.0
    %7354 = vadd.xlane.f32.xlu0 %v7353
    %v7355 = vpop.xlane.xlu0 %7354
    %v7356 = vrot.slane %v7355, 4
    %v7357 = vadd.f32 %v7355, %v7356
    %v7358 = vrot.slane %v7357, 2
    %v7359 = vadd.f32 %v7357, %v7358
    %v7360 = vrot.slane %v7359, 1
    %v7361 = vadd.f32 %v7359, %v7360
    %s7362 = vtos %v7361
    %v7363 = vmul.f32 %v7349, %v7349
    %v7365 = vrot.slane %v7363, 7
    %7366 = vrot.lane.b32.xlu0 %v7365, 32
    %v7367 = vpop.permute.xlu0 %7366
    %v7369 = vsel %vm7306, %v7367, 0.0
    %7370 = vadd.xlane.f32.xlu0 %v7369
    %v7371 = vpop.xlane.xlu0 %7370
    %v7372 = vrot.slane %v7371, 4
    %v7373 = vadd.f32 %v7371, %v7372
    %v7374 = vrot.slane %v7373, 2
    %v7375 = vadd.f32 %v7373, %v7374
    %v7376 = vrot.slane %v7375, 1
    %v7377 = vadd.f32 %v7375, %v7376
    %s7378 = vtos %v7377
    %s7379 = sadd.f32 %s7362, %s7378
    %v7380 = vmul.f32 %v7350, %v7350
    %v7381 = vmul.f32 %v7351, %v7351
    %v7382 = vsel %vm232, %v7380, 0.0
    %v7383 = vsel %vm232, %v7381, 0.0
    %v7384 = vadd.f32 %v7382, %v7383
    %7385 = vadd.xlane.f32.xlu0 %v7384
    %v7386 = vpop.xlane.xlu0 %7385
    %v7387 = vrot.slane %v7386, 4
    %v7388 = vadd.f32 %v7386, %v7387
    %v7389 = vrot.slane %v7388, 2
    %v7390 = vadd.f32 %v7388, %v7389
    %v7391 = vrot.slane %v7390, 1
    %v7392 = vadd.f32 %v7390, %v7391
    %s7393 = vtos %v7392
    %s7394 = sadd.f32 %s7379, %s7393
    %s7395 = smul.f32 %s7394, 0.003125
    %s7396 = sadd.f32 %s7395, 1e-05
    %v7397 = vstv %s7396
    %v7398 = vrsqrt.pop %v7397
    %s7399 = vtos %v7398
    %v7400 = vstv %s7399
    %v7401 = vmul.f32 %v7348, %v7400
    %v7402 = vld [vmem:[#allocation8 + $0x941] sm:$0x1]
    %v7403 = vmul.f32 %v7401, %v7402
    %v7404 = vld [vmem:[#allocation8 + $0x942] sm:$0x1]
    %v7405 = vadd.f32 %v7403, %v7404
    %v7406 = vmul.f32 %v7349, %v7400
    %v7407 = vld [vmem:[#allocation8 + $0x943] sm:$0x1]
    %v7409 = vrot.slane %v7407, 1
    %7410 = vrot.lane.b32.xlu0 %v7409, 96
    %v7411 = vpop.permute.xlu0 %7410
    %v7413 = vmul.f32 %v7406, %v7411
    %v7414 = vld [vmem:[#allocation8 + $0x944] sm:$0x1]
    %v7416 = vrot.slane %v7414, 1
    %7417 = vrot.lane.b32.xlu0 %v7416, 96
    %v7418 = vpop.permute.xlu0 %7417
    %v7420 = vadd.f32 %v7413, %v7418
    %v7421 = vld [vmem:[%s5 + $0x10] sm:$0xff]
    %v7422 = vld [vmem:[%s5 + $0x18] sm:$0xff]
    %v7423 = vld [vmem:[%s5 + $0x20] sm:$0xff]
    %v7424 = vld [vmem:[%s5 + $0x28] sm:$0xff]
    %v7425 = vmul.f32 %v7350, %v7400
    %v7426 = vmul.f32 %v7351, %v7400
    %v7427 = vmul.f32 %v7425, %v7421
    %v7428 = vmul.f32 %v7426, %v7422
    %v7429 = vadd.f32 %v7427, %v7423
    %v7430 = vadd.f32 %v7428, %v7424
    %v7431 = vld [vmem:[%s7] sm:$0xff]
    %v7432 = vld [vmem:[%s7 + $0x8] sm:$0xff]
    %v7433 = vld [vmem:[%s7 + $0x10] sm:$0xff]
    %v7434 = vld [vmem:[%s7 + $0x18] sm:$0xff]
    %v7435 = vld [vmem:[%s7 + $0x20] sm:$0xff]
    %v7436 = vld [vmem:[%s7 + $0x28] sm:$0xff]
    %v7437 = vld [vmem:[%s7 + $0x30] sm:$0xff]
    %v7438 = vld [vmem:[%s7 + $0x38] sm:$0xff]
    %v7440 = vrot.slane %v7420, 7
    %7441 = vrot.lane.b32.xlu0 %v7440, 32
    %v7442 = vpop.permute.xlu0 %7441
    %v7443 = vsel %vm6458, %v7442, 0
    %7445 = vmatprep.subr.mxu0 0.0
    %7446 = vmatpush1.msra.mxu0 %v7435
    %7447 = vmatprep.subr.mxu0 0.0
    %7448 = vmatpush1.msra.mxu0 %v7436
    %7449 = vmatprep.subr.mxu0 0.0
    %7450 = vmatpush1.msra.mxu0 %v7437
    %7451 = vmatprep.subr.mxu0 0.0
    %7452 = vmatpush1.msra.mxu0 %v7438
    %7453 = vmatprep.subr.mxu0 0.0
    %7454 = vmatpush1.msra.mxu0 0.0
    %7455 = vmatprep.subr.mxu0 0.0
    %7456 = vmatpush1.msra.mxu0 0.0
    %7457 = vmatprep.subr.mxu0 0.0
    %7458 = vmatpush1.msra.mxu0 0.0
    %7459 = vmatprep.subr.mxu0 0.0
    %7460 = vmatpush1.msra.mxu0 0.0
    %7461 = vmatprep.subr.mxu0 0.0
    %7462 = vmatpush1.msra.mxu0 0.0
    %7463 = vmatprep.subr.mxu0 0.0
    %7464 = vmatpush1.msra.mxu0 0.0
    %7465 = vmatprep.subr.mxu0 0.0
    %7466 = vmatpush1.msra.mxu0 0.0
    %7467 = vmatprep.subr.mxu0 0.0
    %7468 = vmatpush1.msra.mxu0 0.0
    %7469 = vmatprep.subr.mxu0 0.0
    %7470 = vmatpush1.msra.mxu0 0.0
    %7471 = vmatprep.subr.mxu0 0.0
    %7472 = vmatpush1.msra.mxu0 0.0
    %7473 = vmatprep.subr.mxu0 0.0
    %7474 = vmatpush1.msra.mxu0 0.0
    %7475 = vmatprep.subr.mxu0 0.0
    %7476 = vmatpush1.msra.mxu0 0.0
    %7477 = vmatprep.subr.mxu0 0.0
    %7478 = vmatpush1.msra.mxu0 0.0
    %7479 = vmatprep.subr.mxu0 0.0
    %7480 = vmatpush1.msra.mxu0 0.0
    %7481 = vmatprep.subr.mxu0 0.0
    %7482 = vmatpush1.msra.mxu0 0.0
    %7483 = vmatprep.subr.mxu0 0.0
    %7484 = vmatpush1.msra.mxu0 0.0
    %7485 = vmatprep.subr.mxu0 0.0
    %7486 = vmatpush1.msra.mxu0 0.0
    %7487 = vmatprep.subr.mxu0 0.0
    %7488 = vmatpush1.msra.mxu0 0.0
    %7489 = vmatprep.subr.mxu0 0.0
    %7490 = vmatpush1.msra.mxu0 0.0
    %7491 = vmatprep.subr.mxu0 0.0
    %7492 = vmatpush1.msra.mxu0 0.0
    %7493 = vmatprep.subr.mxu0 0.0
    %7494 = vmatpush1.msra.mxu0 0.0
    %7495 = vmatprep.subr.mxu0 0.0
    %7496 = vmatpush1.msra.mxu0 0.0
    %7497 = vmatprep.subr.mxu0 0.0
    %7498 = vmatpush1.msra.mxu0 0.0
    %7499 = vmatprep.subr.mxu0 0.0
    %7500 = vmatpush1.msra.mxu0 0.0
    %7501 = vmatprep.subr.mxu0 0.0
    %7502 = vmatpush1.msra.mxu0 0.0
    %7503 = vmatprep.subr.mxu0 0.0
    %7504 = vmatpush1.msra.mxu0 0.0
    %7505 = vmatprep.subr.mxu0 0.0
    %7506 = vmatpush1.msra.mxu0 0.0
    %7507 = vmatprep.subr.mxu0 0.0
    %7508 = vmatpush1.msra.mxu0 0.0
    %7509 = vmatprep.mubr.f32.mxu0 0.0
    %7510 = vmatmul.mubr.f32.gmra.mrb[0].mxu0 %v7443
    %v7511 = vpop.f32.mrb[0].mxu0
    %v7512 = vadd.f32 0.0, %v7511
    %v7513 = vpop.f32.mrb[0].mxu0
    %7514 = vdwg.mxu0
    %v7516 = vsel %vm6458, %v7405, 0
    %7518 = vmatprep.subr.mxu0 0.0
    %7519 = vmatpush1.msra.mxu0 %v7431
    %7520 = vmatprep.subr.mxu0 0.0
    %7521 = vmatpush1.msra.mxu0 %v7432
    %7522 = vmatprep.subr.mxu0 0.0
    %7523 = vmatpush1.msra.mxu0 %v7433
    %7524 = vmatprep.subr.mxu0 0.0
    %7525 = vmatpush1.msra.mxu0 %v7434
    %7526 = vmatprep.subr.mxu0 0.0
    %7527 = vmatpush1.msra.mxu0 0.0
    %7528 = vmatprep.subr.mxu0 0.0
    %7529 = vmatpush1.msra.mxu0 0.0
    %7530 = vmatprep.subr.mxu0 0.0
    %7531 = vmatpush1.msra.mxu0 0.0
    %7532 = vmatprep.subr.mxu0 0.0
    %7533 = vmatpush1.msra.mxu0 0.0
    %7534 = vmatprep.subr.mxu0 0.0
    %7535 = vmatpush1.msra.mxu0 0.0
    %7536 = vmatprep.subr.mxu0 0.0
    %7537 = vmatpush1.msra.mxu0 0.0
    %7538 = vmatprep.subr.mxu0 0.0
    %7539 = vmatpush1.msra.mxu0 0.0
    %7540 = vmatprep.subr.mxu0 0.0
    %7541 = vmatpush1.msra.mxu0 0.0
    %7542 = vmatprep.subr.mxu0 0.0
    %7543 = vmatpush1.msra.mxu0 0.0
    %7544 = vmatprep.subr.mxu0 0.0
    %7545 = vmatpush1.msra.mxu0 0.0
    %7546 = vmatprep.subr.mxu0 0.0
    %7547 = vmatpush1.msra.mxu0 0.0
    %7548 = vmatprep.subr.mxu0 0.0
    %7549 = vmatpush1.msra.mxu0 0.0
    %7550 = vmatprep.subr.mxu0 0.0
    %7551 = vmatpush1.msra.mxu0 0.0
    %7552 = vmatprep.subr.mxu0 0.0
    %7553 = vmatpush1.msra.mxu0 0.0
    %7554 = vmatprep.subr.mxu0 0.0
    %7555 = vmatpush1.msra.mxu0 0.0
    %7556 = vmatprep.subr.mxu0 0.0
    %7557 = vmatpush1.msra.mxu0 0.0
    %7558 = vmatprep.subr.mxu0 0.0
    %7559 = vmatpush1.msra.mxu0 0.0
    %7560 = vmatprep.subr.mxu0 0.0
    %7561 = vmatpush1.msra.mxu0 0.0
    %7562 = vmatprep.subr.mxu0 0.0
    %7563 = vmatpush1.msra.mxu0 0.0
    %7564 = vmatprep.subr.mxu0 0.0
    %7565 = vmatpush1.msra.mxu0 0.0
    %7566 = vmatprep.subr.mxu0 0.0
    %7567 = vmatpush1.msra.mxu0 0.0
    %7568 = vmatprep.subr.mxu0 0.0
    %7569 = vmatpush1.msra.mxu0 0.0
    %7570 = vmatprep.subr.mxu0 0.0
    %7571 = vmatpush1.msra.mxu0 0.0
    %7572 = vmatprep.subr.mxu0 0.0
    %7573 = vmatpush1.msra.mxu0 0.0
    %7574 = vmatprep.subr.mxu0 0.0
    %7575 = vmatpush1.msra.mxu0 0.0
    %7576 = vmatprep.subr.mxu0 0.0
    %7577 = vmatpush1.msra.mxu0 0.0
    %7578 = vmatprep.subr.mxu0 0.0
    %7579 = vmatpush1.msra.mxu0 0.0
    %7580 = vmatprep.subr.mxu0 0.0
    %7581 = vmatpush1.msra.mxu0 0.0
    %7582 = vmatprep.mubr.f32.mxu0 0.0
    %7583 = vmatmul.mubr.f32.gmra.mrb[0].mxu0 %v7516
    %v7584 = vpop.f32.mrb[0].mxu0
    %v7585 = vadd.f32 %v7512, %v7584
    %v7586 = vpop.f32.mrb[0].mxu0
    %7587 = vdwg.mxu0
    %v7588 = vld [vmem:[%s7 + $0x40] sm:$0xff]
    %v7589 = vld [vmem:[%s7 + $0x48] sm:$0xff]
    %v7591 = vsel %vm232, %v7429, 0
    %7593 = vmatprep.subr.mxu0 0.0
    %7594 = vmatpush1.msra.mxu0 %v7588
    %7595 = vmatprep.subr.mxu0 0.0
    %7596 = vmatpush1.msra.mxu0 %v7589
    %7597 = vmatprep.subr.mxu0 0.0
    %7598 = vmatpush1.msra.mxu0 0.0
    %7599 = vmatprep.subr.mxu0 0.0
    %7600 = vmatpush1.msra.mxu0 0.0
    %7601 = vmatprep.subr.mxu0 0.0
    %7602 = vmatpush1.msra.mxu0 0.0
    %7603 = vmatprep.subr.mxu0 0.0
    %7604 = vmatpush1.msra.mxu0 0.0
    %7605 = vmatprep.subr.mxu0 0.0
    %7606 = vmatpush1.msra.mxu0 0.0
    %7607 = vmatprep.subr.mxu0 0.0
    %7608 = vmatpush1.msra.mxu0 0.0
    %7609 = vmatprep.subr.mxu0 0.0
    %7610 = vmatpush1.msra.mxu0 0.0
    %7611 = vmatprep.subr.mxu0 0.0
    %7612 = vmatpush1.msra.mxu0 0.0
    %7613 = vmatprep.subr.mxu0 0.0
    %7614 = vmatpush1.msra.mxu0 0.0
    %7615 = vmatprep.subr.mxu0 0.0
    %7616 = vmatpush1.msra.mxu0 0.0
    %7617 = vmatprep.subr.mxu0 0.0
    %7618 = vmatpush1.msra.mxu0 0.0
    %7619 = vmatprep.subr.mxu0 0.0
    %7620 = vmatpush1.msra.mxu0 0.0
    %7621 = vmatprep.subr.mxu0 0.0
    %7622 = vmatpush1.msra.mxu0 0.0
    %7623 = vmatprep.subr.mxu0 0.0
    %7624 = vmatpush1.msra.mxu0 0.0
    %7625 = vmatprep.subr.mxu0 0.0
    %7626 = vmatpush1.msra.mxu0 0.0
    %7627 = vmatprep.subr.mxu0 0.0
    %7628 = vmatpush1.msra.mxu0 0.0
    %7629 = vmatprep.subr.mxu0 0.0
    %7630 = vmatpush1.msra.mxu0 0.0
    %7631 = vmatprep.subr.mxu0 0.0
    %7632 = vmatpush1.msra.mxu0 0.0
    %7633 = vmatprep.subr.mxu0 0.0
    %7634 = vmatpush1.msra.mxu0 0.0
    %7635 = vmatprep.subr.mxu0 0.0
    %7636 = vmatpush1.msra.mxu0 0.0
    %7637 = vmatprep.subr.mxu0 0.0
    %7638 = vmatpush1.msra.mxu0 0.0
    %7639 = vmatprep.subr.mxu0 0.0
    %7640 = vmatpush1.msra.mxu0 0.0
    %7641 = vmatprep.subr.mxu0 0.0
    %7642 = vmatpush1.msra.mxu0 0.0
    %7643 = vmatprep.subr.mxu0 0.0
    %7644 = vmatpush1.msra.mxu0 0.0
    %7645 = vmatprep.subr.mxu0 0.0
    %7646 = vmatpush1.msra.mxu0 0.0
    %7647 = vmatprep.subr.mxu0 0.0
    %7648 = vmatpush1.msra.mxu0 0.0
    %7649 = vmatprep.subr.mxu0 0.0
    %7650 = vmatpush1.msra.mxu0 0.0
    %7651 = vmatprep.subr.mxu0 0.0
    %7652 = vmatpush1.msra.mxu0 0.0
    %7653 = vmatprep.subr.mxu0 0.0
    %7654 = vmatpush1.msra.mxu0 0.0
    %7655 = vmatprep.subr.mxu0 0.0
    %7656 = vmatpush1.msra.mxu0 0.0
    %7657 = vmatprep.mubr.f32.mxu0 0.0
    %7658 = vmatmul.mubr.f32.gmra.mrb[0].mxu0 %v7591
    %v7659 = vpop.f32.mrb[0].mxu0
    %v7660 = vadd.f32 0.0, %v7659
    %v7661 = vpop.f32.mrb[0].mxu0
    %7662 = vdwg.mxu0
    %v7663 = vadd.f32 %v7585, %v7660
    %v7664 = vld [vmem:[%s7 + $0x50] sm:$0xff]
    %v7665 = vld [vmem:[%s7 + $0x58] sm:$0xff]
    %v7666 = vrot.slane %v7429, 1
    %v7667 = vsel %vm232, %v7666, 0
    %7669 = vmatprep.subr.mxu0 0.0
    %7670 = vmatpush1.msra.mxu0 %v7664
    %7671 = vmatprep.subr.mxu0 0.0
    %7672 = vmatpush1.msra.mxu0 %v7665
    %7673 = vmatprep.subr.mxu0 0.0
    %7674 = vmatpush1.msra.mxu0 0.0
    %7675 = vmatprep.subr.mxu0 0.0
    %7676 = vmatpush1.msra.mxu0 0.0
    %7677 = vmatprep.subr.mxu0 0.0
    %7678 = vmatpush1.msra.mxu0 0.0
    %7679 = vmatprep.subr.mxu0 0.0
    %7680 = vmatpush1.msra.mxu0 0.0
    %7681 = vmatprep.subr.mxu0 0.0
    %7682 = vmatpush1.msra.mxu0 0.0
    %7683 = vmatprep.subr.mxu0 0.0
    %7684 = vmatpush1.msra.mxu0 0.0
    %7685 = vmatprep.subr.mxu0 0.0
    %7686 = vmatpush1.msra.mxu0 0.0
    %7687 = vmatprep.subr.mxu0 0.0
    %7688 = vmatpush1.msra.mxu0 0.0
    %7689 = vmatprep.subr.mxu0 0.0
    %7690 = vmatpush1.msra.mxu0 0.0
    %7691 = vmatprep.subr.mxu0 0.0
    %7692 = vmatpush1.msra.mxu0 0.0
    %7693 = vmatprep.subr.mxu0 0.0
    %7694 = vmatpush1.msra.mxu0 0.0
    %7695 = vmatprep.subr.mxu0 0.0
    %7696 = vmatpush1.msra.mxu0 0.0
    %7697 = vmatprep.subr.mxu0 0.0
    %7698 = vmatpush1.msra.mxu0 0.0
    %7699 = vmatprep.subr.mxu0 0.0
    %7700 = vmatpush1.msra.mxu0 0.0
    %7701 = vmatprep.subr.mxu0 0.0
    %7702 = vmatpush1.msra.mxu0 0.0
    %7703 = vmatprep.subr.mxu0 0.0
    %7704 = vmatpush1.msra.mxu0 0.0
    %7705 = vmatprep.subr.mxu0 0.0
    %7706 = vmatpush1.msra.mxu0 0.0
    %7707 = vmatprep.subr.mxu0 0.0
    %7708 = vmatpush1.msra.mxu0 0.0
    %7709 = vmatprep.subr.mxu0 0.0
    %7710 = vmatpush1.msra.mxu0 0.0
    %7711 = vmatprep.subr.mxu0 0.0
    %7712 = vmatpush1.msra.mxu0 0.0
    %7713 = vmatprep.subr.mxu0 0.0
    %7714 = vmatpush1.msra.mxu0 0.0
    %7715 = vmatprep.subr.mxu0 0.0
    %7716 = vmatpush1.msra.mxu0 0.0
    %7717 = vmatprep.subr.mxu0 0.0
    %7718 = vmatpush1.msra.mxu0 0.0
    %7719 = vmatprep.subr.mxu0 0.0
    %7720 = vmatpush1.msra.mxu0 0.0
    %7721 = vmatprep.subr.mxu0 0.0
    %7722 = vmatpush1.msra.mxu0 0.0
    %7723 = vmatprep.subr.mxu0 0.0
    %7724 = vmatpush1.msra.mxu0 0.0
    %7725 = vmatprep.subr.mxu0 0.0
    %7726 = vmatpush1.msra.mxu0 0.0
    %7727 = vmatprep.subr.mxu0 0.0
    %7728 = vmatpush1.msra.mxu0 0.0
    %7729 = vmatprep.subr.mxu0 0.0
    %7730 = vmatpush1.msra.mxu0 0.0
    %7731 = vmatprep.subr.mxu0 0.0
    %7732 = vmatpush1.msra.mxu0 0.0
    %7733 = vmatprep.mubr.f32.mxu0 0.0
    %7734 = vmatmul.mubr.f32.gmra.mrb[0].mxu0 %v7667
    %v7735 = vpop.f32.mrb[0].mxu0
    %v7736 = vadd.f32 0.0, %v7735
    %v7737 = vpop.f32.mrb[0].mxu0
    %7738 = vdwg.mxu0
    %v7739 = vadd.f32 %v7663, %v7736
    %v7740 = vld [vmem:[%s7 + $0x60] sm:$0xff]
    %v7741 = vld [vmem:[%s7 + $0x68] sm:$0xff]
    %v7742 = vrot.slane %v7429, 2
    %v7743 = vsel %vm232, %v7742, 0
    %7745 = vmatprep.subr.mxu0 0.0
    %7746 = vmatpush1.msra.mxu0 %v7740
    %7747 = vmatprep.subr.mxu0 0.0
    %7748 = vmatpush1.msra.mxu0 %v7741
    %7749 = vmatprep.subr.mxu0 0.0
    %7750 = vmatpush1.msra.mxu0 0.0
    %7751 = vmatprep.subr.mxu0 0.0
    %7752 = vmatpush1.msra.mxu0 0.0
    %7753 = vmatprep.subr.mxu0 0.0
    %7754 = vmatpush1.msra.mxu0 0.0
    %7755 = vmatprep.subr.mxu0 0.0
    %7756 = vmatpush1.msra.mxu0 0.0
    %7757 = vmatprep.subr.mxu0 0.0
    %7758 = vmatpush1.msra.mxu0 0.0
    %7759 = vmatprep.subr.mxu0 0.0
    %7760 = vmatpush1.msra.mxu0 0.0
    %7761 = vmatprep.subr.mxu0 0.0
    %7762 = vmatpush1.msra.mxu0 0.0
    %7763 = vmatprep.subr.mxu0 0.0
    %7764 = vmatpush1.msra.mxu0 0.0
    %7765 = vmatprep.subr.mxu0 0.0
    %7766 = vmatpush1.msra.mxu0 0.0
    %7767 = vmatprep.subr.mxu0 0.0
    %7768 = vmatpush1.msra.mxu0 0.0
    %7769 = vmatprep.subr.mxu0 0.0
    %7770 = vmatpush1.msra.mxu0 0.0
    %7771 = vmatprep.subr.mxu0 0.0
    %7772 = vmatpush1.msra.mxu0 0.0
    %7773 = vmatprep.subr.mxu0 0.0
    %7774 = vmatpush1.msra.mxu0 0.0
    %7775 = vmatprep.subr.mxu0 0.0
    %7776 = vmatpush1.msra.mxu0 0.0
    %7777 = vmatprep.subr.mxu0 0.0
    %7778 = vmatpush1.msra.mxu0 0.0
    %7779 = vmatprep.subr.mxu0 0.0
    %7780 = vmatpush1.msra.mxu0 0.0
    %7781 = vmatprep.subr.mxu0 0.0
    %7782 = vmatpush1.msra.mxu0 0.0
    %7783 = vmatprep.subr.mxu0 0.0
    %7784 = vmatpush1.msra.mxu0 0.0
    %7785 = vmatprep.subr.mxu0 0.0
    %7786 = vmatpush1.msra.mxu0 0.0
    %7787 = vmatprep.subr.mxu0 0.0
    %7788 = vmatpush1.msra.mxu0 0.0
    %7789 = vmatprep.subr.mxu0 0.0
    %7790 = vmatpush1.msra.mxu0 0.0
    %7791 = vmatprep.subr.mxu0 0.0
    %7792 = vmatpush1.msra.mxu0 0.0
    %7793 = vmatprep.subr.mxu0 0.0
    %7794 = vmatpush1.msra.mxu0 0.0
    %7795 = vmatprep.subr.mxu0 0.0
    %7796 = vmatpush1.msra.mxu0 0.0
    %7797 = vmatprep.subr.mxu0 0.0
    %7798 = vmatpush1.msra.mxu0 0.0
    %7799 = vmatprep.subr.mxu0 0.0
    %7800 = vmatpush1.msra.mxu0 0.0
    %7801 = vmatprep.subr.mxu0 0.0
    %7802 = vmatpush1.msra.mxu0 0.0
    %7803 = vmatprep.subr.mxu0 0.0
    %7804 = vmatpush1.msra.mxu0 0.0
    %7805 = vmatprep.subr.mxu0 0.0
    %7806 = vmatpush1.msra.mxu0 0.0
    %7807 = vmatprep.subr.mxu0 0.0
    %7808 = vmatpush1.msra.mxu0 0.0
    %7809 = vmatprep.mubr.f32.mxu0 0.0
    %7810 = vmatmul.mubr.f32.gmra.mrb[0].mxu0 %v7743
    %v7811 = vpop.f32.mrb[0].mxu0
    %v7812 = vadd.f32 0.0, %v7811
    %v7813 = vpop.f32.mrb[0].mxu0
    %7814 = vdwg.mxu0
    %v7815 = vadd.f32 %v7739, %v7812
    %v7816 = vld [vmem:[%s7 + $0x70] sm:$0xff]
    %v7817 = vld [vmem:[%s7 + $0x78] sm:$0xff]
    %v7818 = vrot.slane %v7429, 3
    %v7819 = vsel %vm232, %v7818, 0
    %7821 = vmatprep.subr.mxu0 0.0
    %7822 = vmatpush1.msra.mxu0 %v7816
    %7823 = vmatprep.subr.mxu0 0.0
    %7824 = vmatpush1.msra.mxu0 %v7817
    %7825 = vmatprep.subr.mxu0 0.0
    %7826 = vmatpush1.msra.mxu0 0.0
    %7827 = vmatprep.subr.mxu0 0.0
    %7828 = vmatpush1.msra.mxu0 0.0
    %7829 = vmatprep.subr.mxu0 0.0
    %7830 = vmatpush1.msra.mxu0 0.0
    %7831 = vmatprep.subr.mxu0 0.0
    %7832 = vmatpush1.msra.mxu0 0.0
    %7833 = vmatprep.subr.mxu0 0.0
    %7834 = vmatpush1.msra.mxu0 0.0
    %7835 = vmatprep.subr.mxu0 0.0
    %7836 = vmatpush1.msra.mxu0 0.0
    %7837 = vmatprep.subr.mxu0 0.0
    %7838 = vmatpush1.msra.mxu0 0.0
    %7839 = vmatprep.subr.mxu0 0.0
    %7840 = vmatpush1.msra.mxu0 0.0
    %7841 = vmatprep.subr.mxu0 0.0
    %7842 = vmatpush1.msra.mxu0 0.0
    %7843 = vmatprep.subr.mxu0 0.0
    %7844 = vmatpush1.msra.mxu0 0.0
    %7845 = vmatprep.subr.mxu0 0.0
    %7846 = vmatpush1.msra.mxu0 0.0
    %7847 = vmatprep.subr.mxu0 0.0
    %7848 = vmatpush1.msra.mxu0 0.0
    %7849 = vmatprep.subr.mxu0 0.0
    %7850 = vmatpush1.msra.mxu0 0.0
    %7851 = vmatprep.subr.mxu0 0.0
    %7852 = vmatpush1.msra.mxu0 0.0
    %7853 = vmatprep.subr.mxu0 0.0
    %7854 = vmatpush1.msra.mxu0 0.0
    %7855 = vmatprep.subr.mxu0 0.0
    %7856 = vmatpush1.msra.mxu0 0.0
    %7857 = vmatprep.subr.mxu0 0.0
    %7858 = vmatpush1.msra.mxu0 0.0
    %7859 = vmatprep.subr.mxu0 0.0
    %7860 = vmatpush1.msra.mxu0 0.0
    %7861 = vmatprep.subr.mxu0 0.0
    %7862 = vmatpush1.msra.mxu0 0.0
    %7863 = vmatprep.subr.mxu0 0.0
    %7864 = vmatpush1.msra.mxu0 0.0
    %7865 = vmatprep.subr.mxu0 0.0
    %7866 = vmatpush1.msra.mxu0 0.0
    %7867 = vmatprep.subr.mxu0 0.0
    %7868 = vmatpush1.msra.mxu0 0.0
    %7869 = vmatprep.subr.mxu0 0.0
    %7870 = vmatpush1.msra.mxu0 0.0
    %7871 = vmatprep.subr.mxu0 0.0
    %7872 = vmatpush1.msra.mxu0 0.0
    %7873 = vmatprep.subr.mxu0 0.0
    %7874 = vmatpush1.msra.mxu0 0.0
    %7875 = vmatprep.subr.mxu0 0.0
    %7876 = vmatpush1.msra.mxu0 0.0
    %7877 = vmatprep.subr.mxu0 0.0
    %7878 = vmatpush1.msra.mxu0 0.0
    %7879 = vmatprep.subr.mxu0 0.0
    %7880 = vmatpush1.msra.mxu0 0.0
    %7881 = vmatprep.subr.mxu0 0.0
    %7882 = vmatpush1.msra.mxu0 0.0
    %7883 = vmatprep.subr.mxu0 0.0
    %7884 = vmatpush1.msra.mxu0 0.0
    %7885 = vmatprep.mubr.f32.mxu0 0.0
    %7886 = vmatmul.mubr.f32.gmra.mrb[0].mxu0 %v7819
    %v7887 = vpop.f32.mrb[0].mxu0
    %v7888 = vadd.f32 0.0, %v7887
    %v7889 = vpop.f32.mrb[0].mxu0
    %7890 = vdwg.mxu0
    %v7891 = vadd.f32 %v7815, %v7888
    %v7892 = vld [vmem:[%s7 + $0x80] sm:$0xff]
    %v7893 = vld [vmem:[%s7 + $0x88] sm:$0xff]
    %v7894 = vrot.slane %v7429, 4
    %v7895 = vsel %vm232, %v7894, 0
    %7897 = vmatprep.subr.mxu0 0.0
    %7898 = vmatpush1.msra.mxu0 %v7892
    %7899 = vmatprep.subr.mxu0 0.0
    %7900 = vmatpush1.msra.mxu0 %v7893
    %7901 = vmatprep.subr.mxu0 0.0
    %7902 = vmatpush1.msra.mxu0 0.0
    %7903 = vmatprep.subr.mxu0 0.0
    %7904 = vmatpush1.msra.mxu0 0.0
    %7905 = vmatprep.subr.mxu0 0.0
    %7906 = vmatpush1.msra.mxu0 0.0
    %7907 = vmatprep.subr.mxu0 0.0
    %7908 = vmatpush1.msra.mxu0 0.0
    %7909 = vmatprep.subr.mxu0 0.0
    %7910 = vmatpush1.msra.mxu0 0.0
    %7911 = vmatprep.subr.mxu0 0.0
    %7912 = vmatpush1.msra.mxu0 0.0
    %7913 = vmatprep.subr.mxu0 0.0
    %7914 = vmatpush1.msra.mxu0 0.0
    %7915 = vmatprep.subr.mxu0 0.0
    %7916 = vmatpush1.msra.mxu0 0.0
    %7917 = vmatprep.subr.mxu0 0.0
    %7918 = vmatpush1.msra.mxu0 0.0
    %7919 = vmatprep.subr.mxu0 0.0
    %7920 = vmatpush1.msra.mxu0 0.0
    %7921 = vmatprep.subr.mxu0 0.0
    %7922 = vmatpush1.msra.mxu0 0.0
    %7923 = vmatprep.subr.mxu0 0.0
    %7924 = vmatpush1.msra.mxu0 0.0
    %7925 = vmatprep.subr.mxu0 0.0
    %7926 = vmatpush1.msra.mxu0 0.0
    %7927 = vmatprep.subr.mxu0 0.0
    %7928 = vmatpush1.msra.mxu0 0.0
    %7929 = vmatprep.subr.mxu0 0.0
    %7930 = vmatpush1.msra.mxu0 0.0
    %7931 = vmatprep.subr.mxu0 0.0
    %7932 = vmatpush1.msra.mxu0 0.0
    %7933 = vmatprep.subr.mxu0 0.0
    %7934 = vmatpush1.msra.mxu0 0.0
    %7935 = vmatprep.subr.mxu0 0.0
    %7936 = vmatpush1.msra.mxu0 0.0
    %7937 = vmatprep.subr.mxu0 0.0
    %7938 = vmatpush1.msra.mxu0 0.0
    %7939 = vmatprep.subr.mxu0 0.0
    %7940 = vmatpush1.msra.mxu0 0.0
    %7941 = vmatprep.subr.mxu0 0.0
    %7942 = vmatpush1.msra.mxu0 0.0
    %7943 = vmatprep.subr.mxu0 0.0
    %7944 = vmatpush1.msra.mxu0 0.0
    %7945 = vmatprep.subr.mxu0 0.0
    %7946 = vmatpush1.msra.mxu0 0.0
    %7947 = vmatprep.subr.mxu0 0.0
    %7948 = vmatpush1.msra.mxu0 0.0
    %7949 = vmatprep.subr.mxu0 0.0
    %7950 = vmatpush1.msra.mxu0 0.0
    %7951 = vmatprep.subr.mxu0 0.0
    %7952 = vmatpush1.msra.mxu0 0.0
    %7953 = vmatprep.subr.mxu0 0.0
    %7954 = vmatpush1.msra.mxu0 0.0
    %7955 = vmatprep.subr.mxu0 0.0
    %7956 = vmatpush1.msra.mxu0 0.0
    %7957 = vmatprep.subr.mxu0 0.0
    %7958 = vmatpush1.msra.mxu0 0.0
    %7959 = vmatprep.subr.mxu0 0.0
    %7960 = vmatpush1.msra.mxu0 0.0
    %7961 = vmatprep.mubr.f32.mxu0 0.0
    %7962 = vmatmul.mubr.f32.gmra.mrb[0].mxu0 %v7895
    %v7963 = vpop.f32.mrb[0].mxu0
    %v7964 = vadd.f32 0.0, %v7963
    %v7965 = vpop.f32.mrb[0].mxu0
    %7966 = vdwg.mxu0
    %v7967 = vadd.f32 %v7891, %v7964
    %v7968 = vld [vmem:[%s7 + $0x90] sm:$0xff]
    %v7969 = vld [vmem:[%s7 + $0x98] sm:$0xff]
    %v7970 = vrot.slane %v7429, 5
    %v7971 = vsel %vm232, %v7970, 0
    %7973 = vmatprep.subr.mxu0 0.0
    %7974 = vmatpush1.msra.mxu0 %v7968
    %7975 = vmatprep.subr.mxu0 0.0
    %7976 = vmatpush1.msra.mxu0 %v7969
    %7977 = vmatprep.subr.mxu0 0.0
    %7978 = vmatpush1.msra.mxu0 0.0
    %7979 = vmatprep.subr.mxu0 0.0
    %7980 = vmatpush1.msra.mxu0 0.0
    %7981 = vmatprep.subr.mxu0 0.0
    %7982 = vmatpush1.msra.mxu0 0.0
    %7983 = vmatprep.subr.mxu0 0.0
    %7984 = vmatpush1.msra.mxu0 0.0
    %7985 = vmatprep.subr.mxu0 0.0
    %7986 = vmatpush1.msra.mxu0 0.0
    %7987 = vmatprep.subr.mxu0 0.0
    %7988 = vmatpush1.msra.mxu0 0.0
    %7989 = vmatprep.subr.mxu0 0.0
    %7990 = vmatpush1.msra.mxu0 0.0
    %7991 = vmatprep.subr.mxu0 0.0
    %7992 = vmatpush1.msra.mxu0 0.0
    %7993 = vmatprep.subr.mxu0 0.0
    %7994 = vmatpush1.msra.mxu0 0.0
    %7995 = vmatprep.subr.mxu0 0.0
    %7996 = vmatpush1.msra.mxu0 0.0
    %7997 = vmatprep.subr.mxu0 0.0
    %7998 = vmatpush1.msra.mxu0 0.0
    %7999 = vmatprep.subr.mxu0 0.0
    %8000 = vmatpush1.msra.mxu0 0.0
    %8001 = vmatprep.subr.mxu0 0.0
    %8002 = vmatpush1.msra.mxu0 0.0
    %8003 = vmatprep.subr.mxu0 0.0
    %8004 = vmatpush1.msra.mxu0 0.0
    %8005 = vmatprep.subr.mxu0 0.0
    %8006 = vmatpush1.msra.mxu0 0.0
    %8007 = vmatprep.subr.mxu0 0.0
    %8008 = vmatpush1.msra.mxu0 0.0
    %8009 = vmatprep.subr.mxu0 0.0
    %8010 = vmatpush1.msra.mxu0 0.0
    %8011 = vmatprep.subr.mxu0 0.0
    %8012 = vmatpush1.msra.mxu0 0.0
    %8013 = vmatprep.subr.mxu0 0.0
    %8014 = vmatpush1.msra.mxu0 0.0
    %8015 = vmatprep.subr.mxu0 0.0
    %8016 = vmatpush1.msra.mxu0 0.0
    %8017 = vmatprep.subr.mxu0 0.0
    %8018 = vmatpush1.msra.mxu0 0.0
    %8019 = vmatprep.subr.mxu0 0.0
    %8020 = vmatpush1.msra.mxu0 0.0
    %8021 = vmatprep.subr.mxu0 0.0
    %8022 = vmatpush1.msra.mxu0 0.0
    %8023 = vmatprep.subr.mxu0 0.0
    %8024 = vmatpush1.msra.mxu0 0.0
    %8025 = vmatprep.subr.mxu0 0.0
    %8026 = vmatpush1.msra.mxu0 0.0
    %8027 = vmatprep.subr.mxu0 0.0
    %8028 = vmatpush1.msra.mxu0 0.0
    %8029 = vmatprep.subr.mxu0 0.0
    %8030 = vmatpush1.msra.mxu0 0.0
    %8031 = vmatprep.subr.mxu0 0.0
    %8032 = vmatpush1.msra.mxu0 0.0
    %8033 = vmatprep.subr.mxu0 0.0
    %8034 = vmatpush1.msra.mxu0 0.0
    %8035 = vmatprep.subr.mxu0 0.0
    %8036 = vmatpush1.msra.mxu0 0.0
    %8037 = vmatprep.mubr.f32.mxu0 0.0
    %8038 = vmatmul.mubr.f32.gmra.mrb[0].mxu0 %v7971
    %v8039 = vpop.f32.mrb[0].mxu0
    %v8040 = vadd.f32 0.0, %v8039
    %v8041 = vpop.f32.mrb[0].mxu0
    %8042 = vdwg.mxu0
    %v8043 = vadd.f32 %v7967, %v8040
    %v8044 = vld [vmem:[%s7 + $0xa0] sm:$0xff]
    %v8045 = vld [vmem:[%s7 + $0xa8] sm:$0xff]
    %v8046 = vrot.slane %v7429, 6
    %v8047 = vsel %vm232, %v8046, 0
    %8049 = vmatprep.subr.mxu0 0.0
    %8050 = vmatpush1.msra.mxu0 %v8044
    %8051 = vmatprep.subr.mxu0 0.0
    %8052 = vmatpush1.msra.mxu0 %v8045
    %8053 = vmatprep.subr.mxu0 0.0
    %8054 = vmatpush1.msra.mxu0 0.0
    %8055 = vmatprep.subr.mxu0 0.0
    %8056 = vmatpush1.msra.mxu0 0.0
    %8057 = vmatprep.subr.mxu0 0.0
    %8058 = vmatpush1.msra.mxu0 0.0
    %8059 = vmatprep.subr.mxu0 0.0
    %8060 = vmatpush1.msra.mxu0 0.0
    %8061 = vmatprep.subr.mxu0 0.0
    %8062 = vmatpush1.msra.mxu0 0.0
    %8063 = vmatprep.subr.mxu0 0.0
    %8064 = vmatpush1.msra.mxu0 0.0
    %8065 = vmatprep.subr.mxu0 0.0
    %8066 = vmatpush1.msra.mxu0 0.0
    %8067 = vmatprep.subr.mxu0 0.0
    %8068 = vmatpush1.msra.mxu0 0.0
    %8069 = vmatprep.subr.mxu0 0.0
    %8070 = vmatpush1.msra.mxu0 0.0
    %8071 = vmatprep.subr.mxu0 0.0
    %8072 = vmatpush1.msra.mxu0 0.0
    %8073 = vmatprep.subr.mxu0 0.0
    %8074 = vmatpush1.msra.mxu0 0.0
    %8075 = vmatprep.subr.mxu0 0.0
    %8076 = vmatpush1.msra.mxu0 0.0
    %8077 = vmatprep.subr.mxu0 0.0
    %8078 = vmatpush1.msra.mxu0 0.0
    %8079 = vmatprep.subr.mxu0 0.0
    %8080 = vmatpush1.msra.mxu0 0.0
    %8081 = vmatprep.subr.mxu0 0.0
    %8082 = vmatpush1.msra.mxu0 0.0
    %8083 = vmatprep.subr.mxu0 0.0
    %8084 = vmatpush1.msra.mxu0 0.0
    %8085 = vmatprep.subr.mxu0 0.0
    %8086 = vmatpush1.msra.mxu0 0.0
    %8087 = vmatprep.subr.mxu0 0.0
    %8088 = vmatpush1.msra.mxu0 0.0
    %8089 = vmatprep.subr.mxu0 0.0
    %8090 = vmatpush1.msra.mxu0 0.0
    %8091 = vmatprep.subr.mxu0 0.0
    %8092 = vmatpush1.msra.mxu0 0.0
    %8093 = vmatprep.subr.mxu0 0.0
    %8094 = vmatpush1.msra.mxu0 0.0
    %8095 = vmatprep.subr.mxu0 0.0
    %8096 = vmatpush1.msra.mxu0 0.0
    %8097 = vmatprep.subr.mxu0 0.0
    %8098 = vmatpush1.msra.mxu0 0.0
    %8099 = vmatprep.subr.mxu0 0.0
    %8100 = vmatpush1.msra.mxu0 0.0
    %8101 = vmatprep.subr.mxu0 0.0
    %8102 = vmatpush1.msra.mxu0 0.0
    %8103 = vmatprep.subr.mxu0 0.0
    %8104 = vmatpush1.msra.mxu0 0.0
    %8105 = vmatprep.subr.mxu0 0.0
    %8106 = vmatpush1.msra.mxu0 0.0
    %8107 = vmatprep.subr.mxu0 0.0
    %8108 = vmatpush1.msra.mxu0 0.0
    %8109 = vmatprep.subr.mxu0 0.0
    %8110 = vmatpush1.msra.mxu0 0.0
    %8111 = vmatprep.subr.mxu0 0.0
    %8112 = vmatpush1.msra.mxu0 0.0
    %8113 = vmatprep.mubr.f32.mxu0 0.0
    %8114 = vmatmul.mubr.f32.gmra.mrb[0].mxu0 %v8047
    %v8115 = vpop.f32.mrb[0].mxu0
    %v8116 = vadd.f32 0.0, %v8115
    %v8117 = vpop.f32.mrb[0].mxu0
    %8118 = vdwg.mxu0
    %v8119 = vadd.f32 %v8043, %v8116
    %v8120 = vld [vmem:[%s7 + $0xb0] sm:$0xff]
    %v8121 = vld [vmem:[%s7 + $0xb8] sm:$0xff]
    %v8122 = vrot.slane %v7429, 7
    %v8123 = vsel %vm232, %v8122, 0
    %8125 = vmatprep.subr.mxu0 0.0
    %8126 = vmatpush1.msra.mxu0 %v8120
    %8127 = vmatprep.subr.mxu0 0.0
    %8128 = vmatpush1.msra.mxu0 %v8121
    %8129 = vmatprep.subr.mxu0 0.0
    %8130 = vmatpush1.msra.mxu0 0.0
    %8131 = vmatprep.subr.mxu0 0.0
    %8132 = vmatpush1.msra.mxu0 0.0
    %8133 = vmatprep.subr.mxu0 0.0
    %8134 = vmatpush1.msra.mxu0 0.0
    %8135 = vmatprep.subr.mxu0 0.0
    %8136 = vmatpush1.msra.mxu0 0.0
    %8137 = vmatprep.subr.mxu0 0.0
    %8138 = vmatpush1.msra.mxu0 0.0
    %8139 = vmatprep.subr.mxu0 0.0
    %8140 = vmatpush1.msra.mxu0 0.0
    %8141 = vmatprep.subr.mxu0 0.0
    %8142 = vmatpush1.msra.mxu0 0.0
    %8143 = vmatprep.subr.mxu0 0.0
    %8144 = vmatpush1.msra.mxu0 0.0
    %8145 = vmatprep.subr.mxu0 0.0
    %8146 = vmatpush1.msra.mxu0 0.0
    %8147 = vmatprep.subr.mxu0 0.0
    %8148 = vmatpush1.msra.mxu0 0.0
    %8149 = vmatprep.subr.mxu0 0.0
    %8150 = vmatpush1.msra.mxu0 0.0
    %8151 = vmatprep.subr.mxu0 0.0
    %8152 = vmatpush1.msra.mxu0 0.0
    %8153 = vmatprep.subr.mxu0 0.0
    %8154 = vmatpush1.msra.mxu0 0.0
    %8155 = vmatprep.subr.mxu0 0.0
    %8156 = vmatpush1.msra.mxu0 0.0
    %8157 = vmatprep.subr.mxu0 0.0
    %8158 = vmatpush1.msra.mxu0 0.0
    %8159 = vmatprep.subr.mxu0 0.0
    %8160 = vmatpush1.msra.mxu0 0.0
    %8161 = vmatprep.subr.mxu0 0.0
    %8162 = vmatpush1.msra.mxu0 0.0
    %8163 = vmatprep.subr.mxu0 0.0
    %8164 = vmatpush1.msra.mxu0 0.0
    %8165 = vmatprep.subr.mxu0 0.0
    %8166 = vmatpush1.msra.mxu0 0.0
    %8167 = vmatprep.subr.mxu0 0.0
    %8168 = vmatpush1.msra.mxu0 0.0
    %8169 = vmatprep.subr.mxu0 0.0
    %8170 = vmatpush1.msra.mxu0 0.0
    %8171 = vmatprep.subr.mxu0 0.0
    %8172 = vmatpush1.msra.mxu0 0.0
    %8173 = vmatprep.subr.mxu0 0.0
    %8174 = vmatpush1.msra.mxu0 0.0
    %8175 = vmatprep.subr.mxu0 0.0
    %8176 = vmatpush1.msra.mxu0 0.0
    %8177 = vmatprep.subr.mxu0 0.0
    %8178 = vmatpush1.msra.mxu0 0.0
    %8179 = vmatprep.subr.mxu0 0.0
    %8180 = vmatpush1.msra.mxu0 0.0
    %8181 = vmatprep.subr.mxu0 0.0
    %8182 = vmatpush1.msra.mxu0 0.0
    %8183 = vmatprep.subr.mxu0 0.0
    %8184 = vmatpush1.msra.mxu0 0.0
    %8185 = vmatprep.subr.mxu0 0.0
    %8186 = vmatpush1.msra.mxu0 0.0
    %8187 = vmatprep.subr.mxu0 0.0
    %8188 = vmatpush1.msra.mxu0 0.0
    %8189 = vmatprep.mubr.f32.mxu0 0.0
    %8190 = vmatmul.mubr.f32.gmra.mrb[0].mxu0 %v8123
    %v8191 = vpop.f32.mrb[0].mxu0
    %v8192 = vadd.f32 0.0, %v8191
    %v8193 = vpop.f32.mrb[0].mxu0
    %8194 = vdwg.mxu0
    %v8195 = vadd.f32 %v8119, %v8192
    %v8196 = vld [vmem:[%s7 + $0xc0] sm:$0xff]
    %v8197 = vld [vmem:[%s7 + $0xc8] sm:$0xff]
    %v8199 = vsel %vm232, %v7430, 0
    %8201 = vmatprep.subr.mxu0 0.0
    %8202 = vmatpush1.msra.mxu0 %v8196
    %8203 = vmatprep.subr.mxu0 0.0
    %8204 = vmatpush1.msra.mxu0 %v8197
    %8205 = vmatprep.subr.mxu0 0.0
    %8206 = vmatpush1.msra.mxu0 0.0
    %8207 = vmatprep.subr.mxu0 0.0
    %8208 = vmatpush1.msra.mxu0 0.0
    %8209 = vmatprep.subr.mxu0 0.0
    %8210 = vmatpush1.msra.mxu0 0.0
    %8211 = vmatprep.subr.mxu0 0.0
    %8212 = vmatpush1.msra.mxu0 0.0
    %8213 = vmatprep.subr.mxu0 0.0
    %8214 = vmatpush1.msra.mxu0 0.0
    %8215 = vmatprep.subr.mxu0 0.0
    %8216 = vmatpush1.msra.mxu0 0.0
    %8217 = vmatprep.subr.mxu0 0.0
    %8218 = vmatpush1.msra.mxu0 0.0
    %8219 = vmatprep.subr.mxu0 0.0
    %8220 = vmatpush1.msra.mxu0 0.0
    %8221 = vmatprep.subr.mxu0 0.0
    %8222 = vmatpush1.msra.mxu0 0.0
    %8223 = vmatprep.subr.mxu0 0.0
    %8224 = vmatpush1.msra.mxu0 0.0
    %8225 = vmatprep.subr.mxu0 0.0
    %8226 = vmatpush1.msra.mxu0 0.0
    %8227 = vmatprep.subr.mxu0 0.0
    %8228 = vmatpush1.msra.mxu0 0.0
    %8229 = vmatprep.subr.mxu0 0.0
    %8230 = vmatpush1.msra.mxu0 0.0
    %8231 = vmatprep.subr.mxu0 0.0
    %8232 = vmatpush1.msra.mxu0 0.0
    %8233 = vmatprep.subr.mxu0 0.0
    %8234 = vmatpush1.msra.mxu0 0.0
    %8235 = vmatprep.subr.mxu0 0.0
    %8236 = vmatpush1.msra.mxu0 0.0
    %8237 = vmatprep.subr.mxu0 0.0
    %8238 = vmatpush1.msra.mxu0 0.0
    %8239 = vmatprep.subr.mxu0 0.0
    %8240 = vmatpush1.msra.mxu0 0.0
    %8241 = vmatprep.subr.mxu0 0.0
    %8242 = vmatpush1.msra.mxu0 0.0
    %8243 = vmatprep.subr.mxu0 0.0
    %8244 = vmatpush1.msra.mxu0 0.0
    %8245 = vmatprep.subr.mxu0 0.0
    %8246 = vmatpush1.msra.mxu0 0.0
    %8247 = vmatprep.subr.mxu0 0.0
    %8248 = vmatpush1.msra.mxu0 0.0
    %8249 = vmatprep.subr.mxu0 0.0
    %8250 = vmatpush1.msra.mxu0 0.0
    %8251 = vmatprep.subr.mxu0 0.0
    %8252 = vmatpush1.msra.mxu0 0.0
    %8253 = vmatprep.subr.mxu0 0.0
    %8254 = vmatpush1.msra.mxu0 0.0
    %8255 = vmatprep.subr.mxu0 0.0
    %8256 = vmatpush1.msra.mxu0 0.0
    %8257 = vmatprep.subr.mxu0 0.0
    %8258 = vmatpush1.msra.mxu0 0.0
    %8259 = vmatprep.subr.mxu0 0.0
    %8260 = vmatpush1.msra.mxu0 0.0
    %8261 = vmatprep.subr.mxu0 0.0
    %8262 = vmatpush1.msra.mxu0 0.0
    %8263 = vmatprep.subr.mxu0 0.0
    %8264 = vmatpush1.msra.mxu0 0.0
    %8265 = vmatprep.mubr.f32.mxu0 0.0
    %8266 = vmatmul.mubr.f32.gmra.mrb[0].mxu0 %v8199
    %v8267 = vpop.f32.mrb[0].mxu0
    %v8268 = vadd.f32 0.0, %v8267
    %v8269 = vpop.f32.mrb[0].mxu0
    %8270 = vdwg.mxu0
    %v8271 = vadd.f32 %v8195, %v8268
    %v8272 = vld [vmem:[%s7 + $0xd0] sm:$0xff]
    %v8273 = vld [vmem:[%s7 + $0xd8] sm:$0xff]
    %v8274 = vrot.slane %v7430, 1
    %v8275 = vsel %vm232, %v8274, 0
    %8277 = vmatprep.subr.mxu0 0.0
    %8278 = vmatpush1.msra.mxu0 %v8272
    %8279 = vmatprep.subr.mxu0 0.0
    %8280 = vmatpush1.msra.mxu0 %v8273
    %8281 = vmatprep.subr.mxu0 0.0
    %8282 = vmatpush1.msra.mxu0 0.0
    %8283 = vmatprep.subr.mxu0 0.0
    %8284 = vmatpush1.msra.mxu0 0.0
    %8285 = vmatprep.subr.mxu0 0.0
    %8286 = vmatpush1.msra.mxu0 0.0
    %8287 = vmatprep.subr.mxu0 0.0
    %8288 = vmatpush1.msra.mxu0 0.0
    %8289 = vmatprep.subr.mxu0 0.0
    %8290 = vmatpush1.msra.mxu0 0.0
    %8291 = vmatprep.subr.mxu0 0.0
    %8292 = vmatpush1.msra.mxu0 0.0
    %8293 = vmatprep.subr.mxu0 0.0
    %8294 = vmatpush1.msra.mxu0 0.0
    %8295 = vmatprep.subr.mxu0 0.0
    %8296 = vmatpush1.msra.mxu0 0.0
    %8297 = vmatprep.subr.mxu0 0.0
    %8298 = vmatpush1.msra.mxu0 0.0
    %8299 = vmatprep.subr.mxu0 0.0
    %8300 = vmatpush1.msra.mxu0 0.0
    %8301 = vmatprep.subr.mxu0 0.0
    %8302 = vmatpush1.msra.mxu0 0.0
    %8303 = vmatprep.subr.mxu0 0.0
    %8304 = vmatpush1.msra.mxu0 0.0
    %8305 = vmatprep.subr.mxu0 0.0
    %8306 = vmatpush1.msra.mxu0 0.0
    %8307 = vmatprep.subr.mxu0 0.0
    %8308 = vmatpush1.msra.mxu0 0.0
    %8309 = vmatprep.subr.mxu0 0.0
    %8310 = vmatpush1.msra.mxu0 0.0
    %8311 = vmatprep.subr.mxu0 0.0
    %8312 = vmatpush1.msra.mxu0 0.0
    %8313 = vmatprep.subr.mxu0 0.0
    %8314 = vmatpush1.msra.mxu0 0.0
    %8315 = vmatprep.subr.mxu0 0.0
    %8316 = vmatpush1.msra.mxu0 0.0
    %8317 = vmatprep.subr.mxu0 0.0
    %8318 = vmatpush1.msra.mxu0 0.0
    %8319 = vmatprep.subr.mxu0 0.0
    %8320 = vmatpush1.msra.mxu0 0.0
    %8321 = vmatprep.subr.mxu0 0.0
    %8322 = vmatpush1.msra.mxu0 0.0
    %8323 = vmatprep.subr.mxu0 0.0
    %8324 = vmatpush1.msra.mxu0 0.0
    %8325 = vmatprep.subr.mxu0 0.0
    %8326 = vmatpush1.msra.mxu0 0.0
    %8327 = vmatprep.subr.mxu0 0.0
    %8328 = vmatpush1.msra.mxu0 0.0
    %8329 = vmatprep.subr.mxu0 0.0
    %8330 = vmatpush1.msra.mxu0 0.0
    %8331 = vmatprep.subr.mxu0 0.0
    %8332 = vmatpush1.msra.mxu0 0.0
    %8333 = vmatprep.subr.mxu0 0.0
    %8334 = vmatpush1.msra.mxu0 0.0
    %8335 = vmatprep.subr.mxu0 0.0
    %8336 = vmatpush1.msra.mxu0 0.0
    %8337 = vmatprep.subr.mxu0 0.0
    %8338 = vmatpush1.msra.mxu0 0.0
    %8339 = vmatprep.subr.mxu0 0.0
    %8340 = vmatpush1.msra.mxu0 0.0
    %8341 = vmatprep.mubr.f32.mxu0 0.0
    %8342 = vmatmul.mubr.f32.gmra.mrb[0].mxu0 %v8275
    %v8343 = vpop.f32.mrb[0].mxu0
    %v8344 = vadd.f32 0.0, %v8343
    %v8345 = vpop.f32.mrb[0].mxu0
    %8346 = vdwg.mxu0
    %v8347 = vadd.f32 %v8271, %v8344
    %v8348 = vld [vmem:[%s7 + $0xe0] sm:$0xff]
    %v8349 = vld [vmem:[%s7 + $0xe8] sm:$0xff]
    %v8350 = vrot.slane %v7430, 2
    %v8351 = vsel %vm232, %v8350, 0
    %8353 = vmatprep.subr.mxu0 0.0
    %8354 = vmatpush1.msra.mxu0 %v8348
    %8355 = vmatprep.subr.mxu0 0.0
    %8356 = vmatpush1.msra.mxu0 %v8349
    %8357 = vmatprep.subr.mxu0 0.0
    %8358 = vmatpush1.msra.mxu0 0.0
    %8359 = vmatprep.subr.mxu0 0.0
    %8360 = vmatpush1.msra.mxu0 0.0
    %8361 = vmatprep.subr.mxu0 0.0
    %8362 = vmatpush1.msra.mxu0 0.0
    %8363 = vmatprep.subr.mxu0 0.0
    %8364 = vmatpush1.msra.mxu0 0.0
    %8365 = vmatprep.subr.mxu0 0.0
    %8366 = vmatpush1.msra.mxu0 0.0
    %8367 = vmatprep.subr.mxu0 0.0
    %8368 = vmatpush1.msra.mxu0 0.0
    %8369 = vmatprep.subr.mxu0 0.0
    %8370 = vmatpush1.msra.mxu0 0.0
    %8371 = vmatprep.subr.mxu0 0.0
    %8372 = vmatpush1.msra.mxu0 0.0
    %8373 = vmatprep.subr.mxu0 0.0
    %8374 = vmatpush1.msra.mxu0 0.0
    %8375 = vmatprep.subr.mxu0 0.0
    %8376 = vmatpush1.msra.mxu0 0.0
    %8377 = vmatprep.subr.mxu0 0.0
    %8378 = vmatpush1.msra.mxu0 0.0
    %8379 = vmatprep.subr.mxu0 0.0
    %8380 = vmatpush1.msra.mxu0 0.0
    %8381 = vmatprep.subr.mxu0 0.0
    %8382 = vmatpush1.msra.mxu0 0.0
    %8383 = vmatprep.subr.mxu0 0.0
    %8384 = vmatpush1.msra.mxu0 0.0
    %8385 = vmatprep.subr.mxu0 0.0
    %8386 = vmatpush1.msra.mxu0 0.0
    %8387 = vmatprep.subr.mxu0 0.0
    %8388 = vmatpush1.msra.mxu0 0.0
    %8389 = vmatprep.subr.mxu0 0.0
    %8390 = vmatpush1.msra.mxu0 0.0
    %8391 = vmatprep.subr.mxu0 0.0
    %8392 = vmatpush1.msra.mxu0 0.0
    %8393 = vmatprep.subr.mxu0 0.0
    %8394 = vmatpush1.msra.mxu0 0.0
    %8395 = vmatprep.subr.mxu0 0.0
    %8396 = vmatpush1.msra.mxu0 0.0
    %8397 = vmatprep.subr.mxu0 0.0
    %8398 = vmatpush1.msra.mxu0 0.0
    %8399 = vmatprep.subr.mxu0 0.0
    %8400 = vmatpush1.msra.mxu0 0.0
    %8401 = vmatprep.subr.mxu0 0.0
    %8402 = vmatpush1.msra.mxu0 0.0
    %8403 = vmatprep.subr.mxu0 0.0
    %8404 = vmatpush1.msra.mxu0 0.0
    %8405 = vmatprep.subr.mxu0 0.0
    %8406 = vmatpush1.msra.mxu0 0.0
    %8407 = vmatprep.subr.mxu0 0.0
    %8408 = vmatpush1.msra.mxu0 0.0
    %8409 = vmatprep.subr.mxu0 0.0
    %8410 = vmatpush1.msra.mxu0 0.0
    %8411 = vmatprep.subr.mxu0 0.0
    %8412 = vmatpush1.msra.mxu0 0.0
    %8413 = vmatprep.subr.mxu0 0.0
    %8414 = vmatpush1.msra.mxu0 0.0
    %8415 = vmatprep.subr.mxu0 0.0
    %8416 = vmatpush1.msra.mxu0 0.0
    %8417 = vmatprep.mubr.f32.mxu0 0.0
    %8418 = vmatmul.mubr.f32.gmra.mrb[0].mxu0 %v8351
    %v8419 = vpop.f32.mrb[0].mxu0
    %v8420 = vadd.f32 0.0, %v8419
    %v8421 = vpop.f32.mrb[0].mxu0
    %8422 = vdwg.mxu0
    %v8423 = vadd.f32 %v8347, %v8420
    %v8424 = vld [vmem:[%s7 + $0xf0] sm:$0xff]
    %v8425 = vld [vmem:[%s7 + $0xf8] sm:$0xff]
    %v8426 = vrot.slane %v7430, 3
    %v8427 = vsel %vm232, %v8426, 0
    %8429 = vmatprep.subr.mxu0 0.0
    %8430 = vmatpush1.msra.mxu0 %v8424
    %8431 = vmatprep.subr.mxu0 0.0
    %8432 = vmatpush1.msra.mxu0 %v8425
    %8433 = vmatprep.subr.mxu0 0.0
    %8434 = vmatpush1.msra.mxu0 0.0
    %8435 = vmatprep.subr.mxu0 0.0
    %8436 = vmatpush1.msra.mxu0 0.0
    %8437 = vmatprep.subr.mxu0 0.0
    %8438 = vmatpush1.msra.mxu0 0.0
    %8439 = vmatprep.subr.mxu0 0.0
    %8440 = vmatpush1.msra.mxu0 0.0
    %8441 = vmatprep.subr.mxu0 0.0
    %8442 = vmatpush1.msra.mxu0 0.0
    %8443 = vmatprep.subr.mxu0 0.0
    %8444 = vmatpush1.msra.mxu0 0.0
    %8445 = vmatprep.subr.mxu0 0.0
    %8446 = vmatpush1.msra.mxu0 0.0
    %8447 = vmatprep.subr.mxu0 0.0
    %8448 = vmatpush1.msra.mxu0 0.0
    %8449 = vmatprep.subr.mxu0 0.0
    %8450 = vmatpush1.msra.mxu0 0.0
    %8451 = vmatprep.subr.mxu0 0.0
    %8452 = vmatpush1.msra.mxu0 0.0
    %8453 = vmatprep.subr.mxu0 0.0
    %8454 = vmatpush1.msra.mxu0 0.0
    %8455 = vmatprep.subr.mxu0 0.0
    %8456 = vmatpush1.msra.mxu0 0.0
    %8457 = vmatprep.subr.mxu0 0.0
    %8458 = vmatpush1.msra.mxu0 0.0
    %8459 = vmatprep.subr.mxu0 0.0
    %8460 = vmatpush1.msra.mxu0 0.0
    %8461 = vmatprep.subr.mxu0 0.0
    %8462 = vmatpush1.msra.mxu0 0.0
    %8463 = vmatprep.subr.mxu0 0.0
    %8464 = vmatpush1.msra.mxu0 0.0
    %8465 = vmatprep.subr.mxu0 0.0
    %8466 = vmatpush1.msra.mxu0 0.0
    %8467 = vmatprep.subr.mxu0 0.0
    %8468 = vmatpush1.msra.mxu0 0.0
    %8469 = vmatprep.subr.mxu0 0.0
    %8470 = vmatpush1.msra.mxu0 0.0
    %8471 = vmatprep.subr.mxu0 0.0
    %8472 = vmatpush1.msra.mxu0 0.0
    %8473 = vmatprep.subr.mxu0 0.0
    %8474 = vmatpush1.msra.mxu0 0.0
    %8475 = vmatprep.subr.mxu0 0.0
    %8476 = vmatpush1.msra.mxu0 0.0
    %8477 = vmatprep.subr.mxu0 0.0
    %8478 = vmatpush1.msra.mxu0 0.0
    %8479 = vmatprep.subr.mxu0 0.0
    %8480 = vmatpush1.msra.mxu0 0.0
    %8481 = vmatprep.subr.mxu0 0.0
    %8482 = vmatpush1.msra.mxu0 0.0
    %8483 = vmatprep.subr.mxu0 0.0
    %8484 = vmatpush1.msra.mxu0 0.0
    %8485 = vmatprep.subr.mxu0 0.0
    %8486 = vmatpush1.msra.mxu0 0.0
    %8487 = vmatprep.subr.mxu0 0.0
    %8488 = vmatpush1.msra.mxu0 0.0
    %8489 = vmatprep.subr.mxu0 0.0
    %8490 = vmatpush1.msra.mxu0 0.0
    %8491 = vmatprep.subr.mxu0 0.0
    %8492 = vmatpush1.msra.mxu0 0.0
    %8493 = vmatprep.mubr.f32.mxu0 0.0
    %8494 = vmatmul.mubr.f32.gmra.mrb[0].mxu0 %v8427
    %v8495 = vpop.f32.mrb[0].mxu0
    %v8496 = vadd.f32 0.0, %v8495
    %v8497 = vpop.f32.mrb[0].mxu0
    %8498 = vdwg.mxu0
    %v8499 = vadd.f32 %v8423, %v8496
    %v8500 = vld [vmem:[%s7 + $0x100] sm:$0xff]
    %v8501 = vld [vmem:[%s7 + $0x108] sm:$0xff]
    %v8502 = vrot.slane %v7430, 4
    %v8503 = vsel %vm232, %v8502, 0
    %8505 = vmatprep.subr.mxu0 0.0
    %8506 = vmatpush1.msra.mxu0 %v8500
    %8507 = vmatprep.subr.mxu0 0.0
    %8508 = vmatpush1.msra.mxu0 %v8501
    %8509 = vmatprep.subr.mxu0 0.0
    %8510 = vmatpush1.msra.mxu0 0.0
    %8511 = vmatprep.subr.mxu0 0.0
    %8512 = vmatpush1.msra.mxu0 0.0
    %8513 = vmatprep.subr.mxu0 0.0
    %8514 = vmatpush1.msra.mxu0 0.0
    %8515 = vmatprep.subr.mxu0 0.0
    %8516 = vmatpush1.msra.mxu0 0.0
    %8517 = vmatprep.subr.mxu0 0.0
    %8518 = vmatpush1.msra.mxu0 0.0
    %8519 = vmatprep.subr.mxu0 0.0
    %8520 = vmatpush1.msra.mxu0 0.0
    %8521 = vmatprep.subr.mxu0 0.0
    %8522 = vmatpush1.msra.mxu0 0.0
    %8523 = vmatprep.subr.mxu0 0.0
    %8524 = vmatpush1.msra.mxu0 0.0
    %8525 = vmatprep.subr.mxu0 0.0
    %8526 = vmatpush1.msra.mxu0 0.0
    %8527 = vmatprep.subr.mxu0 0.0
    %8528 = vmatpush1.msra.mxu0 0.0
    %8529 = vmatprep.subr.mxu0 0.0
    %8530 = vmatpush1.msra.mxu0 0.0
    %8531 = vmatprep.subr.mxu0 0.0
    %8532 = vmatpush1.msra.mxu0 0.0
    %8533 = vmatprep.subr.mxu0 0.0
    %8534 = vmatpush1.msra.mxu0 0.0
    %8535 = vmatprep.subr.mxu0 0.0
    %8536 = vmatpush1.msra.mxu0 0.0
    %8537 = vmatprep.subr.mxu0 0.0
    %8538 = vmatpush1.msra.mxu0 0.0
    %8539 = vmatprep.subr.mxu0 0.0
    %8540 = vmatpush1.msra.mxu0 0.0
    %8541 = vmatprep.subr.mxu0 0.0
    %8542 = vmatpush1.msra.mxu0 0.0
    %8543 = vmatprep.subr.mxu0 0.0
    %8544 = vmatpush1.msra.mxu0 0.0
    %8545 = vmatprep.subr.mxu0 0.0
    %8546 = vmatpush1.msra.mxu0 0.0
    %8547 = vmatprep.subr.mxu0 0.0
    %8548 = vmatpush1.msra.mxu0 0.0
    %8549 = vmatprep.subr.mxu0 0.0
    %8550 = vmatpush1.msra.mxu0 0.0
    %8551 = vmatprep.subr.mxu0 0.0
    %8552 = vmatpush1.msra.mxu0 0.0
    %8553 = vmatprep.subr.mxu0 0.0
    %8554 = vmatpush1.msra.mxu0 0.0
    %8555 = vmatprep.subr.mxu0 0.0
    %8556 = vmatpush1.msra.mxu0 0.0
    %8557 = vmatprep.subr.mxu0 0.0
    %8558 = vmatpush1.msra.mxu0 0.0
    %8559 = vmatprep.subr.mxu0 0.0
    %8560 = vmatpush1.msra.mxu0 0.0
    %8561 = vmatprep.subr.mxu0 0.0
    %8562 = vmatpush1.msra.mxu0 0.0
    %8563 = vmatprep.subr.mxu0 0.0
    %8564 = vmatpush1.msra.mxu0 0.0
    %8565 = vmatprep.subr.mxu0 0.0
    %8566 = vmatpush1.msra.mxu0 0.0
    %8567 = vmatprep.subr.mxu0 0.0
    %8568 = vmatpush1.msra.mxu0 0.0
    %8569 = vmatprep.mubr.f32.mxu0 0.0
    %8570 = vmatmul.mubr.f32.gmra.mrb[0].mxu0 %v8503
    %v8571 = vpop.f32.mrb[0].mxu0
    %v8572 = vadd.f32 0.0, %v8571
    %v8573 = vpop.f32.mrb[0].mxu0
    %8574 = vdwg.mxu0
    %v8575 = vadd.f32 %v8499, %v8572
    %v8576 = vld [vmem:[%s7 + $0x110] sm:$0xff]
    %v8577 = vld [vmem:[%s7 + $0x118] sm:$0xff]
    %v8578 = vrot.slane %v7430, 5
    %v8579 = vsel %vm232, %v8578, 0
    %8581 = vmatprep.subr.mxu0 0.0
    %8582 = vmatpush1.msra.mxu0 %v8576
    %8583 = vmatprep.subr.mxu0 0.0
    %8584 = vmatpush1.msra.mxu0 %v8577
    %8585 = vmatprep.subr.mxu0 0.0
    %8586 = vmatpush1.msra.mxu0 0.0
    %8587 = vmatprep.subr.mxu0 0.0
    %8588 = vmatpush1.msra.mxu0 0.0
    %8589 = vmatprep.subr.mxu0 0.0
    %8590 = vmatpush1.msra.mxu0 0.0
    %8591 = vmatprep.subr.mxu0 0.0
    %8592 = vmatpush1.msra.mxu0 0.0
    %8593 = vmatprep.subr.mxu0 0.0
    %8594 = vmatpush1.msra.mxu0 0.0
    %8595 = vmatprep.subr.mxu0 0.0
    %8596 = vmatpush1.msra.mxu0 0.0
    %8597 = vmatprep.subr.mxu0 0.0
    %8598 = vmatpush1.msra.mxu0 0.0
    %8599 = vmatprep.subr.mxu0 0.0
    %8600 = vmatpush1.msra.mxu0 0.0
    %8601 = vmatprep.subr.mxu0 0.0
    %8602 = vmatpush1.msra.mxu0 0.0
    %8603 = vmatprep.subr.mxu0 0.0
    %8604 = vmatpush1.msra.mxu0 0.0
    %8605 = vmatprep.subr.mxu0 0.0
    %8606 = vmatpush1.msra.mxu0 0.0
    %8607 = vmatprep.subr.mxu0 0.0
    %8608 = vmatpush1.msra.mxu0 0.0
    %8609 = vmatprep.subr.mxu0 0.0
    %8610 = vmatpush1.msra.mxu0 0.0
    %8611 = vmatprep.subr.mxu0 0.0
    %8612 = vmatpush1.msra.mxu0 0.0
    %8613 = vmatprep.subr.mxu0 0.0
    %8614 = vmatpush1.msra.mxu0 0.0
    %8615 = vmatprep.subr.mxu0 0.0
    %8616 = vmatpush1.msra.mxu0 0.0
    %8617 = vmatprep.subr.mxu0 0.0
    %8618 = vmatpush1.msra.mxu0 0.0
    %8619 = vmatprep.subr.mxu0 0.0
    %8620 = vmatpush1.msra.mxu0 0.0
    %8621 = vmatprep.subr.mxu0 0.0
    %8622 = vmatpush1.msra.mxu0 0.0
    %8623 = vmatprep.subr.mxu0 0.0
    %8624 = vmatpush1.msra.mxu0 0.0
    %8625 = vmatprep.subr.mxu0 0.0
    %8626 = vmatpush1.msra.mxu0 0.0
    %8627 = vmatprep.subr.mxu0 0.0
    %8628 = vmatpush1.msra.mxu0 0.0
    %8629 = vmatprep.subr.mxu0 0.0
    %8630 = vmatpush1.msra.mxu0 0.0
    %8631 = vmatprep.subr.mxu0 0.0
    %8632 = vmatpush1.msra.mxu0 0.0
    %8633 = vmatprep.subr.mxu0 0.0
    %8634 = vmatpush1.msra.mxu0 0.0
    %8635 = vmatprep.subr.mxu0 0.0
    %8636 = vmatpush1.msra.mxu0 0.0
    %8637 = vmatprep.subr.mxu0 0.0
    %8638 = vmatpush1.msra.mxu0 0.0
    %8639 = vmatprep.subr.mxu0 0.0
    %8640 = vmatpush1.msra.mxu0 0.0
    %8641 = vmatprep.subr.mxu0 0.0
    %8642 = vmatpush1.msra.mxu0 0.0
    %8643 = vmatprep.subr.mxu0 0.0
    %8644 = vmatpush1.msra.mxu0 0.0
    %8645 = vmatprep.mubr.f32.mxu0 0.0
    %8646 = vmatmul.mubr.f32.gmra.mrb[0].mxu0 %v8579
    %v8647 = vpop.f32.mrb[0].mxu0
    %v8648 = vadd.f32 0.0, %v8647
    %v8649 = vpop.f32.mrb[0].mxu0
    %8650 = vdwg.mxu0
    %v8651 = vadd.f32 %v8575, %v8648
    %v8652 = vld [vmem:[%s7 + $0x120] sm:$0xff]
    %v8653 = vld [vmem:[%s7 + $0x128] sm:$0xff]
    %v8654 = vrot.slane %v7430, 6
    %v8655 = vsel %vm232, %v8654, 0
    %8657 = vmatprep.subr.mxu0 0.0
    %8658 = vmatpush1.msra.mxu0 %v8652
    %8659 = vmatprep.subr.mxu0 0.0
    %8660 = vmatpush1.msra.mxu0 %v8653
    %8661 = vmatprep.subr.mxu0 0.0
    %8662 = vmatpush1.msra.mxu0 0.0
    %8663 = vmatprep.subr.mxu0 0.0
    %8664 = vmatpush1.msra.mxu0 0.0
    %8665 = vmatprep.subr.mxu0 0.0
    %8666 = vmatpush1.msra.mxu0 0.0
    %8667 = vmatprep.subr.mxu0 0.0
    %8668 = vmatpush1.msra.mxu0 0.0
    %8669 = vmatprep.subr.mxu0 0.0
    %8670 = vmatpush1.msra.mxu0 0.0
    %8671 = vmatprep.subr.mxu0 0.0
    %8672 = vmatpush1.msra.mxu0 0.0
    %8673 = vmatprep.subr.mxu0 0.0
    %8674 = vmatpush1.msra.mxu0 0.0
    %8675 = vmatprep.subr.mxu0 0.0
    %8676 = vmatpush1.msra.mxu0 0.0
    %8677 = vmatprep.subr.mxu0 0.0
    %8678 = vmatpush1.msra.mxu0 0.0
    %8679 = vmatprep.subr.mxu0 0.0
    %8680 = vmatpush1.msra.mxu0 0.0
    %8681 = vmatprep.subr.mxu0 0.0
    %8682 = vmatpush1.msra.mxu0 0.0
    %8683 = vmatprep.subr.mxu0 0.0
    %8684 = vmatpush1.msra.mxu0 0.0
    %8685 = vmatprep.subr.mxu0 0.0
    %8686 = vmatpush1.msra.mxu0 0.0
    %8687 = vmatprep.subr.mxu0 0.0
    %8688 = vmatpush1.msra.mxu0 0.0
    %8689 = vmatprep.subr.mxu0 0.0
    %8690 = vmatpush1.msra.mxu0 0.0
    %8691 = vmatprep.subr.mxu0 0.0
    %8692 = vmatpush1.msra.mxu0 0.0
    %8693 = vmatprep.subr.mxu0 0.0
    %8694 = vmatpush1.msra.mxu0 0.0
    %8695 = vmatprep.subr.mxu0 0.0
    %8696 = vmatpush1.msra.mxu0 0.0
    %8697 = vmatprep.subr.mxu0 0.0
    %8698 = vmatpush1.msra.mxu0 0.0
    %8699 = vmatprep.subr.mxu0 0.0
    %8700 = vmatpush1.msra.mxu0 0.0
    %8701 = vmatprep.subr.mxu0 0.0
    %8702 = vmatpush1.msra.mxu0 0.0
    %8703 = vmatprep.subr.mxu0 0.0
    %8704 = vmatpush1.msra.mxu0 0.0
    %8705 = vmatprep.subr.mxu0 0.0
    %8706 = vmatpush1.msra.mxu0 0.0
    %8707 = vmatprep.subr.mxu0 0.0
    %8708 = vmatpush1.msra.mxu0 0.0
    %8709 = vmatprep.subr.mxu0 0.0
    %8710 = vmatpush1.msra.mxu0 0.0
    %8711 = vmatprep.subr.mxu0 0.0
    %8712 = vmatpush1.msra.mxu0 0.0
    %8713 = vmatprep.subr.mxu0 0.0
    %8714 = vmatpush1.msra.mxu0 0.0
    %8715 = vmatprep.subr.mxu0 0.0
    %8716 = vmatpush1.msra.mxu0 0.0
    %8717 = vmatprep.subr.mxu0 0.0
    %8718 = vmatpush1.msra.mxu0 0.0
    %8719 = vmatprep.subr.mxu0 0.0
    %8720 = vmatpush1.msra.mxu0 0.0
    %8721 = vmatprep.mubr.f32.mxu0 0.0
    %8722 = vmatmul.mubr.f32.gmra.mrb[0].mxu0 %v8655
    %v8723 = vpop.f32.mrb[0].mxu0
    %v8724 = vadd.f32 0.0, %v8723
    %v8725 = vpop.f32.mrb[0].mxu0
    %8726 = vdwg.mxu0
    %v8727 = vadd.f32 %v8651, %v8724
    %v8728 = vld [vmem:[%s7 + $0x130] sm:$0xff]
    %v8729 = vld [vmem:[%s7 + $0x138] sm:$0xff]
    %v8730 = vrot.slane %v7430, 7
    %v8731 = vsel %vm232, %v8730, 0
    %8733 = vmatprep.subr.mxu0 0.0
    %8734 = vmatpush1.msra.mxu0 %v8728
    %8735 = vmatprep.subr.mxu0 0.0
    %8736 = vmatpush1.msra.mxu0 %v8729
    %8737 = vmatprep.subr.mxu0 0.0
    %8738 = vmatpush1.msra.mxu0 0.0
    %8739 = vmatprep.subr.mxu0 0.0
    %8740 = vmatpush1.msra.mxu0 0.0
    %8741 = vmatprep.subr.mxu0 0.0
    %8742 = vmatpush1.msra.mxu0 0.0
    %8743 = vmatprep.subr.mxu0 0.0
    %8744 = vmatpush1.msra.mxu0 0.0
    %8745 = vmatprep.subr.mxu0 0.0
    %8746 = vmatpush1.msra.mxu0 0.0
    %8747 = vmatprep.subr.mxu0 0.0
    %8748 = vmatpush1.msra.mxu0 0.0
    %8749 = vmatprep.subr.mxu0 0.0
    %8750 = vmatpush1.msra.mxu0 0.0
    %8751 = vmatprep.subr.mxu0 0.0
    %8752 = vmatpush1.msra.mxu0 0.0
    %8753 = vmatprep.subr.mxu0 0.0
    %8754 = vmatpush1.msra.mxu0 0.0
    %8755 = vmatprep.subr.mxu0 0.0
    %8756 = vmatpush1.msra.mxu0 0.0
    %8757 = vmatprep.subr.mxu0 0.0
    %8758 = vmatpush1.msra.mxu0 0.0
    %8759 = vmatprep.subr.mxu0 0.0
    %8760 = vmatpush1.msra.mxu0 0.0
    %8761 = vmatprep.subr.mxu0 0.0
    %8762 = vmatpush1.msra.mxu0 0.0
    %8763 = vmatprep.subr.mxu0 0.0
    %8764 = vmatpush1.msra.mxu0 0.0
    %8765 = vmatprep.subr.mxu0 0.0
    %8766 = vmatpush1.msra.mxu0 0.0
    %8767 = vmatprep.subr.mxu0 0.0
    %8768 = vmatpush1.msra.mxu0 0.0
    %8769 = vmatprep.subr.mxu0 0.0
    %8770 = vmatpush1.msra.mxu0 0.0
    %8771 = vmatprep.subr.mxu0 0.0
    %8772 = vmatpush1.msra.mxu0 0.0
    %8773 = vmatprep.subr.mxu0 0.0
    %8774 = vmatpush1.msra.mxu0 0.0
    %8775 = vmatprep.subr.mxu0 0.0
    %8776 = vmatpush1.msra.mxu0 0.0
    %8777 = vmatprep.subr.mxu0 0.0
    %8778 = vmatpush1.msra.mxu0 0.0
    %8779 = vmatprep.subr.mxu0 0.0
    %8780 = vmatpush1.msra.mxu0 0.0
    %8781 = vmatprep.subr.mxu0 0.0
    %8782 = vmatpush1.msra.mxu0 0.0
    %8783 = vmatprep.subr.mxu0 0.0
    %8784 = vmatpush1.msra.mxu0 0.0
    %8785 = vmatprep.subr.mxu0 0.0
    %8786 = vmatpush1.msra.mxu0 0.0
    %8787 = vmatprep.subr.mxu0 0.0
    %8788 = vmatpush1.msra.mxu0 0.0
    %8789 = vmatprep.subr.mxu0 0.0
    %8790 = vmatpush1.msra.mxu0 0.0
    %8791 = vmatprep.subr.mxu0 0.0
    %8792 = vmatpush1.msra.mxu0 0.0
    %8793 = vmatprep.subr.mxu0 0.0
    %8794 = vmatpush1.msra.mxu0 0.0
    %8795 = vmatprep.subr.mxu0 0.0
    %8796 = vmatpush1.msra.mxu0 0.0
    %8797 = vmatprep.mubr.f32.mxu0 0.0
    %8798 = vmatmul.mubr.f32.gmra.mrb[0].mxu0 %v8731
    %v8799 = vpop.f32.mrb[0].mxu0
    %v8800 = vadd.f32 0.0, %v8799
    %v8801 = vpop.f32.mrb[0].mxu0
    %8802 = vdwg.mxu0
    %v8803 = vadd.f32 %v8727, %v8800
    %v8804 = vld [vmem:[#allocation8 + $0x945] sm:$0x1]
    %v8805 = vadd.f32 %v8803, %v8804
    %v8806 = vtanh.pop %v8805
    %v8807 = vld [vmem:[%s7 + $0x140] sm:$0xff]
    %v8808 = vld [vmem:[%s7 + $0x148] sm:$0xff]
    %v8809 = vld [vmem:[%s7 + $0x150] sm:$0xff]
    %v8810 = vld [vmem:[%s7 + $0x158] sm:$0xff]
    %v8811 = vld [vmem:[%s7 + $0x160] sm:$0xff]
    %v8812 = vld [vmem:[%s7 + $0x168] sm:$0xff]
    %v8813 = vld [vmem:[%s7 + $0x170] sm:$0xff]
    %v8814 = vld [vmem:[%s7 + $0x178] sm:$0xff]
    %v8815 = vld [vmem:[#allocation8 + $0x946] sm:$0x1]
    %vm8816 = vcmask 523264
    %v8818 = vsel %vm8816, %v8806, 0
    %8820 = vmatprep.subr.mxu0 0.0
    %8821 = vmatpush1.msra.mxu0 %v8807
    %8822 = vmatprep.subr.mxu0 0.0
    %8823 = vmatpush1.msra.mxu0 %v8808
    %8824 = vmatprep.subr.mxu0 0.0
    %8825 = vmatpush1.msra.mxu0 %v8809
    %8826 = vmatprep.subr.mxu0 0.0
    %8827 = vmatpush1.msra.mxu0 %v8810
    %8828 = vmatprep.subr.mxu0 0.0
    %8829 = vmatpush1.msra.mxu0 %v8811
    %8830 = vmatprep.subr.mxu0 0.0
    %8831 = vmatpush1.msra.mxu0 %v8812
    %8832 = vmatprep.subr.mxu0 0.0
    %8833 = vmatpush1.msra.mxu0 %v8813
    %8834 = vmatprep.subr.mxu0 0.0
    %8835 = vmatpush1.msra.mxu0 %v8814
    %8836 = vmatprep.subr.mxu0 0.0
    %8837 = vmatpush1.msra.mxu0 0.0
    %8838 = vmatprep.subr.mxu0 0.0
    %8839 = vmatpush1.msra.mxu0 0.0
    %8840 = vmatprep.subr.mxu0 0.0
    %8841 = vmatpush1.msra.mxu0 0.0
    %8842 = vmatprep.subr.mxu0 0.0
    %8843 = vmatpush1.msra.mxu0 0.0
    %8844 = vmatprep.subr.mxu0 0.0
    %8845 = vmatpush1.msra.mxu0 0.0
    %8846 = vmatprep.subr.mxu0 0.0
    %8847 = vmatpush1.msra.mxu0 0.0
    %8848 = vmatprep.subr.mxu0 0.0
    %8849 = vmatpush1.msra.mxu0 0.0
    %8850 = vmatprep.subr.mxu0 0.0
    %8851 = vmatpush1.msra.mxu0 0.0
    %8852 = vmatprep.subr.mxu0 0.0
    %8853 = vmatpush1.msra.mxu0 0.0
    %8854 = vmatprep.subr.mxu0 0.0
    %8855 = vmatpush1.msra.mxu0 0.0
    %8856 = vmatprep.subr.mxu0 0.0
    %8857 = vmatpush1.msra.mxu0 0.0
    %8858 = vmatprep.subr.mxu0 0.0
    %8859 = vmatpush1.msra.mxu0 0.0
    %8860 = vmatprep.subr.mxu0 0.0
    %8861 = vmatpush1.msra.mxu0 0.0
    %8862 = vmatprep.subr.mxu0 0.0
    %8863 = vmatpush1.msra.mxu0 0.0
    %8864 = vmatprep.subr.mxu0 0.0
    %8865 = vmatpush1.msra.mxu0 0.0
    %8866 = vmatprep.subr.mxu0 0.0
    %8867 = vmatpush1.msra.mxu0 0.0
    %8868 = vmatprep.subr.mxu0 0.0
    %8869 = vmatpush1.msra.mxu0 0.0
    %8870 = vmatprep.subr.mxu0 0.0
    %8871 = vmatpush1.msra.mxu0 0.0
    %8872 = vmatprep.subr.mxu0 0.0
    %8873 = vmatpush1.msra.mxu0 0.0
    %8874 = vmatprep.subr.mxu0 0.0
    %8875 = vmatpush1.msra.mxu0 0.0
    %8876 = vmatprep.subr.mxu0 0.0
    %8877 = vmatpush1.msra.mxu0 0.0
    %8878 = vmatprep.subr.mxu0 0.0
    %8879 = vmatpush1.msra.mxu0 0.0
    %8880 = vmatprep.subr.mxu0 0.0
    %8881 = vmatpush1.msra.mxu0 0.0
    %8882 = vmatprep.subr.mxu0 0.0
    %8883 = vmatpush1.msra.mxu0 0.0
    %8884 = vmatprep.mubr.f32.mxu0 0.0
    %8885 = vmatmul.mubr.f32.gmra.mrb[0].mxu0 %v8818
    %v8886 = vpop.f32.mrb[0].mxu0
    %v8887 = vadd.f32 %v8815, %v8886
    %v8888 = vpop.f32.mrb[0].mxu0
    %8889 = vdwg.mxu0
    %vm8890 = vcmask 516096
    %v8891 = vsel %vm8890, %v8887, 0.0
    %8892 = vadd.xlane.f32.xlu0 %v8891
    %v8893 = vpop.xlane.xlu0 %8892
    %v8894 = vrcp.pop 64.0
    %v8895 = vmul.f32 %v8893, %v8894
    %v8896 = vsub.f32 %v8887, %v8895
    %v8897 = vmul.f32 %v8896, %v8896
    %v8898 = vsel %vm8890, %v8897, 0.0
    %8899 = vadd.xlane.f32.xlu0 %v8898
    %v8900 = vpop.xlane.xlu0 %8899
    %v8901 = vmul.f32 %v8900, %v8894
    %v8902 = vadd.f32 %v8901, 1e-05
    %v8903 = vrsqrt.pop %v8902
    %v8904 = vmul.f32 %v8896, %v8903
    %v8905 = vld [vmem:[#allocation8 + $0x947] sm:$0x1]
    %v8906 = vmul.f32 %v8904, %v8905
    %v8907 = vld [vmem:[#allocation8 + $0x948] sm:$0x1]
    %v8908 = vadd.f32 %v8906, %v8907
    %v8909 = vtanh.pop %v8908
    %v8910 = vld [vmem:[%s7 + $0x180] sm:$0xff]
    %v8911 = vld [vmem:[%s7 + $0x188] sm:$0xff]
    %v8912 = vld [vmem:[%s7 + $0x190] sm:$0xff]
    %v8913 = vld [vmem:[%s7 + $0x198] sm:$0xff]
    %v8914 = vld [vmem:[%s7 + $0x1a0] sm:$0xff]
    %v8915 = vld [vmem:[%s7 + $0x1a8] sm:$0xff]
    %v8916 = vld [vmem:[%s7 + $0x1b0] sm:$0xff]
    %v8917 = vld [vmem:[%s7 + $0x1b8] sm:$0xff]
    %v8918 = vld [vmem:[#allocation8 + $0x949] sm:$0x1]
    %v8920 = vsel %vm8816, %v8909, 0
    %8922 = vmatprep.subr.mxu0 0.0
    %8923 = vmatpush1.msra.mxu0 %v8910
    %8924 = vmatprep.subr.mxu0 0.0
    %8925 = vmatpush1.msra.mxu0 %v8911
    %8926 = vmatprep.subr.mxu0 0.0
    %8927 = vmatpush1.msra.mxu0 %v8912
    %8928 = vmatprep.subr.mxu0 0.0
    %8929 = vmatpush1.msra.mxu0 %v8913
    %8930 = vmatprep.subr.mxu0 0.0
    %8931 = vmatpush1.msra.mxu0 %v8914
    %8932 = vmatprep.subr.mxu0 0.0
    %8933 = vmatpush1.msra.mxu0 %v8915
    %8934 = vmatprep.subr.mxu0 0.0
    %8935 = vmatpush1.msra.mxu0 %v8916
    %8936 = vmatprep.subr.mxu0 0.0
    %8937 = vmatpush1.msra.mxu0 %v8917
    %8938 = vmatprep.subr.mxu0 0.0
    %8939 = vmatpush1.msra.mxu0 0.0
    %8940 = vmatprep.subr.mxu0 0.0
    %8941 = vmatpush1.msra.mxu0 0.0
    %8942 = vmatprep.subr.mxu0 0.0
    %8943 = vmatpush1.msra.mxu0 0.0
    %8944 = vmatprep.subr.mxu0 0.0
    %8945 = vmatpush1.msra.mxu0 0.0
    %8946 = vmatprep.subr.mxu0 0.0
    %8947 = vmatpush1.msra.mxu0 0.0
    %8948 = vmatprep.subr.mxu0 0.0
    %8949 = vmatpush1.msra.mxu0 0.0
    %8950 = vmatprep.subr.mxu0 0.0
    %8951 = vmatpush1.msra.mxu0 0.0
    %8952 = vmatprep.subr.mxu0 0.0
    %8953 = vmatpush1.msra.mxu0 0.0
    %8954 = vmatprep.subr.mxu0 0.0
    %8955 = vmatpush1.msra.mxu0 0.0
    %8956 = vmatprep.subr.mxu0 0.0
    %8957 = vmatpush1.msra.mxu0 0.0
    %8958 = vmatprep.subr.mxu0 0.0
    %8959 = vmatpush1.msra.mxu0 0.0
    %8960 = vmatprep.subr.mxu0 0.0
    %8961 = vmatpush1.msra.mxu0 0.0
    %8962 = vmatprep.subr.mxu0 0.0
    %8963 = vmatpush1.msra.mxu0 0.0
    %8964 = vmatprep.subr.mxu0 0.0
    %8965 = vmatpush1.msra.mxu0 0.0
    %8966 = vmatprep.subr.mxu0 0.0
    %8967 = vmatpush1.msra.mxu0 0.0
    %8968 = vmatprep.subr.mxu0 0.0
    %8969 = vmatpush1.msra.mxu0 0.0
    %8970 = vmatprep.subr.mxu0 0.0
    %8971 = vmatpush1.msra.mxu0 0.0
    %8972 = vmatprep.subr.mxu0 0.0
    %8973 = vmatpush1.msra.mxu0 0.0
    %8974 = vmatprep.subr.mxu0 0.0
    %8975 = vmatpush1.msra.mxu0 0.0
    %8976 = vmatprep.subr.mxu0 0.0
    %8977 = vmatpush1.msra.mxu0 0.0
    %8978 = vmatprep.subr.mxu0 0.0
    %8979 = vmatpush1.msra.mxu0 0.0
    %8980 = vmatprep.subr.mxu0 0.0
    %8981 = vmatpush1.msra.mxu0 0.0
    %8982 = vmatprep.subr.mxu0 0.0
    %8983 = vmatpush1.msra.mxu0 0.0
    %8984 = vmatprep.subr.mxu0 0.0
    %8985 = vmatpush1.msra.mxu0 0.0
    %8986 = vmatprep.mubr.f32.mxu0 0.0
    %8987 = vmatmul.mubr.f32.gmra.mrb[0].mxu0 %v8920
    %v8988 = vpop.f32.mrb[0].mxu0
    %v8989 = vadd.f32 %v8918, %v8988
    %v8990 = vpop.f32.mrb[0].mxu0
    %8991 = vdwg.mxu0
    %v8992 = vsel %vm8890, %v8989, 0.0
    %8993 = vadd.xlane.f32.xlu0 %v8992
    %v8994 = vpop.xlane.xlu0 %8993
    %v8995 = vmul.f32 %v8994, %v8894
    %v8996 = vsub.f32 %v8989, %v8995
    %v8997 = vmul.f32 %v8996, %v8996
    %v8998 = vsel %vm8890, %v8997, 0.0
    %8999 = vadd.xlane.f32.xlu0 %v8998
    %v9000 = vpop.xlane.xlu0 %8999
    %v9001 = vmul.f32 %v9000, %v8894
    %v9002 = vadd.f32 %v9001, 1e-05
    %v9003 = vrsqrt.pop %v9002
    %v9004 = vmul.f32 %v8996, %v9003
    %v9005 = vld [vmem:[#allocation8 + $0x94a] sm:$0x1]
    %v9006 = vmul.f32 %v9004, %v9005
    %v9007 = vld [vmem:[#allocation8 + $0x94b] sm:$0x1]
    %v9008 = vadd.f32 %v9006, %v9007
    %v9009 = vtanh.pop %v9008
    %v9010 = vld [vmem:[%s7 + $0x1c0] sm:$0xff]
    %v9011 = vld [vmem:[%s7 + $0x1c8] sm:$0xff]
    %v9012 = vld [vmem:[%s7 + $0x1d0] sm:$0xff]
    %v9013 = vld [vmem:[%s7 + $0x1d8] sm:$0xff]
    %v9014 = vld [vmem:[%s7 + $0x1e0] sm:$0xff]
    %v9015 = vld [vmem:[%s7 + $0x1e8] sm:$0xff]
    %v9016 = vld [vmem:[%s7 + $0x1f0] sm:$0xff]
    %v9017 = vld [vmem:[%s7 + $0x1f8] sm:$0xff]
    %v9018 = vld [vmem:[#allocation8 + $0x94c] sm:$0x1]
    %v9020 = vsel %vm8816, %v9009, 0
    %9022 = vmatprep.subr.mxu0 0.0
    %9023 = vmatpush1.msra.mxu0 %v9010
    %9024 = vmatprep.subr.mxu0 0.0
    %9025 = vmatpush1.msra.mxu0 %v9011
    %9026 = vmatprep.subr.mxu0 0.0
    %9027 = vmatpush1.msra.mxu0 %v9012
    %9028 = vmatprep.subr.mxu0 0.0
    %9029 = vmatpush1.msra.mxu0 %v9013
    %9030 = vmatprep.subr.mxu0 0.0
    %9031 = vmatpush1.msra.mxu0 %v9014
    %9032 = vmatprep.subr.mxu0 0.0
    %9033 = vmatpush1.msra.mxu0 %v9015
    %9034 = vmatprep.subr.mxu0 0.0
    %9035 = vmatpush1.msra.mxu0 %v9016
    %9036 = vmatprep.subr.mxu0 0.0
    %9037 = vmatpush1.msra.mxu0 %v9017
    %9038 = vmatprep.subr.mxu0 0.0
    %9039 = vmatpush1.msra.mxu0 0.0
    %9040 = vmatprep.subr.mxu0 0.0
    %9041 = vmatpush1.msra.mxu0 0.0
    %9042 = vmatprep.subr.mxu0 0.0
    %9043 = vmatpush1.msra.mxu0 0.0
    %9044 = vmatprep.subr.mxu0 0.0
    %9045 = vmatpush1.msra.mxu0 0.0
    %9046 = vmatprep.subr.mxu0 0.0
    %9047 = vmatpush1.msra.mxu0 0.0
    %9048 = vmatprep.subr.mxu0 0.0
    %9049 = vmatpush1.msra.mxu0 0.0
    %9050 = vmatprep.subr.mxu0 0.0
    %9051 = vmatpush1.msra.mxu0 0.0
    %9052 = vmatprep.subr.mxu0 0.0
    %9053 = vmatpush1.msra.mxu0 0.0
    %9054 = vmatprep.subr.mxu0 0.0
    %9055 = vmatpush1.msra.mxu0 0.0
    %9056 = vmatprep.subr.mxu0 0.0
    %9057 = vmatpush1.msra.mxu0 0.0
    %9058 = vmatprep.subr.mxu0 0.0
    %9059 = vmatpush1.msra.mxu0 0.0
    %9060 = vmatprep.subr.mxu0 0.0
    %9061 = vmatpush1.msra.mxu0 0.0
    %9062 = vmatprep.subr.mxu0 0.0
    %9063 = vmatpush1.msra.mxu0 0.0
    %9064 = vmatprep.subr.mxu0 0.0
    %9065 = vmatpush1.msra.mxu0 0.0
    %9066 = vmatprep.subr.mxu0 0.0
    %9067 = vmatpush1.msra.mxu0 0.0
    %9068 = vmatprep.subr.mxu0 0.0
    %9069 = vmatpush1.msra.mxu0 0.0
    %9070 = vmatprep.subr.mxu0 0.0
    %9071 = vmatpush1.msra.mxu0 0.0
    %9072 = vmatprep.subr.mxu0 0.0
    %9073 = vmatpush1.msra.mxu0 0.0
    %9074 = vmatprep.subr.mxu0 0.0
    %9075 = vmatpush1.msra.mxu0 0.0
    %9076 = vmatprep.subr.mxu0 0.0
    %9077 = vmatpush1.msra.mxu0 0.0
    %9078 = vmatprep.subr.mxu0 0.0
    %9079 = vmatpush1.msra.mxu0 0.0
    %9080 = vmatprep.subr.mxu0 0.0
    %9081 = vmatpush1.msra.mxu0 0.0
    %9082 = vmatprep.subr.mxu0 0.0
    %9083 = vmatpush1.msra.mxu0 0.0
    %9084 = vmatprep.subr.mxu0 0.0
    %9085 = vmatpush1.msra.mxu0 0.0
    %9086 = vmatprep.mubr.f32.mxu0 0.0
    %9087 = vmatmul.mubr.f32.gmra.mrb[0].mxu0 %v9020
    %v9088 = vpop.f32.mrb[0].mxu0
    %v9089 = vadd.f32 %v9018, %v9088
    %v9090 = vpop.f32.mrb[0].mxu0
    %9091 = vdwg.mxu0
    %v9092 = vsel %vm8890, %v9089, 0.0
    %9093 = vadd.xlane.f32.xlu0 %v9092
    %v9094 = vpop.xlane.xlu0 %9093
    %v9095 = vmul.f32 %v9094, %v8894
    %v9096 = vsub.f32 %v9089, %v9095
    %v9097 = vmul.f32 %v9096, %v9096
    %v9098 = vsel %vm8890, %v9097, 0.0
    %9099 = vadd.xlane.f32.xlu0 %v9098
    %v9100 = vpop.xlane.xlu0 %9099
    %v9101 = vmul.f32 %v9100, %v8894
    %v9102 = vadd.f32 %v9101, 1e-05
    %v9103 = vrsqrt.pop %v9102
    %v9104 = vmul.f32 %v9096, %v9103
    %v9105 = vld [vmem:[#allocation8 + $0x94d] sm:$0x1]
    %v9106 = vmul.f32 %v9104, %v9105
    %v9107 = vld [vmem:[#allocation8 + $0x94e] sm:$0x1]
    %v9108 = vadd.f32 %v9106, %v9107
    %v9109 = vtanh.pop %v9108
    %v9110 = vld [vmem:[#allocation8 + $0x94f] sm:$0x1]
    %v9111 = vmul.f32 %v9109, %v9110
    %v9112 = vsel %vm8890, %v9111, 0.0
    %9113 = vadd.xlane.f32.xlu0 %v9112
    %v9114 = vpop.xlane.xlu0 %9113
    %v9115 = vld [vmem:[#allocation8 + $0x950] sm:$0x1]
    %v9116 = vadd.f32 %v9114, %v9115
    %vm9117 = vcmask 0
    %9118 = vst.msk [vmem:[#allocation10] sm:$0x1] %vm9117, %v9116
    // Predicated region
    $region50: #{forward.1} parent=1 // pred_check
      _
    $region51: #{forward.1} parent=1 // pred_check_branch
      %9120 = sbr.rel (0) target = $region53
    $region52: #{forward.1} parent=1 // pred_region
      %s9122 = ssub.s32 16, 16
      %9123 = vsyncadd [#allocation4], %s9122
      %s9125 = sshll.u32 [#allocation10], 4
      %s9126 = int_to_ptr.vmem [resolvable:$true] %s9125
      %9128 = dma.vmem_to_hbm [thread:$0]  %s9126, 16, %s8, [#allocation4]
    $region53: #{forward.1} parent=1 // pred_fallthru
      _
    // Predicated region
    $region54: #{forward.1} parent=1 // pred_check
      _
    $region55: #{forward.1} parent=1 // pred_check_branch
      %9130 = sbr.rel (0) target = $region57
    $region56: #{forward.1} parent=1 // pred_region
      %9131 = dma.done [#allocation4], 16
    $region57: #{forward.1} parent=1 // pred_fallthru
      _
    %9132 = vsyncpa [#allocation3], 1
    %9133 = vsyncpa [#allocation6], 1
    %9134 = vsyncpa [#allocation9], 1
    %9135 = vsyncpa [#allocation4], 1

</llo_original>
